<compile_context>
chip_gen: v5e
topology: v5e:2x2
jax: 0.10.0
libtpu: 0.0.40
codegen_flags: <defaults>
</compile_context>

<pallas_src>
import functools
import numpy as np

import jax
import jax.numpy as jnp
from jax.experimental import pallas as pl
from jax.experimental.pallas import tpu as pltpu


# ----------------------------------------------------------------------------
# Fused Pallas kernel: full MultiBERTV2 forward for one batch element.
# ----------------------------------------------------------------------------
def multibert_fused_kernel(x_ref, pe_ref,
                           wq_ref, bq_ref, wk_ref, bk_ref, wv_ref, bv_ref,
                           wo_ref, bo_ref, g1_ref, be1_ref,
                           w1_ref, b1_ref, w2_ref, b2_ref, g2_ref, be2_ref,
                           hw0_ref, hb0_ref, hw1_ref, hb1_ref, hw2_ref, hb2_ref,
                           out_ref, *, nheads, nl2):
    """x_ref: (1, S, input_dim); pe_ref: (S, input_dim) (PE duplicated over both halves).

    Stacked layer weights, L = 4*nl2 layers ordered [vb..., ab..., vt..., at...]:
      wq/wk/wv: (L, H, D, dh)   bq/bk/bv: (L, H, 1, dh)
      wo:       (L, H, dh, D)   bo/g1/be1/g2/be2/b2: (L, 1, D)
      w1: (L, D, F)  b1: (L, 1, F)  w2: (L, F, D)
    Head: hw0 (ID, h0), hb0 (1, h0), hw1 (h0, h1), hb1 (1, h1), hw2 (h1, out), hb2 (1, out).
    """
    S = x_ref.shape[1]
    ID = x_ref.shape[2]
    D = ID // 2
    H = nheads
    dh = D // H
    scale = 1.0 / float(np.sqrt(dh))

    def encoder_layer(src, q, k, v, l):
        # ----- multi-head attention (batched over heads, no lane slicing) -----
        qb = jnp.broadcast_to(q, (H, S, D))
        kb = jnp.broadcast_to(k, (H, S, D))
        vb = jnp.broadcast_to(v, (H, S, D))
        qh = jnp.einsum('hsd,hde->hse', qb, wq_ref[l],
                        preferred_element_type=jnp.float32) + bq_ref[l]
        kh = jnp.einsum('hsd,hde->hse', kb, wk_ref[l],
                        preferred_element_type=jnp.float32) + bk_ref[l]
        vh = jnp.einsum('hsd,hde->hse', vb, wv_ref[l],
                        preferred_element_type=jnp.float32) + bv_ref[l]
        s = jnp.einsum('hqe,hke->hqk', qh, kh,
                       preferred_element_type=jnp.float32) * scale     # (H,S,S)
        s = s - jnp.max(s, axis=-1, keepdims=True)
        p = jnp.exp(s)
        p = p * pl.reciprocal(jnp.sum(p, axis=-1, keepdims=True), approx=True)
        o = jnp.einsum('hqk,hke->hqe', p, vh,
                       preferred_element_type=jnp.float32)              # (H,S,dh)
        # out-projection: sum_h o_h @ Wo_h  ==  concat(o_h) @ Wo
        attn = jnp.sum(jnp.einsum('hqe,hed->hqd', o, wo_ref[l],
                                  preferred_element_type=jnp.float32),
                       axis=0) + bo_ref[l]                              # (S,D)

        # ----- residual + LayerNorm 1 -----
        xr = src + attn
        mu = jnp.mean(xr, axis=-1, keepdims=True)
        var = jnp.mean((xr - mu) ** 2, axis=-1, keepdims=True)
        xr = (xr - mu) * jax.lax.rsqrt(var + 1e-5) * g1_ref[l] + be1_ref[l]

        # ----- feed-forward: Linear -> ReLU -> Linear -----
        h1 = jnp.maximum(
            jnp.dot(xr, w1_ref[l], preferred_element_type=jnp.float32) + b1_ref[l], 0.0)
        ff = jnp.dot(h1, w2_ref[l], preferred_element_type=jnp.float32) + b2_ref[l]

        # ----- residual + LayerNorm 2 -----
        y = xr + ff
        mu2 = jnp.mean(y, axis=-1, keepdims=True)
        var2 = jnp.mean((y - mu2) ** 2, axis=-1, keepdims=True)
        return (y - mu2) * jax.lax.rsqrt(var2 + 1e-5) * g2_ref[l] + be2_ref[l]

    # ----- input split + positional embedding (PE already duplicated along feat) -----
    xb = x_ref[0] + pe_ref[...]        # (S, ID)
    vis = xb[:, :D]
    aud = xb[:, D:]

    # ----- cross phase: visual_branch[i] then audio_branch[i] -----
    for i in range(nl2):
        vis_new = encoder_layer(vis, aud, vis, vis, i)              # src=vis, q=aud, k=v=vis
        aud_new = encoder_layer(aud, vis_new, aud, aud, nl2 + i)    # src=aud, q=vis_new, k=v=aud
        vis, aud = vis_new, aud_new

    # ----- per-branch self-attention transformer encoders -----
    for i in range(nl2):
        vis = encoder_layer(vis, vis, vis, vis, 2 * nl2 + i)
    for i in range(nl2):
        aud = encoder_layer(aud, aud, aud, aud, 3 * nl2 + i)

    # ----- regressor head (task != 'va', no tanh), fused into the same kernel -----
    feat = jnp.concatenate([vis, aud], axis=-1)                     # (S, ID)
    h = jnp.maximum(
        jnp.dot(feat, hw0_ref[...], preferred_element_type=jnp.float32) + hb0_ref[...], 0.0)
    h = jnp.maximum(
        jnp.dot(h, hw1_ref[...], preferred_element_type=jnp.float32) + hb1_ref[...], 0.0)
    out_ref[0] = jnp.dot(h, hw2_ref[...], preferred_element_type=jnp.float32) + hb2_ref[...]


# ----------------------------------------------------------------------------
# Wrapper around pallas_call
# ----------------------------------------------------------------------------
_LAYER_WEIGHT_NAMES = ["wq", "bq", "wk", "bk", "wv", "bv", "wo", "bo",
                       "g1", "be1", "w1", "b1", "w2", "b2", "g2", "be2"]
_HEAD_WEIGHT_NAMES = ["hw0", "hb0", "hw1", "hb1", "hw2", "hb2"]


def multibert_v2_forward(x, params, *, nheads, nl2, use_pe=True):
    """x: (S, B, input_dim) float32 — same layout as the PyTorch module."""
    S, B, ID = x.shape
    D = ID // 2
    out_dim = params["hw2"].shape[1]

    # Single tiny layout transpose for the whole forward (batch on the grid axis).
    xt = jnp.transpose(x, (1, 0, 2))                       # (B, S, ID)
    pe = params["pe"] if use_pe else jnp.zeros((S, D), jnp.float32)
    pe2 = jnp.concatenate([pe, pe], axis=-1)               # (S, ID): same PE on both halves

    layer_ws = [params[n] for n in _LAYER_WEIGHT_NAMES]
    head_ws = [params[n] for n in _HEAD_WEIGHT_NAMES]

    def full(a):
        n = a.ndim
        return pl.BlockSpec(a.shape, lambda b, _n=n: (0,) * _n)

    kernel = functools.partial(multibert_fused_kernel, nheads=nheads, nl2=nl2)
    out = pl.pallas_call(
        kernel,
        out_shape=jax.ShapeDtypeStruct((B, S, out_dim), jnp.float32),
        grid=(B,),
        in_specs=[pl.BlockSpec((1, S, ID), lambda b: (b, 0, 0)),
                  full(pe2)]
                 + [full(w) for w in layer_ws]
                 + [full(w) for w in head_ws],
        out_specs=pl.BlockSpec((1, S, out_dim), lambda b: (b, 0, 0)),
        compiler_params=pltpu.CompilerParams(dimension_semantics=("parallel",)),
    )(xt, pe2, *layer_ws, *head_ws)

    return jnp.transpose(out, (1, 0, 2))                   # (S, B, out_dim)


# ----------------------------------------------------------------------------
# Parameter init (deterministic, synthetic) + packing into stacked per-head form
# ----------------------------------------------------------------------------
def init_layer_params(key, D, F):
    ks = jax.random.split(key, 6)
    std = 0.05
    n = lambda k, shape: jax.random.normal(k, shape, jnp.float32) * std
    return dict(
        wq=n(ks[0], (D, D)), bq=jnp.zeros((1, D), jnp.float32),
        wk=n(ks[1], (D, D)), bk=jnp.zeros((1, D), jnp.float32),
        wv=n(ks[2], (D, D)), bv=jnp.zeros((1, D), jnp.float32),
        wo=n(ks[3], (D, D)), bo=jnp.zeros((1, D), jnp.float32),
        g1=jnp.ones((1, D), jnp.float32), be1=jnp.zeros((1, D), jnp.float32),
        w1=n(ks[4], (D, F)), b1=jnp.zeros((1, F), jnp.float32),
        w2=n(ks[5], (F, D)), b2=jnp.zeros((1, D), jnp.float32),
        g2=jnp.ones((1, D), jnp.float32), be2=jnp.zeros((1, D), jnp.float32),
    )


def pack_layer_params(layers, nheads):
    """Stack per-layer params and split attention weights into per-head slabs
    so the kernel can use batched (head-leading) contractions."""
    L = len(layers)
    D = layers[0]["wq"].shape[0]
    H = nheads
    dh = D // H
    stack = lambda name: jnp.stack([l[name] for l in layers], axis=0)
    split_w = lambda w: w.reshape(L, D, H, dh).transpose(0, 2, 1, 3)   # (L,H,D,dh)
    split_b = lambda b: b.reshape(L, 1, H, dh).transpose(0, 2, 1, 3)   # (L,H,1,dh)
    return dict(
        wq=split_w(stack("wq")), bq=split_b(stack("bq")),
        wk=split_w(stack("wk")), bk=split_b(stack("bk")),
        wv=split_w(stack("wv")), bv=split_b(stack("bv")),
        wo=stack("wo").reshape(L, H, dh, D), bo=stack("bo"),
        g1=stack("g1"), be1=stack("be1"),
        w1=stack("w1"), b1=stack("b1"),
        w2=stack("w2"), b2=stack("b2"),
        g2=stack("g2"), be2=stack("be2"),
    )


def init_head_params(key, inc, dims, out_dim):
    ks = jax.random.split(key, 3)
    std = 0.05
    n = lambda k, shape: jax.random.normal(k, shape, jnp.float32) * std
    return dict(
        hw0=n(ks[0], (inc, dims[0])), hb0=jnp.zeros((1, dims[0]), jnp.float32),
        hw1=n(ks[1], (dims[0], dims[1])), hb1=jnp.zeros((1, dims[1]), jnp.float32),
        hw2=n(ks[2], (dims[1], out_dim)), hb2=jnp.zeros((1, out_dim), jnp.float32),
    )


def sinusoid_table(n_pos, d):
    pos = np.arange(n_pos)[:, None].astype(np.float64)
    idx = np.arange(d)[None, :]
    angle = pos / np.power(10000.0, 2.0 * (idx // 2) / d)
    tbl = np.zeros((n_pos, d), dtype=np.float64)
    tbl[:, 0::2] = np.sin(angle[:, 0::2])
    tbl[:, 1::2] = np.cos(angle[:, 1::2])
    return jnp.asarray(tbl, jnp.float32)


def init_multibert_params(key, input_dim, feedforward_dim, nheads, nlayers,
                          seq_len, head_dims, out_dim):
    d_model = input_dim // 2
    nl2 = nlayers // 2
    keys = jax.random.split(key, 4 * nl2 + 1)
    # Layer order in the stack: [vb_0..vb_{nl2-1}, ab_..., vt_..., at_...]
    layers = [init_layer_params(keys[i], d_model, feedforward_dim)
              for i in range(4 * nl2)]
    params = pack_layer_params(layers, nheads)
    params.update(init_head_params(keys[-1], input_dim, head_dims, out_dim))
    params["pe"] = sinusoid_table(seq_len, d_model)
    return params


# ----------------------------------------------------------------------------
# Pure-JAX reference (same math, exact softmax reciprocal) for a sanity check.
# ----------------------------------------------------------------------------
def _reference_forward(x, p, *, nheads, nl2, use_pe=True):
    S, B, ID = x.shape
    D = ID // 2
    dh = D // nheads
    scale = 1.0 / float(np.sqrt(dh))
    pe = p["pe"] if use_pe else jnp.zeros((S, D), jnp.float32)
    pe2 = jnp.concatenate([pe, pe], axis=-1)

    def layer(src, q, k, v, l):
        qh = jnp.einsum('sd,hde->hse', q, p["wq"][l]) + p["bq"][l]
        kh = jnp.einsum('sd,hde->hse', k, p["wk"][l]) + p["bk"][l]
        vh = jnp.einsum('sd,hde->hse', v, p["wv"][l]) + p["bv"][l]
        s = jnp.einsum('hqe,hke->hqk', qh, kh) * scale
        a = jax.nn.softmax(s, axis=-1)
        o = jnp.einsum('hqk,hke->hqe', a, vh)
        attn = jnp.einsum('hqe,hed->qd', o, p["wo"][l]) + p["bo"][l]
        x1 = src + attn
        x1 = ((x1 - x1.mean(-1, keepdims=True))
              * jax.lax.rsqrt(x1.var(-1, keepdims=True) + 1e-5) * p["g1"][l] + p["be1"][l])
        ff = jnp.maximum(x1 @ p["w1"][l] + p["b1"][l], 0.0) @ p["w2"][l] + p["b2"][l]
        y = x1 + ff
        return ((y - y.mean(-1, keepdims=True))
                * jax.lax.rsqrt(y.var(-1, keepdims=True) + 1e-5) * p["g2"][l] + p["be2"][l])

    def one(xe):                                   # xe: (S, ID)
        xe = xe + pe2
        vis, aud = xe[:, :D], xe[:, D:]
        for i in range(nl2):
            vis_new = layer(vis, aud, vis, vis, i)
            aud_new = layer(aud, vis_new, aud, aud, nl2 + i)
            vis, aud = vis_new, aud_new
        for i in range(nl2):
            vis = layer(vis, vis, vis, vis, 2 * nl2 + i)
        for i in range(nl2):
            aud = layer(aud, aud, aud, aud, 3 * nl2 + i)
        feat = jnp.concatenate([vis, aud], axis=-1)
        h = jnp.maximum(feat @ p["hw0"] + p["hb0"], 0.0)
        h = jnp.maximum(h @ p["hw1"] + p["hb1"], 0.0)
        return h @ p["hw2"] + p["hb2"]

    return jax.vmap(one, in_axes=1, out_axes=1)(x)


# ----------------------------------------------------------------------------
if __name__ == "__main__":
    # Hyperparameters (small, consistent with MultiBERTV2.__init__).
    input_dim = 64          # -> d_model = 32 inside the crossformer
    feedforward_dim = 64
    nheads = 4
    nlayers = 4             # -> 2 cross layers + 2 self-attn encoder layers per branch
    seq_len = 8
    batch = 2
    head_dims = [32, 16]
    out_dim = 8
    task = "exp"            # != 'va': single head, no tanh

    key = jax.random.PRNGKey(0)
    k_param, k_x = jax.random.split(key)
    params = init_multibert_params(k_param, input_dim, feedforward_dim, nheads,
                                   nlayers, seq_len, head_dims, out_dim)

    x = jax.random.normal(k_x, (seq_len, batch, input_dim), jnp.float32)

    fwd = jax.jit(functools.partial(multibert_v2_forward,
                                    nheads=nheads, nl2=nlayers // 2, use_pe=True))
    out = fwd(x, params)
    jax.block_until_ready(out)

    assert out.shape == (seq_len, batch, out_dim), out.shape
    assert bool(jnp.all(jnp.isfinite(out)))

    ref = _reference_forward(x, params, nheads=nheads, nl2=nlayers // 2, use_pe=True)
    max_err = float(jnp.max(jnp.abs(out - ref)))
    assert max_err < 2e-3, f"kernel/reference mismatch: max abs err {max_err}"

    print("KERNEL_OK")
</pallas_src>

<mosaic_0001>
module attributes {stable_mosaic.version = 11 : i64} {
  func.func @multibert_fused_kernel(%arg0: i32, %arg1: memref<1x8x64xf32, #tpu.memory_space<vmem>>, %arg2: memref<8x64xf32, #tpu.memory_space<vmem>>, %arg3: memref<8x4x32x8xf32, #tpu.memory_space<vmem>>, %arg4: memref<8x4x1x8xf32, #tpu.memory_space<vmem>>, %arg5: memref<8x4x32x8xf32, #tpu.memory_space<vmem>>, %arg6: memref<8x4x1x8xf32, #tpu.memory_space<vmem>>, %arg7: memref<8x4x32x8xf32, #tpu.memory_space<vmem>>, %arg8: memref<8x4x1x8xf32, #tpu.memory_space<vmem>>, %arg9: memref<8x4x8x32xf32, #tpu.memory_space<vmem>>, %arg10: memref<8x1x32xf32, #tpu.memory_space<vmem>>, %arg11: memref<8x1x32xf32, #tpu.memory_space<vmem>>, %arg12: memref<8x1x32xf32, #tpu.memory_space<vmem>>, %arg13: memref<8x32x64xf32, #tpu.memory_space<vmem>>, %arg14: memref<8x1x64xf32, #tpu.memory_space<vmem>>, %arg15: memref<8x64x32xf32, #tpu.memory_space<vmem>>, %arg16: memref<8x1x32xf32, #tpu.memory_space<vmem>>, %arg17: memref<8x1x32xf32, #tpu.memory_space<vmem>>, %arg18: memref<8x1x32xf32, #tpu.memory_space<vmem>>, %arg19: memref<64x32xf32, #tpu.memory_space<vmem>>, %arg20: memref<1x32xf32, #tpu.memory_space<vmem>>, %arg21: memref<32x16xf32, #tpu.memory_space<vmem>>, %arg22: memref<1x16xf32, #tpu.memory_space<vmem>>, %arg23: memref<16x8xf32, #tpu.memory_space<vmem>>, %arg24: memref<1x8xf32, #tpu.memory_space<vmem>>, %arg25: memref<1x8x8xf32, #tpu.memory_space<vmem>>) attributes {dimension_semantics = [#tpu.dimension_semantics<parallel>], iteration_bounds = array<i64: 2>, scalar_prefetch = 0 : i64, scratch_operands = 0 : i64, tpu.core_type = #tpu.core_type<tc>, window_params = [{transform_indices = @transform_0, window_bounds = array<i64: 1, 8, 64>}, {pipeline_mode = #tpu.pipeline_mode<synchronous>, transform_indices = @transform_1, window_bounds = array<i64: 8, 64>}, {pipeline_mode = #tpu.pipeline_mode<synchronous>, transform_indices = @transform_2, window_bounds = array<i64: 8, 4, 32, 8>}, {pipeline_mode = #tpu.pipeline_mode<synchronous>, transform_indices = @transform_3, window_bounds = array<i64: 8, 4, 1, 8>}, {pipeline_mode = #tpu.pipeline_mode<synchronous>, transform_indices = @transform_4, window_bounds = array<i64: 8, 4, 32, 8>}, {pipeline_mode = #tpu.pipeline_mode<synchronous>, transform_indices = @transform_5, window_bounds = array<i64: 8, 4, 1, 8>}, {pipeline_mode = #tpu.pipeline_mode<synchronous>, transform_indices = @transform_6, window_bounds = array<i64: 8, 4, 32, 8>}, {pipeline_mode = #tpu.pipeline_mode<synchronous>, transform_indices = @transform_7, window_bounds = array<i64: 8, 4, 1, 8>}, {pipeline_mode = #tpu.pipeline_mode<synchronous>, transform_indices = @transform_8, window_bounds = array<i64: 8, 4, 8, 32>}, {pipeline_mode = #tpu.pipeline_mode<synchronous>, transform_indices = @transform_9, window_bounds = array<i64: 8, 1, 32>}, {pipeline_mode = #tpu.pipeline_mode<synchronous>, transform_indices = @transform_10, window_bounds = array<i64: 8, 1, 32>}, {pipeline_mode = #tpu.pipeline_mode<synchronous>, transform_indices = @transform_11, window_bounds = array<i64: 8, 1, 32>}, {pipeline_mode = #tpu.pipeline_mode<synchronous>, transform_indices = @transform_12, window_bounds = array<i64: 8, 32, 64>}, {pipeline_mode = #tpu.pipeline_mode<synchronous>, transform_indices = @transform_13, window_bounds = array<i64: 8, 1, 64>}, {pipeline_mode = #tpu.pipeline_mode<synchronous>, transform_indices = @transform_14, window_bounds = array<i64: 8, 64, 32>}, {pipeline_mode = #tpu.pipeline_mode<synchronous>, transform_indices = @transform_15, window_bounds = array<i64: 8, 1, 32>}, {pipeline_mode = #tpu.pipeline_mode<synchronous>, transform_indices = @transform_16, window_bounds = array<i64: 8, 1, 32>}, {pipeline_mode = #tpu.pipeline_mode<synchronous>, transform_indices = @transform_17, window_bounds = array<i64: 8, 1, 32>}, {pipeline_mode = #tpu.pipeline_mode<synchronous>, transform_indices = @transform_18, window_bounds = array<i64: 64, 32>}, {pipeline_mode = #tpu.pipeline_mode<synchronous>, transform_indices = @transform_19, window_bounds = array<i64: 1, 32>}, {pipeline_mode = #tpu.pipeline_mode<synchronous>, transform_indices = @transform_20, window_bounds = array<i64: 32, 16>}, {pipeline_mode = #tpu.pipeline_mode<synchronous>, transform_indices = @transform_21, window_bounds = array<i64: 1, 16>}, {pipeline_mode = #tpu.pipeline_mode<synchronous>, transform_indices = @transform_22, window_bounds = array<i64: 16, 8>}, {pipeline_mode = #tpu.pipeline_mode<synchronous>, transform_indices = @transform_23, window_bounds = array<i64: 1, 8>}, {transform_indices = @transform_24, window_bounds = array<i64: 1, 8, 8>}]} {
    %c0 = arith.constant 0 : index
    %c0_0 = arith.constant 0 : index
    %c0_1 = arith.constant 0 : index
    %0 = vector.load %arg1[%c0, %c0_0, %c0_1] : memref<1x8x64xf32, #tpu.memory_space<vmem>>, vector<1x8x64xf32>
    %1 = vector.shape_cast %0 : vector<1x8x64xf32> to vector<8x64xf32>
    %c0_2 = arith.constant 0 : index
    %c0_3 = arith.constant 0 : index
    %2 = vector.load %arg2[%c0_2, %c0_3] : memref<8x64xf32, #tpu.memory_space<vmem>>, vector<8x64xf32>
    %3 = arith.addf %1, %2 : vector<8x64xf32>
    %4 = vector.extract_strided_slice %3 {offsets = [0, 0], sizes = [8, 32], strides = [1, 1]} : vector<8x64xf32> to vector<8x32xf32>
    %5 = vector.extract_strided_slice %3 {offsets = [0, 32], sizes = [8, 32], strides = [1, 1]} : vector<8x64xf32> to vector<8x32xf32>
    %6 = vector.shape_cast %5 : vector<8x32xf32> to vector<1x8x32xf32>
    %7 = vector.broadcast %6 : vector<1x8x32xf32> to vector<4x8x32xf32>
    %8 = vector.shape_cast %4 : vector<8x32xf32> to vector<1x8x32xf32>
    %9 = vector.broadcast %8 : vector<1x8x32xf32> to vector<4x8x32xf32>
    %10 = vector.shape_cast %4 : vector<8x32xf32> to vector<1x8x32xf32>
    %11 = vector.broadcast %10 : vector<1x8x32xf32> to vector<4x8x32xf32>
    %c0_4 = arith.constant 0 : index
    %c0_5 = arith.constant 0 : index
    %c0_6 = arith.constant 0 : index
    %c0_7 = arith.constant 0 : index
    %12 = vector.load %arg3[%c0_4, %c0_5, %c0_6, %c0_7] : memref<8x4x32x8xf32, #tpu.memory_space<vmem>>, vector<1x4x32x8xf32>
    %13 = vector.shape_cast %12 : vector<1x4x32x8xf32> to vector<4x32x8xf32>
    "tpu.trace_start"() <{level = 10 : i32, message = "hsd,hde->hse"}> : () -> ()
    %cst = arith.constant dense<0.000000e+00> : vector<4x8x8xf32>
    %14 = tpu.matmul %7, %13, %cst {dimension_numbers = #tpu.dot_dimension_numbers<[2], [1], [1], [2], [0, 0, 0, 1, 1, 2], [0], [0]>} : vector<4x8x32xf32>, vector<4x32x8xf32>, vector<4x8x8xf32> -> vector<4x8x8xf32>
    "tpu.trace_stop"() : () -> ()
    %c0_8 = arith.constant 0 : index
    %c0_9 = arith.constant 0 : index
    %c0_10 = arith.constant 0 : index
    %c0_11 = arith.constant 0 : index
    %15 = vector.load %arg4[%c0_8, %c0_9, %c0_10, %c0_11] : memref<8x4x1x8xf32, #tpu.memory_space<vmem>>, vector<1x4x1x8xf32>
    %16 = vector.shape_cast %15 : vector<1x4x1x8xf32> to vector<4x1x8xf32>
    %17 = vector.broadcast %16 : vector<4x1x8xf32> to vector<4x8x8xf32>
    %18 = arith.addf %14, %17 : vector<4x8x8xf32>
    %c0_12 = arith.constant 0 : index
    %c0_13 = arith.constant 0 : index
    %c0_14 = arith.constant 0 : index
    %c0_15 = arith.constant 0 : index
    %19 = vector.load %arg5[%c0_12, %c0_13, %c0_14, %c0_15] : memref<8x4x32x8xf32, #tpu.memory_space<vmem>>, vector<1x4x32x8xf32>
    %20 = vector.shape_cast %19 : vector<1x4x32x8xf32> to vector<4x32x8xf32>
    "tpu.trace_start"() <{level = 10 : i32, message = "hsd,hde->hse"}> : () -> ()
    %cst_16 = arith.constant dense<0.000000e+00> : vector<4x8x8xf32>
    %21 = tpu.matmul %9, %20, %cst_16 {dimension_numbers = #tpu.dot_dimension_numbers<[2], [1], [1], [2], [0, 0, 0, 1, 1, 2], [0], [0]>} : vector<4x8x32xf32>, vector<4x32x8xf32>, vector<4x8x8xf32> -> vector<4x8x8xf32>
    "tpu.trace_stop"() : () -> ()
    %c0_17 = arith.constant 0 : index
    %c0_18 = arith.constant 0 : index
    %c0_19 = arith.constant 0 : index
    %c0_20 = arith.constant 0 : index
    %22 = vector.load %arg6[%c0_17, %c0_18, %c0_19, %c0_20] : memref<8x4x1x8xf32, #tpu.memory_space<vmem>>, vector<1x4x1x8xf32>
    %23 = vector.shape_cast %22 : vector<1x4x1x8xf32> to vector<4x1x8xf32>
    %24 = vector.broadcast %23 : vector<4x1x8xf32> to vector<4x8x8xf32>
    %25 = arith.addf %21, %24 : vector<4x8x8xf32>
    %c0_21 = arith.constant 0 : index
    %c0_22 = arith.constant 0 : index
    %c0_23 = arith.constant 0 : index
    %c0_24 = arith.constant 0 : index
    %26 = vector.load %arg7[%c0_21, %c0_22, %c0_23, %c0_24] : memref<8x4x32x8xf32, #tpu.memory_space<vmem>>, vector<1x4x32x8xf32>
    %27 = vector.shape_cast %26 : vector<1x4x32x8xf32> to vector<4x32x8xf32>
    "tpu.trace_start"() <{level = 10 : i32, message = "hsd,hde->hse"}> : () -> ()
    %cst_25 = arith.constant dense<0.000000e+00> : vector<4x8x8xf32>
    %28 = tpu.matmul %11, %27, %cst_25 {dimension_numbers = #tpu.dot_dimension_numbers<[2], [1], [1], [2], [0, 0, 0, 1, 1, 2], [0], [0]>} : vector<4x8x32xf32>, vector<4x32x8xf32>, vector<4x8x8xf32> -> vector<4x8x8xf32>
    "tpu.trace_stop"() : () -> ()
    %c0_26 = arith.constant 0 : index
    %c0_27 = arith.constant 0 : index
    %c0_28 = arith.constant 0 : index
    %c0_29 = arith.constant 0 : index
    %29 = vector.load %arg8[%c0_26, %c0_27, %c0_28, %c0_29] : memref<8x4x1x8xf32, #tpu.memory_space<vmem>>, vector<1x4x1x8xf32>
    %30 = vector.shape_cast %29 : vector<1x4x1x8xf32> to vector<4x1x8xf32>
    %31 = vector.broadcast %30 : vector<4x1x8xf32> to vector<4x8x8xf32>
    %32 = arith.addf %28, %31 : vector<4x8x8xf32>
    "tpu.trace_start"() <{level = 10 : i32, message = "hqe,hke->hqk"}> : () -> ()
    %cst_30 = arith.constant dense<0.000000e+00> : vector<4x8x8xf32>
    %33 = tpu.matmul %18, %25, %cst_30 {dimension_numbers = #tpu.dot_dimension_numbers<[2], [2], [1], [1], [0, 0, 0, 1, 1, 1], [0], [0]>} : vector<4x8x8xf32>, vector<4x8x8xf32>, vector<4x8x8xf32> -> vector<4x8x8xf32>
    "tpu.trace_stop"() : () -> ()
    %cst_31 = arith.constant 0.353553385 : f32
    %34 = vector.broadcast %cst_31 : f32 to vector<4x8x8xf32>
    %35 = arith.mulf %33, %34 : vector<4x8x8xf32>
    %cst_32 = arith.constant dense<0xFF800000> : vector<4x8xf32>
    %36 = vector.multi_reduction <maximumf>, %35, %cst_32 [2] : vector<4x8x8xf32> to vector<4x8xf32>
    %37 = vector.shape_cast %36 : vector<4x8xf32> to vector<4x8x1xf32>
    %38 = vector.broadcast %37 : vector<4x8x1xf32> to vector<4x8x8xf32>
    %39 = arith.subf %35, %38 : vector<4x8x8xf32>
    %40 = math.exp %39 : vector<4x8x8xf32>
    %cst_33 = arith.constant dense<0.000000e+00> : vector<4x8xf32>
    %41 = vector.multi_reduction <add>, %40, %cst_33 [2] : vector<4x8x8xf32> to vector<4x8xf32>
    %42 = vector.shape_cast %41 : vector<4x8xf32> to vector<4x8x1xf32>
    %43 = tpu.reciprocal %42 {approx = true} : vector<4x8x1xf32> -> vector<4x8x1xf32>
    %44 = vector.broadcast %43 : vector<4x8x1xf32> to vector<4x8x8xf32>
    %45 = arith.mulf %40, %44 : vector<4x8x8xf32>
    "tpu.trace_start"() <{level = 10 : i32, message = "hqk,hke->hqe"}> : () -> ()
    %cst_34 = arith.constant dense<0.000000e+00> : vector<4x8x8xf32>
    %46 = tpu.matmul %45, %32, %cst_34 {dimension_numbers = #tpu.dot_dimension_numbers<[2], [1], [1], [2], [0, 0, 0, 1, 1, 2], [0], [0]>} : vector<4x8x8xf32>, vector<4x8x8xf32>, vector<4x8x8xf32> -> vector<4x8x8xf32>
    "tpu.trace_stop"() : () -> ()
    %c0_35 = arith.constant 0 : index
    %c0_36 = arith.constant 0 : index
    %c0_37 = arith.constant 0 : index
    %c0_38 = arith.constant 0 : index
    %47 = vector.load %arg9[%c0_35, %c0_36, %c0_37, %c0_38] : memref<8x4x8x32xf32, #tpu.memory_space<vmem>>, vector<1x4x8x32xf32>
    %48 = vector.shape_cast %47 : vector<1x4x8x32xf32> to vector<4x8x32xf32>
    "tpu.trace_start"() <{level = 10 : i32, message = "hqe,hed->hqd"}> : () -> ()
    %cst_39 = arith.constant dense<0.000000e+00> : vector<4x8x32xf32>
    %49 = tpu.matmul %46, %48, %cst_39 {dimension_numbers = #tpu.dot_dimension_numbers<[2], [1], [1], [2], [0, 0, 0, 1, 1, 2], [0], [0]>} : vector<4x8x8xf32>, vector<4x8x32xf32>, vector<4x8x32xf32> -> vector<4x8x32xf32>
    "tpu.trace_stop"() : () -> ()
    %cst_40 = arith.constant dense<0.000000e+00> : vector<8x32xf32>
    %50 = vector.multi_reduction <add>, %49, %cst_40 [0] : vector<4x8x32xf32> to vector<8x32xf32>
    %c0_41 = arith.constant 0 : index
    %c0_42 = arith.constant 0 : index
    %c0_43 = arith.constant 0 : index
    %51 = vector.load %arg10[%c0_41, %c0_42, %c0_43] : memref<8x1x32xf32, #tpu.memory_space<vmem>>, vector<1x1x32xf32>
    %52 = vector.shape_cast %51 : vector<1x1x32xf32> to vector<1x32xf32>
    %53 = vector.broadcast %52 : vector<1x32xf32> to vector<8x32xf32>
    %54 = arith.addf %50, %53 : vector<8x32xf32>
    %55 = arith.addf %4, %54 : vector<8x32xf32>
    %cst_44 = arith.constant dense<0.000000e+00> : vector<8xf32>
    %56 = vector.multi_reduction <add>, %55, %cst_44 [1] : vector<8x32xf32> to vector<8xf32>
    %57 = vector.shape_cast %56 : vector<8xf32> to vector<8x1xf32>
    %cst_45 = arith.constant 3.200000e+01 : f32
    %58 = vector.broadcast %cst_45 : f32 to vector<8x1xf32>
    %59 = arith.divf %57, %58 : vector<8x1xf32>
    %60 = vector.broadcast %59 : vector<8x1xf32> to vector<8x32xf32>
    %61 = arith.subf %55, %60 : vector<8x32xf32>
    %62 = arith.mulf %61, %61 : vector<8x32xf32>
    %cst_46 = arith.constant dense<0.000000e+00> : vector<8xf32>
    %63 = vector.multi_reduction <add>, %62, %cst_46 [1] : vector<8x32xf32> to vector<8xf32>
    %64 = vector.shape_cast %63 : vector<8xf32> to vector<8x1xf32>
    %cst_47 = arith.constant 3.200000e+01 : f32
    %65 = vector.broadcast %cst_47 : f32 to vector<8x1xf32>
    %66 = arith.divf %64, %65 : vector<8x1xf32>
    %67 = vector.broadcast %59 : vector<8x1xf32> to vector<8x32xf32>
    %68 = arith.subf %55, %67 : vector<8x32xf32>
    %cst_48 = arith.constant 9.99999974E-6 : f32
    %69 = vector.broadcast %cst_48 : f32 to vector<8x1xf32>
    %70 = arith.addf %66, %69 : vector<8x1xf32>
    %71 = math.rsqrt %70 : vector<8x1xf32>
    %72 = vector.broadcast %71 : vector<8x1xf32> to vector<8x32xf32>
    %73 = arith.mulf %68, %72 : vector<8x32xf32>
    %c0_49 = arith.constant 0 : index
    %c0_50 = arith.constant 0 : index
    %c0_51 = arith.constant 0 : index
    %74 = vector.load %arg11[%c0_49, %c0_50, %c0_51] : memref<8x1x32xf32, #tpu.memory_space<vmem>>, vector<1x1x32xf32>
    %75 = vector.shape_cast %74 : vector<1x1x32xf32> to vector<1x32xf32>
    %76 = vector.broadcast %75 : vector<1x32xf32> to vector<8x32xf32>
    %77 = arith.mulf %73, %76 : vector<8x32xf32>
    %c0_52 = arith.constant 0 : index
    %c0_53 = arith.constant 0 : index
    %c0_54 = arith.constant 0 : index
    %78 = vector.load %arg12[%c0_52, %c0_53, %c0_54] : memref<8x1x32xf32, #tpu.memory_space<vmem>>, vector<1x1x32xf32>
    %79 = vector.shape_cast %78 : vector<1x1x32xf32> to vector<1x32xf32>
    %80 = vector.broadcast %79 : vector<1x32xf32> to vector<8x32xf32>
    %81 = arith.addf %77, %80 : vector<8x32xf32>
    %c0_55 = arith.constant 0 : index
    %c0_56 = arith.constant 0 : index
    %c0_57 = arith.constant 0 : index
    %82 = vector.load %arg13[%c0_55, %c0_56, %c0_57] : memref<8x32x64xf32, #tpu.memory_space<vmem>>, vector<1x32x64xf32>
    %83 = vector.shape_cast %82 : vector<1x32x64xf32> to vector<32x64xf32>
    %cst_58 = arith.constant dense<0.000000e+00> : vector<8x64xf32>
    %84 = tpu.matmul %81, %83, %cst_58 {dimension_numbers = #tpu.dot_dimension_numbers<[1], [0], [0], [1], [0, 0, 1, 1], [], []>} : vector<8x32xf32>, vector<32x64xf32>, vector<8x64xf32> -> vector<8x64xf32>
    %c0_59 = arith.constant 0 : index
    %c0_60 = arith.constant 0 : index
    %c0_61 = arith.constant 0 : index
    %85 = vector.load %arg14[%c0_59, %c0_60, %c0_61] : memref<8x1x64xf32, #tpu.memory_space<vmem>>, vector<1x1x64xf32>
    %86 = vector.shape_cast %85 : vector<1x1x64xf32> to vector<1x64xf32>
    %87 = vector.broadcast %86 : vector<1x64xf32> to vector<8x64xf32>
    %88 = arith.addf %84, %87 : vector<8x64xf32>
    %cst_62 = arith.constant 0.000000e+00 : f32
    %89 = vector.broadcast %cst_62 : f32 to vector<8x64xf32>
    %90 = arith.maximumf %88, %89 : vector<8x64xf32>
    %c0_63 = arith.constant 0 : index
    %c0_64 = arith.constant 0 : index
    %c0_65 = arith.constant 0 : index
    %91 = vector.load %arg15[%c0_63, %c0_64, %c0_65] : memref<8x64x32xf32, #tpu.memory_space<vmem>>, vector<1x64x32xf32>
    %92 = vector.shape_cast %91 : vector<1x64x32xf32> to vector<64x32xf32>
    %cst_66 = arith.constant dense<0.000000e+00> : vector<8x32xf32>
    %93 = tpu.matmul %90, %92, %cst_66 {dimension_numbers = #tpu.dot_dimension_numbers<[1], [0], [0], [1], [0, 0, 1, 1], [], []>} : vector<8x64xf32>, vector<64x32xf32>, vector<8x32xf32> -> vector<8x32xf32>
    %c0_67 = arith.constant 0 : index
    %c0_68 = arith.constant 0 : index
    %c0_69 = arith.constant 0 : index
    %94 = vector.load %arg16[%c0_67, %c0_68, %c0_69] : memref<8x1x32xf32, #tpu.memory_space<vmem>>, vector<1x1x32xf32>
    %95 = vector.shape_cast %94 : vector<1x1x32xf32> to vector<1x32xf32>
    %96 = vector.broadcast %95 : vector<1x32xf32> to vector<8x32xf32>
    %97 = arith.addf %93, %96 : vector<8x32xf32>
    %98 = arith.addf %81, %97 : vector<8x32xf32>
    %cst_70 = arith.constant dense<0.000000e+00> : vector<8xf32>
    %99 = vector.multi_reduction <add>, %98, %cst_70 [1] : vector<8x32xf32> to vector<8xf32>
    %100 = vector.shape_cast %99 : vector<8xf32> to vector<8x1xf32>
    %cst_71 = arith.constant 3.200000e+01 : f32
    %101 = vector.broadcast %cst_71 : f32 to vector<8x1xf32>
    %102 = arith.divf %100, %101 : vector<8x1xf32>
    %103 = vector.broadcast %102 : vector<8x1xf32> to vector<8x32xf32>
    %104 = arith.subf %98, %103 : vector<8x32xf32>
    %105 = arith.mulf %104, %104 : vector<8x32xf32>
    %cst_72 = arith.constant dense<0.000000e+00> : vector<8xf32>
    %106 = vector.multi_reduction <add>, %105, %cst_72 [1] : vector<8x32xf32> to vector<8xf32>
    %107 = vector.shape_cast %106 : vector<8xf32> to vector<8x1xf32>
    %cst_73 = arith.constant 3.200000e+01 : f32
    %108 = vector.broadcast %cst_73 : f32 to vector<8x1xf32>
    %109 = arith.divf %107, %108 : vector<8x1xf32>
    %110 = vector.broadcast %102 : vector<8x1xf32> to vector<8x32xf32>
    %111 = arith.subf %98, %110 : vector<8x32xf32>
    %cst_74 = arith.constant 9.99999974E-6 : f32
    %112 = vector.broadcast %cst_74 : f32 to vector<8x1xf32>
    %113 = arith.addf %109, %112 : vector<8x1xf32>
    %114 = math.rsqrt %113 : vector<8x1xf32>
    %115 = vector.broadcast %114 : vector<8x1xf32> to vector<8x32xf32>
    %116 = arith.mulf %111, %115 : vector<8x32xf32>
    %c0_75 = arith.constant 0 : index
    %c0_76 = arith.constant 0 : index
    %c0_77 = arith.constant 0 : index
    %117 = vector.load %arg17[%c0_75, %c0_76, %c0_77] : memref<8x1x32xf32, #tpu.memory_space<vmem>>, vector<1x1x32xf32>
    %118 = vector.shape_cast %117 : vector<1x1x32xf32> to vector<1x32xf32>
    %119 = vector.broadcast %118 : vector<1x32xf32> to vector<8x32xf32>
    %120 = arith.mulf %116, %119 : vector<8x32xf32>
    %c0_78 = arith.constant 0 : index
    %c0_79 = arith.constant 0 : index
    %c0_80 = arith.constant 0 : index
    %121 = vector.load %arg18[%c0_78, %c0_79, %c0_80] : memref<8x1x32xf32, #tpu.memory_space<vmem>>, vector<1x1x32xf32>
    %122 = vector.shape_cast %121 : vector<1x1x32xf32> to vector<1x32xf32>
    %123 = vector.broadcast %122 : vector<1x32xf32> to vector<8x32xf32>
    %124 = arith.addf %120, %123 : vector<8x32xf32>
    %125 = vector.shape_cast %124 : vector<8x32xf32> to vector<1x8x32xf32>
    %126 = vector.broadcast %125 : vector<1x8x32xf32> to vector<4x8x32xf32>
    %127 = vector.shape_cast %5 : vector<8x32xf32> to vector<1x8x32xf32>
    %128 = vector.broadcast %127 : vector<1x8x32xf32> to vector<4x8x32xf32>
    %129 = vector.shape_cast %5 : vector<8x32xf32> to vector<1x8x32xf32>
    %130 = vector.broadcast %129 : vector<1x8x32xf32> to vector<4x8x32xf32>
    %c2 = arith.constant 2 : index
    %c0_81 = arith.constant 0 : index
    %c0_82 = arith.constant 0 : index
    %c0_83 = arith.constant 0 : index
    %131 = vector.load %arg3[%c2, %c0_81, %c0_82, %c0_83] : memref<8x4x32x8xf32, #tpu.memory_space<vmem>>, vector<1x4x32x8xf32>
    %132 = vector.shape_cast %131 : vector<1x4x32x8xf32> to vector<4x32x8xf32>
    "tpu.trace_start"() <{level = 10 : i32, message = "hsd,hde->hse"}> : () -> ()
    %cst_84 = arith.constant dense<0.000000e+00> : vector<4x8x8xf32>
    %133 = tpu.matmul %126, %132, %cst_84 {dimension_numbers = #tpu.dot_dimension_numbers<[2], [1], [1], [2], [0, 0, 0, 1, 1, 2], [0], [0]>} : vector<4x8x32xf32>, vector<4x32x8xf32>, vector<4x8x8xf32> -> vector<4x8x8xf32>
    "tpu.trace_stop"() : () -> ()
    %c2_85 = arith.constant 2 : index
    %c0_86 = arith.constant 0 : index
    %c0_87 = arith.constant 0 : index
    %c0_88 = arith.constant 0 : index
    %134 = vector.load %arg4[%c2_85, %c0_86, %c0_87, %c0_88] : memref<8x4x1x8xf32, #tpu.memory_space<vmem>>, vector<1x4x1x8xf32>
    %135 = vector.shape_cast %134 : vector<1x4x1x8xf32> to vector<4x1x8xf32>
    %136 = vector.broadcast %135 : vector<4x1x8xf32> to vector<4x8x8xf32>
    %137 = arith.addf %133, %136 : vector<4x8x8xf32>
    %c2_89 = arith.constant 2 : index
    %c0_90 = arith.constant 0 : index
    %c0_91 = arith.constant 0 : index
    %c0_92 = arith.constant 0 : index
    %138 = vector.load %arg5[%c2_89, %c0_90, %c0_91, %c0_92] : memref<8x4x32x8xf32, #tpu.memory_space<vmem>>, vector<1x4x32x8xf32>
    %139 = vector.shape_cast %138 : vector<1x4x32x8xf32> to vector<4x32x8xf32>
    "tpu.trace_start"() <{level = 10 : i32, message = "hsd,hde->hse"}> : () -> ()
    %cst_93 = arith.constant dense<0.000000e+00> : vector<4x8x8xf32>
    %140 = tpu.matmul %128, %139, %cst_93 {dimension_numbers = #tpu.dot_dimension_numbers<[2], [1], [1], [2], [0, 0, 0, 1, 1, 2], [0], [0]>} : vector<4x8x32xf32>, vector<4x32x8xf32>, vector<4x8x8xf32> -> vector<4x8x8xf32>
    "tpu.trace_stop"() : () -> ()
    %c2_94 = arith.constant 2 : index
    %c0_95 = arith.constant 0 : index
    %c0_96 = arith.constant 0 : index
    %c0_97 = arith.constant 0 : index
    %141 = vector.load %arg6[%c2_94, %c0_95, %c0_96, %c0_97] : memref<8x4x1x8xf32, #tpu.memory_space<vmem>>, vector<1x4x1x8xf32>
    %142 = vector.shape_cast %141 : vector<1x4x1x8xf32> to vector<4x1x8xf32>
    %143 = vector.broadcast %142 : vector<4x1x8xf32> to vector<4x8x8xf32>
    %144 = arith.addf %140, %143 : vector<4x8x8xf32>
    %c2_98 = arith.constant 2 : index
    %c0_99 = arith.constant 0 : index
    %c0_100 = arith.constant 0 : index
    %c0_101 = arith.constant 0 : index
    %145 = vector.load %arg7[%c2_98, %c0_99, %c0_100, %c0_101] : memref<8x4x32x8xf32, #tpu.memory_space<vmem>>, vector<1x4x32x8xf32>
    %146 = vector.shape_cast %145 : vector<1x4x32x8xf32> to vector<4x32x8xf32>
    "tpu.trace_start"() <{level = 10 : i32, message = "hsd,hde->hse"}> : () -> ()
    %cst_102 = arith.constant dense<0.000000e+00> : vector<4x8x8xf32>
    %147 = tpu.matmul %130, %146, %cst_102 {dimension_numbers = #tpu.dot_dimension_numbers<[2], [1], [1], [2], [0, 0, 0, 1, 1, 2], [0], [0]>} : vector<4x8x32xf32>, vector<4x32x8xf32>, vector<4x8x8xf32> -> vector<4x8x8xf32>
    "tpu.trace_stop"() : () -> ()
    %c2_103 = arith.constant 2 : index
    %c0_104 = arith.constant 0 : index
    %c0_105 = arith.constant 0 : index
    %c0_106 = arith.constant 0 : index
    %148 = vector.load %arg8[%c2_103, %c0_104, %c0_105, %c0_106] : memref<8x4x1x8xf32, #tpu.memory_space<vmem>>, vector<1x4x1x8xf32>
    %149 = vector.shape_cast %148 : vector<1x4x1x8xf32> to vector<4x1x8xf32>
    %150 = vector.broadcast %149 : vector<4x1x8xf32> to vector<4x8x8xf32>
    %151 = arith.addf %147, %150 : vector<4x8x8xf32>
    "tpu.trace_start"() <{level = 10 : i32, message = "hqe,hke->hqk"}> : () -> ()
    %cst_107 = arith.constant dense<0.000000e+00> : vector<4x8x8xf32>
    %152 = tpu.matmul %137, %144, %cst_107 {dimension_numbers = #tpu.dot_dimension_numbers<[2], [2], [1], [1], [0, 0, 0, 1, 1, 1], [0], [0]>} : vector<4x8x8xf32>, vector<4x8x8xf32>, vector<4x8x8xf32> -> vector<4x8x8xf32>
    "tpu.trace_stop"() : () -> ()
    %cst_108 = arith.constant 0.353553385 : f32
    %153 = vector.broadcast %cst_108 : f32 to vector<4x8x8xf32>
    %154 = arith.mulf %152, %153 : vector<4x8x8xf32>
    %cst_109 = arith.constant dense<0xFF800000> : vector<4x8xf32>
    %155 = vector.multi_reduction <maximumf>, %154, %cst_109 [2] : vector<4x8x8xf32> to vector<4x8xf32>
    %156 = vector.shape_cast %155 : vector<4x8xf32> to vector<4x8x1xf32>
    %157 = vector.broadcast %156 : vector<4x8x1xf32> to vector<4x8x8xf32>
    %158 = arith.subf %154, %157 : vector<4x8x8xf32>
    %159 = math.exp %158 : vector<4x8x8xf32>
    %cst_110 = arith.constant dense<0.000000e+00> : vector<4x8xf32>
    %160 = vector.multi_reduction <add>, %159, %cst_110 [2] : vector<4x8x8xf32> to vector<4x8xf32>
    %161 = vector.shape_cast %160 : vector<4x8xf32> to vector<4x8x1xf32>
    %162 = tpu.reciprocal %161 {approx = true} : vector<4x8x1xf32> -> vector<4x8x1xf32>
    %163 = vector.broadcast %162 : vector<4x8x1xf32> to vector<4x8x8xf32>
    %164 = arith.mulf %159, %163 : vector<4x8x8xf32>
    "tpu.trace_start"() <{level = 10 : i32, message = "hqk,hke->hqe"}> : () -> ()
    %cst_111 = arith.constant dense<0.000000e+00> : vector<4x8x8xf32>
    %165 = tpu.matmul %164, %151, %cst_111 {dimension_numbers = #tpu.dot_dimension_numbers<[2], [1], [1], [2], [0, 0, 0, 1, 1, 2], [0], [0]>} : vector<4x8x8xf32>, vector<4x8x8xf32>, vector<4x8x8xf32> -> vector<4x8x8xf32>
    "tpu.trace_stop"() : () -> ()
    %c2_112 = arith.constant 2 : index
    %c0_113 = arith.constant 0 : index
    %c0_114 = arith.constant 0 : index
    %c0_115 = arith.constant 0 : index
    %166 = vector.load %arg9[%c2_112, %c0_113, %c0_114, %c0_115] : memref<8x4x8x32xf32, #tpu.memory_space<vmem>>, vector<1x4x8x32xf32>
    %167 = vector.shape_cast %166 : vector<1x4x8x32xf32> to vector<4x8x32xf32>
    "tpu.trace_start"() <{level = 10 : i32, message = "hqe,hed->hqd"}> : () -> ()
    %cst_116 = arith.constant dense<0.000000e+00> : vector<4x8x32xf32>
    %168 = tpu.matmul %165, %167, %cst_116 {dimension_numbers = #tpu.dot_dimension_numbers<[2], [1], [1], [2], [0, 0, 0, 1, 1, 2], [0], [0]>} : vector<4x8x8xf32>, vector<4x8x32xf32>, vector<4x8x32xf32> -> vector<4x8x32xf32>
    "tpu.trace_stop"() : () -> ()
    %cst_117 = arith.constant dense<0.000000e+00> : vector<8x32xf32>
    %169 = vector.multi_reduction <add>, %168, %cst_117 [0] : vector<4x8x32xf32> to vector<8x32xf32>
    %c2_118 = arith.constant 2 : index
    %c0_119 = arith.constant 0 : index
    %c0_120 = arith.constant 0 : index
    %170 = vector.load %arg10[%c2_118, %c0_119, %c0_120] : memref<8x1x32xf32, #tpu.memory_space<vmem>>, vector<1x1x32xf32>
    %171 = vector.shape_cast %170 : vector<1x1x32xf32> to vector<1x32xf32>
    %172 = vector.broadcast %171 : vector<1x32xf32> to vector<8x32xf32>
    %173 = arith.addf %169, %172 : vector<8x32xf32>
    %174 = arith.addf %5, %173 : vector<8x32xf32>
    %cst_121 = arith.constant dense<0.000000e+00> : vector<8xf32>
    %175 = vector.multi_reduction <add>, %174, %cst_121 [1] : vector<8x32xf32> to vector<8xf32>
    %176 = vector.shape_cast %175 : vector<8xf32> to vector<8x1xf32>
    %cst_122 = arith.constant 3.200000e+01 : f32
    %177 = vector.broadcast %cst_122 : f32 to vector<8x1xf32>
    %178 = arith.divf %176, %177 : vector<8x1xf32>
    %179 = vector.broadcast %178 : vector<8x1xf32> to vector<8x32xf32>
    %180 = arith.subf %174, %179 : vector<8x32xf32>
    %181 = arith.mulf %180, %180 : vector<8x32xf32>
    %cst_123 = arith.constant dense<0.000000e+00> : vector<8xf32>
    %182 = vector.multi_reduction <add>, %181, %cst_123 [1] : vector<8x32xf32> to vector<8xf32>
    %183 = vector.shape_cast %182 : vector<8xf32> to vector<8x1xf32>
    %cst_124 = arith.constant 3.200000e+01 : f32
    %184 = vector.broadcast %cst_124 : f32 to vector<8x1xf32>
    %185 = arith.divf %183, %184 : vector<8x1xf32>
    %186 = vector.broadcast %178 : vector<8x1xf32> to vector<8x32xf32>
    %187 = arith.subf %174, %186 : vector<8x32xf32>
    %cst_125 = arith.constant 9.99999974E-6 : f32
    %188 = vector.broadcast %cst_125 : f32 to vector<8x1xf32>
    %189 = arith.addf %185, %188 : vector<8x1xf32>
    %190 = math.rsqrt %189 : vector<8x1xf32>
    %191 = vector.broadcast %190 : vector<8x1xf32> to vector<8x32xf32>
    %192 = arith.mulf %187, %191 : vector<8x32xf32>
    %c2_126 = arith.constant 2 : index
    %c0_127 = arith.constant 0 : index
    %c0_128 = arith.constant 0 : index
    %193 = vector.load %arg11[%c2_126, %c0_127, %c0_128] : memref<8x1x32xf32, #tpu.memory_space<vmem>>, vector<1x1x32xf32>
    %194 = vector.shape_cast %193 : vector<1x1x32xf32> to vector<1x32xf32>
    %195 = vector.broadcast %194 : vector<1x32xf32> to vector<8x32xf32>
    %196 = arith.mulf %192, %195 : vector<8x32xf32>
    %c2_129 = arith.constant 2 : index
    %c0_130 = arith.constant 0 : index
    %c0_131 = arith.constant 0 : index
    %197 = vector.load %arg12[%c2_129, %c0_130, %c0_131] : memref<8x1x32xf32, #tpu.memory_space<vmem>>, vector<1x1x32xf32>
    %198 = vector.shape_cast %197 : vector<1x1x32xf32> to vector<1x32xf32>
    %199 = vector.broadcast %198 : vector<1x32xf32> to vector<8x32xf32>
    %200 = arith.addf %196, %199 : vector<8x32xf32>
    %c2_132 = arith.constant 2 : index
    %c0_133 = arith.constant 0 : index
    %c0_134 = arith.constant 0 : index
    %201 = vector.load %arg13[%c2_132, %c0_133, %c0_134] : memref<8x32x64xf32, #tpu.memory_space<vmem>>, vector<1x32x64xf32>
    %202 = vector.shape_cast %201 : vector<1x32x64xf32> to vector<32x64xf32>
    %cst_135 = arith.constant dense<0.000000e+00> : vector<8x64xf32>
    %203 = tpu.matmul %200, %202, %cst_135 {dimension_numbers = #tpu.dot_dimension_numbers<[1], [0], [0], [1], [0, 0, 1, 1], [], []>} : vector<8x32xf32>, vector<32x64xf32>, vector<8x64xf32> -> vector<8x64xf32>
    %c2_136 = arith.constant 2 : index
    %c0_137 = arith.constant 0 : index
    %c0_138 = arith.constant 0 : index
    %204 = vector.load %arg14[%c2_136, %c0_137, %c0_138] : memref<8x1x64xf32, #tpu.memory_space<vmem>>, vector<1x1x64xf32>
    %205 = vector.shape_cast %204 : vector<1x1x64xf32> to vector<1x64xf32>
    %206 = vector.broadcast %205 : vector<1x64xf32> to vector<8x64xf32>
    %207 = arith.addf %203, %206 : vector<8x64xf32>
    %cst_139 = arith.constant 0.000000e+00 : f32
    %208 = vector.broadcast %cst_139 : f32 to vector<8x64xf32>
    %209 = arith.maximumf %207, %208 : vector<8x64xf32>
    %c2_140 = arith.constant 2 : index
    %c0_141 = arith.constant 0 : index
    %c0_142 = arith.constant 0 : index
    %210 = vector.load %arg15[%c2_140, %c0_141, %c0_142] : memref<8x64x32xf32, #tpu.memory_space<vmem>>, vector<1x64x32xf32>
    %211 = vector.shape_cast %210 : vector<1x64x32xf32> to vector<64x32xf32>
    %cst_143 = arith.constant dense<0.000000e+00> : vector<8x32xf32>
    %212 = tpu.matmul %209, %211, %cst_143 {dimension_numbers = #tpu.dot_dimension_numbers<[1], [0], [0], [1], [0, 0, 1, 1], [], []>} : vector<8x64xf32>, vector<64x32xf32>, vector<8x32xf32> -> vector<8x32xf32>
    %c2_144 = arith.constant 2 : index
    %c0_145 = arith.constant 0 : index
    %c0_146 = arith.constant 0 : index
    %213 = vector.load %arg16[%c2_144, %c0_145, %c0_146] : memref<8x1x32xf32, #tpu.memory_space<vmem>>, vector<1x1x32xf32>
    %214 = vector.shape_cast %213 : vector<1x1x32xf32> to vector<1x32xf32>
    %215 = vector.broadcast %214 : vector<1x32xf32> to vector<8x32xf32>
    %216 = arith.addf %212, %215 : vector<8x32xf32>
    %217 = arith.addf %200, %216 : vector<8x32xf32>
    %cst_147 = arith.constant dense<0.000000e+00> : vector<8xf32>
    %218 = vector.multi_reduction <add>, %217, %cst_147 [1] : vector<8x32xf32> to vector<8xf32>
    %219 = vector.shape_cast %218 : vector<8xf32> to vector<8x1xf32>
    %cst_148 = arith.constant 3.200000e+01 : f32
    %220 = vector.broadcast %cst_148 : f32 to vector<8x1xf32>
    %221 = arith.divf %219, %220 : vector<8x1xf32>
    %222 = vector.broadcast %221 : vector<8x1xf32> to vector<8x32xf32>
    %223 = arith.subf %217, %222 : vector<8x32xf32>
    %224 = arith.mulf %223, %223 : vector<8x32xf32>
    %cst_149 = arith.constant dense<0.000000e+00> : vector<8xf32>
    %225 = vector.multi_reduction <add>, %224, %cst_149 [1] : vector<8x32xf32> to vector<8xf32>
    %226 = vector.shape_cast %225 : vector<8xf32> to vector<8x1xf32>
    %cst_150 = arith.constant 3.200000e+01 : f32
    %227 = vector.broadcast %cst_150 : f32 to vector<8x1xf32>
    %228 = arith.divf %226, %227 : vector<8x1xf32>
    %229 = vector.broadcast %221 : vector<8x1xf32> to vector<8x32xf32>
    %230 = arith.subf %217, %229 : vector<8x32xf32>
    %cst_151 = arith.constant 9.99999974E-6 : f32
    %231 = vector.broadcast %cst_151 : f32 to vector<8x1xf32>
    %232 = arith.addf %228, %231 : vector<8x1xf32>
    %233 = math.rsqrt %232 : vector<8x1xf32>
    %234 = vector.broadcast %233 : vector<8x1xf32> to vector<8x32xf32>
    %235 = arith.mulf %230, %234 : vector<8x32xf32>
    %c2_152 = arith.constant 2 : index
    %c0_153 = arith.constant 0 : index
    %c0_154 = arith.constant 0 : index
    %236 = vector.load %arg17[%c2_152, %c0_153, %c0_154] : memref<8x1x32xf32, #tpu.memory_space<vmem>>, vector<1x1x32xf32>
    %237 = vector.shape_cast %236 : vector<1x1x32xf32> to vector<1x32xf32>
    %238 = vector.broadcast %237 : vector<1x32xf32> to vector<8x32xf32>
    %239 = arith.mulf %235, %238 : vector<8x32xf32>
    %c2_155 = arith.constant 2 : index
    %c0_156 = arith.constant 0 : index
    %c0_157 = arith.constant 0 : index
    %240 = vector.load %arg18[%c2_155, %c0_156, %c0_157] : memref<8x1x32xf32, #tpu.memory_space<vmem>>, vector<1x1x32xf32>
    %241 = vector.shape_cast %240 : vector<1x1x32xf32> to vector<1x32xf32>
    %242 = vector.broadcast %241 : vector<1x32xf32> to vector<8x32xf32>
    %243 = arith.addf %239, %242 : vector<8x32xf32>
    %244 = vector.shape_cast %243 : vector<8x32xf32> to vector<1x8x32xf32>
    %245 = vector.broadcast %244 : vector<1x8x32xf32> to vector<4x8x32xf32>
    %246 = vector.shape_cast %124 : vector<8x32xf32> to vector<1x8x32xf32>
    %247 = vector.broadcast %246 : vector<1x8x32xf32> to vector<4x8x32xf32>
    %248 = vector.shape_cast %124 : vector<8x32xf32> to vector<1x8x32xf32>
    %249 = vector.broadcast %248 : vector<1x8x32xf32> to vector<4x8x32xf32>
    %c1 = arith.constant 1 : index
    %c0_158 = arith.constant 0 : index
    %c0_159 = arith.constant 0 : index
    %c0_160 = arith.constant 0 : index
    %250 = vector.load %arg3[%c1, %c0_158, %c0_159, %c0_160] : memref<8x4x32x8xf32, #tpu.memory_space<vmem>>, vector<1x4x32x8xf32>
    %251 = vector.shape_cast %250 : vector<1x4x32x8xf32> to vector<4x32x8xf32>
    "tpu.trace_start"() <{level = 10 : i32, message = "hsd,hde->hse"}> : () -> ()
    %cst_161 = arith.constant dense<0.000000e+00> : vector<4x8x8xf32>
    %252 = tpu.matmul %245, %251, %cst_161 {dimension_numbers = #tpu.dot_dimension_numbers<[2], [1], [1], [2], [0, 0, 0, 1, 1, 2], [0], [0]>} : vector<4x8x32xf32>, vector<4x32x8xf32>, vector<4x8x8xf32> -> vector<4x8x8xf32>
    "tpu.trace_stop"() : () -> ()
    %c1_162 = arith.constant 1 : index
    %c0_163 = arith.constant 0 : index
    %c0_164 = arith.constant 0 : index
    %c0_165 = arith.constant 0 : index
    %253 = vector.load %arg4[%c1_162, %c0_163, %c0_164, %c0_165] : memref<8x4x1x8xf32, #tpu.memory_space<vmem>>, vector<1x4x1x8xf32>
    %254 = vector.shape_cast %253 : vector<1x4x1x8xf32> to vector<4x1x8xf32>
    %255 = vector.broadcast %254 : vector<4x1x8xf32> to vector<4x8x8xf32>
    %256 = arith.addf %252, %255 : vector<4x8x8xf32>
    %c1_166 = arith.constant 1 : index
    %c0_167 = arith.constant 0 : index
    %c0_168 = arith.constant 0 : index
    %c0_169 = arith.constant 0 : index
    %257 = vector.load %arg5[%c1_166, %c0_167, %c0_168, %c0_169] : memref<8x4x32x8xf32, #tpu.memory_space<vmem>>, vector<1x4x32x8xf32>
    %258 = vector.shape_cast %257 : vector<1x4x32x8xf32> to vector<4x32x8xf32>
    "tpu.trace_start"() <{level = 10 : i32, message = "hsd,hde->hse"}> : () -> ()
    %cst_170 = arith.constant dense<0.000000e+00> : vector<4x8x8xf32>
    %259 = tpu.matmul %247, %258, %cst_170 {dimension_numbers = #tpu.dot_dimension_numbers<[2], [1], [1], [2], [0, 0, 0, 1, 1, 2], [0], [0]>} : vector<4x8x32xf32>, vector<4x32x8xf32>, vector<4x8x8xf32> -> vector<4x8x8xf32>
    "tpu.trace_stop"() : () -> ()
    %c1_171 = arith.constant 1 : index
    %c0_172 = arith.constant 0 : index
    %c0_173 = arith.constant 0 : index
    %c0_174 = arith.constant 0 : index
    %260 = vector.load %arg6[%c1_171, %c0_172, %c0_173, %c0_174] : memref<8x4x1x8xf32, #tpu.memory_space<vmem>>, vector<1x4x1x8xf32>
    %261 = vector.shape_cast %260 : vector<1x4x1x8xf32> to vector<4x1x8xf32>
    %262 = vector.broadcast %261 : vector<4x1x8xf32> to vector<4x8x8xf32>
    %263 = arith.addf %259, %262 : vector<4x8x8xf32>
    %c1_175 = arith.constant 1 : index
    %c0_176 = arith.constant 0 : index
    %c0_177 = arith.constant 0 : index
    %c0_178 = arith.constant 0 : index
    %264 = vector.load %arg7[%c1_175, %c0_176, %c0_177, %c0_178] : memref<8x4x32x8xf32, #tpu.memory_space<vmem>>, vector<1x4x32x8xf32>
    %265 = vector.shape_cast %264 : vector<1x4x32x8xf32> to vector<4x32x8xf32>
    "tpu.trace_start"() <{level = 10 : i32, message = "hsd,hde->hse"}> : () -> ()
    %cst_179 = arith.constant dense<0.000000e+00> : vector<4x8x8xf32>
    %266 = tpu.matmul %249, %265, %cst_179 {dimension_numbers = #tpu.dot_dimension_numbers<[2], [1], [1], [2], [0, 0, 0, 1, 1, 2], [0], [0]>} : vector<4x8x32xf32>, vector<4x32x8xf32>, vector<4x8x8xf32> -> vector<4x8x8xf32>
    "tpu.trace_stop"() : () -> ()
    %c1_180 = arith.constant 1 : index
    %c0_181 = arith.constant 0 : index
    %c0_182 = arith.constant 0 : index
    %c0_183 = arith.constant 0 : index
    %267 = vector.load %arg8[%c1_180, %c0_181, %c0_182, %c0_183] : memref<8x4x1x8xf32, #tpu.memory_space<vmem>>, vector<1x4x1x8xf32>
    %268 = vector.shape_cast %267 : vector<1x4x1x8xf32> to vector<4x1x8xf32>
    %269 = vector.broadcast %268 : vector<4x1x8xf32> to vector<4x8x8xf32>
    %270 = arith.addf %266, %269 : vector<4x8x8xf32>
    "tpu.trace_start"() <{level = 10 : i32, message = "hqe,hke->hqk"}> : () -> ()
    %cst_184 = arith.constant dense<0.000000e+00> : vector<4x8x8xf32>
    %271 = tpu.matmul %256, %263, %cst_184 {dimension_numbers = #tpu.dot_dimension_numbers<[2], [2], [1], [1], [0, 0, 0, 1, 1, 1], [0], [0]>} : vector<4x8x8xf32>, vector<4x8x8xf32>, vector<4x8x8xf32> -> vector<4x8x8xf32>
    "tpu.trace_stop"() : () -> ()
    %cst_185 = arith.constant 0.353553385 : f32
    %272 = vector.broadcast %cst_185 : f32 to vector<4x8x8xf32>
    %273 = arith.mulf %271, %272 : vector<4x8x8xf32>
    %cst_186 = arith.constant dense<0xFF800000> : vector<4x8xf32>
    %274 = vector.multi_reduction <maximumf>, %273, %cst_186 [2] : vector<4x8x8xf32> to vector<4x8xf32>
    %275 = vector.shape_cast %274 : vector<4x8xf32> to vector<4x8x1xf32>
    %276 = vector.broadcast %275 : vector<4x8x1xf32> to vector<4x8x8xf32>
    %277 = arith.subf %273, %276 : vector<4x8x8xf32>
    %278 = math.exp %277 : vector<4x8x8xf32>
    %cst_187 = arith.constant dense<0.000000e+00> : vector<4x8xf32>
    %279 = vector.multi_reduction <add>, %278, %cst_187 [2] : vector<4x8x8xf32> to vector<4x8xf32>
    %280 = vector.shape_cast %279 : vector<4x8xf32> to vector<4x8x1xf32>
    %281 = tpu.reciprocal %280 {approx = true} : vector<4x8x1xf32> -> vector<4x8x1xf32>
    %282 = vector.broadcast %281 : vector<4x8x1xf32> to vector<4x8x8xf32>
    %283 = arith.mulf %278, %282 : vector<4x8x8xf32>
    "tpu.trace_start"() <{level = 10 : i32, message = "hqk,hke->hqe"}> : () -> ()
    %cst_188 = arith.constant dense<0.000000e+00> : vector<4x8x8xf32>
    %284 = tpu.matmul %283, %270, %cst_188 {dimension_numbers = #tpu.dot_dimension_numbers<[2], [1], [1], [2], [0, 0, 0, 1, 1, 2], [0], [0]>} : vector<4x8x8xf32>, vector<4x8x8xf32>, vector<4x8x8xf32> -> vector<4x8x8xf32>
    "tpu.trace_stop"() : () -> ()
    %c1_189 = arith.constant 1 : index
    %c0_190 = arith.constant 0 : index
    %c0_191 = arith.constant 0 : index
    %c0_192 = arith.constant 0 : index
    %285 = vector.load %arg9[%c1_189, %c0_190, %c0_191, %c0_192] : memref<8x4x8x32xf32, #tpu.memory_space<vmem>>, vector<1x4x8x32xf32>
    %286 = vector.shape_cast %285 : vector<1x4x8x32xf32> to vector<4x8x32xf32>
    "tpu.trace_start"() <{level = 10 : i32, message = "hqe,hed->hqd"}> : () -> ()
    %cst_193 = arith.constant dense<0.000000e+00> : vector<4x8x32xf32>
    %287 = tpu.matmul %284, %286, %cst_193 {dimension_numbers = #tpu.dot_dimension_numbers<[2], [1], [1], [2], [0, 0, 0, 1, 1, 2], [0], [0]>} : vector<4x8x8xf32>, vector<4x8x32xf32>, vector<4x8x32xf32> -> vector<4x8x32xf32>
    "tpu.trace_stop"() : () -> ()
    %cst_194 = arith.constant dense<0.000000e+00> : vector<8x32xf32>
    %288 = vector.multi_reduction <add>, %287, %cst_194 [0] : vector<4x8x32xf32> to vector<8x32xf32>
    %c1_195 = arith.constant 1 : index
    %c0_196 = arith.constant 0 : index
    %c0_197 = arith.constant 0 : index
    %289 = vector.load %arg10[%c1_195, %c0_196, %c0_197] : memref<8x1x32xf32, #tpu.memory_space<vmem>>, vector<1x1x32xf32>
    %290 = vector.shape_cast %289 : vector<1x1x32xf32> to vector<1x32xf32>
    %291 = vector.broadcast %290 : vector<1x32xf32> to vector<8x32xf32>
    %292 = arith.addf %288, %291 : vector<8x32xf32>
    %293 = arith.addf %124, %292 : vector<8x32xf32>
    %cst_198 = arith.constant dense<0.000000e+00> : vector<8xf32>
    %294 = vector.multi_reduction <add>, %293, %cst_198 [1] : vector<8x32xf32> to vector<8xf32>
    %295 = vector.shape_cast %294 : vector<8xf32> to vector<8x1xf32>
    %cst_199 = arith.constant 3.200000e+01 : f32
    %296 = vector.broadcast %cst_199 : f32 to vector<8x1xf32>
    %297 = arith.divf %295, %296 : vector<8x1xf32>
    %298 = vector.broadcast %297 : vector<8x1xf32> to vector<8x32xf32>
    %299 = arith.subf %293, %298 : vector<8x32xf32>
    %300 = arith.mulf %299, %299 : vector<8x32xf32>
    %cst_200 = arith.constant dense<0.000000e+00> : vector<8xf32>
    %301 = vector.multi_reduction <add>, %300, %cst_200 [1] : vector<8x32xf32> to vector<8xf32>
    %302 = vector.shape_cast %301 : vector<8xf32> to vector<8x1xf32>
    %cst_201 = arith.constant 3.200000e+01 : f32
    %303 = vector.broadcast %cst_201 : f32 to vector<8x1xf32>
    %304 = arith.divf %302, %303 : vector<8x1xf32>
    %305 = vector.broadcast %297 : vector<8x1xf32> to vector<8x32xf32>
    %306 = arith.subf %293, %305 : vector<8x32xf32>
    %cst_202 = arith.constant 9.99999974E-6 : f32
    %307 = vector.broadcast %cst_202 : f32 to vector<8x1xf32>
    %308 = arith.addf %304, %307 : vector<8x1xf32>
    %309 = math.rsqrt %308 : vector<8x1xf32>
    %310 = vector.broadcast %309 : vector<8x1xf32> to vector<8x32xf32>
    %311 = arith.mulf %306, %310 : vector<8x32xf32>
    %c1_203 = arith.constant 1 : index
    %c0_204 = arith.constant 0 : index
    %c0_205 = arith.constant 0 : index
    %312 = vector.load %arg11[%c1_203, %c0_204, %c0_205] : memref<8x1x32xf32, #tpu.memory_space<vmem>>, vector<1x1x32xf32>
    %313 = vector.shape_cast %312 : vector<1x1x32xf32> to vector<1x32xf32>
    %314 = vector.broadcast %313 : vector<1x32xf32> to vector<8x32xf32>
    %315 = arith.mulf %311, %314 : vector<8x32xf32>
    %c1_206 = arith.constant 1 : index
    %c0_207 = arith.constant 0 : index
    %c0_208 = arith.constant 0 : index
    %316 = vector.load %arg12[%c1_206, %c0_207, %c0_208] : memref<8x1x32xf32, #tpu.memory_space<vmem>>, vector<1x1x32xf32>
    %317 = vector.shape_cast %316 : vector<1x1x32xf32> to vector<1x32xf32>
    %318 = vector.broadcast %317 : vector<1x32xf32> to vector<8x32xf32>
    %319 = arith.addf %315, %318 : vector<8x32xf32>
    %c1_209 = arith.constant 1 : index
    %c0_210 = arith.constant 0 : index
    %c0_211 = arith.constant 0 : index
    %320 = vector.load %arg13[%c1_209, %c0_210, %c0_211] : memref<8x32x64xf32, #tpu.memory_space<vmem>>, vector<1x32x64xf32>
    %321 = vector.shape_cast %320 : vector<1x32x64xf32> to vector<32x64xf32>
    %cst_212 = arith.constant dense<0.000000e+00> : vector<8x64xf32>
    %322 = tpu.matmul %319, %321, %cst_212 {dimension_numbers = #tpu.dot_dimension_numbers<[1], [0], [0], [1], [0, 0, 1, 1], [], []>} : vector<8x32xf32>, vector<32x64xf32>, vector<8x64xf32> -> vector<8x64xf32>
    %c1_213 = arith.constant 1 : index
    %c0_214 = arith.constant 0 : index
    %c0_215 = arith.constant 0 : index
    %323 = vector.load %arg14[%c1_213, %c0_214, %c0_215] : memref<8x1x64xf32, #tpu.memory_space<vmem>>, vector<1x1x64xf32>
    %324 = vector.shape_cast %323 : vector<1x1x64xf32> to vector<1x64xf32>
    %325 = vector.broadcast %324 : vector<1x64xf32> to vector<8x64xf32>
    %326 = arith.addf %322, %325 : vector<8x64xf32>
    %cst_216 = arith.constant 0.000000e+00 : f32
    %327 = vector.broadcast %cst_216 : f32 to vector<8x64xf32>
    %328 = arith.maximumf %326, %327 : vector<8x64xf32>
    %c1_217 = arith.constant 1 : index
    %c0_218 = arith.constant 0 : index
    %c0_219 = arith.constant 0 : index
    %329 = vector.load %arg15[%c1_217, %c0_218, %c0_219] : memref<8x64x32xf32, #tpu.memory_space<vmem>>, vector<1x64x32xf32>
    %330 = vector.shape_cast %329 : vector<1x64x32xf32> to vector<64x32xf32>
    %cst_220 = arith.constant dense<0.000000e+00> : vector<8x32xf32>
    %331 = tpu.matmul %328, %330, %cst_220 {dimension_numbers = #tpu.dot_dimension_numbers<[1], [0], [0], [1], [0, 0, 1, 1], [], []>} : vector<8x64xf32>, vector<64x32xf32>, vector<8x32xf32> -> vector<8x32xf32>
    %c1_221 = arith.constant 1 : index
    %c0_222 = arith.constant 0 : index
    %c0_223 = arith.constant 0 : index
    %332 = vector.load %arg16[%c1_221, %c0_222, %c0_223] : memref<8x1x32xf32, #tpu.memory_space<vmem>>, vector<1x1x32xf32>
    %333 = vector.shape_cast %332 : vector<1x1x32xf32> to vector<1x32xf32>
    %334 = vector.broadcast %333 : vector<1x32xf32> to vector<8x32xf32>
    %335 = arith.addf %331, %334 : vector<8x32xf32>
    %336 = arith.addf %319, %335 : vector<8x32xf32>
    %cst_224 = arith.constant dense<0.000000e+00> : vector<8xf32>
    %337 = vector.multi_reduction <add>, %336, %cst_224 [1] : vector<8x32xf32> to vector<8xf32>
    %338 = vector.shape_cast %337 : vector<8xf32> to vector<8x1xf32>
    %cst_225 = arith.constant 3.200000e+01 : f32
    %339 = vector.broadcast %cst_225 : f32 to vector<8x1xf32>
    %340 = arith.divf %338, %339 : vector<8x1xf32>
    %341 = vector.broadcast %340 : vector<8x1xf32> to vector<8x32xf32>
    %342 = arith.subf %336, %341 : vector<8x32xf32>
    %343 = arith.mulf %342, %342 : vector<8x32xf32>
    %cst_226 = arith.constant dense<0.000000e+00> : vector<8xf32>
    %344 = vector.multi_reduction <add>, %343, %cst_226 [1] : vector<8x32xf32> to vector<8xf32>
    %345 = vector.shape_cast %344 : vector<8xf32> to vector<8x1xf32>
    %cst_227 = arith.constant 3.200000e+01 : f32
    %346 = vector.broadcast %cst_227 : f32 to vector<8x1xf32>
    %347 = arith.divf %345, %346 : vector<8x1xf32>
    %348 = vector.broadcast %340 : vector<8x1xf32> to vector<8x32xf32>
    %349 = arith.subf %336, %348 : vector<8x32xf32>
    %cst_228 = arith.constant 9.99999974E-6 : f32
    %350 = vector.broadcast %cst_228 : f32 to vector<8x1xf32>
    %351 = arith.addf %347, %350 : vector<8x1xf32>
    %352 = math.rsqrt %351 : vector<8x1xf32>
    %353 = vector.broadcast %352 : vector<8x1xf32> to vector<8x32xf32>
    %354 = arith.mulf %349, %353 : vector<8x32xf32>
    %c1_229 = arith.constant 1 : index
    %c0_230 = arith.constant 0 : index
    %c0_231 = arith.constant 0 : index
    %355 = vector.load %arg17[%c1_229, %c0_230, %c0_231] : memref<8x1x32xf32, #tpu.memory_space<vmem>>, vector<1x1x32xf32>
    %356 = vector.shape_cast %355 : vector<1x1x32xf32> to vector<1x32xf32>
    %357 = vector.broadcast %356 : vector<1x32xf32> to vector<8x32xf32>
    %358 = arith.mulf %354, %357 : vector<8x32xf32>
    %c1_232 = arith.constant 1 : index
    %c0_233 = arith.constant 0 : index
    %c0_234 = arith.constant 0 : index
    %359 = vector.load %arg18[%c1_232, %c0_233, %c0_234] : memref<8x1x32xf32, #tpu.memory_space<vmem>>, vector<1x1x32xf32>
    %360 = vector.shape_cast %359 : vector<1x1x32xf32> to vector<1x32xf32>
    %361 = vector.broadcast %360 : vector<1x32xf32> to vector<8x32xf32>
    %362 = arith.addf %358, %361 : vector<8x32xf32>
    %363 = vector.shape_cast %362 : vector<8x32xf32> to vector<1x8x32xf32>
    %364 = vector.broadcast %363 : vector<1x8x32xf32> to vector<4x8x32xf32>
    %365 = vector.shape_cast %243 : vector<8x32xf32> to vector<1x8x32xf32>
    %366 = vector.broadcast %365 : vector<1x8x32xf32> to vector<4x8x32xf32>
    %367 = vector.shape_cast %243 : vector<8x32xf32> to vector<1x8x32xf32>
    %368 = vector.broadcast %367 : vector<1x8x32xf32> to vector<4x8x32xf32>
    %c3 = arith.constant 3 : index
    %c0_235 = arith.constant 0 : index
    %c0_236 = arith.constant 0 : index
    %c0_237 = arith.constant 0 : index
    %369 = vector.load %arg3[%c3, %c0_235, %c0_236, %c0_237] : memref<8x4x32x8xf32, #tpu.memory_space<vmem>>, vector<1x4x32x8xf32>
    %370 = vector.shape_cast %369 : vector<1x4x32x8xf32> to vector<4x32x8xf32>
    "tpu.trace_start"() <{level = 10 : i32, message = "hsd,hde->hse"}> : () -> ()
    %cst_238 = arith.constant dense<0.000000e+00> : vector<4x8x8xf32>
    %371 = tpu.matmul %364, %370, %cst_238 {dimension_numbers = #tpu.dot_dimension_numbers<[2], [1], [1], [2], [0, 0, 0, 1, 1, 2], [0], [0]>} : vector<4x8x32xf32>, vector<4x32x8xf32>, vector<4x8x8xf32> -> vector<4x8x8xf32>
    "tpu.trace_stop"() : () -> ()
    %c3_239 = arith.constant 3 : index
    %c0_240 = arith.constant 0 : index
    %c0_241 = arith.constant 0 : index
    %c0_242 = arith.constant 0 : index
    %372 = vector.load %arg4[%c3_239, %c0_240, %c0_241, %c0_242] : memref<8x4x1x8xf32, #tpu.memory_space<vmem>>, vector<1x4x1x8xf32>
    %373 = vector.shape_cast %372 : vector<1x4x1x8xf32> to vector<4x1x8xf32>
    %374 = vector.broadcast %373 : vector<4x1x8xf32> to vector<4x8x8xf32>
    %375 = arith.addf %371, %374 : vector<4x8x8xf32>
    %c3_243 = arith.constant 3 : index
    %c0_244 = arith.constant 0 : index
    %c0_245 = arith.constant 0 : index
    %c0_246 = arith.constant 0 : index
    %376 = vector.load %arg5[%c3_243, %c0_244, %c0_245, %c0_246] : memref<8x4x32x8xf32, #tpu.memory_space<vmem>>, vector<1x4x32x8xf32>
    %377 = vector.shape_cast %376 : vector<1x4x32x8xf32> to vector<4x32x8xf32>
    "tpu.trace_start"() <{level = 10 : i32, message = "hsd,hde->hse"}> : () -> ()
    %cst_247 = arith.constant dense<0.000000e+00> : vector<4x8x8xf32>
    %378 = tpu.matmul %366, %377, %cst_247 {dimension_numbers = #tpu.dot_dimension_numbers<[2], [1], [1], [2], [0, 0, 0, 1, 1, 2], [0], [0]>} : vector<4x8x32xf32>, vector<4x32x8xf32>, vector<4x8x8xf32> -> vector<4x8x8xf32>
    "tpu.trace_stop"() : () -> ()
    %c3_248 = arith.constant 3 : index
    %c0_249 = arith.constant 0 : index
    %c0_250 = arith.constant 0 : index
    %c0_251 = arith.constant 0 : index
    %379 = vector.load %arg6[%c3_248, %c0_249, %c0_250, %c0_251] : memref<8x4x1x8xf32, #tpu.memory_space<vmem>>, vector<1x4x1x8xf32>
    %380 = vector.shape_cast %379 : vector<1x4x1x8xf32> to vector<4x1x8xf32>
    %381 = vector.broadcast %380 : vector<4x1x8xf32> to vector<4x8x8xf32>
    %382 = arith.addf %378, %381 : vector<4x8x8xf32>
    %c3_252 = arith.constant 3 : index
    %c0_253 = arith.constant 0 : index
    %c0_254 = arith.constant 0 : index
    %c0_255 = arith.constant 0 : index
    %383 = vector.load %arg7[%c3_252, %c0_253, %c0_254, %c0_255] : memref<8x4x32x8xf32, #tpu.memory_space<vmem>>, vector<1x4x32x8xf32>
    %384 = vector.shape_cast %383 : vector<1x4x32x8xf32> to vector<4x32x8xf32>
    "tpu.trace_start"() <{level = 10 : i32, message = "hsd,hde->hse"}> : () -> ()
    %cst_256 = arith.constant dense<0.000000e+00> : vector<4x8x8xf32>
    %385 = tpu.matmul %368, %384, %cst_256 {dimension_numbers = #tpu.dot_dimension_numbers<[2], [1], [1], [2], [0, 0, 0, 1, 1, 2], [0], [0]>} : vector<4x8x32xf32>, vector<4x32x8xf32>, vector<4x8x8xf32> -> vector<4x8x8xf32>
    "tpu.trace_stop"() : () -> ()
    %c3_257 = arith.constant 3 : index
    %c0_258 = arith.constant 0 : index
    %c0_259 = arith.constant 0 : index
    %c0_260 = arith.constant 0 : index
    %386 = vector.load %arg8[%c3_257, %c0_258, %c0_259, %c0_260] : memref<8x4x1x8xf32, #tpu.memory_space<vmem>>, vector<1x4x1x8xf32>
    %387 = vector.shape_cast %386 : vector<1x4x1x8xf32> to vector<4x1x8xf32>
    %388 = vector.broadcast %387 : vector<4x1x8xf32> to vector<4x8x8xf32>
    %389 = arith.addf %385, %388 : vector<4x8x8xf32>
    "tpu.trace_start"() <{level = 10 : i32, message = "hqe,hke->hqk"}> : () -> ()
    %cst_261 = arith.constant dense<0.000000e+00> : vector<4x8x8xf32>
    %390 = tpu.matmul %375, %382, %cst_261 {dimension_numbers = #tpu.dot_dimension_numbers<[2], [2], [1], [1], [0, 0, 0, 1, 1, 1], [0], [0]>} : vector<4x8x8xf32>, vector<4x8x8xf32>, vector<4x8x8xf32> -> vector<4x8x8xf32>
    "tpu.trace_stop"() : () -> ()
    %cst_262 = arith.constant 0.353553385 : f32
    %391 = vector.broadcast %cst_262 : f32 to vector<4x8x8xf32>
    %392 = arith.mulf %390, %391 : vector<4x8x8xf32>
    %cst_263 = arith.constant dense<0xFF800000> : vector<4x8xf32>
    %393 = vector.multi_reduction <maximumf>, %392, %cst_263 [2] : vector<4x8x8xf32> to vector<4x8xf32>
    %394 = vector.shape_cast %393 : vector<4x8xf32> to vector<4x8x1xf32>
    %395 = vector.broadcast %394 : vector<4x8x1xf32> to vector<4x8x8xf32>
    %396 = arith.subf %392, %395 : vector<4x8x8xf32>
    %397 = math.exp %396 : vector<4x8x8xf32>
    %cst_264 = arith.constant dense<0.000000e+00> : vector<4x8xf32>
    %398 = vector.multi_reduction <add>, %397, %cst_264 [2] : vector<4x8x8xf32> to vector<4x8xf32>
    %399 = vector.shape_cast %398 : vector<4x8xf32> to vector<4x8x1xf32>
    %400 = tpu.reciprocal %399 {approx = true} : vector<4x8x1xf32> -> vector<4x8x1xf32>
    %401 = vector.broadcast %400 : vector<4x8x1xf32> to vector<4x8x8xf32>
    %402 = arith.mulf %397, %401 : vector<4x8x8xf32>
    "tpu.trace_start"() <{level = 10 : i32, message = "hqk,hke->hqe"}> : () -> ()
    %cst_265 = arith.constant dense<0.000000e+00> : vector<4x8x8xf32>
    %403 = tpu.matmul %402, %389, %cst_265 {dimension_numbers = #tpu.dot_dimension_numbers<[2], [1], [1], [2], [0, 0, 0, 1, 1, 2], [0], [0]>} : vector<4x8x8xf32>, vector<4x8x8xf32>, vector<4x8x8xf32> -> vector<4x8x8xf32>
    "tpu.trace_stop"() : () -> ()
    %c3_266 = arith.constant 3 : index
    %c0_267 = arith.constant 0 : index
    %c0_268 = arith.constant 0 : index
    %c0_269 = arith.constant 0 : index
    %404 = vector.load %arg9[%c3_266, %c0_267, %c0_268, %c0_269] : memref<8x4x8x32xf32, #tpu.memory_space<vmem>>, vector<1x4x8x32xf32>
    %405 = vector.shape_cast %404 : vector<1x4x8x32xf32> to vector<4x8x32xf32>
    "tpu.trace_start"() <{level = 10 : i32, message = "hqe,hed->hqd"}> : () -> ()
    %cst_270 = arith.constant dense<0.000000e+00> : vector<4x8x32xf32>
    %406 = tpu.matmul %403, %405, %cst_270 {dimension_numbers = #tpu.dot_dimension_numbers<[2], [1], [1], [2], [0, 0, 0, 1, 1, 2], [0], [0]>} : vector<4x8x8xf32>, vector<4x8x32xf32>, vector<4x8x32xf32> -> vector<4x8x32xf32>
    "tpu.trace_stop"() : () -> ()
    %cst_271 = arith.constant dense<0.000000e+00> : vector<8x32xf32>
    %407 = vector.multi_reduction <add>, %406, %cst_271 [0] : vector<4x8x32xf32> to vector<8x32xf32>
    %c3_272 = arith.constant 3 : index
    %c0_273 = arith.constant 0 : index
    %c0_274 = arith.constant 0 : index
    %408 = vector.load %arg10[%c3_272, %c0_273, %c0_274] : memref<8x1x32xf32, #tpu.memory_space<vmem>>, vector<1x1x32xf32>
    %409 = vector.shape_cast %408 : vector<1x1x32xf32> to vector<1x32xf32>
    %410 = vector.broadcast %409 : vector<1x32xf32> to vector<8x32xf32>
    %411 = arith.addf %407, %410 : vector<8x32xf32>
    %412 = arith.addf %243, %411 : vector<8x32xf32>
    %cst_275 = arith.constant dense<0.000000e+00> : vector<8xf32>
    %413 = vector.multi_reduction <add>, %412, %cst_275 [1] : vector<8x32xf32> to vector<8xf32>
    %414 = vector.shape_cast %413 : vector<8xf32> to vector<8x1xf32>
    %cst_276 = arith.constant 3.200000e+01 : f32
    %415 = vector.broadcast %cst_276 : f32 to vector<8x1xf32>
    %416 = arith.divf %414, %415 : vector<8x1xf32>
    %417 = vector.broadcast %416 : vector<8x1xf32> to vector<8x32xf32>
    %418 = arith.subf %412, %417 : vector<8x32xf32>
    %419 = arith.mulf %418, %418 : vector<8x32xf32>
    %cst_277 = arith.constant dense<0.000000e+00> : vector<8xf32>
    %420 = vector.multi_reduction <add>, %419, %cst_277 [1] : vector<8x32xf32> to vector<8xf32>
    %421 = vector.shape_cast %420 : vector<8xf32> to vector<8x1xf32>
    %cst_278 = arith.constant 3.200000e+01 : f32
    %422 = vector.broadcast %cst_278 : f32 to vector<8x1xf32>
    %423 = arith.divf %421, %422 : vector<8x1xf32>
    %424 = vector.broadcast %416 : vector<8x1xf32> to vector<8x32xf32>
    %425 = arith.subf %412, %424 : vector<8x32xf32>
    %cst_279 = arith.constant 9.99999974E-6 : f32
    %426 = vector.broadcast %cst_279 : f32 to vector<8x1xf32>
    %427 = arith.addf %423, %426 : vector<8x1xf32>
    %428 = math.rsqrt %427 : vector<8x1xf32>
    %429 = vector.broadcast %428 : vector<8x1xf32> to vector<8x32xf32>
    %430 = arith.mulf %425, %429 : vector<8x32xf32>
    %c3_280 = arith.constant 3 : index
    %c0_281 = arith.constant 0 : index
    %c0_282 = arith.constant 0 : index
    %431 = vector.load %arg11[%c3_280, %c0_281, %c0_282] : memref<8x1x32xf32, #tpu.memory_space<vmem>>, vector<1x1x32xf32>
    %432 = vector.shape_cast %431 : vector<1x1x32xf32> to vector<1x32xf32>
    %433 = vector.broadcast %432 : vector<1x32xf32> to vector<8x32xf32>
    %434 = arith.mulf %430, %433 : vector<8x32xf32>
    %c3_283 = arith.constant 3 : index
    %c0_284 = arith.constant 0 : index
    %c0_285 = arith.constant 0 : index
    %435 = vector.load %arg12[%c3_283, %c0_284, %c0_285] : memref<8x1x32xf32, #tpu.memory_space<vmem>>, vector<1x1x32xf32>
    %436 = vector.shape_cast %435 : vector<1x1x32xf32> to vector<1x32xf32>
    %437 = vector.broadcast %436 : vector<1x32xf32> to vector<8x32xf32>
    %438 = arith.addf %434, %437 : vector<8x32xf32>
    %c3_286 = arith.constant 3 : index
    %c0_287 = arith.constant 0 : index
    %c0_288 = arith.constant 0 : index
    %439 = vector.load %arg13[%c3_286, %c0_287, %c0_288] : memref<8x32x64xf32, #tpu.memory_space<vmem>>, vector<1x32x64xf32>
    %440 = vector.shape_cast %439 : vector<1x32x64xf32> to vector<32x64xf32>
    %cst_289 = arith.constant dense<0.000000e+00> : vector<8x64xf32>
    %441 = tpu.matmul %438, %440, %cst_289 {dimension_numbers = #tpu.dot_dimension_numbers<[1], [0], [0], [1], [0, 0, 1, 1], [], []>} : vector<8x32xf32>, vector<32x64xf32>, vector<8x64xf32> -> vector<8x64xf32>
    %c3_290 = arith.constant 3 : index
    %c0_291 = arith.constant 0 : index
    %c0_292 = arith.constant 0 : index
    %442 = vector.load %arg14[%c3_290, %c0_291, %c0_292] : memref<8x1x64xf32, #tpu.memory_space<vmem>>, vector<1x1x64xf32>
    %443 = vector.shape_cast %442 : vector<1x1x64xf32> to vector<1x64xf32>
    %444 = vector.broadcast %443 : vector<1x64xf32> to vector<8x64xf32>
    %445 = arith.addf %441, %444 : vector<8x64xf32>
    %cst_293 = arith.constant 0.000000e+00 : f32
    %446 = vector.broadcast %cst_293 : f32 to vector<8x64xf32>
    %447 = arith.maximumf %445, %446 : vector<8x64xf32>
    %c3_294 = arith.constant 3 : index
    %c0_295 = arith.constant 0 : index
    %c0_296 = arith.constant 0 : index
    %448 = vector.load %arg15[%c3_294, %c0_295, %c0_296] : memref<8x64x32xf32, #tpu.memory_space<vmem>>, vector<1x64x32xf32>
    %449 = vector.shape_cast %448 : vector<1x64x32xf32> to vector<64x32xf32>
    %cst_297 = arith.constant dense<0.000000e+00> : vector<8x32xf32>
    %450 = tpu.matmul %447, %449, %cst_297 {dimension_numbers = #tpu.dot_dimension_numbers<[1], [0], [0], [1], [0, 0, 1, 1], [], []>} : vector<8x64xf32>, vector<64x32xf32>, vector<8x32xf32> -> vector<8x32xf32>
    %c3_298 = arith.constant 3 : index
    %c0_299 = arith.constant 0 : index
    %c0_300 = arith.constant 0 : index
    %451 = vector.load %arg16[%c3_298, %c0_299, %c0_300] : memref<8x1x32xf32, #tpu.memory_space<vmem>>, vector<1x1x32xf32>
    %452 = vector.shape_cast %451 : vector<1x1x32xf32> to vector<1x32xf32>
    %453 = vector.broadcast %452 : vector<1x32xf32> to vector<8x32xf32>
    %454 = arith.addf %450, %453 : vector<8x32xf32>
    %455 = arith.addf %438, %454 : vector<8x32xf32>
    %cst_301 = arith.constant dense<0.000000e+00> : vector<8xf32>
    %456 = vector.multi_reduction <add>, %455, %cst_301 [1] : vector<8x32xf32> to vector<8xf32>
    %457 = vector.shape_cast %456 : vector<8xf32> to vector<8x1xf32>
    %cst_302 = arith.constant 3.200000e+01 : f32
    %458 = vector.broadcast %cst_302 : f32 to vector<8x1xf32>
    %459 = arith.divf %457, %458 : vector<8x1xf32>
    %460 = vector.broadcast %459 : vector<8x1xf32> to vector<8x32xf32>
    %461 = arith.subf %455, %460 : vector<8x32xf32>
    %462 = arith.mulf %461, %461 : vector<8x32xf32>
    %cst_303 = arith.constant dense<0.000000e+00> : vector<8xf32>
    %463 = vector.multi_reduction <add>, %462, %cst_303 [1] : vector<8x32xf32> to vector<8xf32>
    %464 = vector.shape_cast %463 : vector<8xf32> to vector<8x1xf32>
    %cst_304 = arith.constant 3.200000e+01 : f32
    %465 = vector.broadcast %cst_304 : f32 to vector<8x1xf32>
    %466 = arith.divf %464, %465 : vector<8x1xf32>
    %467 = vector.broadcast %459 : vector<8x1xf32> to vector<8x32xf32>
    %468 = arith.subf %455, %467 : vector<8x32xf32>
    %cst_305 = arith.constant 9.99999974E-6 : f32
    %469 = vector.broadcast %cst_305 : f32 to vector<8x1xf32>
    %470 = arith.addf %466, %469 : vector<8x1xf32>
    %471 = math.rsqrt %470 : vector<8x1xf32>
    %472 = vector.broadcast %471 : vector<8x1xf32> to vector<8x32xf32>
    %473 = arith.mulf %468, %472 : vector<8x32xf32>
    %c3_306 = arith.constant 3 : index
    %c0_307 = arith.constant 0 : index
    %c0_308 = arith.constant 0 : index
    %474 = vector.load %arg17[%c3_306, %c0_307, %c0_308] : memref<8x1x32xf32, #tpu.memory_space<vmem>>, vector<1x1x32xf32>
    %475 = vector.shape_cast %474 : vector<1x1x32xf32> to vector<1x32xf32>
    %476 = vector.broadcast %475 : vector<1x32xf32> to vector<8x32xf32>
    %477 = arith.mulf %473, %476 : vector<8x32xf32>
    %c3_309 = arith.constant 3 : index
    %c0_310 = arith.constant 0 : index
    %c0_311 = arith.constant 0 : index
    %478 = vector.load %arg18[%c3_309, %c0_310, %c0_311] : memref<8x1x32xf32, #tpu.memory_space<vmem>>, vector<1x1x32xf32>
    %479 = vector.shape_cast %478 : vector<1x1x32xf32> to vector<1x32xf32>
    %480 = vector.broadcast %479 : vector<1x32xf32> to vector<8x32xf32>
    %481 = arith.addf %477, %480 : vector<8x32xf32>
    %482 = vector.shape_cast %362 : vector<8x32xf32> to vector<1x8x32xf32>
    %483 = vector.broadcast %482 : vector<1x8x32xf32> to vector<4x8x32xf32>
    %484 = vector.shape_cast %362 : vector<8x32xf32> to vector<1x8x32xf32>
    %485 = vector.broadcast %484 : vector<1x8x32xf32> to vector<4x8x32xf32>
    %486 = vector.shape_cast %362 : vector<8x32xf32> to vector<1x8x32xf32>
    %487 = vector.broadcast %486 : vector<1x8x32xf32> to vector<4x8x32xf32>
    %c4 = arith.constant 4 : index
    %c0_312 = arith.constant 0 : index
    %c0_313 = arith.constant 0 : index
    %c0_314 = arith.constant 0 : index
    %488 = vector.load %arg3[%c4, %c0_312, %c0_313, %c0_314] : memref<8x4x32x8xf32, #tpu.memory_space<vmem>>, vector<1x4x32x8xf32>
    %489 = vector.shape_cast %488 : vector<1x4x32x8xf32> to vector<4x32x8xf32>
    "tpu.trace_start"() <{level = 10 : i32, message = "hsd,hde->hse"}> : () -> ()
    %cst_315 = arith.constant dense<0.000000e+00> : vector<4x8x8xf32>
    %490 = tpu.matmul %483, %489, %cst_315 {dimension_numbers = #tpu.dot_dimension_numbers<[2], [1], [1], [2], [0, 0, 0, 1, 1, 2], [0], [0]>} : vector<4x8x32xf32>, vector<4x32x8xf32>, vector<4x8x8xf32> -> vector<4x8x8xf32>
    "tpu.trace_stop"() : () -> ()
    %c4_316 = arith.constant 4 : index
    %c0_317 = arith.constant 0 : index
    %c0_318 = arith.constant 0 : index
    %c0_319 = arith.constant 0 : index
    %491 = vector.load %arg4[%c4_316, %c0_317, %c0_318, %c0_319] : memref<8x4x1x8xf32, #tpu.memory_space<vmem>>, vector<1x4x1x8xf32>
    %492 = vector.shape_cast %491 : vector<1x4x1x8xf32> to vector<4x1x8xf32>
    %493 = vector.broadcast %492 : vector<4x1x8xf32> to vector<4x8x8xf32>
    %494 = arith.addf %490, %493 : vector<4x8x8xf32>
    %c4_320 = arith.constant 4 : index
    %c0_321 = arith.constant 0 : index
    %c0_322 = arith.constant 0 : index
    %c0_323 = arith.constant 0 : index
    %495 = vector.load %arg5[%c4_320, %c0_321, %c0_322, %c0_323] : memref<8x4x32x8xf32, #tpu.memory_space<vmem>>, vector<1x4x32x8xf32>
    %496 = vector.shape_cast %495 : vector<1x4x32x8xf32> to vector<4x32x8xf32>
    "tpu.trace_start"() <{level = 10 : i32, message = "hsd,hde->hse"}> : () -> ()
    %cst_324 = arith.constant dense<0.000000e+00> : vector<4x8x8xf32>
    %497 = tpu.matmul %485, %496, %cst_324 {dimension_numbers = #tpu.dot_dimension_numbers<[2], [1], [1], [2], [0, 0, 0, 1, 1, 2], [0], [0]>} : vector<4x8x32xf32>, vector<4x32x8xf32>, vector<4x8x8xf32> -> vector<4x8x8xf32>
    "tpu.trace_stop"() : () -> ()
    %c4_325 = arith.constant 4 : index
    %c0_326 = arith.constant 0 : index
    %c0_327 = arith.constant 0 : index
    %c0_328 = arith.constant 0 : index
    %498 = vector.load %arg6[%c4_325, %c0_326, %c0_327, %c0_328] : memref<8x4x1x8xf32, #tpu.memory_space<vmem>>, vector<1x4x1x8xf32>
    %499 = vector.shape_cast %498 : vector<1x4x1x8xf32> to vector<4x1x8xf32>
    %500 = vector.broadcast %499 : vector<4x1x8xf32> to vector<4x8x8xf32>
    %501 = arith.addf %497, %500 : vector<4x8x8xf32>
    %c4_329 = arith.constant 4 : index
    %c0_330 = arith.constant 0 : index
    %c0_331 = arith.constant 0 : index
    %c0_332 = arith.constant 0 : index
    %502 = vector.load %arg7[%c4_329, %c0_330, %c0_331, %c0_332] : memref<8x4x32x8xf32, #tpu.memory_space<vmem>>, vector<1x4x32x8xf32>
    %503 = vector.shape_cast %502 : vector<1x4x32x8xf32> to vector<4x32x8xf32>
    "tpu.trace_start"() <{level = 10 : i32, message = "hsd,hde->hse"}> : () -> ()
    %cst_333 = arith.constant dense<0.000000e+00> : vector<4x8x8xf32>
    %504 = tpu.matmul %487, %503, %cst_333 {dimension_numbers = #tpu.dot_dimension_numbers<[2], [1], [1], [2], [0, 0, 0, 1, 1, 2], [0], [0]>} : vector<4x8x32xf32>, vector<4x32x8xf32>, vector<4x8x8xf32> -> vector<4x8x8xf32>
    "tpu.trace_stop"() : () -> ()
    %c4_334 = arith.constant 4 : index
    %c0_335 = arith.constant 0 : index
    %c0_336 = arith.constant 0 : index
    %c0_337 = arith.constant 0 : index
    %505 = vector.load %arg8[%c4_334, %c0_335, %c0_336, %c0_337] : memref<8x4x1x8xf32, #tpu.memory_space<vmem>>, vector<1x4x1x8xf32>
    %506 = vector.shape_cast %505 : vector<1x4x1x8xf32> to vector<4x1x8xf32>
    %507 = vector.broadcast %506 : vector<4x1x8xf32> to vector<4x8x8xf32>
    %508 = arith.addf %504, %507 : vector<4x8x8xf32>
    "tpu.trace_start"() <{level = 10 : i32, message = "hqe,hke->hqk"}> : () -> ()
    %cst_338 = arith.constant dense<0.000000e+00> : vector<4x8x8xf32>
    %509 = tpu.matmul %494, %501, %cst_338 {dimension_numbers = #tpu.dot_dimension_numbers<[2], [2], [1], [1], [0, 0, 0, 1, 1, 1], [0], [0]>} : vector<4x8x8xf32>, vector<4x8x8xf32>, vector<4x8x8xf32> -> vector<4x8x8xf32>
    "tpu.trace_stop"() : () -> ()
    %cst_339 = arith.constant 0.353553385 : f32
    %510 = vector.broadcast %cst_339 : f32 to vector<4x8x8xf32>
    %511 = arith.mulf %509, %510 : vector<4x8x8xf32>
    %cst_340 = arith.constant dense<0xFF800000> : vector<4x8xf32>
    %512 = vector.multi_reduction <maximumf>, %511, %cst_340 [2] : vector<4x8x8xf32> to vector<4x8xf32>
    %513 = vector.shape_cast %512 : vector<4x8xf32> to vector<4x8x1xf32>
    %514 = vector.broadcast %513 : vector<4x8x1xf32> to vector<4x8x8xf32>
    %515 = arith.subf %511, %514 : vector<4x8x8xf32>
    %516 = math.exp %515 : vector<4x8x8xf32>
    %cst_341 = arith.constant dense<0.000000e+00> : vector<4x8xf32>
    %517 = vector.multi_reduction <add>, %516, %cst_341 [2] : vector<4x8x8xf32> to vector<4x8xf32>
    %518 = vector.shape_cast %517 : vector<4x8xf32> to vector<4x8x1xf32>
    %519 = tpu.reciprocal %518 {approx = true} : vector<4x8x1xf32> -> vector<4x8x1xf32>
    %520 = vector.broadcast %519 : vector<4x8x1xf32> to vector<4x8x8xf32>
    %521 = arith.mulf %516, %520 : vector<4x8x8xf32>
    "tpu.trace_start"() <{level = 10 : i32, message = "hqk,hke->hqe"}> : () -> ()
    %cst_342 = arith.constant dense<0.000000e+00> : vector<4x8x8xf32>
    %522 = tpu.matmul %521, %508, %cst_342 {dimension_numbers = #tpu.dot_dimension_numbers<[2], [1], [1], [2], [0, 0, 0, 1, 1, 2], [0], [0]>} : vector<4x8x8xf32>, vector<4x8x8xf32>, vector<4x8x8xf32> -> vector<4x8x8xf32>
    "tpu.trace_stop"() : () -> ()
    %c4_343 = arith.constant 4 : index
    %c0_344 = arith.constant 0 : index
    %c0_345 = arith.constant 0 : index
    %c0_346 = arith.constant 0 : index
    %523 = vector.load %arg9[%c4_343, %c0_344, %c0_345, %c0_346] : memref<8x4x8x32xf32, #tpu.memory_space<vmem>>, vector<1x4x8x32xf32>
    %524 = vector.shape_cast %523 : vector<1x4x8x32xf32> to vector<4x8x32xf32>
    "tpu.trace_start"() <{level = 10 : i32, message = "hqe,hed->hqd"}> : () -> ()
    %cst_347 = arith.constant dense<0.000000e+00> : vector<4x8x32xf32>
    %525 = tpu.matmul %522, %524, %cst_347 {dimension_numbers = #tpu.dot_dimension_numbers<[2], [1], [1], [2], [0, 0, 0, 1, 1, 2], [0], [0]>} : vector<4x8x8xf32>, vector<4x8x32xf32>, vector<4x8x32xf32> -> vector<4x8x32xf32>
    "tpu.trace_stop"() : () -> ()
    %cst_348 = arith.constant dense<0.000000e+00> : vector<8x32xf32>
    %526 = vector.multi_reduction <add>, %525, %cst_348 [0] : vector<4x8x32xf32> to vector<8x32xf32>
    %c4_349 = arith.constant 4 : index
    %c0_350 = arith.constant 0 : index
    %c0_351 = arith.constant 0 : index
    %527 = vector.load %arg10[%c4_349, %c0_350, %c0_351] : memref<8x1x32xf32, #tpu.memory_space<vmem>>, vector<1x1x32xf32>
    %528 = vector.shape_cast %527 : vector<1x1x32xf32> to vector<1x32xf32>
    %529 = vector.broadcast %528 : vector<1x32xf32> to vector<8x32xf32>
    %530 = arith.addf %526, %529 : vector<8x32xf32>
    %531 = arith.addf %362, %530 : vector<8x32xf32>
    %cst_352 = arith.constant dense<0.000000e+00> : vector<8xf32>
    %532 = vector.multi_reduction <add>, %531, %cst_352 [1] : vector<8x32xf32> to vector<8xf32>
    %533 = vector.shape_cast %532 : vector<8xf32> to vector<8x1xf32>
    %cst_353 = arith.constant 3.200000e+01 : f32
    %534 = vector.broadcast %cst_353 : f32 to vector<8x1xf32>
    %535 = arith.divf %533, %534 : vector<8x1xf32>
    %536 = vector.broadcast %535 : vector<8x1xf32> to vector<8x32xf32>
    %537 = arith.subf %531, %536 : vector<8x32xf32>
    %538 = arith.mulf %537, %537 : vector<8x32xf32>
    %cst_354 = arith.constant dense<0.000000e+00> : vector<8xf32>
    %539 = vector.multi_reduction <add>, %538, %cst_354 [1] : vector<8x32xf32> to vector<8xf32>
    %540 = vector.shape_cast %539 : vector<8xf32> to vector<8x1xf32>
    %cst_355 = arith.constant 3.200000e+01 : f32
    %541 = vector.broadcast %cst_355 : f32 to vector<8x1xf32>
    %542 = arith.divf %540, %541 : vector<8x1xf32>
    %543 = vector.broadcast %535 : vector<8x1xf32> to vector<8x32xf32>
    %544 = arith.subf %531, %543 : vector<8x32xf32>
    %cst_356 = arith.constant 9.99999974E-6 : f32
    %545 = vector.broadcast %cst_356 : f32 to vector<8x1xf32>
    %546 = arith.addf %542, %545 : vector<8x1xf32>
    %547 = math.rsqrt %546 : vector<8x1xf32>
    %548 = vector.broadcast %547 : vector<8x1xf32> to vector<8x32xf32>
    %549 = arith.mulf %544, %548 : vector<8x32xf32>
    %c4_357 = arith.constant 4 : index
    %c0_358 = arith.constant 0 : index
    %c0_359 = arith.constant 0 : index
    %550 = vector.load %arg11[%c4_357, %c0_358, %c0_359] : memref<8x1x32xf32, #tpu.memory_space<vmem>>, vector<1x1x32xf32>
    %551 = vector.shape_cast %550 : vector<1x1x32xf32> to vector<1x32xf32>
    %552 = vector.broadcast %551 : vector<1x32xf32> to vector<8x32xf32>
    %553 = arith.mulf %549, %552 : vector<8x32xf32>
    %c4_360 = arith.constant 4 : index
    %c0_361 = arith.constant 0 : index
    %c0_362 = arith.constant 0 : index
    %554 = vector.load %arg12[%c4_360, %c0_361, %c0_362] : memref<8x1x32xf32, #tpu.memory_space<vmem>>, vector<1x1x32xf32>
    %555 = vector.shape_cast %554 : vector<1x1x32xf32> to vector<1x32xf32>
    %556 = vector.broadcast %555 : vector<1x32xf32> to vector<8x32xf32>
    %557 = arith.addf %553, %556 : vector<8x32xf32>
    %c4_363 = arith.constant 4 : index
    %c0_364 = arith.constant 0 : index
    %c0_365 = arith.constant 0 : index
    %558 = vector.load %arg13[%c4_363, %c0_364, %c0_365] : memref<8x32x64xf32, #tpu.memory_space<vmem>>, vector<1x32x64xf32>
    %559 = vector.shape_cast %558 : vector<1x32x64xf32> to vector<32x64xf32>
    %cst_366 = arith.constant dense<0.000000e+00> : vector<8x64xf32>
    %560 = tpu.matmul %557, %559, %cst_366 {dimension_numbers = #tpu.dot_dimension_numbers<[1], [0], [0], [1], [0, 0, 1, 1], [], []>} : vector<8x32xf32>, vector<32x64xf32>, vector<8x64xf32> -> vector<8x64xf32>
    %c4_367 = arith.constant 4 : index
    %c0_368 = arith.constant 0 : index
    %c0_369 = arith.constant 0 : index
    %561 = vector.load %arg14[%c4_367, %c0_368, %c0_369] : memref<8x1x64xf32, #tpu.memory_space<vmem>>, vector<1x1x64xf32>
    %562 = vector.shape_cast %561 : vector<1x1x64xf32> to vector<1x64xf32>
    %563 = vector.broadcast %562 : vector<1x64xf32> to vector<8x64xf32>
    %564 = arith.addf %560, %563 : vector<8x64xf32>
    %cst_370 = arith.constant 0.000000e+00 : f32
    %565 = vector.broadcast %cst_370 : f32 to vector<8x64xf32>
    %566 = arith.maximumf %564, %565 : vector<8x64xf32>
    %c4_371 = arith.constant 4 : index
    %c0_372 = arith.constant 0 : index
    %c0_373 = arith.constant 0 : index
    %567 = vector.load %arg15[%c4_371, %c0_372, %c0_373] : memref<8x64x32xf32, #tpu.memory_space<vmem>>, vector<1x64x32xf32>
    %568 = vector.shape_cast %567 : vector<1x64x32xf32> to vector<64x32xf32>
    %cst_374 = arith.constant dense<0.000000e+00> : vector<8x32xf32>
    %569 = tpu.matmul %566, %568, %cst_374 {dimension_numbers = #tpu.dot_dimension_numbers<[1], [0], [0], [1], [0, 0, 1, 1], [], []>} : vector<8x64xf32>, vector<64x32xf32>, vector<8x32xf32> -> vector<8x32xf32>
    %c4_375 = arith.constant 4 : index
    %c0_376 = arith.constant 0 : index
    %c0_377 = arith.constant 0 : index
    %570 = vector.load %arg16[%c4_375, %c0_376, %c0_377] : memref<8x1x32xf32, #tpu.memory_space<vmem>>, vector<1x1x32xf32>
    %571 = vector.shape_cast %570 : vector<1x1x32xf32> to vector<1x32xf32>
    %572 = vector.broadcast %571 : vector<1x32xf32> to vector<8x32xf32>
    %573 = arith.addf %569, %572 : vector<8x32xf32>
    %574 = arith.addf %557, %573 : vector<8x32xf32>
    %cst_378 = arith.constant dense<0.000000e+00> : vector<8xf32>
    %575 = vector.multi_reduction <add>, %574, %cst_378 [1] : vector<8x32xf32> to vector<8xf32>
    %576 = vector.shape_cast %575 : vector<8xf32> to vector<8x1xf32>
    %cst_379 = arith.constant 3.200000e+01 : f32
    %577 = vector.broadcast %cst_379 : f32 to vector<8x1xf32>
    %578 = arith.divf %576, %577 : vector<8x1xf32>
    %579 = vector.broadcast %578 : vector<8x1xf32> to vector<8x32xf32>
    %580 = arith.subf %574, %579 : vector<8x32xf32>
    %581 = arith.mulf %580, %580 : vector<8x32xf32>
    %cst_380 = arith.constant dense<0.000000e+00> : vector<8xf32>
    %582 = vector.multi_reduction <add>, %581, %cst_380 [1] : vector<8x32xf32> to vector<8xf32>
    %583 = vector.shape_cast %582 : vector<8xf32> to vector<8x1xf32>
    %cst_381 = arith.constant 3.200000e+01 : f32
    %584 = vector.broadcast %cst_381 : f32 to vector<8x1xf32>
    %585 = arith.divf %583, %584 : vector<8x1xf32>
    %586 = vector.broadcast %578 : vector<8x1xf32> to vector<8x32xf32>
    %587 = arith.subf %574, %586 : vector<8x32xf32>
    %cst_382 = arith.constant 9.99999974E-6 : f32
    %588 = vector.broadcast %cst_382 : f32 to vector<8x1xf32>
    %589 = arith.addf %585, %588 : vector<8x1xf32>
    %590 = math.rsqrt %589 : vector<8x1xf32>
    %591 = vector.broadcast %590 : vector<8x1xf32> to vector<8x32xf32>
    %592 = arith.mulf %587, %591 : vector<8x32xf32>
    %c4_383 = arith.constant 4 : index
    %c0_384 = arith.constant 0 : index
    %c0_385 = arith.constant 0 : index
    %593 = vector.load %arg17[%c4_383, %c0_384, %c0_385] : memref<8x1x32xf32, #tpu.memory_space<vmem>>, vector<1x1x32xf32>
    %594 = vector.shape_cast %593 : vector<1x1x32xf32> to vector<1x32xf32>
    %595 = vector.broadcast %594 : vector<1x32xf32> to vector<8x32xf32>
    %596 = arith.mulf %592, %595 : vector<8x32xf32>
    %c4_386 = arith.constant 4 : index
    %c0_387 = arith.constant 0 : index
    %c0_388 = arith.constant 0 : index
    %597 = vector.load %arg18[%c4_386, %c0_387, %c0_388] : memref<8x1x32xf32, #tpu.memory_space<vmem>>, vector<1x1x32xf32>
    %598 = vector.shape_cast %597 : vector<1x1x32xf32> to vector<1x32xf32>
    %599 = vector.broadcast %598 : vector<1x32xf32> to vector<8x32xf32>
    %600 = arith.addf %596, %599 : vector<8x32xf32>
    %601 = vector.shape_cast %600 : vector<8x32xf32> to vector<1x8x32xf32>
    %602 = vector.broadcast %601 : vector<1x8x32xf32> to vector<4x8x32xf32>
    %603 = vector.shape_cast %600 : vector<8x32xf32> to vector<1x8x32xf32>
    %604 = vector.broadcast %603 : vector<1x8x32xf32> to vector<4x8x32xf32>
    %605 = vector.shape_cast %600 : vector<8x32xf32> to vector<1x8x32xf32>
    %606 = vector.broadcast %605 : vector<1x8x32xf32> to vector<4x8x32xf32>
    %c5 = arith.constant 5 : index
    %c0_389 = arith.constant 0 : index
    %c0_390 = arith.constant 0 : index
    %c0_391 = arith.constant 0 : index
    %607 = vector.load %arg3[%c5, %c0_389, %c0_390, %c0_391] : memref<8x4x32x8xf32, #tpu.memory_space<vmem>>, vector<1x4x32x8xf32>
    %608 = vector.shape_cast %607 : vector<1x4x32x8xf32> to vector<4x32x8xf32>
    "tpu.trace_start"() <{level = 10 : i32, message = "hsd,hde->hse"}> : () -> ()
    %cst_392 = arith.constant dense<0.000000e+00> : vector<4x8x8xf32>
    %609 = tpu.matmul %602, %608, %cst_392 {dimension_numbers = #tpu.dot_dimension_numbers<[2], [1], [1], [2], [0, 0, 0, 1, 1, 2], [0], [0]>} : vector<4x8x32xf32>, vector<4x32x8xf32>, vector<4x8x8xf32> -> vector<4x8x8xf32>
    "tpu.trace_stop"() : () -> ()
    %c5_393 = arith.constant 5 : index
    %c0_394 = arith.constant 0 : index
    %c0_395 = arith.constant 0 : index
    %c0_396 = arith.constant 0 : index
    %610 = vector.load %arg4[%c5_393, %c0_394, %c0_395, %c0_396] : memref<8x4x1x8xf32, #tpu.memory_space<vmem>>, vector<1x4x1x8xf32>
    %611 = vector.shape_cast %610 : vector<1x4x1x8xf32> to vector<4x1x8xf32>
    %612 = vector.broadcast %611 : vector<4x1x8xf32> to vector<4x8x8xf32>
    %613 = arith.addf %609, %612 : vector<4x8x8xf32>
    %c5_397 = arith.constant 5 : index
    %c0_398 = arith.constant 0 : index
    %c0_399 = arith.constant 0 : index
    %c0_400 = arith.constant 0 : index
    %614 = vector.load %arg5[%c5_397, %c0_398, %c0_399, %c0_400] : memref<8x4x32x8xf32, #tpu.memory_space<vmem>>, vector<1x4x32x8xf32>
    %615 = vector.shape_cast %614 : vector<1x4x32x8xf32> to vector<4x32x8xf32>
    "tpu.trace_start"() <{level = 10 : i32, message = "hsd,hde->hse"}> : () -> ()
    %cst_401 = arith.constant dense<0.000000e+00> : vector<4x8x8xf32>
    %616 = tpu.matmul %604, %615, %cst_401 {dimension_numbers = #tpu.dot_dimension_numbers<[2], [1], [1], [2], [0, 0, 0, 1, 1, 2], [0], [0]>} : vector<4x8x32xf32>, vector<4x32x8xf32>, vector<4x8x8xf32> -> vector<4x8x8xf32>
    "tpu.trace_stop"() : () -> ()
    %c5_402 = arith.constant 5 : index
    %c0_403 = arith.constant 0 : index
    %c0_404 = arith.constant 0 : index
    %c0_405 = arith.constant 0 : index
    %617 = vector.load %arg6[%c5_402, %c0_403, %c0_404, %c0_405] : memref<8x4x1x8xf32, #tpu.memory_space<vmem>>, vector<1x4x1x8xf32>
    %618 = vector.shape_cast %617 : vector<1x4x1x8xf32> to vector<4x1x8xf32>
    %619 = vector.broadcast %618 : vector<4x1x8xf32> to vector<4x8x8xf32>
    %620 = arith.addf %616, %619 : vector<4x8x8xf32>
    %c5_406 = arith.constant 5 : index
    %c0_407 = arith.constant 0 : index
    %c0_408 = arith.constant 0 : index
    %c0_409 = arith.constant 0 : index
    %621 = vector.load %arg7[%c5_406, %c0_407, %c0_408, %c0_409] : memref<8x4x32x8xf32, #tpu.memory_space<vmem>>, vector<1x4x32x8xf32>
    %622 = vector.shape_cast %621 : vector<1x4x32x8xf32> to vector<4x32x8xf32>
    "tpu.trace_start"() <{level = 10 : i32, message = "hsd,hde->hse"}> : () -> ()
    %cst_410 = arith.constant dense<0.000000e+00> : vector<4x8x8xf32>
    %623 = tpu.matmul %606, %622, %cst_410 {dimension_numbers = #tpu.dot_dimension_numbers<[2], [1], [1], [2], [0, 0, 0, 1, 1, 2], [0], [0]>} : vector<4x8x32xf32>, vector<4x32x8xf32>, vector<4x8x8xf32> -> vector<4x8x8xf32>
    "tpu.trace_stop"() : () -> ()
    %c5_411 = arith.constant 5 : index
    %c0_412 = arith.constant 0 : index
    %c0_413 = arith.constant 0 : index
    %c0_414 = arith.constant 0 : index
    %624 = vector.load %arg8[%c5_411, %c0_412, %c0_413, %c0_414] : memref<8x4x1x8xf32, #tpu.memory_space<vmem>>, vector<1x4x1x8xf32>
    %625 = vector.shape_cast %624 : vector<1x4x1x8xf32> to vector<4x1x8xf32>
    %626 = vector.broadcast %625 : vector<4x1x8xf32> to vector<4x8x8xf32>
    %627 = arith.addf %623, %626 : vector<4x8x8xf32>
    "tpu.trace_start"() <{level = 10 : i32, message = "hqe,hke->hqk"}> : () -> ()
    %cst_415 = arith.constant dense<0.000000e+00> : vector<4x8x8xf32>
    %628 = tpu.matmul %613, %620, %cst_415 {dimension_numbers = #tpu.dot_dimension_numbers<[2], [2], [1], [1], [0, 0, 0, 1, 1, 1], [0], [0]>} : vector<4x8x8xf32>, vector<4x8x8xf32>, vector<4x8x8xf32> -> vector<4x8x8xf32>
    "tpu.trace_stop"() : () -> ()
    %cst_416 = arith.constant 0.353553385 : f32
    %629 = vector.broadcast %cst_416 : f32 to vector<4x8x8xf32>
    %630 = arith.mulf %628, %629 : vector<4x8x8xf32>
    %cst_417 = arith.constant dense<0xFF800000> : vector<4x8xf32>
    %631 = vector.multi_reduction <maximumf>, %630, %cst_417 [2] : vector<4x8x8xf32> to vector<4x8xf32>
    %632 = vector.shape_cast %631 : vector<4x8xf32> to vector<4x8x1xf32>
    %633 = vector.broadcast %632 : vector<4x8x1xf32> to vector<4x8x8xf32>
    %634 = arith.subf %630, %633 : vector<4x8x8xf32>
    %635 = math.exp %634 : vector<4x8x8xf32>
    %cst_418 = arith.constant dense<0.000000e+00> : vector<4x8xf32>
    %636 = vector.multi_reduction <add>, %635, %cst_418 [2] : vector<4x8x8xf32> to vector<4x8xf32>
    %637 = vector.shape_cast %636 : vector<4x8xf32> to vector<4x8x1xf32>
    %638 = tpu.reciprocal %637 {approx = true} : vector<4x8x1xf32> -> vector<4x8x1xf32>
    %639 = vector.broadcast %638 : vector<4x8x1xf32> to vector<4x8x8xf32>
    %640 = arith.mulf %635, %639 : vector<4x8x8xf32>
    "tpu.trace_start"() <{level = 10 : i32, message = "hqk,hke->hqe"}> : () -> ()
    %cst_419 = arith.constant dense<0.000000e+00> : vector<4x8x8xf32>
    %641 = tpu.matmul %640, %627, %cst_419 {dimension_numbers = #tpu.dot_dimension_numbers<[2], [1], [1], [2], [0, 0, 0, 1, 1, 2], [0], [0]>} : vector<4x8x8xf32>, vector<4x8x8xf32>, vector<4x8x8xf32> -> vector<4x8x8xf32>
    "tpu.trace_stop"() : () -> ()
    %c5_420 = arith.constant 5 : index
    %c0_421 = arith.constant 0 : index
    %c0_422 = arith.constant 0 : index
    %c0_423 = arith.constant 0 : index
    %642 = vector.load %arg9[%c5_420, %c0_421, %c0_422, %c0_423] : memref<8x4x8x32xf32, #tpu.memory_space<vmem>>, vector<1x4x8x32xf32>
    %643 = vector.shape_cast %642 : vector<1x4x8x32xf32> to vector<4x8x32xf32>
    "tpu.trace_start"() <{level = 10 : i32, message = "hqe,hed->hqd"}> : () -> ()
    %cst_424 = arith.constant dense<0.000000e+00> : vector<4x8x32xf32>
    %644 = tpu.matmul %641, %643, %cst_424 {dimension_numbers = #tpu.dot_dimension_numbers<[2], [1], [1], [2], [0, 0, 0, 1, 1, 2], [0], [0]>} : vector<4x8x8xf32>, vector<4x8x32xf32>, vector<4x8x32xf32> -> vector<4x8x32xf32>
    "tpu.trace_stop"() : () -> ()
    %cst_425 = arith.constant dense<0.000000e+00> : vector<8x32xf32>
    %645 = vector.multi_reduction <add>, %644, %cst_425 [0] : vector<4x8x32xf32> to vector<8x32xf32>
    %c5_426 = arith.constant 5 : index
    %c0_427 = arith.constant 0 : index
    %c0_428 = arith.constant 0 : index
    %646 = vector.load %arg10[%c5_426, %c0_427, %c0_428] : memref<8x1x32xf32, #tpu.memory_space<vmem>>, vector<1x1x32xf32>
    %647 = vector.shape_cast %646 : vector<1x1x32xf32> to vector<1x32xf32>
    %648 = vector.broadcast %647 : vector<1x32xf32> to vector<8x32xf32>
    %649 = arith.addf %645, %648 : vector<8x32xf32>
    %650 = arith.addf %600, %649 : vector<8x32xf32>
    %cst_429 = arith.constant dense<0.000000e+00> : vector<8xf32>
    %651 = vector.multi_reduction <add>, %650, %cst_429 [1] : vector<8x32xf32> to vector<8xf32>
    %652 = vector.shape_cast %651 : vector<8xf32> to vector<8x1xf32>
    %cst_430 = arith.constant 3.200000e+01 : f32
    %653 = vector.broadcast %cst_430 : f32 to vector<8x1xf32>
    %654 = arith.divf %652, %653 : vector<8x1xf32>
    %655 = vector.broadcast %654 : vector<8x1xf32> to vector<8x32xf32>
    %656 = arith.subf %650, %655 : vector<8x32xf32>
    %657 = arith.mulf %656, %656 : vector<8x32xf32>
    %cst_431 = arith.constant dense<0.000000e+00> : vector<8xf32>
    %658 = vector.multi_reduction <add>, %657, %cst_431 [1] : vector<8x32xf32> to vector<8xf32>
    %659 = vector.shape_cast %658 : vector<8xf32> to vector<8x1xf32>
    %cst_432 = arith.constant 3.200000e+01 : f32
    %660 = vector.broadcast %cst_432 : f32 to vector<8x1xf32>
    %661 = arith.divf %659, %660 : vector<8x1xf32>
    %662 = vector.broadcast %654 : vector<8x1xf32> to vector<8x32xf32>
    %663 = arith.subf %650, %662 : vector<8x32xf32>
    %cst_433 = arith.constant 9.99999974E-6 : f32
    %664 = vector.broadcast %cst_433 : f32 to vector<8x1xf32>
    %665 = arith.addf %661, %664 : vector<8x1xf32>
    %666 = math.rsqrt %665 : vector<8x1xf32>
    %667 = vector.broadcast %666 : vector<8x1xf32> to vector<8x32xf32>
    %668 = arith.mulf %663, %667 : vector<8x32xf32>
    %c5_434 = arith.constant 5 : index
    %c0_435 = arith.constant 0 : index
    %c0_436 = arith.constant 0 : index
    %669 = vector.load %arg11[%c5_434, %c0_435, %c0_436] : memref<8x1x32xf32, #tpu.memory_space<vmem>>, vector<1x1x32xf32>
    %670 = vector.shape_cast %669 : vector<1x1x32xf32> to vector<1x32xf32>
    %671 = vector.broadcast %670 : vector<1x32xf32> to vector<8x32xf32>
    %672 = arith.mulf %668, %671 : vector<8x32xf32>
    %c5_437 = arith.constant 5 : index
    %c0_438 = arith.constant 0 : index
    %c0_439 = arith.constant 0 : index
    %673 = vector.load %arg12[%c5_437, %c0_438, %c0_439] : memref<8x1x32xf32, #tpu.memory_space<vmem>>, vector<1x1x32xf32>
    %674 = vector.shape_cast %673 : vector<1x1x32xf32> to vector<1x32xf32>
    %675 = vector.broadcast %674 : vector<1x32xf32> to vector<8x32xf32>
    %676 = arith.addf %672, %675 : vector<8x32xf32>
    %c5_440 = arith.constant 5 : index
    %c0_441 = arith.constant 0 : index
    %c0_442 = arith.constant 0 : index
    %677 = vector.load %arg13[%c5_440, %c0_441, %c0_442] : memref<8x32x64xf32, #tpu.memory_space<vmem>>, vector<1x32x64xf32>
    %678 = vector.shape_cast %677 : vector<1x32x64xf32> to vector<32x64xf32>
    %cst_443 = arith.constant dense<0.000000e+00> : vector<8x64xf32>
    %679 = tpu.matmul %676, %678, %cst_443 {dimension_numbers = #tpu.dot_dimension_numbers<[1], [0], [0], [1], [0, 0, 1, 1], [], []>} : vector<8x32xf32>, vector<32x64xf32>, vector<8x64xf32> -> vector<8x64xf32>
    %c5_444 = arith.constant 5 : index
    %c0_445 = arith.constant 0 : index
    %c0_446 = arith.constant 0 : index
    %680 = vector.load %arg14[%c5_444, %c0_445, %c0_446] : memref<8x1x64xf32, #tpu.memory_space<vmem>>, vector<1x1x64xf32>
    %681 = vector.shape_cast %680 : vector<1x1x64xf32> to vector<1x64xf32>
    %682 = vector.broadcast %681 : vector<1x64xf32> to vector<8x64xf32>
    %683 = arith.addf %679, %682 : vector<8x64xf32>
    %cst_447 = arith.constant 0.000000e+00 : f32
    %684 = vector.broadcast %cst_447 : f32 to vector<8x64xf32>
    %685 = arith.maximumf %683, %684 : vector<8x64xf32>
    %c5_448 = arith.constant 5 : index
    %c0_449 = arith.constant 0 : index
    %c0_450 = arith.constant 0 : index
    %686 = vector.load %arg15[%c5_448, %c0_449, %c0_450] : memref<8x64x32xf32, #tpu.memory_space<vmem>>, vector<1x64x32xf32>
    %687 = vector.shape_cast %686 : vector<1x64x32xf32> to vector<64x32xf32>
    %cst_451 = arith.constant dense<0.000000e+00> : vector<8x32xf32>
    %688 = tpu.matmul %685, %687, %cst_451 {dimension_numbers = #tpu.dot_dimension_numbers<[1], [0], [0], [1], [0, 0, 1, 1], [], []>} : vector<8x64xf32>, vector<64x32xf32>, vector<8x32xf32> -> vector<8x32xf32>
    %c5_452 = arith.constant 5 : index
    %c0_453 = arith.constant 0 : index
    %c0_454 = arith.constant 0 : index
    %689 = vector.load %arg16[%c5_452, %c0_453, %c0_454] : memref<8x1x32xf32, #tpu.memory_space<vmem>>, vector<1x1x32xf32>
    %690 = vector.shape_cast %689 : vector<1x1x32xf32> to vector<1x32xf32>
    %691 = vector.broadcast %690 : vector<1x32xf32> to vector<8x32xf32>
    %692 = arith.addf %688, %691 : vector<8x32xf32>
    %693 = arith.addf %676, %692 : vector<8x32xf32>
    %cst_455 = arith.constant dense<0.000000e+00> : vector<8xf32>
    %694 = vector.multi_reduction <add>, %693, %cst_455 [1] : vector<8x32xf32> to vector<8xf32>
    %695 = vector.shape_cast %694 : vector<8xf32> to vector<8x1xf32>
    %cst_456 = arith.constant 3.200000e+01 : f32
    %696 = vector.broadcast %cst_456 : f32 to vector<8x1xf32>
    %697 = arith.divf %695, %696 : vector<8x1xf32>
    %698 = vector.broadcast %697 : vector<8x1xf32> to vector<8x32xf32>
    %699 = arith.subf %693, %698 : vector<8x32xf32>
    %700 = arith.mulf %699, %699 : vector<8x32xf32>
    %cst_457 = arith.constant dense<0.000000e+00> : vector<8xf32>
    %701 = vector.multi_reduction <add>, %700, %cst_457 [1] : vector<8x32xf32> to vector<8xf32>
    %702 = vector.shape_cast %701 : vector<8xf32> to vector<8x1xf32>
    %cst_458 = arith.constant 3.200000e+01 : f32
    %703 = vector.broadcast %cst_458 : f32 to vector<8x1xf32>
    %704 = arith.divf %702, %703 : vector<8x1xf32>
    %705 = vector.broadcast %697 : vector<8x1xf32> to vector<8x32xf32>
    %706 = arith.subf %693, %705 : vector<8x32xf32>
    %cst_459 = arith.constant 9.99999974E-6 : f32
    %707 = vector.broadcast %cst_459 : f32 to vector<8x1xf32>
    %708 = arith.addf %704, %707 : vector<8x1xf32>
    %709 = math.rsqrt %708 : vector<8x1xf32>
    %710 = vector.broadcast %709 : vector<8x1xf32> to vector<8x32xf32>
    %711 = arith.mulf %706, %710 : vector<8x32xf32>
    %c5_460 = arith.constant 5 : index
    %c0_461 = arith.constant 0 : index
    %c0_462 = arith.constant 0 : index
    %712 = vector.load %arg17[%c5_460, %c0_461, %c0_462] : memref<8x1x32xf32, #tpu.memory_space<vmem>>, vector<1x1x32xf32>
    %713 = vector.shape_cast %712 : vector<1x1x32xf32> to vector<1x32xf32>
    %714 = vector.broadcast %713 : vector<1x32xf32> to vector<8x32xf32>
    %715 = arith.mulf %711, %714 : vector<8x32xf32>
    %c5_463 = arith.constant 5 : index
    %c0_464 = arith.constant 0 : index
    %c0_465 = arith.constant 0 : index
    %716 = vector.load %arg18[%c5_463, %c0_464, %c0_465] : memref<8x1x32xf32, #tpu.memory_space<vmem>>, vector<1x1x32xf32>
    %717 = vector.shape_cast %716 : vector<1x1x32xf32> to vector<1x32xf32>
    %718 = vector.broadcast %717 : vector<1x32xf32> to vector<8x32xf32>
    %719 = arith.addf %715, %718 : vector<8x32xf32>
    %720 = vector.shape_cast %481 : vector<8x32xf32> to vector<1x8x32xf32>
    %721 = vector.broadcast %720 : vector<1x8x32xf32> to vector<4x8x32xf32>
    %722 = vector.shape_cast %481 : vector<8x32xf32> to vector<1x8x32xf32>
    %723 = vector.broadcast %722 : vector<1x8x32xf32> to vector<4x8x32xf32>
    %724 = vector.shape_cast %481 : vector<8x32xf32> to vector<1x8x32xf32>
    %725 = vector.broadcast %724 : vector<1x8x32xf32> to vector<4x8x32xf32>
    %c6 = arith.constant 6 : index
    %c0_466 = arith.constant 0 : index
    %c0_467 = arith.constant 0 : index
    %c0_468 = arith.constant 0 : index
    %726 = vector.load %arg3[%c6, %c0_466, %c0_467, %c0_468] : memref<8x4x32x8xf32, #tpu.memory_space<vmem>>, vector<1x4x32x8xf32>
    %727 = vector.shape_cast %726 : vector<1x4x32x8xf32> to vector<4x32x8xf32>
    "tpu.trace_start"() <{level = 10 : i32, message = "hsd,hde->hse"}> : () -> ()
    %cst_469 = arith.constant dense<0.000000e+00> : vector<4x8x8xf32>
    %728 = tpu.matmul %721, %727, %cst_469 {dimension_numbers = #tpu.dot_dimension_numbers<[2], [1], [1], [2], [0, 0, 0, 1, 1, 2], [0], [0]>} : vector<4x8x32xf32>, vector<4x32x8xf32>, vector<4x8x8xf32> -> vector<4x8x8xf32>
    "tpu.trace_stop"() : () -> ()
    %c6_470 = arith.constant 6 : index
    %c0_471 = arith.constant 0 : index
    %c0_472 = arith.constant 0 : index
    %c0_473 = arith.constant 0 : index
    %729 = vector.load %arg4[%c6_470, %c0_471, %c0_472, %c0_473] : memref<8x4x1x8xf32, #tpu.memory_space<vmem>>, vector<1x4x1x8xf32>
    %730 = vector.shape_cast %729 : vector<1x4x1x8xf32> to vector<4x1x8xf32>
    %731 = vector.broadcast %730 : vector<4x1x8xf32> to vector<4x8x8xf32>
    %732 = arith.addf %728, %731 : vector<4x8x8xf32>
    %c6_474 = arith.constant 6 : index
    %c0_475 = arith.constant 0 : index
    %c0_476 = arith.constant 0 : index
    %c0_477 = arith.constant 0 : index
    %733 = vector.load %arg5[%c6_474, %c0_475, %c0_476, %c0_477] : memref<8x4x32x8xf32, #tpu.memory_space<vmem>>, vector<1x4x32x8xf32>
    %734 = vector.shape_cast %733 : vector<1x4x32x8xf32> to vector<4x32x8xf32>
    "tpu.trace_start"() <{level = 10 : i32, message = "hsd,hde->hse"}> : () -> ()
    %cst_478 = arith.constant dense<0.000000e+00> : vector<4x8x8xf32>
    %735 = tpu.matmul %723, %734, %cst_478 {dimension_numbers = #tpu.dot_dimension_numbers<[2], [1], [1], [2], [0, 0, 0, 1, 1, 2], [0], [0]>} : vector<4x8x32xf32>, vector<4x32x8xf32>, vector<4x8x8xf32> -> vector<4x8x8xf32>
    "tpu.trace_stop"() : () -> ()
    %c6_479 = arith.constant 6 : index
    %c0_480 = arith.constant 0 : index
    %c0_481 = arith.constant 0 : index
    %c0_482 = arith.constant 0 : index
    %736 = vector.load %arg6[%c6_479, %c0_480, %c0_481, %c0_482] : memref<8x4x1x8xf32, #tpu.memory_space<vmem>>, vector<1x4x1x8xf32>
    %737 = vector.shape_cast %736 : vector<1x4x1x8xf32> to vector<4x1x8xf32>
    %738 = vector.broadcast %737 : vector<4x1x8xf32> to vector<4x8x8xf32>
    %739 = arith.addf %735, %738 : vector<4x8x8xf32>
    %c6_483 = arith.constant 6 : index
    %c0_484 = arith.constant 0 : index
    %c0_485 = arith.constant 0 : index
    %c0_486 = arith.constant 0 : index
    %740 = vector.load %arg7[%c6_483, %c0_484, %c0_485, %c0_486] : memref<8x4x32x8xf32, #tpu.memory_space<vmem>>, vector<1x4x32x8xf32>
    %741 = vector.shape_cast %740 : vector<1x4x32x8xf32> to vector<4x32x8xf32>
    "tpu.trace_start"() <{level = 10 : i32, message = "hsd,hde->hse"}> : () -> ()
    %cst_487 = arith.constant dense<0.000000e+00> : vector<4x8x8xf32>
    %742 = tpu.matmul %725, %741, %cst_487 {dimension_numbers = #tpu.dot_dimension_numbers<[2], [1], [1], [2], [0, 0, 0, 1, 1, 2], [0], [0]>} : vector<4x8x32xf32>, vector<4x32x8xf32>, vector<4x8x8xf32> -> vector<4x8x8xf32>
    "tpu.trace_stop"() : () -> ()
    %c6_488 = arith.constant 6 : index
    %c0_489 = arith.constant 0 : index
    %c0_490 = arith.constant 0 : index
    %c0_491 = arith.constant 0 : index
    %743 = vector.load %arg8[%c6_488, %c0_489, %c0_490, %c0_491] : memref<8x4x1x8xf32, #tpu.memory_space<vmem>>, vector<1x4x1x8xf32>
    %744 = vector.shape_cast %743 : vector<1x4x1x8xf32> to vector<4x1x8xf32>
    %745 = vector.broadcast %744 : vector<4x1x8xf32> to vector<4x8x8xf32>
    %746 = arith.addf %742, %745 : vector<4x8x8xf32>
    "tpu.trace_start"() <{level = 10 : i32, message = "hqe,hke->hqk"}> : () -> ()
    %cst_492 = arith.constant dense<0.000000e+00> : vector<4x8x8xf32>
    %747 = tpu.matmul %732, %739, %cst_492 {dimension_numbers = #tpu.dot_dimension_numbers<[2], [2], [1], [1], [0, 0, 0, 1, 1, 1], [0], [0]>} : vector<4x8x8xf32>, vector<4x8x8xf32>, vector<4x8x8xf32> -> vector<4x8x8xf32>
    "tpu.trace_stop"() : () -> ()
    %cst_493 = arith.constant 0.353553385 : f32
    %748 = vector.broadcast %cst_493 : f32 to vector<4x8x8xf32>
    %749 = arith.mulf %747, %748 : vector<4x8x8xf32>
    %cst_494 = arith.constant dense<0xFF800000> : vector<4x8xf32>
    %750 = vector.multi_reduction <maximumf>, %749, %cst_494 [2] : vector<4x8x8xf32> to vector<4x8xf32>
    %751 = vector.shape_cast %750 : vector<4x8xf32> to vector<4x8x1xf32>
    %752 = vector.broadcast %751 : vector<4x8x1xf32> to vector<4x8x8xf32>
    %753 = arith.subf %749, %752 : vector<4x8x8xf32>
    %754 = math.exp %753 : vector<4x8x8xf32>
    %cst_495 = arith.constant dense<0.000000e+00> : vector<4x8xf32>
    %755 = vector.multi_reduction <add>, %754, %cst_495 [2] : vector<4x8x8xf32> to vector<4x8xf32>
    %756 = vector.shape_cast %755 : vector<4x8xf32> to vector<4x8x1xf32>
    %757 = tpu.reciprocal %756 {approx = true} : vector<4x8x1xf32> -> vector<4x8x1xf32>
    %758 = vector.broadcast %757 : vector<4x8x1xf32> to vector<4x8x8xf32>
    %759 = arith.mulf %754, %758 : vector<4x8x8xf32>
    "tpu.trace_start"() <{level = 10 : i32, message = "hqk,hke->hqe"}> : () -> ()
    %cst_496 = arith.constant dense<0.000000e+00> : vector<4x8x8xf32>
    %760 = tpu.matmul %759, %746, %cst_496 {dimension_numbers = #tpu.dot_dimension_numbers<[2], [1], [1], [2], [0, 0, 0, 1, 1, 2], [0], [0]>} : vector<4x8x8xf32>, vector<4x8x8xf32>, vector<4x8x8xf32> -> vector<4x8x8xf32>
    "tpu.trace_stop"() : () -> ()
    %c6_497 = arith.constant 6 : index
    %c0_498 = arith.constant 0 : index
    %c0_499 = arith.constant 0 : index
    %c0_500 = arith.constant 0 : index
    %761 = vector.load %arg9[%c6_497, %c0_498, %c0_499, %c0_500] : memref<8x4x8x32xf32, #tpu.memory_space<vmem>>, vector<1x4x8x32xf32>
    %762 = vector.shape_cast %761 : vector<1x4x8x32xf32> to vector<4x8x32xf32>
    "tpu.trace_start"() <{level = 10 : i32, message = "hqe,hed->hqd"}> : () -> ()
    %cst_501 = arith.constant dense<0.000000e+00> : vector<4x8x32xf32>
    %763 = tpu.matmul %760, %762, %cst_501 {dimension_numbers = #tpu.dot_dimension_numbers<[2], [1], [1], [2], [0, 0, 0, 1, 1, 2], [0], [0]>} : vector<4x8x8xf32>, vector<4x8x32xf32>, vector<4x8x32xf32> -> vector<4x8x32xf32>
    "tpu.trace_stop"() : () -> ()
    %cst_502 = arith.constant dense<0.000000e+00> : vector<8x32xf32>
    %764 = vector.multi_reduction <add>, %763, %cst_502 [0] : vector<4x8x32xf32> to vector<8x32xf32>
    %c6_503 = arith.constant 6 : index
    %c0_504 = arith.constant 0 : index
    %c0_505 = arith.constant 0 : index
    %765 = vector.load %arg10[%c6_503, %c0_504, %c0_505] : memref<8x1x32xf32, #tpu.memory_space<vmem>>, vector<1x1x32xf32>
    %766 = vector.shape_cast %765 : vector<1x1x32xf32> to vector<1x32xf32>
    %767 = vector.broadcast %766 : vector<1x32xf32> to vector<8x32xf32>
    %768 = arith.addf %764, %767 : vector<8x32xf32>
    %769 = arith.addf %481, %768 : vector<8x32xf32>
    %cst_506 = arith.constant dense<0.000000e+00> : vector<8xf32>
    %770 = vector.multi_reduction <add>, %769, %cst_506 [1] : vector<8x32xf32> to vector<8xf32>
    %771 = vector.shape_cast %770 : vector<8xf32> to vector<8x1xf32>
    %cst_507 = arith.constant 3.200000e+01 : f32
    %772 = vector.broadcast %cst_507 : f32 to vector<8x1xf32>
    %773 = arith.divf %771, %772 : vector<8x1xf32>
    %774 = vector.broadcast %773 : vector<8x1xf32> to vector<8x32xf32>
    %775 = arith.subf %769, %774 : vector<8x32xf32>
    %776 = arith.mulf %775, %775 : vector<8x32xf32>
    %cst_508 = arith.constant dense<0.000000e+00> : vector<8xf32>
    %777 = vector.multi_reduction <add>, %776, %cst_508 [1] : vector<8x32xf32> to vector<8xf32>
    %778 = vector.shape_cast %777 : vector<8xf32> to vector<8x1xf32>
    %cst_509 = arith.constant 3.200000e+01 : f32
    %779 = vector.broadcast %cst_509 : f32 to vector<8x1xf32>
    %780 = arith.divf %778, %779 : vector<8x1xf32>
    %781 = vector.broadcast %773 : vector<8x1xf32> to vector<8x32xf32>
    %782 = arith.subf %769, %781 : vector<8x32xf32>
    %cst_510 = arith.constant 9.99999974E-6 : f32
    %783 = vector.broadcast %cst_510 : f32 to vector<8x1xf32>
    %784 = arith.addf %780, %783 : vector<8x1xf32>
    %785 = math.rsqrt %784 : vector<8x1xf32>
    %786 = vector.broadcast %785 : vector<8x1xf32> to vector<8x32xf32>
    %787 = arith.mulf %782, %786 : vector<8x32xf32>
    %c6_511 = arith.constant 6 : index
    %c0_512 = arith.constant 0 : index
    %c0_513 = arith.constant 0 : index
    %788 = vector.load %arg11[%c6_511, %c0_512, %c0_513] : memref<8x1x32xf32, #tpu.memory_space<vmem>>, vector<1x1x32xf32>
    %789 = vector.shape_cast %788 : vector<1x1x32xf32> to vector<1x32xf32>
    %790 = vector.broadcast %789 : vector<1x32xf32> to vector<8x32xf32>
    %791 = arith.mulf %787, %790 : vector<8x32xf32>
    %c6_514 = arith.constant 6 : index
    %c0_515 = arith.constant 0 : index
    %c0_516 = arith.constant 0 : index
    %792 = vector.load %arg12[%c6_514, %c0_515, %c0_516] : memref<8x1x32xf32, #tpu.memory_space<vmem>>, vector<1x1x32xf32>
    %793 = vector.shape_cast %792 : vector<1x1x32xf32> to vector<1x32xf32>
    %794 = vector.broadcast %793 : vector<1x32xf32> to vector<8x32xf32>
    %795 = arith.addf %791, %794 : vector<8x32xf32>
    %c6_517 = arith.constant 6 : index
    %c0_518 = arith.constant 0 : index
    %c0_519 = arith.constant 0 : index
    %796 = vector.load %arg13[%c6_517, %c0_518, %c0_519] : memref<8x32x64xf32, #tpu.memory_space<vmem>>, vector<1x32x64xf32>
    %797 = vector.shape_cast %796 : vector<1x32x64xf32> to vector<32x64xf32>
    %cst_520 = arith.constant dense<0.000000e+00> : vector<8x64xf32>
    %798 = tpu.matmul %795, %797, %cst_520 {dimension_numbers = #tpu.dot_dimension_numbers<[1], [0], [0], [1], [0, 0, 1, 1], [], []>} : vector<8x32xf32>, vector<32x64xf32>, vector<8x64xf32> -> vector<8x64xf32>
    %c6_521 = arith.constant 6 : index
    %c0_522 = arith.constant 0 : index
    %c0_523 = arith.constant 0 : index
    %799 = vector.load %arg14[%c6_521, %c0_522, %c0_523] : memref<8x1x64xf32, #tpu.memory_space<vmem>>, vector<1x1x64xf32>
    %800 = vector.shape_cast %799 : vector<1x1x64xf32> to vector<1x64xf32>
    %801 = vector.broadcast %800 : vector<1x64xf32> to vector<8x64xf32>
    %802 = arith.addf %798, %801 : vector<8x64xf32>
    %cst_524 = arith.constant 0.000000e+00 : f32
    %803 = vector.broadcast %cst_524 : f32 to vector<8x64xf32>
    %804 = arith.maximumf %802, %803 : vector<8x64xf32>
    %c6_525 = arith.constant 6 : index
    %c0_526 = arith.constant 0 : index
    %c0_527 = arith.constant 0 : index
    %805 = vector.load %arg15[%c6_525, %c0_526, %c0_527] : memref<8x64x32xf32, #tpu.memory_space<vmem>>, vector<1x64x32xf32>
    %806 = vector.shape_cast %805 : vector<1x64x32xf32> to vector<64x32xf32>
    %cst_528 = arith.constant dense<0.000000e+00> : vector<8x32xf32>
    %807 = tpu.matmul %804, %806, %cst_528 {dimension_numbers = #tpu.dot_dimension_numbers<[1], [0], [0], [1], [0, 0, 1, 1], [], []>} : vector<8x64xf32>, vector<64x32xf32>, vector<8x32xf32> -> vector<8x32xf32>
    %c6_529 = arith.constant 6 : index
    %c0_530 = arith.constant 0 : index
    %c0_531 = arith.constant 0 : index
    %808 = vector.load %arg16[%c6_529, %c0_530, %c0_531] : memref<8x1x32xf32, #tpu.memory_space<vmem>>, vector<1x1x32xf32>
    %809 = vector.shape_cast %808 : vector<1x1x32xf32> to vector<1x32xf32>
    %810 = vector.broadcast %809 : vector<1x32xf32> to vector<8x32xf32>
    %811 = arith.addf %807, %810 : vector<8x32xf32>
    %812 = arith.addf %795, %811 : vector<8x32xf32>
    %cst_532 = arith.constant dense<0.000000e+00> : vector<8xf32>
    %813 = vector.multi_reduction <add>, %812, %cst_532 [1] : vector<8x32xf32> to vector<8xf32>
    %814 = vector.shape_cast %813 : vector<8xf32> to vector<8x1xf32>
    %cst_533 = arith.constant 3.200000e+01 : f32
    %815 = vector.broadcast %cst_533 : f32 to vector<8x1xf32>
    %816 = arith.divf %814, %815 : vector<8x1xf32>
    %817 = vector.broadcast %816 : vector<8x1xf32> to vector<8x32xf32>
    %818 = arith.subf %812, %817 : vector<8x32xf32>
    %819 = arith.mulf %818, %818 : vector<8x32xf32>
    %cst_534 = arith.constant dense<0.000000e+00> : vector<8xf32>
    %820 = vector.multi_reduction <add>, %819, %cst_534 [1] : vector<8x32xf32> to vector<8xf32>
    %821 = vector.shape_cast %820 : vector<8xf32> to vector<8x1xf32>
    %cst_535 = arith.constant 3.200000e+01 : f32
    %822 = vector.broadcast %cst_535 : f32 to vector<8x1xf32>
    %823 = arith.divf %821, %822 : vector<8x1xf32>
    %824 = vector.broadcast %816 : vector<8x1xf32> to vector<8x32xf32>
    %825 = arith.subf %812, %824 : vector<8x32xf32>
    %cst_536 = arith.constant 9.99999974E-6 : f32
    %826 = vector.broadcast %cst_536 : f32 to vector<8x1xf32>
    %827 = arith.addf %823, %826 : vector<8x1xf32>
    %828 = math.rsqrt %827 : vector<8x1xf32>
    %829 = vector.broadcast %828 : vector<8x1xf32> to vector<8x32xf32>
    %830 = arith.mulf %825, %829 : vector<8x32xf32>
    %c6_537 = arith.constant 6 : index
    %c0_538 = arith.constant 0 : index
    %c0_539 = arith.constant 0 : index
    %831 = vector.load %arg17[%c6_537, %c0_538, %c0_539] : memref<8x1x32xf32, #tpu.memory_space<vmem>>, vector<1x1x32xf32>
    %832 = vector.shape_cast %831 : vector<1x1x32xf32> to vector<1x32xf32>
    %833 = vector.broadcast %832 : vector<1x32xf32> to vector<8x32xf32>
    %834 = arith.mulf %830, %833 : vector<8x32xf32>
    %c6_540 = arith.constant 6 : index
    %c0_541 = arith.constant 0 : index
    %c0_542 = arith.constant 0 : index
    %835 = vector.load %arg18[%c6_540, %c0_541, %c0_542] : memref<8x1x32xf32, #tpu.memory_space<vmem>>, vector<1x1x32xf32>
    %836 = vector.shape_cast %835 : vector<1x1x32xf32> to vector<1x32xf32>
    %837 = vector.broadcast %836 : vector<1x32xf32> to vector<8x32xf32>
    %838 = arith.addf %834, %837 : vector<8x32xf32>
    %839 = vector.shape_cast %838 : vector<8x32xf32> to vector<1x8x32xf32>
    %840 = vector.broadcast %839 : vector<1x8x32xf32> to vector<4x8x32xf32>
    %841 = vector.shape_cast %838 : vector<8x32xf32> to vector<1x8x32xf32>
    %842 = vector.broadcast %841 : vector<1x8x32xf32> to vector<4x8x32xf32>
    %843 = vector.shape_cast %838 : vector<8x32xf32> to vector<1x8x32xf32>
    %844 = vector.broadcast %843 : vector<1x8x32xf32> to vector<4x8x32xf32>
    %c7 = arith.constant 7 : index
    %c0_543 = arith.constant 0 : index
    %c0_544 = arith.constant 0 : index
    %c0_545 = arith.constant 0 : index
    %845 = vector.load %arg3[%c7, %c0_543, %c0_544, %c0_545] : memref<8x4x32x8xf32, #tpu.memory_space<vmem>>, vector<1x4x32x8xf32>
    %846 = vector.shape_cast %845 : vector<1x4x32x8xf32> to vector<4x32x8xf32>
    "tpu.trace_start"() <{level = 10 : i32, message = "hsd,hde->hse"}> : () -> ()
    %cst_546 = arith.constant dense<0.000000e+00> : vector<4x8x8xf32>
    %847 = tpu.matmul %840, %846, %cst_546 {dimension_numbers = #tpu.dot_dimension_numbers<[2], [1], [1], [2], [0, 0, 0, 1, 1, 2], [0], [0]>} : vector<4x8x32xf32>, vector<4x32x8xf32>, vector<4x8x8xf32> -> vector<4x8x8xf32>
    "tpu.trace_stop"() : () -> ()
    %c7_547 = arith.constant 7 : index
    %c0_548 = arith.constant 0 : index
    %c0_549 = arith.constant 0 : index
    %c0_550 = arith.constant 0 : index
    %848 = vector.load %arg4[%c7_547, %c0_548, %c0_549, %c0_550] : memref<8x4x1x8xf32, #tpu.memory_space<vmem>>, vector<1x4x1x8xf32>
    %849 = vector.shape_cast %848 : vector<1x4x1x8xf32> to vector<4x1x8xf32>
    %850 = vector.broadcast %849 : vector<4x1x8xf32> to vector<4x8x8xf32>
    %851 = arith.addf %847, %850 : vector<4x8x8xf32>
    %c7_551 = arith.constant 7 : index
    %c0_552 = arith.constant 0 : index
    %c0_553 = arith.constant 0 : index
    %c0_554 = arith.constant 0 : index
    %852 = vector.load %arg5[%c7_551, %c0_552, %c0_553, %c0_554] : memref<8x4x32x8xf32, #tpu.memory_space<vmem>>, vector<1x4x32x8xf32>
    %853 = vector.shape_cast %852 : vector<1x4x32x8xf32> to vector<4x32x8xf32>
    "tpu.trace_start"() <{level = 10 : i32, message = "hsd,hde->hse"}> : () -> ()
    %cst_555 = arith.constant dense<0.000000e+00> : vector<4x8x8xf32>
    %854 = tpu.matmul %842, %853, %cst_555 {dimension_numbers = #tpu.dot_dimension_numbers<[2], [1], [1], [2], [0, 0, 0, 1, 1, 2], [0], [0]>} : vector<4x8x32xf32>, vector<4x32x8xf32>, vector<4x8x8xf32> -> vector<4x8x8xf32>
    "tpu.trace_stop"() : () -> ()
    %c7_556 = arith.constant 7 : index
    %c0_557 = arith.constant 0 : index
    %c0_558 = arith.constant 0 : index
    %c0_559 = arith.constant 0 : index
    %855 = vector.load %arg6[%c7_556, %c0_557, %c0_558, %c0_559] : memref<8x4x1x8xf32, #tpu.memory_space<vmem>>, vector<1x4x1x8xf32>
    %856 = vector.shape_cast %855 : vector<1x4x1x8xf32> to vector<4x1x8xf32>
    %857 = vector.broadcast %856 : vector<4x1x8xf32> to vector<4x8x8xf32>
    %858 = arith.addf %854, %857 : vector<4x8x8xf32>
    %c7_560 = arith.constant 7 : index
    %c0_561 = arith.constant 0 : index
    %c0_562 = arith.constant 0 : index
    %c0_563 = arith.constant 0 : index
    %859 = vector.load %arg7[%c7_560, %c0_561, %c0_562, %c0_563] : memref<8x4x32x8xf32, #tpu.memory_space<vmem>>, vector<1x4x32x8xf32>
    %860 = vector.shape_cast %859 : vector<1x4x32x8xf32> to vector<4x32x8xf32>
    "tpu.trace_start"() <{level = 10 : i32, message = "hsd,hde->hse"}> : () -> ()
    %cst_564 = arith.constant dense<0.000000e+00> : vector<4x8x8xf32>
    %861 = tpu.matmul %844, %860, %cst_564 {dimension_numbers = #tpu.dot_dimension_numbers<[2], [1], [1], [2], [0, 0, 0, 1, 1, 2], [0], [0]>} : vector<4x8x32xf32>, vector<4x32x8xf32>, vector<4x8x8xf32> -> vector<4x8x8xf32>
    "tpu.trace_stop"() : () -> ()
    %c7_565 = arith.constant 7 : index
    %c0_566 = arith.constant 0 : index
    %c0_567 = arith.constant 0 : index
    %c0_568 = arith.constant 0 : index
    %862 = vector.load %arg8[%c7_565, %c0_566, %c0_567, %c0_568] : memref<8x4x1x8xf32, #tpu.memory_space<vmem>>, vector<1x4x1x8xf32>
    %863 = vector.shape_cast %862 : vector<1x4x1x8xf32> to vector<4x1x8xf32>
    %864 = vector.broadcast %863 : vector<4x1x8xf32> to vector<4x8x8xf32>
    %865 = arith.addf %861, %864 : vector<4x8x8xf32>
    "tpu.trace_start"() <{level = 10 : i32, message = "hqe,hke->hqk"}> : () -> ()
    %cst_569 = arith.constant dense<0.000000e+00> : vector<4x8x8xf32>
    %866 = tpu.matmul %851, %858, %cst_569 {dimension_numbers = #tpu.dot_dimension_numbers<[2], [2], [1], [1], [0, 0, 0, 1, 1, 1], [0], [0]>} : vector<4x8x8xf32>, vector<4x8x8xf32>, vector<4x8x8xf32> -> vector<4x8x8xf32>
    "tpu.trace_stop"() : () -> ()
    %cst_570 = arith.constant 0.353553385 : f32
    %867 = vector.broadcast %cst_570 : f32 to vector<4x8x8xf32>
    %868 = arith.mulf %866, %867 : vector<4x8x8xf32>
    %cst_571 = arith.constant dense<0xFF800000> : vector<4x8xf32>
    %869 = vector.multi_reduction <maximumf>, %868, %cst_571 [2] : vector<4x8x8xf32> to vector<4x8xf32>
    %870 = vector.shape_cast %869 : vector<4x8xf32> to vector<4x8x1xf32>
    %871 = vector.broadcast %870 : vector<4x8x1xf32> to vector<4x8x8xf32>
    %872 = arith.subf %868, %871 : vector<4x8x8xf32>
    %873 = math.exp %872 : vector<4x8x8xf32>
    %cst_572 = arith.constant dense<0.000000e+00> : vector<4x8xf32>
    %874 = vector.multi_reduction <add>, %873, %cst_572 [2] : vector<4x8x8xf32> to vector<4x8xf32>
    %875 = vector.shape_cast %874 : vector<4x8xf32> to vector<4x8x1xf32>
    %876 = tpu.reciprocal %875 {approx = true} : vector<4x8x1xf32> -> vector<4x8x1xf32>
    %877 = vector.broadcast %876 : vector<4x8x1xf32> to vector<4x8x8xf32>
    %878 = arith.mulf %873, %877 : vector<4x8x8xf32>
    "tpu.trace_start"() <{level = 10 : i32, message = "hqk,hke->hqe"}> : () -> ()
    %cst_573 = arith.constant dense<0.000000e+00> : vector<4x8x8xf32>
    %879 = tpu.matmul %878, %865, %cst_573 {dimension_numbers = #tpu.dot_dimension_numbers<[2], [1], [1], [2], [0, 0, 0, 1, 1, 2], [0], [0]>} : vector<4x8x8xf32>, vector<4x8x8xf32>, vector<4x8x8xf32> -> vector<4x8x8xf32>
    "tpu.trace_stop"() : () -> ()
    %c7_574 = arith.constant 7 : index
    %c0_575 = arith.constant 0 : index
    %c0_576 = arith.constant 0 : index
    %c0_577 = arith.constant 0 : index
    %880 = vector.load %arg9[%c7_574, %c0_575, %c0_576, %c0_577] : memref<8x4x8x32xf32, #tpu.memory_space<vmem>>, vector<1x4x8x32xf32>
    %881 = vector.shape_cast %880 : vector<1x4x8x32xf32> to vector<4x8x32xf32>
    "tpu.trace_start"() <{level = 10 : i32, message = "hqe,hed->hqd"}> : () -> ()
    %cst_578 = arith.constant dense<0.000000e+00> : vector<4x8x32xf32>
    %882 = tpu.matmul %879, %881, %cst_578 {dimension_numbers = #tpu.dot_dimension_numbers<[2], [1], [1], [2], [0, 0, 0, 1, 1, 2], [0], [0]>} : vector<4x8x8xf32>, vector<4x8x32xf32>, vector<4x8x32xf32> -> vector<4x8x32xf32>
    "tpu.trace_stop"() : () -> ()
    %cst_579 = arith.constant dense<0.000000e+00> : vector<8x32xf32>
    %883 = vector.multi_reduction <add>, %882, %cst_579 [0] : vector<4x8x32xf32> to vector<8x32xf32>
    %c7_580 = arith.constant 7 : index
    %c0_581 = arith.constant 0 : index
    %c0_582 = arith.constant 0 : index
    %884 = vector.load %arg10[%c7_580, %c0_581, %c0_582] : memref<8x1x32xf32, #tpu.memory_space<vmem>>, vector<1x1x32xf32>
    %885 = vector.shape_cast %884 : vector<1x1x32xf32> to vector<1x32xf32>
    %886 = vector.broadcast %885 : vector<1x32xf32> to vector<8x32xf32>
    %887 = arith.addf %883, %886 : vector<8x32xf32>
    %888 = arith.addf %838, %887 : vector<8x32xf32>
    %cst_583 = arith.constant dense<0.000000e+00> : vector<8xf32>
    %889 = vector.multi_reduction <add>, %888, %cst_583 [1] : vector<8x32xf32> to vector<8xf32>
    %890 = vector.shape_cast %889 : vector<8xf32> to vector<8x1xf32>
    %cst_584 = arith.constant 3.200000e+01 : f32
    %891 = vector.broadcast %cst_584 : f32 to vector<8x1xf32>
    %892 = arith.divf %890, %891 : vector<8x1xf32>
    %893 = vector.broadcast %892 : vector<8x1xf32> to vector<8x32xf32>
    %894 = arith.subf %888, %893 : vector<8x32xf32>
    %895 = arith.mulf %894, %894 : vector<8x32xf32>
    %cst_585 = arith.constant dense<0.000000e+00> : vector<8xf32>
    %896 = vector.multi_reduction <add>, %895, %cst_585 [1] : vector<8x32xf32> to vector<8xf32>
    %897 = vector.shape_cast %896 : vector<8xf32> to vector<8x1xf32>
    %cst_586 = arith.constant 3.200000e+01 : f32
    %898 = vector.broadcast %cst_586 : f32 to vector<8x1xf32>
    %899 = arith.divf %897, %898 : vector<8x1xf32>
    %900 = vector.broadcast %892 : vector<8x1xf32> to vector<8x32xf32>
    %901 = arith.subf %888, %900 : vector<8x32xf32>
    %cst_587 = arith.constant 9.99999974E-6 : f32
    %902 = vector.broadcast %cst_587 : f32 to vector<8x1xf32>
    %903 = arith.addf %899, %902 : vector<8x1xf32>
    %904 = math.rsqrt %903 : vector<8x1xf32>
    %905 = vector.broadcast %904 : vector<8x1xf32> to vector<8x32xf32>
    %906 = arith.mulf %901, %905 : vector<8x32xf32>
    %c7_588 = arith.constant 7 : index
    %c0_589 = arith.constant 0 : index
    %c0_590 = arith.constant 0 : index
    %907 = vector.load %arg11[%c7_588, %c0_589, %c0_590] : memref<8x1x32xf32, #tpu.memory_space<vmem>>, vector<1x1x32xf32>
    %908 = vector.shape_cast %907 : vector<1x1x32xf32> to vector<1x32xf32>
    %909 = vector.broadcast %908 : vector<1x32xf32> to vector<8x32xf32>
    %910 = arith.mulf %906, %909 : vector<8x32xf32>
    %c7_591 = arith.constant 7 : index
    %c0_592 = arith.constant 0 : index
    %c0_593 = arith.constant 0 : index
    %911 = vector.load %arg12[%c7_591, %c0_592, %c0_593] : memref<8x1x32xf32, #tpu.memory_space<vmem>>, vector<1x1x32xf32>
    %912 = vector.shape_cast %911 : vector<1x1x32xf32> to vector<1x32xf32>
    %913 = vector.broadcast %912 : vector<1x32xf32> to vector<8x32xf32>
    %914 = arith.addf %910, %913 : vector<8x32xf32>
    %c7_594 = arith.constant 7 : index
    %c0_595 = arith.constant 0 : index
    %c0_596 = arith.constant 0 : index
    %915 = vector.load %arg13[%c7_594, %c0_595, %c0_596] : memref<8x32x64xf32, #tpu.memory_space<vmem>>, vector<1x32x64xf32>
    %916 = vector.shape_cast %915 : vector<1x32x64xf32> to vector<32x64xf32>
    %cst_597 = arith.constant dense<0.000000e+00> : vector<8x64xf32>
    %917 = tpu.matmul %914, %916, %cst_597 {dimension_numbers = #tpu.dot_dimension_numbers<[1], [0], [0], [1], [0, 0, 1, 1], [], []>} : vector<8x32xf32>, vector<32x64xf32>, vector<8x64xf32> -> vector<8x64xf32>
    %c7_598 = arith.constant 7 : index
    %c0_599 = arith.constant 0 : index
    %c0_600 = arith.constant 0 : index
    %918 = vector.load %arg14[%c7_598, %c0_599, %c0_600] : memref<8x1x64xf32, #tpu.memory_space<vmem>>, vector<1x1x64xf32>
    %919 = vector.shape_cast %918 : vector<1x1x64xf32> to vector<1x64xf32>
    %920 = vector.broadcast %919 : vector<1x64xf32> to vector<8x64xf32>
    %921 = arith.addf %917, %920 : vector<8x64xf32>
    %cst_601 = arith.constant 0.000000e+00 : f32
    %922 = vector.broadcast %cst_601 : f32 to vector<8x64xf32>
    %923 = arith.maximumf %921, %922 : vector<8x64xf32>
    %c7_602 = arith.constant 7 : index
    %c0_603 = arith.constant 0 : index
    %c0_604 = arith.constant 0 : index
    %924 = vector.load %arg15[%c7_602, %c0_603, %c0_604] : memref<8x64x32xf32, #tpu.memory_space<vmem>>, vector<1x64x32xf32>
    %925 = vector.shape_cast %924 : vector<1x64x32xf32> to vector<64x32xf32>
    %cst_605 = arith.constant dense<0.000000e+00> : vector<8x32xf32>
    %926 = tpu.matmul %923, %925, %cst_605 {dimension_numbers = #tpu.dot_dimension_numbers<[1], [0], [0], [1], [0, 0, 1, 1], [], []>} : vector<8x64xf32>, vector<64x32xf32>, vector<8x32xf32> -> vector<8x32xf32>
    %c7_606 = arith.constant 7 : index
    %c0_607 = arith.constant 0 : index
    %c0_608 = arith.constant 0 : index
    %927 = vector.load %arg16[%c7_606, %c0_607, %c0_608] : memref<8x1x32xf32, #tpu.memory_space<vmem>>, vector<1x1x32xf32>
    %928 = vector.shape_cast %927 : vector<1x1x32xf32> to vector<1x32xf32>
    %929 = vector.broadcast %928 : vector<1x32xf32> to vector<8x32xf32>
    %930 = arith.addf %926, %929 : vector<8x32xf32>
    %931 = arith.addf %914, %930 : vector<8x32xf32>
    %cst_609 = arith.constant dense<0.000000e+00> : vector<8xf32>
    %932 = vector.multi_reduction <add>, %931, %cst_609 [1] : vector<8x32xf32> to vector<8xf32>
    %933 = vector.shape_cast %932 : vector<8xf32> to vector<8x1xf32>
    %cst_610 = arith.constant 3.200000e+01 : f32
    %934 = vector.broadcast %cst_610 : f32 to vector<8x1xf32>
    %935 = arith.divf %933, %934 : vector<8x1xf32>
    %936 = vector.broadcast %935 : vector<8x1xf32> to vector<8x32xf32>
    %937 = arith.subf %931, %936 : vector<8x32xf32>
    %938 = arith.mulf %937, %937 : vector<8x32xf32>
    %cst_611 = arith.constant dense<0.000000e+00> : vector<8xf32>
    %939 = vector.multi_reduction <add>, %938, %cst_611 [1] : vector<8x32xf32> to vector<8xf32>
    %940 = vector.shape_cast %939 : vector<8xf32> to vector<8x1xf32>
    %cst_612 = arith.constant 3.200000e+01 : f32
    %941 = vector.broadcast %cst_612 : f32 to vector<8x1xf32>
    %942 = arith.divf %940, %941 : vector<8x1xf32>
    %943 = vector.broadcast %935 : vector<8x1xf32> to vector<8x32xf32>
    %944 = arith.subf %931, %943 : vector<8x32xf32>
    %cst_613 = arith.constant 9.99999974E-6 : f32
    %945 = vector.broadcast %cst_613 : f32 to vector<8x1xf32>
    %946 = arith.addf %942, %945 : vector<8x1xf32>
    %947 = math.rsqrt %946 : vector<8x1xf32>
    %948 = vector.broadcast %947 : vector<8x1xf32> to vector<8x32xf32>
    %949 = arith.mulf %944, %948 : vector<8x32xf32>
    %c7_614 = arith.constant 7 : index
    %c0_615 = arith.constant 0 : index
    %c0_616 = arith.constant 0 : index
    %950 = vector.load %arg17[%c7_614, %c0_615, %c0_616] : memref<8x1x32xf32, #tpu.memory_space<vmem>>, vector<1x1x32xf32>
    %951 = vector.shape_cast %950 : vector<1x1x32xf32> to vector<1x32xf32>
    %952 = vector.broadcast %951 : vector<1x32xf32> to vector<8x32xf32>
    %953 = arith.mulf %949, %952 : vector<8x32xf32>
    %c7_617 = arith.constant 7 : index
    %c0_618 = arith.constant 0 : index
    %c0_619 = arith.constant 0 : index
    %954 = vector.load %arg18[%c7_617, %c0_618, %c0_619] : memref<8x1x32xf32, #tpu.memory_space<vmem>>, vector<1x1x32xf32>
    %955 = vector.shape_cast %954 : vector<1x1x32xf32> to vector<1x32xf32>
    %956 = vector.broadcast %955 : vector<1x32xf32> to vector<8x32xf32>
    %957 = arith.addf %953, %956 : vector<8x32xf32>
    %958 = tpu.concatenate %719, %957 in 1 : vector<8x32xf32>, vector<8x32xf32> -> vector<8x64xf32>
    %c0_620 = arith.constant 0 : index
    %c0_621 = arith.constant 0 : index
    %959 = vector.load %arg19[%c0_620, %c0_621] : memref<64x32xf32, #tpu.memory_space<vmem>>, vector<64x32xf32>
    %cst_622 = arith.constant dense<0.000000e+00> : vector<8x32xf32>
    %960 = tpu.matmul %958, %959, %cst_622 {dimension_numbers = #tpu.dot_dimension_numbers<[1], [0], [0], [1], [0, 0, 1, 1], [], []>} : vector<8x64xf32>, vector<64x32xf32>, vector<8x32xf32> -> vector<8x32xf32>
    %c0_623 = arith.constant 0 : index
    %c0_624 = arith.constant 0 : index
    %961 = vector.load %arg20[%c0_623, %c0_624] : memref<1x32xf32, #tpu.memory_space<vmem>>, vector<1x32xf32>
    %962 = vector.broadcast %961 : vector<1x32xf32> to vector<8x32xf32>
    %963 = arith.addf %960, %962 : vector<8x32xf32>
    %cst_625 = arith.constant 0.000000e+00 : f32
    %964 = vector.broadcast %cst_625 : f32 to vector<8x32xf32>
    %965 = arith.maximumf %963, %964 : vector<8x32xf32>
    %c0_626 = arith.constant 0 : index
    %c0_627 = arith.constant 0 : index
    %966 = vector.load %arg21[%c0_626, %c0_627] : memref<32x16xf32, #tpu.memory_space<vmem>>, vector<32x16xf32>
    %cst_628 = arith.constant dense<0.000000e+00> : vector<8x16xf32>
    %967 = tpu.matmul %965, %966, %cst_628 {dimension_numbers = #tpu.dot_dimension_numbers<[1], [0], [0], [1], [0, 0, 1, 1], [], []>} : vector<8x32xf32>, vector<32x16xf32>, vector<8x16xf32> -> vector<8x16xf32>
    %c0_629 = arith.constant 0 : index
    %c0_630 = arith.constant 0 : index
    %968 = vector.load %arg22[%c0_629, %c0_630] : memref<1x16xf32, #tpu.memory_space<vmem>>, vector<1x16xf32>
    %969 = vector.broadcast %968 : vector<1x16xf32> to vector<8x16xf32>
    %970 = arith.addf %967, %969 : vector<8x16xf32>
    %cst_631 = arith.constant 0.000000e+00 : f32
    %971 = vector.broadcast %cst_631 : f32 to vector<8x16xf32>
    %972 = arith.maximumf %970, %971 : vector<8x16xf32>
    %c0_632 = arith.constant 0 : index
    %c0_633 = arith.constant 0 : index
    %973 = vector.load %arg23[%c0_632, %c0_633] : memref<16x8xf32, #tpu.memory_space<vmem>>, vector<16x8xf32>
    %cst_634 = arith.constant dense<0.000000e+00> : vector<8x8xf32>
    %974 = tpu.matmul %972, %973, %cst_634 {dimension_numbers = #tpu.dot_dimension_numbers<[1], [0], [0], [1], [0, 0, 1, 1], [], []>} : vector<8x16xf32>, vector<16x8xf32>, vector<8x8xf32> -> vector<8x8xf32>
    %c0_635 = arith.constant 0 : index
    %c0_636 = arith.constant 0 : index
    %975 = vector.load %arg24[%c0_635, %c0_636] : memref<1x8xf32, #tpu.memory_space<vmem>>, vector<1x8xf32>
    %976 = vector.broadcast %975 : vector<1x8xf32> to vector<8x8xf32>
    %977 = arith.addf %974, %976 : vector<8x8xf32>
    %c0_637 = arith.constant 0 : index
    %c0_638 = arith.constant 0 : index
    %c0_639 = arith.constant 0 : index
    %978 = vector.load %arg25[%c0_637, %c0_638, %c0_639] : memref<1x8x8xf32, #tpu.memory_space<vmem>>, vector<1x8x8xf32>
    %979 = vector.shape_cast %978 : vector<1x8x8xf32> to vector<8x8xf32>
    %980 = vector.shape_cast %977 : vector<8x8xf32> to vector<1x8x8xf32>
    tpu.vector_store %arg25[%c0_637, %c0_638, %c0_639], %980 {strides = array<i32>} : memref<1x8x8xf32, #tpu.memory_space<vmem>>, vector<1x8x8xf32>,
    return
  }
  func.func @transform_0(%arg0: i32) -> (i32, i32, i32) {
    %c0_i32 = arith.constant 0 : i32
    %c0_i32_0 = arith.constant 0 : i32
    %c0_i32_1 = arith.constant 0 : i32
    return %arg0, %c0_i32, %c0_i32_0 : i32, i32, i32
  }
  func.func @transform_1(%arg0: i32) -> (i32, i32) {
    %c0_i32 = arith.constant 0 : i32
    %c0_i32_0 = arith.constant 0 : i32
    %c0_i32_1 = arith.constant 0 : i32
    return %c0_i32, %c0_i32_0 : i32, i32
  }
  func.func @transform_2(%arg0: i32) -> (i32, i32, i32, i32) {
    %c0_i32 = arith.constant 0 : i32
    %c0_i32_0 = arith.constant 0 : i32
    %c0_i32_1 = arith.constant 0 : i32
    %c0_i32_2 = arith.constant 0 : i32
    %c0_i32_3 = arith.constant 0 : i32
    return %c0_i32, %c0_i32_0, %c0_i32_1, %c0_i32_2 : i32, i32, i32, i32
  }
  func.func @transform_3(%arg0: i32) -> (i32, i32, i32, i32) {
    %c0_i32 = arith.constant 0 : i32
    %c0_i32_0 = arith.constant 0 : i32
    %c0_i32_1 = arith.constant 0 : i32
    %c0_i32_2 = arith.constant 0 : i32
    %c0_i32_3 = arith.constant 0 : i32
    return %c0_i32, %c0_i32_0, %c0_i32_1, %c0_i32_2 : i32, i32, i32, i32
  }
  func.func @transform_4(%arg0: i32) -> (i32, i32, i32, i32) {
    %c0_i32 = arith.constant 0 : i32
    %c0_i32_0 = arith.constant 0 : i32
    %c0_i32_1 = arith.constant 0 : i32
    %c0_i32_2 = arith.constant 0 : i32
    %c0_i32_3 = arith.constant 0 : i32
    return %c0_i32, %c0_i32_0, %c0_i32_1, %c0_i32_2 : i32, i32, i32, i32
  }
  func.func @transform_5(%arg0: i32) -> (i32, i32, i32, i32) {
    %c0_i32 = arith.constant 0 : i32
    %c0_i32_0 = arith.constant 0 : i32
    %c0_i32_1 = arith.constant 0 : i32
    %c0_i32_2 = arith.constant 0 : i32
    %c0_i32_3 = arith.constant 0 : i32
    return %c0_i32, %c0_i32_0, %c0_i32_1, %c0_i32_2 : i32, i32, i32, i32
  }
  func.func @transform_6(%arg0: i32) -> (i32, i32, i32, i32) {
    %c0_i32 = arith.constant 0 : i32
    %c0_i32_0 = arith.constant 0 : i32
    %c0_i32_1 = arith.constant 0 : i32
    %c0_i32_2 = arith.constant 0 : i32
    %c0_i32_3 = arith.constant 0 : i32
    return %c0_i32, %c0_i32_0, %c0_i32_1, %c0_i32_2 : i32, i32, i32, i32
  }
  func.func @transform_7(%arg0: i32) -> (i32, i32, i32, i32) {
    %c0_i32 = arith.constant 0 : i32
    %c0_i32_0 = arith.constant 0 : i32
    %c0_i32_1 = arith.constant 0 : i32
    %c0_i32_2 = arith.constant 0 : i32
    %c0_i32_3 = arith.constant 0 : i32
    return %c0_i32, %c0_i32_0, %c0_i32_1, %c0_i32_2 : i32, i32, i32, i32
  }
  func.func @transform_8(%arg0: i32) -> (i32, i32, i32, i32) {
    %c0_i32 = arith.constant 0 : i32
    %c0_i32_0 = arith.constant 0 : i32
    %c0_i32_1 = arith.constant 0 : i32
    %c0_i32_2 = arith.constant 0 : i32
    %c0_i32_3 = arith.constant 0 : i32
    return %c0_i32, %c0_i32_0, %c0_i32_1, %c0_i32_2 : i32, i32, i32, i32
  }
  func.func @transform_9(%arg0: i32) -> (i32, i32, i32) {
    %c0_i32 = arith.constant 0 : i32
    %c0_i32_0 = arith.constant 0 : i32
    %c0_i32_1 = arith.constant 0 : i32
    %c0_i32_2 = arith.constant 0 : i32
    return %c0_i32, %c0_i32_0, %c0_i32_1 : i32, i32, i32
  }
  func.func @transform_10(%arg0: i32) -> (i32, i32, i32) {
    %c0_i32 = arith.constant 0 : i32
    %c0_i32_0 = arith.constant 0 : i32
    %c0_i32_1 = arith.constant 0 : i32
    %c0_i32_2 = arith.constant 0 : i32
    return %c0_i32, %c0_i32_0, %c0_i32_1 : i32, i32, i32
  }
  func.func @transform_11(%arg0: i32) -> (i32, i32, i32) {
    %c0_i32 = arith.constant 0 : i32
    %c0_i32_0 = arith.constant 0 : i32
    %c0_i32_1 = arith.constant 0 : i32
    %c0_i32_2 = arith.constant 0 : i32
    return %c0_i32, %c0_i32_0, %c0_i32_1 : i32, i32, i32
  }
  func.func @transform_12(%arg0: i32) -> (i32, i32, i32) {
    %c0_i32 = arith.constant 0 : i32
    %c0_i32_0 = arith.constant 0 : i32
    %c0_i32_1 = arith.constant 0 : i32
    %c0_i32_2 = arith.constant 0 : i32
    return %c0_i32, %c0_i32_0, %c0_i32_1 : i32, i32, i32
  }
  func.func @transform_13(%arg0: i32) -> (i32, i32, i32) {
    %c0_i32 = arith.constant 0 : i32
    %c0_i32_0 = arith.constant 0 : i32
    %c0_i32_1 = arith.constant 0 : i32
    %c0_i32_2 = arith.constant 0 : i32
    return %c0_i32, %c0_i32_0, %c0_i32_1 : i32, i32, i32
  }
  func.func @transform_14(%arg0: i32) -> (i32, i32, i32) {
    %c0_i32 = arith.constant 0 : i32
    %c0_i32_0 = arith.constant 0 : i32
    %c0_i32_1 = arith.constant 0 : i32
    %c0_i32_2 = arith.constant 0 : i32
    return %c0_i32, %c0_i32_0, %c0_i32_1 : i32, i32, i32
  }
  func.func @transform_15(%arg0: i32) -> (i32, i32, i32) {
    %c0_i32 = arith.constant 0 : i32
    %c0_i32_0 = arith.constant 0 : i32
    %c0_i32_1 = arith.constant 0 : i32
    %c0_i32_2 = arith.constant 0 : i32
    return %c0_i32, %c0_i32_0, %c0_i32_1 : i32, i32, i32
  }
  func.func @transform_16(%arg0: i32) -> (i32, i32, i32) {
    %c0_i32 = arith.constant 0 : i32
    %c0_i32_0 = arith.constant 0 : i32
    %c0_i32_1 = arith.constant 0 : i32
    %c0_i32_2 = arith.constant 0 : i32
    return %c0_i32, %c0_i32_0, %c0_i32_1 : i32, i32, i32
  }
  func.func @transform_17(%arg0: i32) -> (i32, i32, i32) {
    %c0_i32 = arith.constant 0 : i32
    %c0_i32_0 = arith.constant 0 : i32
    %c0_i32_1 = arith.constant 0 : i32
    %c0_i32_2 = arith.constant 0 : i32
    return %c0_i32, %c0_i32_0, %c0_i32_1 : i32, i32, i32
  }
  func.func @transform_18(%arg0: i32) -> (i32, i32) {
    %c0_i32 = arith.constant 0 : i32
    %c0_i32_0 = arith.constant 0 : i32
    %c0_i32_1 = arith.constant 0 : i32
    return %c0_i32, %c0_i32_0 : i32, i32
  }
  func.func @transform_19(%arg0: i32) -> (i32, i32) {
    %c0_i32 = arith.constant 0 : i32
    %c0_i32_0 = arith.constant 0 : i32
    %c0_i32_1 = arith.constant 0 : i32
    return %c0_i32, %c0_i32_0 : i32, i32
  }
  func.func @transform_20(%arg0: i32) -> (i32, i32) {
    %c0_i32 = arith.constant 0 : i32
    %c0_i32_0 = arith.constant 0 : i32
    %c0_i32_1 = arith.constant 0 : i32
    return %c0_i32, %c0_i32_0 : i32, i32
  }
  func.func @transform_21(%arg0: i32) -> (i32, i32) {
    %c0_i32 = arith.constant 0 : i32
    %c0_i32_0 = arith.constant 0 : i32
    %c0_i32_1 = arith.constant 0 : i32
    return %c0_i32, %c0_i32_0 : i32, i32
  }
  func.func @transform_22(%arg0: i32) -> (i32, i32) {
    %c0_i32 = arith.constant 0 : i32
    %c0_i32_0 = arith.constant 0 : i32
    %c0_i32_1 = arith.constant 0 : i32
    return %c0_i32, %c0_i32_0 : i32, i32
  }
  func.func @transform_23(%arg0: i32) -> (i32, i32) {
    %c0_i32 = arith.constant 0 : i32
    %c0_i32_0 = arith.constant 0 : i32
    %c0_i32_1 = arith.constant 0 : i32
    return %c0_i32, %c0_i32_0 : i32, i32
  }
  func.func @transform_24(%arg0: i32) -> (i32, i32, i32) {
    %c0_i32 = arith.constant 0 : i32
    %c0_i32_0 = arith.constant 0 : i32
    %c0_i32_1 = arith.constant 0 : i32
    return %arg0, %c0_i32, %c0_i32_0 : i32, i32, i32
  }
}

</mosaic_0001>

<llo_original>
// kernel: multibert_v2_forward.1
$region0: #{multibert_v2_forward.1}
  #allocation0 [shape = 'u32[]', space=smem, size = 0x4, offset = 0x4, fixed_abs, tag = 'smem constant byte address 0x4 - core index']
  #allocation1 [shape = 'u32[72,128]{1,0:T(1,128)}', space=vmem, size = 0x9000, scoped, tag = 'internal scratch']
  %s0 = inlined_call_operand.vmem [shape: f32[2,8,64], index: 0, kind: input, shape index: {}]
  %s1 = inlined_call_operand.vmem [shape: f32[8,64], index: 1, kind: input, shape index: {}]
  %s2 = inlined_call_operand.vmem [shape: f32[8,4,32,8], index: 2, kind: input, shape index: {}]
  %s3 = inlined_call_operand.vmem [shape: f32[8,4,1,8], index: 3, kind: input, shape index: {}]
  %s4 = inlined_call_operand.vmem [shape: f32[8,4,32,8], index: 4, kind: input, shape index: {}]
  %s5 = inlined_call_operand.vmem [shape: f32[8,4,1,8], index: 5, kind: input, shape index: {}]
  %s6 = inlined_call_operand.vmem [shape: f32[8,4,32,8], index: 6, kind: input, shape index: {}]
  %s7 = inlined_call_operand.vmem [shape: f32[8,4,1,8], index: 7, kind: input, shape index: {}]
  %s8 = inlined_call_operand.vmem [shape: f32[8,4,8,32], index: 8, kind: input, shape index: {}]
  %s9 = inlined_call_operand.vmem [shape: f32[8,1,32], index: 9, kind: input, shape index: {}]
  %s10 = inlined_call_operand.vmem [shape: f32[8,1,32], index: 10, kind: input, shape index: {}]
  %s11 = inlined_call_operand.vmem [shape: f32[8,1,32], index: 11, kind: input, shape index: {}]
  %s12 = inlined_call_operand.vmem [shape: f32[8,32,64], index: 12, kind: input, shape index: {}]
  %s13 = inlined_call_operand.vmem [shape: f32[8,1,64], index: 13, kind: input, shape index: {}]
  %s14 = inlined_call_operand.vmem [shape: f32[8,64,32], index: 14, kind: input, shape index: {}]
  %s15 = inlined_call_operand.vmem [shape: f32[8,1,32], index: 15, kind: input, shape index: {}]
  %s16 = inlined_call_operand.vmem [shape: f32[8,1,32], index: 16, kind: input, shape index: {}]
  %s17 = inlined_call_operand.vmem [shape: f32[8,1,32], index: 17, kind: input, shape index: {}]
  %s18 = inlined_call_operand.vmem [shape: f32[64,32], index: 18, kind: input, shape index: {}]
  %s19 = inlined_call_operand.vmem [shape: f32[1,32], index: 19, kind: input, shape index: {}]
  %s20 = inlined_call_operand.vmem [shape: f32[32,16], index: 20, kind: input, shape index: {}]
  %s21 = inlined_call_operand.vmem [shape: f32[1,16], index: 21, kind: input, shape index: {}]
  %s22 = inlined_call_operand.vmem [shape: f32[16,8], index: 22, kind: input, shape index: {}]
  %s23 = inlined_call_operand.vmem [shape: f32[1,8], index: 23, kind: input, shape index: {}]
  %s24 = inlined_call_operand.vmem [shape: f32[2,8,8], index: 24, kind: output, shape index: {}]
  %s25 = sld [smem:[#allocation0]]
  $region129: #{multibert_v2_forward.1} parent=0
    _
  %s27 = ssub.s32 1, %s25
  %s28 = scalar_select 0, %s27, %s25
  loop: start=0, step=1, limit=4
  $region2: #{multibert_v2_forward.1} parent=0 // loop_pre_header
    _
  $region3: #{multibert_v2_forward.1} parent=0 // loop_header
    %s30 = sphi 0, %s34
    %p31 = scmp.ge.s32.totalorder %s30, 4
    %s40 = sphi 0, %s42
    %s43 = sphi 0, %s40
    %s44 = sphi 0, %s43
    %s60 = sphi 0, %s44
    %s64 = sphi 0, %s64
    %s66 = sphi 0, %s64
    %s67 = sphi 0, %s66
    %s81 = sphi 0, %s67
    %s85 = sphi 0, %s85
    %s87 = sphi 0, %s85
    %s88 = sphi 0, %s87
    %s102 = sphi 0, %s88
    %s106 = sphi 0, %s106
    %s108 = sphi 0, %s106
    %s109 = sphi 0, %s108
    %s123 = sphi 0, %s109
    %s127 = sphi 0, %s127
    %s129 = sphi 0, %s127
    %s130 = sphi 0, %s129
    %s144 = sphi 0, %s130
    %s148 = sphi 0, %s148
    %s150 = sphi 0, %s148
    %s151 = sphi 0, %s150
    %s165 = sphi 0, %s151
    %s169 = sphi 0, %s169
    %s171 = sphi 0, %s169
    %s172 = sphi 0, %s171
    %s186 = sphi 0, %s172
    %s190 = sphi 0, %s190
    %s192 = sphi 0, %s190
    %s193 = sphi 0, %s192
    %s207 = sphi 0, %s193
    %s211 = sphi 0, %s211
    %s213 = sphi 0, %s211
    %s214 = sphi 0, %s213
    %s228 = sphi 0, %s214
    %s232 = sphi 0, %s232
    %s234 = sphi 0, %s232
    %s235 = sphi 0, %s234
    %s249 = sphi 0, %s235
    %s253 = sphi 0, %s253
    %s255 = sphi 0, %s253
    %s256 = sphi 0, %s255
    %s270 = sphi 0, %s256
    %s274 = sphi 0, %s274
    %s276 = sphi 0, %s274
    %s277 = sphi 0, %s276
    %s291 = sphi 0, %s277
    %s295 = sphi 0, %s295
    %s297 = sphi 0, %s295
    %s298 = sphi 0, %s297
    %s312 = sphi 0, %s298
    %s316 = sphi 0, %s316
    %s318 = sphi 0, %s316
    %s319 = sphi 0, %s318
    %s333 = sphi 0, %s319
    %s337 = sphi 0, %s337
    %s339 = sphi 0, %s337
    %s340 = sphi 0, %s339
    %s354 = sphi 0, %s340
    %s358 = sphi 0, %s358
    %s360 = sphi 0, %s358
    %s361 = sphi 0, %s360
    %s375 = sphi 0, %s361
    %s379 = sphi 0, %s379
    %s381 = sphi 0, %s379
    %s382 = sphi 0, %s381
    %s396 = sphi 0, %s382
    %s400 = sphi 0, %s400
    %s402 = sphi 0, %s400
    %s403 = sphi 0, %s402
    %s417 = sphi 0, %s403
    %s421 = sphi 0, %s421
    %s423 = sphi 0, %s421
    %s424 = sphi 0, %s423
    %s438 = sphi 0, %s424
    %s442 = sphi 0, %s442
    %s444 = sphi 0, %s442
    %s445 = sphi 0, %s444
    %s459 = sphi 0, %s445
    %s463 = sphi 0, %s463
    %s465 = sphi 0, %s463
    %s466 = sphi 0, %s465
    %s480 = sphi 0, %s466
    %s484 = sphi 0, %s484
    %s486 = sphi 0, %s484
    %s487 = sphi 0, %s486
    %s501 = sphi 0, %s487
    %s505 = sphi 0, %s505
    %s507 = sphi 0, %s505
    %s508 = sphi 0, %s507
    %s522 = sphi 0, %s508
    %s526 = sphi 0, %s526
    %s528 = sphi 0, %s526
    %s529 = sphi 0, %s528
    %s543 = sphi 0, %s529
    %s549 = sphi 0, %s551
    %s552 = sphi 0, %s549
    %s553 = sphi 0, %s552
    %s569 = sphi 0, %s553
  $region4: #{multibert_v2_forward.1} parent=0 // loop_header_branch
    %33 = sbr.rel (%p31) target = $region8
  $region5: #{multibert_v2_forward.1} parent=0 // loop_body
    %s35 = ssub.s32 %s30, 1
    %s36 = ssub.s32 %s30, 2
    %s37 = sadd.s32 %s30, 1
    %s38 = ssub.s32 %s30, %s37
    %p39 = scmp.eq.s32.totalorder %s38, 0
    %s41 = sadd.s32 %s40, 1
    %s42 = scalar_select %p39, %s40, %s41
    %p45 = pneg %p39
    %p46 = scmp.eq.s32.totalorder %s30, 1
    %p47 = por %p45, %p46
    %p48 = scmp.ne.s32.totalorder %s40, %s43
    %p49 = scmp.eq.s32.totalorder %s30, 0
    %p50 = por %p48, %p49
    %p51 = scmp.ne.s32.totalorder %s40, %s43
    %p52 = scmp.eq.s32.totalorder %s35, 1
    %p53 = por %p51, %p52
    %p54 = scmp.ne.s32.totalorder %s43, %s44
    %p55 = scmp.eq.s32.totalorder %s35, 0
    %p56 = por %p54, %p55
    %p57 = scmp.ne.s32.totalorder %s43, %s44
    %p58 = scmp.eq.s32.totalorder %s36, 1
    %p59 = por %p57, %p58
    %p61 = scmp.ne.s32.totalorder %s44, %s60
    %p62 = scmp.eq.s32.totalorder %s36, 0
    %p63 = por %p61, %p62
    %s65 = sadd.s32 %s64, 1
    %p68 = scmp.eq.s32.totalorder %s30, 1
    %p69 = scmp.ne.s32.totalorder %s64, %s66
    %p70 = scmp.eq.s32.totalorder %s30, 0
    %p71 = por %p69, %p70
    %p72 = scmp.ne.s32.totalorder %s64, %s66
    %p73 = scmp.eq.s32.totalorder %s35, 1
    %p74 = por %p72, %p73
    %p75 = scmp.ne.s32.totalorder %s66, %s67
    %p76 = scmp.eq.s32.totalorder %s35, 0
    %p77 = por %p75, %p76
    %p78 = scmp.ne.s32.totalorder %s66, %s67
    %p79 = scmp.eq.s32.totalorder %s36, 1
    %p80 = por %p78, %p79
    %p82 = scmp.ne.s32.totalorder %s67, %s81
    %p83 = scmp.eq.s32.totalorder %s36, 0
    %p84 = por %p82, %p83
    %s86 = sadd.s32 %s85, 1
    %p89 = scmp.eq.s32.totalorder %s30, 1
    %p90 = scmp.ne.s32.totalorder %s85, %s87
    %p91 = scmp.eq.s32.totalorder %s30, 0
    %p92 = por %p90, %p91
    %p93 = scmp.ne.s32.totalorder %s85, %s87
    %p94 = scmp.eq.s32.totalorder %s35, 1
    %p95 = por %p93, %p94
    %p96 = scmp.ne.s32.totalorder %s87, %s88
    %p97 = scmp.eq.s32.totalorder %s35, 0
    %p98 = por %p96, %p97
    %p99 = scmp.ne.s32.totalorder %s87, %s88
    %p100 = scmp.eq.s32.totalorder %s36, 1
    %p101 = por %p99, %p100
    %p103 = scmp.ne.s32.totalorder %s88, %s102
    %p104 = scmp.eq.s32.totalorder %s36, 0
    %p105 = por %p103, %p104
    %s107 = sadd.s32 %s106, 1
    %p110 = scmp.eq.s32.totalorder %s30, 1
    %p111 = scmp.ne.s32.totalorder %s106, %s108
    %p112 = scmp.eq.s32.totalorder %s30, 0
    %p113 = por %p111, %p112
    %p114 = scmp.ne.s32.totalorder %s106, %s108
    %p115 = scmp.eq.s32.totalorder %s35, 1
    %p116 = por %p114, %p115
    %p117 = scmp.ne.s32.totalorder %s108, %s109
    %p118 = scmp.eq.s32.totalorder %s35, 0
    %p119 = por %p117, %p118
    %p120 = scmp.ne.s32.totalorder %s108, %s109
    %p121 = scmp.eq.s32.totalorder %s36, 1
    %p122 = por %p120, %p121
    %p124 = scmp.ne.s32.totalorder %s109, %s123
    %p125 = scmp.eq.s32.totalorder %s36, 0
    %p126 = por %p124, %p125
    %s128 = sadd.s32 %s127, 1
    %p131 = scmp.eq.s32.totalorder %s30, 1
    %p132 = scmp.ne.s32.totalorder %s127, %s129
    %p133 = scmp.eq.s32.totalorder %s30, 0
    %p134 = por %p132, %p133
    %p135 = scmp.ne.s32.totalorder %s127, %s129
    %p136 = scmp.eq.s32.totalorder %s35, 1
    %p137 = por %p135, %p136
    %p138 = scmp.ne.s32.totalorder %s129, %s130
    %p139 = scmp.eq.s32.totalorder %s35, 0
    %p140 = por %p138, %p139
    %p141 = scmp.ne.s32.totalorder %s129, %s130
    %p142 = scmp.eq.s32.totalorder %s36, 1
    %p143 = por %p141, %p142
    %p145 = scmp.ne.s32.totalorder %s130, %s144
    %p146 = scmp.eq.s32.totalorder %s36, 0
    %p147 = por %p145, %p146
    %s149 = sadd.s32 %s148, 1
    %p152 = scmp.eq.s32.totalorder %s30, 1
    %p153 = scmp.ne.s32.totalorder %s148, %s150
    %p154 = scmp.eq.s32.totalorder %s30, 0
    %p155 = por %p153, %p154
    %p156 = scmp.ne.s32.totalorder %s148, %s150
    %p157 = scmp.eq.s32.totalorder %s35, 1
    %p158 = por %p156, %p157
    %p159 = scmp.ne.s32.totalorder %s150, %s151
    %p160 = scmp.eq.s32.totalorder %s35, 0
    %p161 = por %p159, %p160
    %p162 = scmp.ne.s32.totalorder %s150, %s151
    %p163 = scmp.eq.s32.totalorder %s36, 1
    %p164 = por %p162, %p163
    %p166 = scmp.ne.s32.totalorder %s151, %s165
    %p167 = scmp.eq.s32.totalorder %s36, 0
    %p168 = por %p166, %p167
    %s170 = sadd.s32 %s169, 1
    %p173 = scmp.eq.s32.totalorder %s30, 1
    %p174 = scmp.ne.s32.totalorder %s169, %s171
    %p175 = scmp.eq.s32.totalorder %s30, 0
    %p176 = por %p174, %p175
    %p177 = scmp.ne.s32.totalorder %s169, %s171
    %p178 = scmp.eq.s32.totalorder %s35, 1
    %p179 = por %p177, %p178
    %p180 = scmp.ne.s32.totalorder %s171, %s172
    %p181 = scmp.eq.s32.totalorder %s35, 0
    %p182 = por %p180, %p181
    %p183 = scmp.ne.s32.totalorder %s171, %s172
    %p184 = scmp.eq.s32.totalorder %s36, 1
    %p185 = por %p183, %p184
    %p187 = scmp.ne.s32.totalorder %s172, %s186
    %p188 = scmp.eq.s32.totalorder %s36, 0
    %p189 = por %p187, %p188
    %s191 = sadd.s32 %s190, 1
    %p194 = scmp.eq.s32.totalorder %s30, 1
    %p195 = scmp.ne.s32.totalorder %s190, %s192
    %p196 = scmp.eq.s32.totalorder %s30, 0
    %p197 = por %p195, %p196
    %p198 = scmp.ne.s32.totalorder %s190, %s192
    %p199 = scmp.eq.s32.totalorder %s35, 1
    %p200 = por %p198, %p199
    %p201 = scmp.ne.s32.totalorder %s192, %s193
    %p202 = scmp.eq.s32.totalorder %s35, 0
    %p203 = por %p201, %p202
    %p204 = scmp.ne.s32.totalorder %s192, %s193
    %p205 = scmp.eq.s32.totalorder %s36, 1
    %p206 = por %p204, %p205
    %p208 = scmp.ne.s32.totalorder %s193, %s207
    %p209 = scmp.eq.s32.totalorder %s36, 0
    %p210 = por %p208, %p209
    %s212 = sadd.s32 %s211, 1
    %p215 = scmp.eq.s32.totalorder %s30, 1
    %p216 = scmp.ne.s32.totalorder %s211, %s213
    %p217 = scmp.eq.s32.totalorder %s30, 0
    %p218 = por %p216, %p217
    %p219 = scmp.ne.s32.totalorder %s211, %s213
    %p220 = scmp.eq.s32.totalorder %s35, 1
    %p221 = por %p219, %p220
    %p222 = scmp.ne.s32.totalorder %s213, %s214
    %p223 = scmp.eq.s32.totalorder %s35, 0
    %p224 = por %p222, %p223
    %p225 = scmp.ne.s32.totalorder %s213, %s214
    %p226 = scmp.eq.s32.totalorder %s36, 1
    %p227 = por %p225, %p226
    %p229 = scmp.ne.s32.totalorder %s214, %s228
    %p230 = scmp.eq.s32.totalorder %s36, 0
    %p231 = por %p229, %p230
    %s233 = sadd.s32 %s232, 1
    %p236 = scmp.eq.s32.totalorder %s30, 1
    %p237 = scmp.ne.s32.totalorder %s232, %s234
    %p238 = scmp.eq.s32.totalorder %s30, 0
    %p239 = por %p237, %p238
    %p240 = scmp.ne.s32.totalorder %s232, %s234
    %p241 = scmp.eq.s32.totalorder %s35, 1
    %p242 = por %p240, %p241
    %p243 = scmp.ne.s32.totalorder %s234, %s235
    %p244 = scmp.eq.s32.totalorder %s35, 0
    %p245 = por %p243, %p244
    %p246 = scmp.ne.s32.totalorder %s234, %s235
    %p247 = scmp.eq.s32.totalorder %s36, 1
    %p248 = por %p246, %p247
    %p250 = scmp.ne.s32.totalorder %s235, %s249
    %p251 = scmp.eq.s32.totalorder %s36, 0
    %p252 = por %p250, %p251
    %s254 = sadd.s32 %s253, 1
    %p257 = scmp.eq.s32.totalorder %s30, 1
    %p258 = scmp.ne.s32.totalorder %s253, %s255
    %p259 = scmp.eq.s32.totalorder %s30, 0
    %p260 = por %p258, %p259
    %p261 = scmp.ne.s32.totalorder %s253, %s255
    %p262 = scmp.eq.s32.totalorder %s35, 1
    %p263 = por %p261, %p262
    %p264 = scmp.ne.s32.totalorder %s255, %s256
    %p265 = scmp.eq.s32.totalorder %s35, 0
    %p266 = por %p264, %p265
    %p267 = scmp.ne.s32.totalorder %s255, %s256
    %p268 = scmp.eq.s32.totalorder %s36, 1
    %p269 = por %p267, %p268
    %p271 = scmp.ne.s32.totalorder %s256, %s270
    %p272 = scmp.eq.s32.totalorder %s36, 0
    %p273 = por %p271, %p272
    %s275 = sadd.s32 %s274, 1
    %p278 = scmp.eq.s32.totalorder %s30, 1
    %p279 = scmp.ne.s32.totalorder %s274, %s276
    %p280 = scmp.eq.s32.totalorder %s30, 0
    %p281 = por %p279, %p280
    %p282 = scmp.ne.s32.totalorder %s274, %s276
    %p283 = scmp.eq.s32.totalorder %s35, 1
    %p284 = por %p282, %p283
    %p285 = scmp.ne.s32.totalorder %s276, %s277
    %p286 = scmp.eq.s32.totalorder %s35, 0
    %p287 = por %p285, %p286
    %p288 = scmp.ne.s32.totalorder %s276, %s277
    %p289 = scmp.eq.s32.totalorder %s36, 1
    %p290 = por %p288, %p289
    %p292 = scmp.ne.s32.totalorder %s277, %s291
    %p293 = scmp.eq.s32.totalorder %s36, 0
    %p294 = por %p292, %p293
    %s296 = sadd.s32 %s295, 1
    %p299 = scmp.eq.s32.totalorder %s30, 1
    %p300 = scmp.ne.s32.totalorder %s295, %s297
    %p301 = scmp.eq.s32.totalorder %s30, 0
    %p302 = por %p300, %p301
    %p303 = scmp.ne.s32.totalorder %s295, %s297
    %p304 = scmp.eq.s32.totalorder %s35, 1
    %p305 = por %p303, %p304
    %p306 = scmp.ne.s32.totalorder %s297, %s298
    %p307 = scmp.eq.s32.totalorder %s35, 0
    %p308 = por %p306, %p307
    %p309 = scmp.ne.s32.totalorder %s297, %s298
    %p310 = scmp.eq.s32.totalorder %s36, 1
    %p311 = por %p309, %p310
    %p313 = scmp.ne.s32.totalorder %s298, %s312
    %p314 = scmp.eq.s32.totalorder %s36, 0
    %p315 = por %p313, %p314
    %s317 = sadd.s32 %s316, 1
    %p320 = scmp.eq.s32.totalorder %s30, 1
    %p321 = scmp.ne.s32.totalorder %s316, %s318
    %p322 = scmp.eq.s32.totalorder %s30, 0
    %p323 = por %p321, %p322
    %p324 = scmp.ne.s32.totalorder %s316, %s318
    %p325 = scmp.eq.s32.totalorder %s35, 1
    %p326 = por %p324, %p325
    %p327 = scmp.ne.s32.totalorder %s318, %s319
    %p328 = scmp.eq.s32.totalorder %s35, 0
    %p329 = por %p327, %p328
    %p330 = scmp.ne.s32.totalorder %s318, %s319
    %p331 = scmp.eq.s32.totalorder %s36, 1
    %p332 = por %p330, %p331
    %p334 = scmp.ne.s32.totalorder %s319, %s333
    %p335 = scmp.eq.s32.totalorder %s36, 0
    %p336 = por %p334, %p335
    %s338 = sadd.s32 %s337, 1
    %p341 = scmp.eq.s32.totalorder %s30, 1
    %p342 = scmp.ne.s32.totalorder %s337, %s339
    %p343 = scmp.eq.s32.totalorder %s30, 0
    %p344 = por %p342, %p343
    %p345 = scmp.ne.s32.totalorder %s337, %s339
    %p346 = scmp.eq.s32.totalorder %s35, 1
    %p347 = por %p345, %p346
    %p348 = scmp.ne.s32.totalorder %s339, %s340
    %p349 = scmp.eq.s32.totalorder %s35, 0
    %p350 = por %p348, %p349
    %p351 = scmp.ne.s32.totalorder %s339, %s340
    %p352 = scmp.eq.s32.totalorder %s36, 1
    %p353 = por %p351, %p352
    %p355 = scmp.ne.s32.totalorder %s340, %s354
    %p356 = scmp.eq.s32.totalorder %s36, 0
    %p357 = por %p355, %p356
    %s359 = sadd.s32 %s358, 1
    %p362 = scmp.eq.s32.totalorder %s30, 1
    %p363 = scmp.ne.s32.totalorder %s358, %s360
    %p364 = scmp.eq.s32.totalorder %s30, 0
    %p365 = por %p363, %p364
    %p366 = scmp.ne.s32.totalorder %s358, %s360
    %p367 = scmp.eq.s32.totalorder %s35, 1
    %p368 = por %p366, %p367
    %p369 = scmp.ne.s32.totalorder %s360, %s361
    %p370 = scmp.eq.s32.totalorder %s35, 0
    %p371 = por %p369, %p370
    %p372 = scmp.ne.s32.totalorder %s360, %s361
    %p373 = scmp.eq.s32.totalorder %s36, 1
    %p374 = por %p372, %p373
    %p376 = scmp.ne.s32.totalorder %s361, %s375
    %p377 = scmp.eq.s32.totalorder %s36, 0
    %p378 = por %p376, %p377
    %s380 = sadd.s32 %s379, 1
    %p383 = scmp.eq.s32.totalorder %s30, 1
    %p384 = scmp.ne.s32.totalorder %s379, %s381
    %p385 = scmp.eq.s32.totalorder %s30, 0
    %p386 = por %p384, %p385
    %p387 = scmp.ne.s32.totalorder %s379, %s381
    %p388 = scmp.eq.s32.totalorder %s35, 1
    %p389 = por %p387, %p388
    %p390 = scmp.ne.s32.totalorder %s381, %s382
    %p391 = scmp.eq.s32.totalorder %s35, 0
    %p392 = por %p390, %p391
    %p393 = scmp.ne.s32.totalorder %s381, %s382
    %p394 = scmp.eq.s32.totalorder %s36, 1
    %p395 = por %p393, %p394
    %p397 = scmp.ne.s32.totalorder %s382, %s396
    %p398 = scmp.eq.s32.totalorder %s36, 0
    %p399 = por %p397, %p398
    %s401 = sadd.s32 %s400, 1
    %p404 = scmp.eq.s32.totalorder %s30, 1
    %p405 = scmp.ne.s32.totalorder %s400, %s402
    %p406 = scmp.eq.s32.totalorder %s30, 0
    %p407 = por %p405, %p406
    %p408 = scmp.ne.s32.totalorder %s400, %s402
    %p409 = scmp.eq.s32.totalorder %s35, 1
    %p410 = por %p408, %p409
    %p411 = scmp.ne.s32.totalorder %s402, %s403
    %p412 = scmp.eq.s32.totalorder %s35, 0
    %p413 = por %p411, %p412
    %p414 = scmp.ne.s32.totalorder %s402, %s403
    %p415 = scmp.eq.s32.totalorder %s36, 1
    %p416 = por %p414, %p415
    %p418 = scmp.ne.s32.totalorder %s403, %s417
    %p419 = scmp.eq.s32.totalorder %s36, 0
    %p420 = por %p418, %p419
    %s422 = sadd.s32 %s421, 1
    %p425 = scmp.eq.s32.totalorder %s30, 1
    %p426 = scmp.ne.s32.totalorder %s421, %s423
    %p427 = scmp.eq.s32.totalorder %s30, 0
    %p428 = por %p426, %p427
    %p429 = scmp.ne.s32.totalorder %s421, %s423
    %p430 = scmp.eq.s32.totalorder %s35, 1
    %p431 = por %p429, %p430
    %p432 = scmp.ne.s32.totalorder %s423, %s424
    %p433 = scmp.eq.s32.totalorder %s35, 0
    %p434 = por %p432, %p433
    %p435 = scmp.ne.s32.totalorder %s423, %s424
    %p436 = scmp.eq.s32.totalorder %s36, 1
    %p437 = por %p435, %p436
    %p439 = scmp.ne.s32.totalorder %s424, %s438
    %p440 = scmp.eq.s32.totalorder %s36, 0
    %p441 = por %p439, %p440
    %s443 = sadd.s32 %s442, 1
    %p446 = scmp.eq.s32.totalorder %s30, 1
    %p447 = scmp.ne.s32.totalorder %s442, %s444
    %p448 = scmp.eq.s32.totalorder %s30, 0
    %p449 = por %p447, %p448
    %p450 = scmp.ne.s32.totalorder %s442, %s444
    %p451 = scmp.eq.s32.totalorder %s35, 1
    %p452 = por %p450, %p451
    %p453 = scmp.ne.s32.totalorder %s444, %s445
    %p454 = scmp.eq.s32.totalorder %s35, 0
    %p455 = por %p453, %p454
    %p456 = scmp.ne.s32.totalorder %s444, %s445
    %p457 = scmp.eq.s32.totalorder %s36, 1
    %p458 = por %p456, %p457
    %p460 = scmp.ne.s32.totalorder %s445, %s459
    %p461 = scmp.eq.s32.totalorder %s36, 0
    %p462 = por %p460, %p461
    %s464 = sadd.s32 %s463, 1
    %p467 = scmp.eq.s32.totalorder %s30, 1
    %p468 = scmp.ne.s32.totalorder %s463, %s465
    %p469 = scmp.eq.s32.totalorder %s30, 0
    %p470 = por %p468, %p469
    %p471 = scmp.ne.s32.totalorder %s463, %s465
    %p472 = scmp.eq.s32.totalorder %s35, 1
    %p473 = por %p471, %p472
    %p474 = scmp.ne.s32.totalorder %s465, %s466
    %p475 = scmp.eq.s32.totalorder %s35, 0
    %p476 = por %p474, %p475
    %p477 = scmp.ne.s32.totalorder %s465, %s466
    %p478 = scmp.eq.s32.totalorder %s36, 1
    %p479 = por %p477, %p478
    %p481 = scmp.ne.s32.totalorder %s466, %s480
    %p482 = scmp.eq.s32.totalorder %s36, 0
    %p483 = por %p481, %p482
    %s485 = sadd.s32 %s484, 1
    %p488 = scmp.eq.s32.totalorder %s30, 1
    %p489 = scmp.ne.s32.totalorder %s484, %s486
    %p490 = scmp.eq.s32.totalorder %s30, 0
    %p491 = por %p489, %p490
    %p492 = scmp.ne.s32.totalorder %s484, %s486
    %p493 = scmp.eq.s32.totalorder %s35, 1
    %p494 = por %p492, %p493
    %p495 = scmp.ne.s32.totalorder %s486, %s487
    %p496 = scmp.eq.s32.totalorder %s35, 0
    %p497 = por %p495, %p496
    %p498 = scmp.ne.s32.totalorder %s486, %s487
    %p499 = scmp.eq.s32.totalorder %s36, 1
    %p500 = por %p498, %p499
    %p502 = scmp.ne.s32.totalorder %s487, %s501
    %p503 = scmp.eq.s32.totalorder %s36, 0
    %p504 = por %p502, %p503
    %s506 = sadd.s32 %s505, 1
    %p509 = scmp.eq.s32.totalorder %s30, 1
    %p510 = scmp.ne.s32.totalorder %s505, %s507
    %p511 = scmp.eq.s32.totalorder %s30, 0
    %p512 = por %p510, %p511
    %p513 = scmp.ne.s32.totalorder %s505, %s507
    %p514 = scmp.eq.s32.totalorder %s35, 1
    %p515 = por %p513, %p514
    %p516 = scmp.ne.s32.totalorder %s507, %s508
    %p517 = scmp.eq.s32.totalorder %s35, 0
    %p518 = por %p516, %p517
    %p519 = scmp.ne.s32.totalorder %s507, %s508
    %p520 = scmp.eq.s32.totalorder %s36, 1
    %p521 = por %p519, %p520
    %p523 = scmp.ne.s32.totalorder %s508, %s522
    %p524 = scmp.eq.s32.totalorder %s36, 0
    %p525 = por %p523, %p524
    %s527 = sadd.s32 %s526, 1
    %p530 = scmp.eq.s32.totalorder %s30, 1
    %p531 = scmp.ne.s32.totalorder %s526, %s528
    %p532 = scmp.eq.s32.totalorder %s30, 0
    %p533 = por %p531, %p532
    %p534 = scmp.ne.s32.totalorder %s526, %s528
    %p535 = scmp.eq.s32.totalorder %s35, 1
    %p536 = por %p534, %p535
    %p537 = scmp.ne.s32.totalorder %s528, %s529
    %p538 = scmp.eq.s32.totalorder %s35, 0
    %p539 = por %p537, %p538
    %p540 = scmp.ne.s32.totalorder %s528, %s529
    %p541 = scmp.eq.s32.totalorder %s36, 1
    %p542 = por %p540, %p541
    %p544 = scmp.ne.s32.totalorder %s529, %s543
    %p545 = scmp.eq.s32.totalorder %s36, 0
    %p546 = por %p544, %p545
    %s547 = ssub.s32 %s30, %s37
    %p548 = scmp.eq.s32.totalorder %s547, 0
    %s550 = sadd.s32 %s549, 1
    %s551 = scalar_select %p548, %s549, %s550
    %p554 = pneg %p548
    %p555 = scmp.eq.s32.totalorder %s30, 1
    %p556 = por %p554, %p555
    %p557 = scmp.ne.s32.totalorder %s549, %s552
    %p558 = scmp.eq.s32.totalorder %s30, 0
    %p559 = por %p557, %p558
    %p560 = scmp.ne.s32.totalorder %s549, %s552
    %p561 = scmp.eq.s32.totalorder %s35, 1
    %p562 = por %p560, %p561
    %p563 = scmp.ne.s32.totalorder %s552, %s553
    %p564 = scmp.eq.s32.totalorder %s35, 0
    %p565 = por %p563, %p564
    %p566 = scmp.ne.s32.totalorder %s552, %s553
    %p567 = scmp.eq.s32.totalorder %s36, 1
    %p568 = por %p566, %p567
    %p570 = scmp.ne.s32.totalorder %s553, %s569
    %p571 = scmp.eq.s32.totalorder %s36, 0
    %p572 = por %p570, %p571
    %p573 = scmp.le.s32.totalorder 1, %s30
    %p574 = scmp.lt.s32.totalorder %s30, 3
    %p575 = pnand %p573, %p574
    %p576 = pneg %p575
    // Predicated region
    $region9: #{multibert_v2_forward.1} parent=5 // pred_check
      _
    $region10: #{multibert_v2_forward.1} parent=5 // pred_check_branch
      %578 = sbr.rel (%p575) target = $region12
    $region11: #{multibert_v2_forward.1} parent=5 // pred_region
      %s579 = ssub.s32 %s30, 1
      // Predicated region
      $region13: #{multibert_v2_forward.1} parent=11 // pred_check
        %p580 = pneg %p77
      $region14: #{multibert_v2_forward.1} parent=11 // pred_check_branch
        %582 = sbr.rel (%p580) target = $region16
      $region15: #{multibert_v2_forward.1} parent=11 // pred_region
        _
      $region16: #{multibert_v2_forward.1} parent=11 // pred_fallthru
        _
      // Predicated region
      $region17: #{multibert_v2_forward.1} parent=11 // pred_check
        %p583 = pneg %p98
      $region18: #{multibert_v2_forward.1} parent=11 // pred_check_branch
        %585 = sbr.rel (%p583) target = $region20
      $region19: #{multibert_v2_forward.1} parent=11 // pred_region
        _
      $region20: #{multibert_v2_forward.1} parent=11 // pred_fallthru
        _
      // Predicated region
      $region21: #{multibert_v2_forward.1} parent=11 // pred_check
        %p586 = pneg %p119
      $region22: #{multibert_v2_forward.1} parent=11 // pred_check_branch
        %588 = sbr.rel (%p586) target = $region24
      $region23: #{multibert_v2_forward.1} parent=11 // pred_region
        _
      $region24: #{multibert_v2_forward.1} parent=11 // pred_fallthru
        _
      // Predicated region
      $region25: #{multibert_v2_forward.1} parent=11 // pred_check
        %p589 = pneg %p140
      $region26: #{multibert_v2_forward.1} parent=11 // pred_check_branch
        %591 = sbr.rel (%p589) target = $region28
      $region27: #{multibert_v2_forward.1} parent=11 // pred_region
        _
      $region28: #{multibert_v2_forward.1} parent=11 // pred_fallthru
        _
      // Predicated region
      $region29: #{multibert_v2_forward.1} parent=11 // pred_check
        %p592 = pneg %p161
      $region30: #{multibert_v2_forward.1} parent=11 // pred_check_branch
        %594 = sbr.rel (%p592) target = $region32
      $region31: #{multibert_v2_forward.1} parent=11 // pred_region
        _
      $region32: #{multibert_v2_forward.1} parent=11 // pred_fallthru
        _
      // Predicated region
      $region33: #{multibert_v2_forward.1} parent=11 // pred_check
        %p595 = pneg %p182
      $region34: #{multibert_v2_forward.1} parent=11 // pred_check_branch
        %597 = sbr.rel (%p595) target = $region36
      $region35: #{multibert_v2_forward.1} parent=11 // pred_region
        _
      $region36: #{multibert_v2_forward.1} parent=11 // pred_fallthru
        _
      // Predicated region
      $region37: #{multibert_v2_forward.1} parent=11 // pred_check
        %p598 = pneg %p203
      $region38: #{multibert_v2_forward.1} parent=11 // pred_check_branch
        %600 = sbr.rel (%p598) target = $region40
      $region39: #{multibert_v2_forward.1} parent=11 // pred_region
        _
      $region40: #{multibert_v2_forward.1} parent=11 // pred_fallthru
        _
      // Predicated region
      $region41: #{multibert_v2_forward.1} parent=11 // pred_check
        %p601 = pneg %p224
      $region42: #{multibert_v2_forward.1} parent=11 // pred_check_branch
        %603 = sbr.rel (%p601) target = $region44
      $region43: #{multibert_v2_forward.1} parent=11 // pred_region
        _
      $region44: #{multibert_v2_forward.1} parent=11 // pred_fallthru
        _
      // Predicated region
      $region45: #{multibert_v2_forward.1} parent=11 // pred_check
        %p604 = pneg %p245
      $region46: #{multibert_v2_forward.1} parent=11 // pred_check_branch
        %606 = sbr.rel (%p604) target = $region48
      $region47: #{multibert_v2_forward.1} parent=11 // pred_region
        _
      $region48: #{multibert_v2_forward.1} parent=11 // pred_fallthru
        _
      // Predicated region
      $region49: #{multibert_v2_forward.1} parent=11 // pred_check
        %p607 = pneg %p266
      $region50: #{multibert_v2_forward.1} parent=11 // pred_check_branch
        %609 = sbr.rel (%p607) target = $region52
      $region51: #{multibert_v2_forward.1} parent=11 // pred_region
        _
      $region52: #{multibert_v2_forward.1} parent=11 // pred_fallthru
        _
      // Predicated region
      $region53: #{multibert_v2_forward.1} parent=11 // pred_check
        %p610 = pneg %p287
      $region54: #{multibert_v2_forward.1} parent=11 // pred_check_branch
        %612 = sbr.rel (%p610) target = $region56
      $region55: #{multibert_v2_forward.1} parent=11 // pred_region
        _
      $region56: #{multibert_v2_forward.1} parent=11 // pred_fallthru
        _
      // Predicated region
      $region57: #{multibert_v2_forward.1} parent=11 // pred_check
        %p613 = pneg %p308
      $region58: #{multibert_v2_forward.1} parent=11 // pred_check_branch
        %615 = sbr.rel (%p613) target = $region60
      $region59: #{multibert_v2_forward.1} parent=11 // pred_region
        _
      $region60: #{multibert_v2_forward.1} parent=11 // pred_fallthru
        _
      // Predicated region
      $region61: #{multibert_v2_forward.1} parent=11 // pred_check
        %p616 = pneg %p329
      $region62: #{multibert_v2_forward.1} parent=11 // pred_check_branch
        %618 = sbr.rel (%p616) target = $region64
      $region63: #{multibert_v2_forward.1} parent=11 // pred_region
        _
      $region64: #{multibert_v2_forward.1} parent=11 // pred_fallthru
        _
      // Predicated region
      $region65: #{multibert_v2_forward.1} parent=11 // pred_check
        %p619 = pneg %p350
      $region66: #{multibert_v2_forward.1} parent=11 // pred_check_branch
        %621 = sbr.rel (%p619) target = $region68
      $region67: #{multibert_v2_forward.1} parent=11 // pred_region
        _
      $region68: #{multibert_v2_forward.1} parent=11 // pred_fallthru
        _
      // Predicated region
      $region69: #{multibert_v2_forward.1} parent=11 // pred_check
        %p622 = pneg %p371
      $region70: #{multibert_v2_forward.1} parent=11 // pred_check_branch
        %624 = sbr.rel (%p622) target = $region72
      $region71: #{multibert_v2_forward.1} parent=11 // pred_region
        _
      $region72: #{multibert_v2_forward.1} parent=11 // pred_fallthru
        _
      // Predicated region
      $region73: #{multibert_v2_forward.1} parent=11 // pred_check
        %p625 = pneg %p392
      $region74: #{multibert_v2_forward.1} parent=11 // pred_check_branch
        %627 = sbr.rel (%p625) target = $region76
      $region75: #{multibert_v2_forward.1} parent=11 // pred_region
        _
      $region76: #{multibert_v2_forward.1} parent=11 // pred_fallthru
        _
      // Predicated region
      $region77: #{multibert_v2_forward.1} parent=11 // pred_check
        %p628 = pneg %p413
      $region78: #{multibert_v2_forward.1} parent=11 // pred_check_branch
        %630 = sbr.rel (%p628) target = $region80
      $region79: #{multibert_v2_forward.1} parent=11 // pred_region
        _
      $region80: #{multibert_v2_forward.1} parent=11 // pred_fallthru
        _
      // Predicated region
      $region81: #{multibert_v2_forward.1} parent=11 // pred_check
        %p631 = pneg %p434
      $region82: #{multibert_v2_forward.1} parent=11 // pred_check_branch
        %633 = sbr.rel (%p631) target = $region84
      $region83: #{multibert_v2_forward.1} parent=11 // pred_region
        _
      $region84: #{multibert_v2_forward.1} parent=11 // pred_fallthru
        _
      // Predicated region
      $region85: #{multibert_v2_forward.1} parent=11 // pred_check
        %p634 = pneg %p455
      $region86: #{multibert_v2_forward.1} parent=11 // pred_check_branch
        %636 = sbr.rel (%p634) target = $region88
      $region87: #{multibert_v2_forward.1} parent=11 // pred_region
        _
      $region88: #{multibert_v2_forward.1} parent=11 // pred_fallthru
        _
      // Predicated region
      $region89: #{multibert_v2_forward.1} parent=11 // pred_check
        %p637 = pneg %p476
      $region90: #{multibert_v2_forward.1} parent=11 // pred_check_branch
        %639 = sbr.rel (%p637) target = $region92
      $region91: #{multibert_v2_forward.1} parent=11 // pred_region
        _
      $region92: #{multibert_v2_forward.1} parent=11 // pred_fallthru
        _
      // Predicated region
      $region93: #{multibert_v2_forward.1} parent=11 // pred_check
        %p640 = pneg %p497
      $region94: #{multibert_v2_forward.1} parent=11 // pred_check_branch
        %642 = sbr.rel (%p640) target = $region96
      $region95: #{multibert_v2_forward.1} parent=11 // pred_region
        _
      $region96: #{multibert_v2_forward.1} parent=11 // pred_fallthru
        _
      // Predicated region
      $region97: #{multibert_v2_forward.1} parent=11 // pred_check
        %p643 = pneg %p518
      $region98: #{multibert_v2_forward.1} parent=11 // pred_check_branch
        %645 = sbr.rel (%p643) target = $region100
      $region99: #{multibert_v2_forward.1} parent=11 // pred_region
        _
      $region100: #{multibert_v2_forward.1} parent=11 // pred_fallthru
        _
      // Predicated region
      $region101: #{multibert_v2_forward.1} parent=11 // pred_check
        %p646 = pneg %p539
      $region102: #{multibert_v2_forward.1} parent=11 // pred_check_branch
        %648 = sbr.rel (%p646) target = $region104
      $region103: #{multibert_v2_forward.1} parent=11 // pred_region
        _
      $region104: #{multibert_v2_forward.1} parent=11 // pred_fallthru
        _
    $region12: #{multibert_v2_forward.1} parent=5 // pred_fallthru
      _
    %p649 = scmp.lt.s32.totalorder %s30, 2
    // Predicated region
    $region105: #{multibert_v2_forward.1} parent=5 // pred_check
      %p650 = pneg %p649
    $region106: #{multibert_v2_forward.1} parent=5 // pred_check_branch
      %652 = sbr.rel (%p650) target = $region108
    $region107: #{multibert_v2_forward.1} parent=5 // pred_region
      // Predicated region
      $region109: #{multibert_v2_forward.1} parent=107 // pred_check
        %p653 = pneg %p50
      $region110: #{multibert_v2_forward.1} parent=107 // pred_check_branch
        %655 = sbr.rel (%p653) target = $region112
      $region111: #{multibert_v2_forward.1} parent=107 // pred_region
        %p656 = scmp.lt.s32.totalorder %s30, 1
        %s657 = scalar_select %p656, %s30, 1
        %s658 = smul.addr %s657, 8
        %s659 = scalar_lea.vmem %s0, %s658
      $region112: #{multibert_v2_forward.1} parent=107 // pred_fallthru
        _
    $region108: #{multibert_v2_forward.1} parent=5 // pred_fallthru
      _
    %p660 = scmp.le.s32.totalorder 1, %s30
    %p661 = scmp.lt.s32.totalorder %s30, 3
    %p662 = pnand %p660, %p661
    %p663 = pneg %p662
    // Predicated region
    $region113: #{multibert_v2_forward.1} parent=5 // pred_check
      _
    $region114: #{multibert_v2_forward.1} parent=5 // pred_check_branch
      %665 = sbr.rel (%p662) target = $region116
    $region115: #{multibert_v2_forward.1} parent=5 // pred_region
      %s666 = ssub.s32 %s30, 1
      %p667 = scmp.lt.s32.totalorder %s35, 1
      %s668 = scalar_select %p667, %s35, 1
      %s669 = smul.addr %s668, 8
      %s670 = scalar_lea.vmem %s0, %s669
      %p671 = pneg %p56
      %p672 = pneg %p53
      %p673 = pneg %p77
      %p674 = pneg %p74
      %p675 = pneg %p98
      %p676 = pneg %p95
      %p677 = pneg %p119
      %p678 = pneg %p116
      %p679 = pneg %p140
      %p680 = pneg %p137
      %p681 = pneg %p161
      %p682 = pneg %p158
      %p683 = pneg %p182
      %p684 = pneg %p179
      %p685 = pneg %p203
      %p686 = pneg %p200
      %p687 = pneg %p224
      %p688 = pneg %p221
      %p689 = pneg %p245
      %p690 = pneg %p242
      %p691 = pneg %p266
      %p692 = pneg %p263
      %p693 = pneg %p287
      %p694 = pneg %p284
      %p695 = pneg %p308
      %p696 = pneg %p305
      %p697 = pneg %p329
      %p698 = pneg %p326
      %p699 = pneg %p350
      %p700 = pneg %p347
      %p701 = pneg %p371
      %p702 = pneg %p368
      %p703 = pneg %p392
      %p704 = pneg %p389
      %p705 = pneg %p413
      %p706 = pneg %p410
      %p707 = pneg %p434
      %p708 = pneg %p431
      %p709 = pneg %p455
      %p710 = pneg %p452
      %p711 = pneg %p476
      %p712 = pneg %p473
      %p713 = pneg %p497
      %p714 = pneg %p494
      %p715 = pneg %p518
      %p716 = pneg %p515
      %p717 = pneg %p539
      %p718 = pneg %p536
      %p719 = pneg %p565
      %p720 = pneg %p562
      %p721 = scmp.lt.s32.totalorder %s35, 1
      %s722 = scalar_select %p721, %s35, 1
      %s723 = smul.addr %s722, 8
      %s724 = scalar_lea.vmem %s24, %s723
      %p725 = scmp.lt.s32.totalorder %s35, 1
      %s726 = scalar_select %p725, %s35, 1
      %s727 = smul.addr %s726, 8
      %s728 = scalar_lea.vmem %s0, %s727
      %p729 = scmp.lt.s32.totalorder %s35, 1
      %s730 = scalar_select %p729, %s35, 1
      %s731 = smul.addr %s730, 8
      %s732 = scalar_lea.vmem %s24, %s731
      %v733 = vld [vmem:[%s728] sm:$0xff]
      %v734 = vld [vmem:[%s1] sm:$0xff]
      %v735 = vadd.f32 %v733, %v734
      %v736 = vld [vmem:[%s2] sm:$0xff]
      %v737 = vld [vmem:[%s2 + $0x8] sm:$0xff]
      %v738 = vld [vmem:[%s2 + $0x10] sm:$0xff]
      %v739 = vld [vmem:[%s2 + $0x18] sm:$0xff]
      %v740 = vld [vmem:[%s2 + $0x20] sm:$0xff]
      %v741 = vld [vmem:[%s2 + $0x28] sm:$0xff]
      %v742 = vld [vmem:[%s2 + $0x30] sm:$0xff]
      %v743 = vld [vmem:[%s2 + $0x38] sm:$0xff]
      %v744 = vld [vmem:[%s2 + $0x40] sm:$0xff]
      %v745 = vld [vmem:[%s2 + $0x48] sm:$0xff]
      %v746 = vld [vmem:[%s2 + $0x50] sm:$0xff]
      %v747 = vld [vmem:[%s2 + $0x58] sm:$0xff]
      %v748 = vld [vmem:[%s2 + $0x60] sm:$0xff]
      %v749 = vld [vmem:[%s2 + $0x68] sm:$0xff]
      %v750 = vld [vmem:[%s2 + $0x70] sm:$0xff]
      %v751 = vld [vmem:[%s2 + $0x78] sm:$0xff]
      %v752 = vld [vmem:[%s3] sm:$0x1]
      %v753 = vld [vmem:[%s3 + $0x1] sm:$0x1]
      %v754 = vld [vmem:[%s3 + $0x2] sm:$0x1]
      %v755 = vld [vmem:[%s3 + $0x3] sm:$0x1]
      %v760 = vperm.slane %v752, 0
      %v761 = vperm.slane %v753, 0
      %v762 = vperm.slane %v754, 0
      %v763 = vperm.slane %v755, 0
      %769 = vrot.lane.b32.xlu0 %v735, 96
      %v770 = vpop.permute.xlu0 %769
      %vm771 = vcmask 261120
      %v772 = vsel %vm771, %v770, 0
      %774 = vmatpush.msra.mxu0 0.0
      %775 = vmatpush.msra.mxu0 0.0
      %776 = vmatpush.msra.mxu0 0.0
      %777 = vmatpush.msra.mxu0 0.0
      %778 = vmatpush.msra.mxu0 0.0
      %779 = vmatpush.msra.mxu0 0.0
      %780 = vmatpush.msra.mxu0 0.0
      %781 = vmatpush.msra.mxu0 0.0
      %782 = vmatpush.msra.mxu0 0.0
      %783 = vmatpush.msra.mxu0 0.0
      %784 = vmatpush.msra.mxu0 0.0
      %785 = vmatpush.msra.mxu0 0.0
      %786 = vmatpush.msra.mxu0 %v739
      %787 = vmatpush.msra.mxu0 %v738
      %788 = vmatpush.msra.mxu0 %v737
      %789 = vmatpush.msra.mxu0 %v736
      %790 = vmatmul.f32.gmra.mxu0 %v772
      %v791 = vpop.f32.mrf.mxu0
      %v792 = vadd.f32 %v760, %v791
      %793 = vdwg.mxu0
      %794 = vmatpush.msra.mxu0 0.0
      %795 = vmatpush.msra.mxu0 0.0
      %796 = vmatpush.msra.mxu0 0.0
      %797 = vmatpush.msra.mxu0 0.0
      %798 = vmatpush.msra.mxu0 0.0
      %799 = vmatpush.msra.mxu0 0.0
      %800 = vmatpush.msra.mxu0 0.0
      %801 = vmatpush.msra.mxu0 0.0
      %802 = vmatpush.msra.mxu0 0.0
      %803 = vmatpush.msra.mxu0 0.0
      %804 = vmatpush.msra.mxu0 0.0
      %805 = vmatpush.msra.mxu0 0.0
      %806 = vmatpush.msra.mxu0 %v743
      %807 = vmatpush.msra.mxu0 %v742
      %808 = vmatpush.msra.mxu0 %v741
      %809 = vmatpush.msra.mxu0 %v740
      %810 = vmatmul.f32.gmra.mxu0 %v772
      %v811 = vpop.f32.mrf.mxu0
      %v812 = vadd.f32 %v761, %v811
      %813 = vdwg.mxu0
      %814 = vmatpush.msra.mxu0 0.0
      %815 = vmatpush.msra.mxu0 0.0
      %816 = vmatpush.msra.mxu0 0.0
      %817 = vmatpush.msra.mxu0 0.0
      %818 = vmatpush.msra.mxu0 0.0
      %819 = vmatpush.msra.mxu0 0.0
      %820 = vmatpush.msra.mxu0 0.0
      %821 = vmatpush.msra.mxu0 0.0
      %822 = vmatpush.msra.mxu0 0.0
      %823 = vmatpush.msra.mxu0 0.0
      %824 = vmatpush.msra.mxu0 0.0
      %825 = vmatpush.msra.mxu0 0.0
      %826 = vmatpush.msra.mxu0 %v747
      %827 = vmatpush.msra.mxu0 %v746
      %828 = vmatpush.msra.mxu0 %v745
      %829 = vmatpush.msra.mxu0 %v744
      %830 = vmatmul.f32.gmra.mxu0 %v772
      %v831 = vpop.f32.mrf.mxu0
      %v832 = vadd.f32 %v762, %v831
      %833 = vdwg.mxu0
      %834 = vmatpush.msra.mxu0 0.0
      %835 = vmatpush.msra.mxu0 0.0
      %836 = vmatpush.msra.mxu0 0.0
      %837 = vmatpush.msra.mxu0 0.0
      %838 = vmatpush.msra.mxu0 0.0
      %839 = vmatpush.msra.mxu0 0.0
      %840 = vmatpush.msra.mxu0 0.0
      %841 = vmatpush.msra.mxu0 0.0
      %842 = vmatpush.msra.mxu0 0.0
      %843 = vmatpush.msra.mxu0 0.0
      %844 = vmatpush.msra.mxu0 0.0
      %845 = vmatpush.msra.mxu0 0.0
      %846 = vmatpush.msra.mxu0 %v751
      %847 = vmatpush.msra.mxu0 %v750
      %848 = vmatpush.msra.mxu0 %v749
      %849 = vmatpush.msra.mxu0 %v748
      %850 = vmatmul.f32.gmra.mxu0 %v772
      %v851 = vpop.f32.mrf.mxu0
      %v852 = vadd.f32 %v763, %v851
      %853 = vdwg.mxu0
      %v854 = vld [vmem:[%s4] sm:$0xff]
      %v855 = vld [vmem:[%s4 + $0x8] sm:$0xff]
      %v856 = vld [vmem:[%s4 + $0x10] sm:$0xff]
      %v857 = vld [vmem:[%s4 + $0x18] sm:$0xff]
      %v858 = vld [vmem:[%s4 + $0x20] sm:$0xff]
      %v859 = vld [vmem:[%s4 + $0x28] sm:$0xff]
      %v860 = vld [vmem:[%s4 + $0x30] sm:$0xff]
      %v861 = vld [vmem:[%s4 + $0x38] sm:$0xff]
      %v862 = vld [vmem:[%s4 + $0x40] sm:$0xff]
      %v863 = vld [vmem:[%s4 + $0x48] sm:$0xff]
      %v864 = vld [vmem:[%s4 + $0x50] sm:$0xff]
      %v865 = vld [vmem:[%s4 + $0x58] sm:$0xff]
      %v866 = vld [vmem:[%s4 + $0x60] sm:$0xff]
      %v867 = vld [vmem:[%s4 + $0x68] sm:$0xff]
      %v868 = vld [vmem:[%s4 + $0x70] sm:$0xff]
      %v869 = vld [vmem:[%s4 + $0x78] sm:$0xff]
      %v870 = vld [vmem:[%s5] sm:$0x1]
      %v871 = vld [vmem:[%s5 + $0x1] sm:$0x1]
      %v872 = vld [vmem:[%s5 + $0x2] sm:$0x1]
      %v873 = vld [vmem:[%s5 + $0x3] sm:$0x1]
      %v878 = vperm.slane %v870, 0
      %v879 = vperm.slane %v871, 0
      %v880 = vperm.slane %v872, 0
      %v881 = vperm.slane %v873, 0
      %v886 = vsel %vm771, %v735, 0
      %888 = vmatpush.msra.mxu0 0.0
      %889 = vmatpush.msra.mxu0 0.0
      %890 = vmatpush.msra.mxu0 0.0
      %891 = vmatpush.msra.mxu0 0.0
      %892 = vmatpush.msra.mxu0 0.0
      %893 = vmatpush.msra.mxu0 0.0
      %894 = vmatpush.msra.mxu0 0.0
      %895 = vmatpush.msra.mxu0 0.0
      %896 = vmatpush.msra.mxu0 0.0
      %897 = vmatpush.msra.mxu0 0.0
      %898 = vmatpush.msra.mxu0 0.0
      %899 = vmatpush.msra.mxu0 0.0
      %900 = vmatpush.msra.mxu0 %v857
      %901 = vmatpush.msra.mxu0 %v856
      %902 = vmatpush.msra.mxu0 %v855
      %903 = vmatpush.msra.mxu0 %v854
      %904 = vmatmul.f32.gmra.mxu0 %v886
      %v905 = vpop.f32.mrf.mxu0
      %v906 = vadd.f32 %v878, %v905
      %907 = vdwg.mxu0
      %908 = vmatpush.msra.mxu0 0.0
      %909 = vmatpush.msra.mxu0 0.0
      %910 = vmatpush.msra.mxu0 0.0
      %911 = vmatpush.msra.mxu0 0.0
      %912 = vmatpush.msra.mxu0 0.0
      %913 = vmatpush.msra.mxu0 0.0
      %914 = vmatpush.msra.mxu0 0.0
      %915 = vmatpush.msra.mxu0 0.0
      %916 = vmatpush.msra.mxu0 0.0
      %917 = vmatpush.msra.mxu0 0.0
      %918 = vmatpush.msra.mxu0 0.0
      %919 = vmatpush.msra.mxu0 0.0
      %920 = vmatpush.msra.mxu0 %v861
      %921 = vmatpush.msra.mxu0 %v860
      %922 = vmatpush.msra.mxu0 %v859
      %923 = vmatpush.msra.mxu0 %v858
      %924 = vmatmul.f32.gmra.mxu0 %v886
      %v925 = vpop.f32.mrf.mxu0
      %v926 = vadd.f32 %v879, %v925
      %927 = vdwg.mxu0
      %928 = vmatpush.msra.mxu0 0.0
      %929 = vmatpush.msra.mxu0 0.0
      %930 = vmatpush.msra.mxu0 0.0
      %931 = vmatpush.msra.mxu0 0.0
      %932 = vmatpush.msra.mxu0 0.0
      %933 = vmatpush.msra.mxu0 0.0
      %934 = vmatpush.msra.mxu0 0.0
      %935 = vmatpush.msra.mxu0 0.0
      %936 = vmatpush.msra.mxu0 0.0
      %937 = vmatpush.msra.mxu0 0.0
      %938 = vmatpush.msra.mxu0 0.0
      %939 = vmatpush.msra.mxu0 0.0
      %940 = vmatpush.msra.mxu0 %v865
      %941 = vmatpush.msra.mxu0 %v864
      %942 = vmatpush.msra.mxu0 %v863
      %943 = vmatpush.msra.mxu0 %v862
      %944 = vmatmul.f32.gmra.mxu0 %v886
      %v945 = vpop.f32.mrf.mxu0
      %v946 = vadd.f32 %v880, %v945
      %947 = vdwg.mxu0
      %948 = vmatpush.msra.mxu0 0.0
      %949 = vmatpush.msra.mxu0 0.0
      %950 = vmatpush.msra.mxu0 0.0
      %951 = vmatpush.msra.mxu0 0.0
      %952 = vmatpush.msra.mxu0 0.0
      %953 = vmatpush.msra.mxu0 0.0
      %954 = vmatpush.msra.mxu0 0.0
      %955 = vmatpush.msra.mxu0 0.0
      %956 = vmatpush.msra.mxu0 0.0
      %957 = vmatpush.msra.mxu0 0.0
      %958 = vmatpush.msra.mxu0 0.0
      %959 = vmatpush.msra.mxu0 0.0
      %960 = vmatpush.msra.mxu0 %v869
      %961 = vmatpush.msra.mxu0 %v868
      %962 = vmatpush.msra.mxu0 %v867
      %963 = vmatpush.msra.mxu0 %v866
      %964 = vmatmul.f32.gmra.mxu0 %v886
      %v965 = vpop.f32.mrf.mxu0
      %v966 = vadd.f32 %v881, %v965
      %967 = vdwg.mxu0
      %v968 = vld [vmem:[%s6] sm:$0xff]
      %v969 = vld [vmem:[%s6 + $0x8] sm:$0xff]
      %v970 = vld [vmem:[%s6 + $0x10] sm:$0xff]
      %v971 = vld [vmem:[%s6 + $0x18] sm:$0xff]
      %v972 = vld [vmem:[%s6 + $0x20] sm:$0xff]
      %v973 = vld [vmem:[%s6 + $0x28] sm:$0xff]
      %v974 = vld [vmem:[%s6 + $0x30] sm:$0xff]
      %v975 = vld [vmem:[%s6 + $0x38] sm:$0xff]
      %v976 = vld [vmem:[%s6 + $0x40] sm:$0xff]
      %v977 = vld [vmem:[%s6 + $0x48] sm:$0xff]
      %v978 = vld [vmem:[%s6 + $0x50] sm:$0xff]
      %v979 = vld [vmem:[%s6 + $0x58] sm:$0xff]
      %v980 = vld [vmem:[%s6 + $0x60] sm:$0xff]
      %v981 = vld [vmem:[%s6 + $0x68] sm:$0xff]
      %v982 = vld [vmem:[%s6 + $0x70] sm:$0xff]
      %v983 = vld [vmem:[%s6 + $0x78] sm:$0xff]
      %v984 = vld [vmem:[%s7] sm:$0x1]
      %v985 = vld [vmem:[%s7 + $0x1] sm:$0x1]
      %v986 = vld [vmem:[%s7 + $0x2] sm:$0x1]
      %v987 = vld [vmem:[%s7 + $0x3] sm:$0x1]
      %v992 = vperm.slane %v984, 0
      %v993 = vperm.slane %v985, 0
      %v994 = vperm.slane %v986, 0
      %v995 = vperm.slane %v987, 0
      %1000 = vmatpush.msra.mxu0 0.0
      %1001 = vmatpush.msra.mxu0 0.0
      %1002 = vmatpush.msra.mxu0 0.0
      %1003 = vmatpush.msra.mxu0 0.0
      %1004 = vmatpush.msra.mxu0 0.0
      %1005 = vmatpush.msra.mxu0 0.0
      %1006 = vmatpush.msra.mxu0 0.0
      %1007 = vmatpush.msra.mxu0 0.0
      %1008 = vmatpush.msra.mxu0 0.0
      %1009 = vmatpush.msra.mxu0 0.0
      %1010 = vmatpush.msra.mxu0 0.0
      %1011 = vmatpush.msra.mxu0 0.0
      %1012 = vmatpush.msra.mxu0 %v971
      %1013 = vmatpush.msra.mxu0 %v970
      %1014 = vmatpush.msra.mxu0 %v969
      %1015 = vmatpush.msra.mxu0 %v968
      %1016 = vmatmul.f32.gmra.mxu0 %v886
      %v1017 = vpop.f32.mrf.mxu0
      %v1018 = vadd.f32 %v992, %v1017
      %1019 = vdwg.mxu0
      %1020 = vmatpush.msra.mxu0 0.0
      %1021 = vmatpush.msra.mxu0 0.0
      %1022 = vmatpush.msra.mxu0 0.0
      %1023 = vmatpush.msra.mxu0 0.0
      %1024 = vmatpush.msra.mxu0 0.0
      %1025 = vmatpush.msra.mxu0 0.0
      %1026 = vmatpush.msra.mxu0 0.0
      %1027 = vmatpush.msra.mxu0 0.0
      %1028 = vmatpush.msra.mxu0 0.0
      %1029 = vmatpush.msra.mxu0 0.0
      %1030 = vmatpush.msra.mxu0 0.0
      %1031 = vmatpush.msra.mxu0 0.0
      %1032 = vmatpush.msra.mxu0 %v975
      %1033 = vmatpush.msra.mxu0 %v974
      %1034 = vmatpush.msra.mxu0 %v973
      %1035 = vmatpush.msra.mxu0 %v972
      %1036 = vmatmul.f32.gmra.mxu0 %v886
      %v1037 = vpop.f32.mrf.mxu0
      %v1038 = vadd.f32 %v993, %v1037
      %1039 = vdwg.mxu0
      %1040 = vmatpush.msra.mxu0 0.0
      %1041 = vmatpush.msra.mxu0 0.0
      %1042 = vmatpush.msra.mxu0 0.0
      %1043 = vmatpush.msra.mxu0 0.0
      %1044 = vmatpush.msra.mxu0 0.0
      %1045 = vmatpush.msra.mxu0 0.0
      %1046 = vmatpush.msra.mxu0 0.0
      %1047 = vmatpush.msra.mxu0 0.0
      %1048 = vmatpush.msra.mxu0 0.0
      %1049 = vmatpush.msra.mxu0 0.0
      %1050 = vmatpush.msra.mxu0 0.0
      %1051 = vmatpush.msra.mxu0 0.0
      %1052 = vmatpush.msra.mxu0 %v979
      %1053 = vmatpush.msra.mxu0 %v978
      %1054 = vmatpush.msra.mxu0 %v977
      %1055 = vmatpush.msra.mxu0 %v976
      %1056 = vmatmul.f32.gmra.mxu0 %v886
      %v1057 = vpop.f32.mrf.mxu0
      %v1058 = vadd.f32 %v994, %v1057
      %1059 = vdwg.mxu0
      %1060 = vmatpush.msra.mxu0 0.0
      %1061 = vmatpush.msra.mxu0 0.0
      %1062 = vmatpush.msra.mxu0 0.0
      %1063 = vmatpush.msra.mxu0 0.0
      %1064 = vmatpush.msra.mxu0 0.0
      %1065 = vmatpush.msra.mxu0 0.0
      %1066 = vmatpush.msra.mxu0 0.0
      %1067 = vmatpush.msra.mxu0 0.0
      %1068 = vmatpush.msra.mxu0 0.0
      %1069 = vmatpush.msra.mxu0 0.0
      %1070 = vmatpush.msra.mxu0 0.0
      %1071 = vmatpush.msra.mxu0 0.0
      %1072 = vmatpush.msra.mxu0 %v983
      %1073 = vmatpush.msra.mxu0 %v982
      %1074 = vmatpush.msra.mxu0 %v981
      %1075 = vmatpush.msra.mxu0 %v980
      %1076 = vmatmul.f32.gmra.mxu0 %v886
      %v1077 = vpop.f32.mrf.mxu0
      %v1078 = vadd.f32 %v995, %v1077
      %1079 = vdwg.mxu0
      %vm1080 = vcmask 64512
      %v1082 = vsel %vm1080, %v792, 0
      %v1085 = vsel %vm1080, %v906, 0
      %1087 = vmatpush.xpose.msra.mxu0 0.0
      %1088 = vmatpush.xpose.msra.mxu0 0.0
      %1089 = vmatpush.xpose.msra.mxu0 0.0
      %1090 = vmatpush.xpose.msra.mxu0 0.0
      %1091 = vmatpush.xpose.msra.mxu0 0.0
      %1092 = vmatpush.xpose.msra.mxu0 0.0
      %1093 = vmatpush.xpose.msra.mxu0 0.0
      %1094 = vmatpush.xpose.msra.mxu0 0.0
      %1095 = vmatpush.xpose.msra.mxu0 0.0
      %1096 = vmatpush.xpose.msra.mxu0 0.0
      %1097 = vmatpush.xpose.msra.mxu0 0.0
      %1098 = vmatpush.xpose.msra.mxu0 0.0
      %1099 = vmatpush.xpose.msra.mxu0 0.0
      %1100 = vmatpush.xpose.msra.mxu0 0.0
      %1101 = vmatpush.xpose.msra.mxu0 0.0
      %1102 = vmatpush.xpose.msra.mxu0 %v1085
      %1103 = vmatmul.f32.gmra.mxu0 %v1082
      %v1104 = vpop.f32.mrf.mxu0
      %v1105 = vadd.f32 0.0, %v1104
      %1106 = vdwg.mxu0
      %v1108 = vsel %vm1080, %v812, 0
      %v1111 = vsel %vm1080, %v926, 0
      %1113 = vmatpush.xpose.msra.mxu0 0.0
      %1114 = vmatpush.xpose.msra.mxu0 0.0
      %1115 = vmatpush.xpose.msra.mxu0 0.0
      %1116 = vmatpush.xpose.msra.mxu0 0.0
      %1117 = vmatpush.xpose.msra.mxu0 0.0
      %1118 = vmatpush.xpose.msra.mxu0 0.0
      %1119 = vmatpush.xpose.msra.mxu0 0.0
      %1120 = vmatpush.xpose.msra.mxu0 0.0
      %1121 = vmatpush.xpose.msra.mxu0 0.0
      %1122 = vmatpush.xpose.msra.mxu0 0.0
      %1123 = vmatpush.xpose.msra.mxu0 0.0
      %1124 = vmatpush.xpose.msra.mxu0 0.0
      %1125 = vmatpush.xpose.msra.mxu0 0.0
      %1126 = vmatpush.xpose.msra.mxu0 0.0
      %1127 = vmatpush.xpose.msra.mxu0 0.0
      %1128 = vmatpush.xpose.msra.mxu0 %v1111
      %1129 = vmatmul.f32.gmra.mxu0 %v1108
      %v1130 = vpop.f32.mrf.mxu0
      %v1131 = vadd.f32 0.0, %v1130
      %1132 = vdwg.mxu0
      %v1134 = vsel %vm1080, %v832, 0
      %v1137 = vsel %vm1080, %v946, 0
      %1139 = vmatpush.xpose.msra.mxu0 0.0
      %1140 = vmatpush.xpose.msra.mxu0 0.0
      %1141 = vmatpush.xpose.msra.mxu0 0.0
      %1142 = vmatpush.xpose.msra.mxu0 0.0
      %1143 = vmatpush.xpose.msra.mxu0 0.0
      %1144 = vmatpush.xpose.msra.mxu0 0.0
      %1145 = vmatpush.xpose.msra.mxu0 0.0
      %1146 = vmatpush.xpose.msra.mxu0 0.0
      %1147 = vmatpush.xpose.msra.mxu0 0.0
      %1148 = vmatpush.xpose.msra.mxu0 0.0
      %1149 = vmatpush.xpose.msra.mxu0 0.0
      %1150 = vmatpush.xpose.msra.mxu0 0.0
      %1151 = vmatpush.xpose.msra.mxu0 0.0
      %1152 = vmatpush.xpose.msra.mxu0 0.0
      %1153 = vmatpush.xpose.msra.mxu0 0.0
      %1154 = vmatpush.xpose.msra.mxu0 %v1137
      %1155 = vmatmul.f32.gmra.mxu0 %v1134
      %v1156 = vpop.f32.mrf.mxu0
      %v1157 = vadd.f32 0.0, %v1156
      %1158 = vdwg.mxu0
      %v1160 = vsel %vm1080, %v852, 0
      %v1163 = vsel %vm1080, %v966, 0
      %1165 = vmatpush.xpose.msra.mxu0 0.0
      %1166 = vmatpush.xpose.msra.mxu0 0.0
      %1167 = vmatpush.xpose.msra.mxu0 0.0
      %1168 = vmatpush.xpose.msra.mxu0 0.0
      %1169 = vmatpush.xpose.msra.mxu0 0.0
      %1170 = vmatpush.xpose.msra.mxu0 0.0
      %1171 = vmatpush.xpose.msra.mxu0 0.0
      %1172 = vmatpush.xpose.msra.mxu0 0.0
      %1173 = vmatpush.xpose.msra.mxu0 0.0
      %1174 = vmatpush.xpose.msra.mxu0 0.0
      %1175 = vmatpush.xpose.msra.mxu0 0.0
      %1176 = vmatpush.xpose.msra.mxu0 0.0
      %1177 = vmatpush.xpose.msra.mxu0 0.0
      %1178 = vmatpush.xpose.msra.mxu0 0.0
      %1179 = vmatpush.xpose.msra.mxu0 0.0
      %1180 = vmatpush.xpose.msra.mxu0 %v1163
      %1181 = vmatmul.f32.gmra.mxu0 %v1160
      %v1182 = vpop.f32.mrf.mxu0
      %v1183 = vadd.f32 0.0, %v1182
      %1184 = vdwg.mxu0
      %v1185 = vmul.f32 %v1105, 0.35355338
      %v1186 = vmul.f32 %v1131, 0.35355338
      %v1187 = vmul.f32 %v1157, 0.35355338
      %v1188 = vmul.f32 %v1183, 0.35355338
      %v1189 = vsel %vm1080, %v1185, -inf
      %1190 = vmax.xlane.f32.xlu0 %v1189
      %v1191 = vpop.xlane.xlu0 %1190
      %v1192 = vsel %vm1080, %v1186, -inf
      %1193 = vmax.xlane.f32.xlu0 %v1192
      %v1194 = vpop.xlane.xlu0 %1193
      %v1195 = vsel %vm1080, %v1187, -inf
      %1196 = vmax.xlane.f32.xlu0 %v1195
      %v1197 = vpop.xlane.xlu0 %1196
      %v1198 = vsel %vm1080, %v1188, -inf
      %1199 = vmax.xlane.f32.xlu0 %v1198
      %v1200 = vpop.xlane.xlu0 %1199
      %v1201 = vsub.f32 %v1185, %v1191
      %v1202 = vsub.f32 %v1186, %v1194
      %v1203 = vsub.f32 %v1187, %v1197
      %v1204 = vsub.f32 %v1188, %v1200
      %v1205 = vmul.f32 %v1201, 1.442695
      %v1206 = vpow.pop %v1205
      %v1207 = vmul.f32 %v1202, 1.442695
      %v1208 = vpow.pop %v1207
      %v1209 = vmul.f32 %v1203, 1.442695
      %v1210 = vpow.pop %v1209
      %v1211 = vmul.f32 %v1204, 1.442695
      %v1212 = vpow.pop %v1211
      %v1213 = vsel %vm1080, %v1206, 0.0
      %1214 = vadd.xlane.f32.xlu0 %v1213
      %v1215 = vpop.xlane.xlu0 %1214
      %v1216 = vsel %vm1080, %v1208, 0.0
      %1217 = vadd.xlane.f32.xlu0 %v1216
      %v1218 = vpop.xlane.xlu0 %1217
      %v1219 = vsel %vm1080, %v1210, 0.0
      %1220 = vadd.xlane.f32.xlu0 %v1219
      %v1221 = vpop.xlane.xlu0 %1220
      %v1222 = vsel %vm1080, %v1212, 0.0
      %1223 = vadd.xlane.f32.xlu0 %v1222
      %v1224 = vpop.xlane.xlu0 %1223
      %v1225 = vrcp.pop %v1215
      %v1226 = vrcp.pop %v1218
      %v1227 = vrcp.pop %v1221
      %v1228 = vrcp.pop %v1224
      %v1229 = vmul.f32 %v1206, %v1225
      %v1230 = vmul.f32 %v1208, %v1226
      %v1231 = vmul.f32 %v1210, %v1227
      %v1232 = vmul.f32 %v1212, %v1228
      %v1234 = vsel %vm1080, %v1229, 0
      %1236 = vmatpush.msra.mxu0 0.0
      %1237 = vmatpush.msra.mxu0 0.0
      %1238 = vmatpush.msra.mxu0 0.0
      %1239 = vmatpush.msra.mxu0 0.0
      %1240 = vmatpush.msra.mxu0 0.0
      %1241 = vmatpush.msra.mxu0 0.0
      %1242 = vmatpush.msra.mxu0 0.0
      %1243 = vmatpush.msra.mxu0 0.0
      %1244 = vmatpush.msra.mxu0 0.0
      %1245 = vmatpush.msra.mxu0 0.0
      %1246 = vmatpush.msra.mxu0 0.0
      %1247 = vmatpush.msra.mxu0 0.0
      %1248 = vmatpush.msra.mxu0 0.0
      %1249 = vmatpush.msra.mxu0 0.0
      %1250 = vmatpush.msra.mxu0 0.0
      %1251 = vmatpush.msra.mxu0 %v1018
      %1252 = vmatmul.f32.gmra.mxu0 %v1234
      %v1253 = vpop.f32.mrf.mxu0
      %v1254 = vadd.f32 0.0, %v1253
      %1255 = vdwg.mxu0
      %v1257 = vsel %vm1080, %v1230, 0
      %1259 = vmatpush.msra.mxu0 0.0
      %1260 = vmatpush.msra.mxu0 0.0
      %1261 = vmatpush.msra.mxu0 0.0
      %1262 = vmatpush.msra.mxu0 0.0
      %1263 = vmatpush.msra.mxu0 0.0
      %1264 = vmatpush.msra.mxu0 0.0
      %1265 = vmatpush.msra.mxu0 0.0
      %1266 = vmatpush.msra.mxu0 0.0
      %1267 = vmatpush.msra.mxu0 0.0
      %1268 = vmatpush.msra.mxu0 0.0
      %1269 = vmatpush.msra.mxu0 0.0
      %1270 = vmatpush.msra.mxu0 0.0
      %1271 = vmatpush.msra.mxu0 0.0
      %1272 = vmatpush.msra.mxu0 0.0
      %1273 = vmatpush.msra.mxu0 0.0
      %1274 = vmatpush.msra.mxu0 %v1038
      %1275 = vmatmul.f32.gmra.mxu0 %v1257
      %v1276 = vpop.f32.mrf.mxu0
      %v1277 = vadd.f32 0.0, %v1276
      %1278 = vdwg.mxu0
      %v1280 = vsel %vm1080, %v1231, 0
      %1282 = vmatpush.msra.mxu0 0.0
      %1283 = vmatpush.msra.mxu0 0.0
      %1284 = vmatpush.msra.mxu0 0.0
      %1285 = vmatpush.msra.mxu0 0.0
      %1286 = vmatpush.msra.mxu0 0.0
      %1287 = vmatpush.msra.mxu0 0.0
      %1288 = vmatpush.msra.mxu0 0.0
      %1289 = vmatpush.msra.mxu0 0.0
      %1290 = vmatpush.msra.mxu0 0.0
      %1291 = vmatpush.msra.mxu0 0.0
      %1292 = vmatpush.msra.mxu0 0.0
      %1293 = vmatpush.msra.mxu0 0.0
      %1294 = vmatpush.msra.mxu0 0.0
      %1295 = vmatpush.msra.mxu0 0.0
      %1296 = vmatpush.msra.mxu0 0.0
      %1297 = vmatpush.msra.mxu0 %v1058
      %1298 = vmatmul.f32.gmra.mxu0 %v1280
      %v1299 = vpop.f32.mrf.mxu0
      %v1300 = vadd.f32 0.0, %v1299
      %1301 = vdwg.mxu0
      %v1303 = vsel %vm1080, %v1232, 0
      %1305 = vmatpush.msra.mxu0 0.0
      %1306 = vmatpush.msra.mxu0 0.0
      %1307 = vmatpush.msra.mxu0 0.0
      %1308 = vmatpush.msra.mxu0 0.0
      %1309 = vmatpush.msra.mxu0 0.0
      %1310 = vmatpush.msra.mxu0 0.0
      %1311 = vmatpush.msra.mxu0 0.0
      %1312 = vmatpush.msra.mxu0 0.0
      %1313 = vmatpush.msra.mxu0 0.0
      %1314 = vmatpush.msra.mxu0 0.0
      %1315 = vmatpush.msra.mxu0 0.0
      %1316 = vmatpush.msra.mxu0 0.0
      %1317 = vmatpush.msra.mxu0 0.0
      %1318 = vmatpush.msra.mxu0 0.0
      %1319 = vmatpush.msra.mxu0 0.0
      %1320 = vmatpush.msra.mxu0 %v1078
      %1321 = vmatmul.f32.gmra.mxu0 %v1303
      %v1322 = vpop.f32.mrf.mxu0
      %v1323 = vadd.f32 0.0, %v1322
      %1324 = vdwg.mxu0
      %v1325 = vld [vmem:[%s8] sm:$0xff]
      %v1326 = vld [vmem:[%s8 + $0x8] sm:$0xff]
      %v1327 = vld [vmem:[%s8 + $0x10] sm:$0xff]
      %v1328 = vld [vmem:[%s8 + $0x18] sm:$0xff]
      %v1330 = vsel %vm1080, %v1254, 0
      %1332 = vmatpush.msra.mxu0 0.0
      %1333 = vmatpush.msra.mxu0 0.0
      %1334 = vmatpush.msra.mxu0 0.0
      %1335 = vmatpush.msra.mxu0 0.0
      %1336 = vmatpush.msra.mxu0 0.0
      %1337 = vmatpush.msra.mxu0 0.0
      %1338 = vmatpush.msra.mxu0 0.0
      %1339 = vmatpush.msra.mxu0 0.0
      %1340 = vmatpush.msra.mxu0 0.0
      %1341 = vmatpush.msra.mxu0 0.0
      %1342 = vmatpush.msra.mxu0 0.0
      %1343 = vmatpush.msra.mxu0 0.0
      %1344 = vmatpush.msra.mxu0 0.0
      %1345 = vmatpush.msra.mxu0 0.0
      %1346 = vmatpush.msra.mxu0 0.0
      %1347 = vmatpush.msra.mxu0 %v1325
      %1348 = vmatmul.f32.gmra.mxu0 %v1330
      %v1349 = vpop.f32.mrf.mxu0
      %v1350 = vadd.f32 0.0, %v1349
      %1351 = vdwg.mxu0
      %v1353 = vsel %vm1080, %v1277, 0
      %1355 = vmatpush.msra.mxu0 0.0
      %1356 = vmatpush.msra.mxu0 0.0
      %1357 = vmatpush.msra.mxu0 0.0
      %1358 = vmatpush.msra.mxu0 0.0
      %1359 = vmatpush.msra.mxu0 0.0
      %1360 = vmatpush.msra.mxu0 0.0
      %1361 = vmatpush.msra.mxu0 0.0
      %1362 = vmatpush.msra.mxu0 0.0
      %1363 = vmatpush.msra.mxu0 0.0
      %1364 = vmatpush.msra.mxu0 0.0
      %1365 = vmatpush.msra.mxu0 0.0
      %1366 = vmatpush.msra.mxu0 0.0
      %1367 = vmatpush.msra.mxu0 0.0
      %1368 = vmatpush.msra.mxu0 0.0
      %1369 = vmatpush.msra.mxu0 0.0
      %1370 = vmatpush.msra.mxu0 %v1326
      %1371 = vmatmul.f32.gmra.mxu0 %v1353
      %v1372 = vpop.f32.mrf.mxu0
      %v1373 = vadd.f32 0.0, %v1372
      %1374 = vdwg.mxu0
      %v1376 = vsel %vm1080, %v1300, 0
      %1378 = vmatpush.msra.mxu0 0.0
      %1379 = vmatpush.msra.mxu0 0.0
      %1380 = vmatpush.msra.mxu0 0.0
      %1381 = vmatpush.msra.mxu0 0.0
      %1382 = vmatpush.msra.mxu0 0.0
      %1383 = vmatpush.msra.mxu0 0.0
      %1384 = vmatpush.msra.mxu0 0.0
      %1385 = vmatpush.msra.mxu0 0.0
      %1386 = vmatpush.msra.mxu0 0.0
      %1387 = vmatpush.msra.mxu0 0.0
      %1388 = vmatpush.msra.mxu0 0.0
      %1389 = vmatpush.msra.mxu0 0.0
      %1390 = vmatpush.msra.mxu0 0.0
      %1391 = vmatpush.msra.mxu0 0.0
      %1392 = vmatpush.msra.mxu0 0.0
      %1393 = vmatpush.msra.mxu0 %v1327
      %1394 = vmatmul.f32.gmra.mxu0 %v1376
      %v1395 = vpop.f32.mrf.mxu0
      %v1396 = vadd.f32 0.0, %v1395
      %1397 = vdwg.mxu0
      %v1399 = vsel %vm1080, %v1323, 0
      %1401 = vmatpush.msra.mxu0 0.0
      %1402 = vmatpush.msra.mxu0 0.0
      %1403 = vmatpush.msra.mxu0 0.0
      %1404 = vmatpush.msra.mxu0 0.0
      %1405 = vmatpush.msra.mxu0 0.0
      %1406 = vmatpush.msra.mxu0 0.0
      %1407 = vmatpush.msra.mxu0 0.0
      %1408 = vmatpush.msra.mxu0 0.0
      %1409 = vmatpush.msra.mxu0 0.0
      %1410 = vmatpush.msra.mxu0 0.0
      %1411 = vmatpush.msra.mxu0 0.0
      %1412 = vmatpush.msra.mxu0 0.0
      %1413 = vmatpush.msra.mxu0 0.0
      %1414 = vmatpush.msra.mxu0 0.0
      %1415 = vmatpush.msra.mxu0 0.0
      %1416 = vmatpush.msra.mxu0 %v1328
      %1417 = vmatmul.f32.gmra.mxu0 %v1399
      %v1418 = vpop.f32.mrf.mxu0
      %v1419 = vadd.f32 0.0, %v1418
      %1420 = vdwg.mxu0
      %v1421 = vsel %vm771, %v1350, 0.0
      %v1422 = vsel %vm771, %v1373, 0.0
      %v1423 = vadd.f32 %v1421, %v1422
      %v1424 = vsel %vm771, %v1396, 0.0
      %v1425 = vadd.f32 %v1423, %v1424
      %v1426 = vsel %vm771, %v1419, 0.0
      %v1427 = vadd.f32 %v1425, %v1426
      %v1428 = vld [vmem:[%s9] sm:$0x1]
      %v1430 = vperm.slane %v1428, 0
      %v1432 = vadd.f32 %v1427, %v1430
      %v1433 = vadd.f32 %v735, %v1432
      %v1434 = vsel %vm771, %v1433, 0.0
      %1435 = vadd.xlane.f32.xlu0 %v1434
      %v1436 = vpop.xlane.xlu0 %1435
      %v1437 = vrcp.pop 32.0
      %v1438 = vmul.f32 32.0, %v1437
      %v1439 = vsub.f32 1.0, %v1438
      %v1440 = vmul.f32 %v1437, %v1439
      %v1441 = vadd.f32 %v1437, %v1440
      %vm1442 = vweird.f32 %v1437
      %v1443 = vsel %vm1442, %v1437, %v1441
      %v1444 = vmul.f32 %v1436, %v1443
      %v1445 = vsub.f32 %v1433, %v1444
      %v1446 = vmul.f32 %v1445, %v1445
      %v1447 = vsel %vm771, %v1446, 0.0
      %1448 = vadd.xlane.f32.xlu0 %v1447
      %v1449 = vpop.xlane.xlu0 %1448
      %v1450 = vmul.f32 %v1449, %v1443
      %v1451 = vadd.f32 %v1450, 1e-05
      %v1452 = vrsqrt.pop %v1451
      %v1453 = vmul.f32 %v1452, %v1451
      %v1454 = vmul.f32 %v1453, %v1452
      %v1455 = vmul.f32 0.5, %v1454
      %v1456 = vsub.f32 1.5, %v1455
      %v1457 = vmul.f32 %v1452, %v1456
      %vm1458 = vweird.f32 %v1451
      %vm1459 = vweird.f32 %v1452
      %vm1460 = vmor %vm1458, %vm1459
      %v1461 = vsel %vm1460, %v1452, %v1457
      %v1462 = vmul.f32 %v1445, %v1461
      %v1463 = vld [vmem:[%s10] sm:$0x1]
      %v1465 = vperm.slane %v1463, 0
      %v1467 = vmul.f32 %v1462, %v1465
      %v1468 = vld [vmem:[%s11] sm:$0x1]
      %v1470 = vperm.slane %v1468, 0
      %v1472 = vadd.f32 %v1467, %v1470
      %v1473 = vld [vmem:[%s12] sm:$0xff]
      %v1474 = vld [vmem:[%s12 + $0x8] sm:$0xff]
      %v1475 = vld [vmem:[%s12 + $0x10] sm:$0xff]
      %v1476 = vld [vmem:[%s12 + $0x18] sm:$0xff]
      %v1477 = vld [vmem:[%s13] sm:$0x1]
      %v1479 = vperm.slane %v1477, 0
      %v1482 = vsel %vm771, %v1472, 0
      %1484 = vmatpush.msra.mxu0 0.0
      %1485 = vmatpush.msra.mxu0 0.0
      %1486 = vmatpush.msra.mxu0 0.0
      %1487 = vmatpush.msra.mxu0 0.0
      %1488 = vmatpush.msra.mxu0 0.0
      %1489 = vmatpush.msra.mxu0 0.0
      %1490 = vmatpush.msra.mxu0 0.0
      %1491 = vmatpush.msra.mxu0 0.0
      %1492 = vmatpush.msra.mxu0 0.0
      %1493 = vmatpush.msra.mxu0 0.0
      %1494 = vmatpush.msra.mxu0 0.0
      %1495 = vmatpush.msra.mxu0 0.0
      %1496 = vmatpush.msra.mxu0 %v1476
      %1497 = vmatpush.msra.mxu0 %v1475
      %1498 = vmatpush.msra.mxu0 %v1474
      %1499 = vmatpush.msra.mxu0 %v1473
      %1500 = vmatmul.f32.gmra.mxu0 %v1482
      %v1501 = vpop.f32.mrf.mxu0
      %v1502 = vadd.f32 %v1479, %v1501
      %1503 = vdwg.mxu0
      %v1504 = vmax.f32 %v1502, 0.0
      %v1505 = vld [vmem:[%s14] sm:$0xff]
      %v1506 = vld [vmem:[%s14 + $0x8] sm:$0xff]
      %v1507 = vld [vmem:[%s14 + $0x10] sm:$0xff]
      %v1508 = vld [vmem:[%s14 + $0x18] sm:$0xff]
      %v1509 = vld [vmem:[%s14 + $0x20] sm:$0xff]
      %v1510 = vld [vmem:[%s14 + $0x28] sm:$0xff]
      %v1511 = vld [vmem:[%s14 + $0x30] sm:$0xff]
      %v1512 = vld [vmem:[%s14 + $0x38] sm:$0xff]
      %v1513 = vld [vmem:[%s15] sm:$0x1]
      %v1515 = vperm.slane %v1513, 0
      %vm1517 = vcmask 523264
      %v1519 = vsel %vm1517, %v1504, 0
      %1521 = vmatpush.msra.mxu0 0.0
      %1522 = vmatpush.msra.mxu0 0.0
      %1523 = vmatpush.msra.mxu0 0.0
      %1524 = vmatpush.msra.mxu0 0.0
      %1525 = vmatpush.msra.mxu0 0.0
      %1526 = vmatpush.msra.mxu0 0.0
      %1527 = vmatpush.msra.mxu0 0.0
      %1528 = vmatpush.msra.mxu0 0.0
      %1529 = vmatpush.msra.mxu0 %v1512
      %1530 = vmatpush.msra.mxu0 %v1511
      %1531 = vmatpush.msra.mxu0 %v1510
      %1532 = vmatpush.msra.mxu0 %v1509
      %1533 = vmatpush.msra.mxu0 %v1508
      %1534 = vmatpush.msra.mxu0 %v1507
      %1535 = vmatpush.msra.mxu0 %v1506
      %1536 = vmatpush.msra.mxu0 %v1505
      %1537 = vmatmul.f32.gmra.mxu0 %v1519
      %v1538 = vpop.f32.mrf.mxu0
      %v1539 = vadd.f32 %v1515, %v1538
      %1540 = vdwg.mxu0
      %v1541 = vadd.f32 %v1472, %v1539
      %v1542 = vsel %vm771, %v1541, 0.0
      %1543 = vadd.xlane.f32.xlu0 %v1542
      %v1544 = vpop.xlane.xlu0 %1543
      %v1545 = vmul.f32 %v1544, %v1443
      %v1546 = vsub.f32 %v1541, %v1545
      %v1547 = vmul.f32 %v1546, %v1546
      %v1548 = vsel %vm771, %v1547, 0.0
      %1549 = vadd.xlane.f32.xlu0 %v1548
      %v1550 = vpop.xlane.xlu0 %1549
      %v1551 = vmul.f32 %v1550, %v1443
      %v1552 = vadd.f32 %v1551, 1e-05
      %v1553 = vrsqrt.pop %v1552
      %v1554 = vmul.f32 %v1553, %v1552
      %v1555 = vmul.f32 %v1554, %v1553
      %v1556 = vmul.f32 0.5, %v1555
      %v1557 = vsub.f32 1.5, %v1556
      %v1558 = vmul.f32 %v1553, %v1557
      %vm1559 = vweird.f32 %v1552
      %vm1560 = vweird.f32 %v1553
      %vm1561 = vmor %vm1559, %vm1560
      %v1562 = vsel %vm1561, %v1553, %v1558
      %v1563 = vmul.f32 %v1546, %v1562
      %v1564 = vld [vmem:[%s16] sm:$0x1]
      %v1566 = vperm.slane %v1564, 0
      %v1568 = vmul.f32 %v1563, %v1566
      %v1569 = vld [vmem:[%s17] sm:$0x1]
      %v1571 = vperm.slane %v1569, 0
      %v1573 = vadd.f32 %v1568, %v1571
      %s1574 = scalar_lea.vmem %s2, 256
      %v1575 = vld [vmem:[%s1574] sm:$0xff]
      %v1576 = vld [vmem:[%s1574 + $0x8] sm:$0xff]
      %v1577 = vld [vmem:[%s1574 + $0x10] sm:$0xff]
      %v1578 = vld [vmem:[%s1574 + $0x18] sm:$0xff]
      %v1579 = vld [vmem:[%s1574 + $0x20] sm:$0xff]
      %v1580 = vld [vmem:[%s1574 + $0x28] sm:$0xff]
      %v1581 = vld [vmem:[%s1574 + $0x30] sm:$0xff]
      %v1582 = vld [vmem:[%s1574 + $0x38] sm:$0xff]
      %v1583 = vld [vmem:[%s1574 + $0x40] sm:$0xff]
      %v1584 = vld [vmem:[%s1574 + $0x48] sm:$0xff]
      %v1585 = vld [vmem:[%s1574 + $0x50] sm:$0xff]
      %v1586 = vld [vmem:[%s1574 + $0x58] sm:$0xff]
      %v1587 = vld [vmem:[%s1574 + $0x60] sm:$0xff]
      %v1588 = vld [vmem:[%s1574 + $0x68] sm:$0xff]
      %v1589 = vld [vmem:[%s1574 + $0x70] sm:$0xff]
      %v1590 = vld [vmem:[%s1574 + $0x78] sm:$0xff]
      %s1591 = scalar_lea.vmem %s3, 8
      %v1592 = vld [vmem:[%s1591] sm:$0x1]
      %v1593 = vld [vmem:[%s1591 + $0x1] sm:$0x1]
      %v1594 = vld [vmem:[%s1591 + $0x2] sm:$0x1]
      %v1595 = vld [vmem:[%s1591 + $0x3] sm:$0x1]
      %v1600 = vperm.slane %v1592, 0
      %v1601 = vperm.slane %v1593, 0
      %v1602 = vperm.slane %v1594, 0
      %v1603 = vperm.slane %v1595, 0
      %v1609 = vsel %vm771, %v1573, 0
      %1611 = vmatpush.msra.mxu0 0.0
      %1612 = vmatpush.msra.mxu0 0.0
      %1613 = vmatpush.msra.mxu0 0.0
      %1614 = vmatpush.msra.mxu0 0.0
      %1615 = vmatpush.msra.mxu0 0.0
      %1616 = vmatpush.msra.mxu0 0.0
      %1617 = vmatpush.msra.mxu0 0.0
      %1618 = vmatpush.msra.mxu0 0.0
      %1619 = vmatpush.msra.mxu0 0.0
      %1620 = vmatpush.msra.mxu0 0.0
      %1621 = vmatpush.msra.mxu0 0.0
      %1622 = vmatpush.msra.mxu0 0.0
      %1623 = vmatpush.msra.mxu0 %v1578
      %1624 = vmatpush.msra.mxu0 %v1577
      %1625 = vmatpush.msra.mxu0 %v1576
      %1626 = vmatpush.msra.mxu0 %v1575
      %1627 = vmatmul.f32.gmra.mxu0 %v1609
      %v1628 = vpop.f32.mrf.mxu0
      %v1629 = vadd.f32 %v1600, %v1628
      %1630 = vdwg.mxu0
      %1631 = vmatpush.msra.mxu0 0.0
      %1632 = vmatpush.msra.mxu0 0.0
      %1633 = vmatpush.msra.mxu0 0.0
      %1634 = vmatpush.msra.mxu0 0.0
      %1635 = vmatpush.msra.mxu0 0.0
      %1636 = vmatpush.msra.mxu0 0.0
      %1637 = vmatpush.msra.mxu0 0.0
      %1638 = vmatpush.msra.mxu0 0.0
      %1639 = vmatpush.msra.mxu0 0.0
      %1640 = vmatpush.msra.mxu0 0.0
      %1641 = vmatpush.msra.mxu0 0.0
      %1642 = vmatpush.msra.mxu0 0.0
      %1643 = vmatpush.msra.mxu0 %v1582
      %1644 = vmatpush.msra.mxu0 %v1581
      %1645 = vmatpush.msra.mxu0 %v1580
      %1646 = vmatpush.msra.mxu0 %v1579
      %1647 = vmatmul.f32.gmra.mxu0 %v1609
      %v1648 = vpop.f32.mrf.mxu0
      %v1649 = vadd.f32 %v1601, %v1648
      %1650 = vdwg.mxu0
      %1651 = vmatpush.msra.mxu0 0.0
      %1652 = vmatpush.msra.mxu0 0.0
      %1653 = vmatpush.msra.mxu0 0.0
      %1654 = vmatpush.msra.mxu0 0.0
      %1655 = vmatpush.msra.mxu0 0.0
      %1656 = vmatpush.msra.mxu0 0.0
      %1657 = vmatpush.msra.mxu0 0.0
      %1658 = vmatpush.msra.mxu0 0.0
      %1659 = vmatpush.msra.mxu0 0.0
      %1660 = vmatpush.msra.mxu0 0.0
      %1661 = vmatpush.msra.mxu0 0.0
      %1662 = vmatpush.msra.mxu0 0.0
      %1663 = vmatpush.msra.mxu0 %v1586
      %1664 = vmatpush.msra.mxu0 %v1585
      %1665 = vmatpush.msra.mxu0 %v1584
      %1666 = vmatpush.msra.mxu0 %v1583
      %1667 = vmatmul.f32.gmra.mxu0 %v1609
      %v1668 = vpop.f32.mrf.mxu0
      %v1669 = vadd.f32 %v1602, %v1668
      %1670 = vdwg.mxu0
      %1671 = vmatpush.msra.mxu0 0.0
      %1672 = vmatpush.msra.mxu0 0.0
      %1673 = vmatpush.msra.mxu0 0.0
      %1674 = vmatpush.msra.mxu0 0.0
      %1675 = vmatpush.msra.mxu0 0.0
      %1676 = vmatpush.msra.mxu0 0.0
      %1677 = vmatpush.msra.mxu0 0.0
      %1678 = vmatpush.msra.mxu0 0.0
      %1679 = vmatpush.msra.mxu0 0.0
      %1680 = vmatpush.msra.mxu0 0.0
      %1681 = vmatpush.msra.mxu0 0.0
      %1682 = vmatpush.msra.mxu0 0.0
      %1683 = vmatpush.msra.mxu0 %v1590
      %1684 = vmatpush.msra.mxu0 %v1589
      %1685 = vmatpush.msra.mxu0 %v1588
      %1686 = vmatpush.msra.mxu0 %v1587
      %1687 = vmatmul.f32.gmra.mxu0 %v1609
      %v1688 = vpop.f32.mrf.mxu0
      %v1689 = vadd.f32 %v1603, %v1688
      %1690 = vdwg.mxu0
      %s1691 = scalar_lea.vmem %s4, 256
      %v1692 = vld [vmem:[%s1691] sm:$0xff]
      %v1693 = vld [vmem:[%s1691 + $0x8] sm:$0xff]
      %v1694 = vld [vmem:[%s1691 + $0x10] sm:$0xff]
      %v1695 = vld [vmem:[%s1691 + $0x18] sm:$0xff]
      %v1696 = vld [vmem:[%s1691 + $0x20] sm:$0xff]
      %v1697 = vld [vmem:[%s1691 + $0x28] sm:$0xff]
      %v1698 = vld [vmem:[%s1691 + $0x30] sm:$0xff]
      %v1699 = vld [vmem:[%s1691 + $0x38] sm:$0xff]
      %v1700 = vld [vmem:[%s1691 + $0x40] sm:$0xff]
      %v1701 = vld [vmem:[%s1691 + $0x48] sm:$0xff]
      %v1702 = vld [vmem:[%s1691 + $0x50] sm:$0xff]
      %v1703 = vld [vmem:[%s1691 + $0x58] sm:$0xff]
      %v1704 = vld [vmem:[%s1691 + $0x60] sm:$0xff]
      %v1705 = vld [vmem:[%s1691 + $0x68] sm:$0xff]
      %v1706 = vld [vmem:[%s1691 + $0x70] sm:$0xff]
      %v1707 = vld [vmem:[%s1691 + $0x78] sm:$0xff]
      %s1708 = scalar_lea.vmem %s5, 8
      %v1709 = vld [vmem:[%s1708] sm:$0x1]
      %v1710 = vld [vmem:[%s1708 + $0x1] sm:$0x1]
      %v1711 = vld [vmem:[%s1708 + $0x2] sm:$0x1]
      %v1712 = vld [vmem:[%s1708 + $0x3] sm:$0x1]
      %v1717 = vperm.slane %v1709, 0
      %v1718 = vperm.slane %v1710, 0
      %v1719 = vperm.slane %v1711, 0
      %v1720 = vperm.slane %v1712, 0
      %1725 = vmatpush.msra.mxu0 0.0
      %1726 = vmatpush.msra.mxu0 0.0
      %1727 = vmatpush.msra.mxu0 0.0
      %1728 = vmatpush.msra.mxu0 0.0
      %1729 = vmatpush.msra.mxu0 0.0
      %1730 = vmatpush.msra.mxu0 0.0
      %1731 = vmatpush.msra.mxu0 0.0
      %1732 = vmatpush.msra.mxu0 0.0
      %1733 = vmatpush.msra.mxu0 0.0
      %1734 = vmatpush.msra.mxu0 0.0
      %1735 = vmatpush.msra.mxu0 0.0
      %1736 = vmatpush.msra.mxu0 0.0
      %1737 = vmatpush.msra.mxu0 %v1695
      %1738 = vmatpush.msra.mxu0 %v1694
      %1739 = vmatpush.msra.mxu0 %v1693
      %1740 = vmatpush.msra.mxu0 %v1692
      %1741 = vmatmul.f32.gmra.mxu0 %v772
      %v1742 = vpop.f32.mrf.mxu0
      %v1743 = vadd.f32 %v1717, %v1742
      %1744 = vdwg.mxu0
      %1745 = vmatpush.msra.mxu0 0.0
      %1746 = vmatpush.msra.mxu0 0.0
      %1747 = vmatpush.msra.mxu0 0.0
      %1748 = vmatpush.msra.mxu0 0.0
      %1749 = vmatpush.msra.mxu0 0.0
      %1750 = vmatpush.msra.mxu0 0.0
      %1751 = vmatpush.msra.mxu0 0.0
      %1752 = vmatpush.msra.mxu0 0.0
      %1753 = vmatpush.msra.mxu0 0.0
      %1754 = vmatpush.msra.mxu0 0.0
      %1755 = vmatpush.msra.mxu0 0.0
      %1756 = vmatpush.msra.mxu0 0.0
      %1757 = vmatpush.msra.mxu0 %v1699
      %1758 = vmatpush.msra.mxu0 %v1698
      %1759 = vmatpush.msra.mxu0 %v1697
      %1760 = vmatpush.msra.mxu0 %v1696
      %1761 = vmatmul.f32.gmra.mxu0 %v772
      %v1762 = vpop.f32.mrf.mxu0
      %v1763 = vadd.f32 %v1718, %v1762
      %1764 = vdwg.mxu0
      %1765 = vmatpush.msra.mxu0 0.0
      %1766 = vmatpush.msra.mxu0 0.0
      %1767 = vmatpush.msra.mxu0 0.0
      %1768 = vmatpush.msra.mxu0 0.0
      %1769 = vmatpush.msra.mxu0 0.0
      %1770 = vmatpush.msra.mxu0 0.0
      %1771 = vmatpush.msra.mxu0 0.0
      %1772 = vmatpush.msra.mxu0 0.0
      %1773 = vmatpush.msra.mxu0 0.0
      %1774 = vmatpush.msra.mxu0 0.0
      %1775 = vmatpush.msra.mxu0 0.0
      %1776 = vmatpush.msra.mxu0 0.0
      %1777 = vmatpush.msra.mxu0 %v1703
      %1778 = vmatpush.msra.mxu0 %v1702
      %1779 = vmatpush.msra.mxu0 %v1701
      %1780 = vmatpush.msra.mxu0 %v1700
      %1781 = vmatmul.f32.gmra.mxu0 %v772
      %v1782 = vpop.f32.mrf.mxu0
      %v1783 = vadd.f32 %v1719, %v1782
      %1784 = vdwg.mxu0
      %1785 = vmatpush.msra.mxu0 0.0
      %1786 = vmatpush.msra.mxu0 0.0
      %1787 = vmatpush.msra.mxu0 0.0
      %1788 = vmatpush.msra.mxu0 0.0
      %1789 = vmatpush.msra.mxu0 0.0
      %1790 = vmatpush.msra.mxu0 0.0
      %1791 = vmatpush.msra.mxu0 0.0
      %1792 = vmatpush.msra.mxu0 0.0
      %1793 = vmatpush.msra.mxu0 0.0
      %1794 = vmatpush.msra.mxu0 0.0
      %1795 = vmatpush.msra.mxu0 0.0
      %1796 = vmatpush.msra.mxu0 0.0
      %1797 = vmatpush.msra.mxu0 %v1707
      %1798 = vmatpush.msra.mxu0 %v1706
      %1799 = vmatpush.msra.mxu0 %v1705
      %1800 = vmatpush.msra.mxu0 %v1704
      %1801 = vmatmul.f32.gmra.mxu0 %v772
      %v1802 = vpop.f32.mrf.mxu0
      %v1803 = vadd.f32 %v1720, %v1802
      %1804 = vdwg.mxu0
      %s1805 = scalar_lea.vmem %s6, 256
      %v1806 = vld [vmem:[%s1805] sm:$0xff]
      %v1807 = vld [vmem:[%s1805 + $0x8] sm:$0xff]
      %v1808 = vld [vmem:[%s1805 + $0x10] sm:$0xff]
      %v1809 = vld [vmem:[%s1805 + $0x18] sm:$0xff]
      %v1810 = vld [vmem:[%s1805 + $0x20] sm:$0xff]
      %v1811 = vld [vmem:[%s1805 + $0x28] sm:$0xff]
      %v1812 = vld [vmem:[%s1805 + $0x30] sm:$0xff]
      %v1813 = vld [vmem:[%s1805 + $0x38] sm:$0xff]
      %v1814 = vld [vmem:[%s1805 + $0x40] sm:$0xff]
      %v1815 = vld [vmem:[%s1805 + $0x48] sm:$0xff]
      %v1816 = vld [vmem:[%s1805 + $0x50] sm:$0xff]
      %v1817 = vld [vmem:[%s1805 + $0x58] sm:$0xff]
      %v1818 = vld [vmem:[%s1805 + $0x60] sm:$0xff]
      %v1819 = vld [vmem:[%s1805 + $0x68] sm:$0xff]
      %v1820 = vld [vmem:[%s1805 + $0x70] sm:$0xff]
      %v1821 = vld [vmem:[%s1805 + $0x78] sm:$0xff]
      %s1822 = scalar_lea.vmem %s7, 8
      %v1823 = vld [vmem:[%s1822] sm:$0x1]
      %v1824 = vld [vmem:[%s1822 + $0x1] sm:$0x1]
      %v1825 = vld [vmem:[%s1822 + $0x2] sm:$0x1]
      %v1826 = vld [vmem:[%s1822 + $0x3] sm:$0x1]
      %v1831 = vperm.slane %v1823, 0
      %v1832 = vperm.slane %v1824, 0
      %v1833 = vperm.slane %v1825, 0
      %v1834 = vperm.slane %v1826, 0
      %1839 = vmatpush.msra.mxu0 0.0
      %1840 = vmatpush.msra.mxu0 0.0
      %1841 = vmatpush.msra.mxu0 0.0
      %1842 = vmatpush.msra.mxu0 0.0
      %1843 = vmatpush.msra.mxu0 0.0
      %1844 = vmatpush.msra.mxu0 0.0
      %1845 = vmatpush.msra.mxu0 0.0
      %1846 = vmatpush.msra.mxu0 0.0
      %1847 = vmatpush.msra.mxu0 0.0
      %1848 = vmatpush.msra.mxu0 0.0
      %1849 = vmatpush.msra.mxu0 0.0
      %1850 = vmatpush.msra.mxu0 0.0
      %1851 = vmatpush.msra.mxu0 %v1809
      %1852 = vmatpush.msra.mxu0 %v1808
      %1853 = vmatpush.msra.mxu0 %v1807
      %1854 = vmatpush.msra.mxu0 %v1806
      %1855 = vmatmul.f32.gmra.mxu0 %v772
      %v1856 = vpop.f32.mrf.mxu0
      %v1857 = vadd.f32 %v1831, %v1856
      %1858 = vdwg.mxu0
      %1859 = vmatpush.msra.mxu0 0.0
      %1860 = vmatpush.msra.mxu0 0.0
      %1861 = vmatpush.msra.mxu0 0.0
      %1862 = vmatpush.msra.mxu0 0.0
      %1863 = vmatpush.msra.mxu0 0.0
      %1864 = vmatpush.msra.mxu0 0.0
      %1865 = vmatpush.msra.mxu0 0.0
      %1866 = vmatpush.msra.mxu0 0.0
      %1867 = vmatpush.msra.mxu0 0.0
      %1868 = vmatpush.msra.mxu0 0.0
      %1869 = vmatpush.msra.mxu0 0.0
      %1870 = vmatpush.msra.mxu0 0.0
      %1871 = vmatpush.msra.mxu0 %v1813
      %1872 = vmatpush.msra.mxu0 %v1812
      %1873 = vmatpush.msra.mxu0 %v1811
      %1874 = vmatpush.msra.mxu0 %v1810
      %1875 = vmatmul.f32.gmra.mxu0 %v772
      %v1876 = vpop.f32.mrf.mxu0
      %v1877 = vadd.f32 %v1832, %v1876
      %1878 = vdwg.mxu0
      %1879 = vmatpush.msra.mxu0 0.0
      %1880 = vmatpush.msra.mxu0 0.0
      %1881 = vmatpush.msra.mxu0 0.0
      %1882 = vmatpush.msra.mxu0 0.0
      %1883 = vmatpush.msra.mxu0 0.0
      %1884 = vmatpush.msra.mxu0 0.0
      %1885 = vmatpush.msra.mxu0 0.0
      %1886 = vmatpush.msra.mxu0 0.0
      %1887 = vmatpush.msra.mxu0 0.0
      %1888 = vmatpush.msra.mxu0 0.0
      %1889 = vmatpush.msra.mxu0 0.0
      %1890 = vmatpush.msra.mxu0 0.0
      %1891 = vmatpush.msra.mxu0 %v1817
      %1892 = vmatpush.msra.mxu0 %v1816
      %1893 = vmatpush.msra.mxu0 %v1815
      %1894 = vmatpush.msra.mxu0 %v1814
      %1895 = vmatmul.f32.gmra.mxu0 %v772
      %v1896 = vpop.f32.mrf.mxu0
      %v1897 = vadd.f32 %v1833, %v1896
      %1898 = vdwg.mxu0
      %1899 = vmatpush.msra.mxu0 0.0
      %1900 = vmatpush.msra.mxu0 0.0
      %1901 = vmatpush.msra.mxu0 0.0
      %1902 = vmatpush.msra.mxu0 0.0
      %1903 = vmatpush.msra.mxu0 0.0
      %1904 = vmatpush.msra.mxu0 0.0
      %1905 = vmatpush.msra.mxu0 0.0
      %1906 = vmatpush.msra.mxu0 0.0
      %1907 = vmatpush.msra.mxu0 0.0
      %1908 = vmatpush.msra.mxu0 0.0
      %1909 = vmatpush.msra.mxu0 0.0
      %1910 = vmatpush.msra.mxu0 0.0
      %1911 = vmatpush.msra.mxu0 %v1821
      %1912 = vmatpush.msra.mxu0 %v1820
      %1913 = vmatpush.msra.mxu0 %v1819
      %1914 = vmatpush.msra.mxu0 %v1818
      %1915 = vmatmul.f32.gmra.mxu0 %v772
      %v1916 = vpop.f32.mrf.mxu0
      %v1917 = vadd.f32 %v1834, %v1916
      %1918 = vdwg.mxu0
      %v1920 = vsel %vm1080, %v1629, 0
      %v1923 = vsel %vm1080, %v1743, 0
      %1925 = vmatpush.xpose.msra.mxu0 0.0
      %1926 = vmatpush.xpose.msra.mxu0 0.0
      %1927 = vmatpush.xpose.msra.mxu0 0.0
      %1928 = vmatpush.xpose.msra.mxu0 0.0
      %1929 = vmatpush.xpose.msra.mxu0 0.0
      %1930 = vmatpush.xpose.msra.mxu0 0.0
      %1931 = vmatpush.xpose.msra.mxu0 0.0
      %1932 = vmatpush.xpose.msra.mxu0 0.0
      %1933 = vmatpush.xpose.msra.mxu0 0.0
      %1934 = vmatpush.xpose.msra.mxu0 0.0
      %1935 = vmatpush.xpose.msra.mxu0 0.0
      %1936 = vmatpush.xpose.msra.mxu0 0.0
      %1937 = vmatpush.xpose.msra.mxu0 0.0
      %1938 = vmatpush.xpose.msra.mxu0 0.0
      %1939 = vmatpush.xpose.msra.mxu0 0.0
      %1940 = vmatpush.xpose.msra.mxu0 %v1923
      %1941 = vmatmul.f32.gmra.mxu0 %v1920
      %v1942 = vpop.f32.mrf.mxu0
      %v1943 = vadd.f32 0.0, %v1942
      %1944 = vdwg.mxu0
      %v1946 = vsel %vm1080, %v1649, 0
      %v1949 = vsel %vm1080, %v1763, 0
      %1951 = vmatpush.xpose.msra.mxu0 0.0
      %1952 = vmatpush.xpose.msra.mxu0 0.0
      %1953 = vmatpush.xpose.msra.mxu0 0.0
      %1954 = vmatpush.xpose.msra.mxu0 0.0
      %1955 = vmatpush.xpose.msra.mxu0 0.0
      %1956 = vmatpush.xpose.msra.mxu0 0.0
      %1957 = vmatpush.xpose.msra.mxu0 0.0
      %1958 = vmatpush.xpose.msra.mxu0 0.0
      %1959 = vmatpush.xpose.msra.mxu0 0.0
      %1960 = vmatpush.xpose.msra.mxu0 0.0
      %1961 = vmatpush.xpose.msra.mxu0 0.0
      %1962 = vmatpush.xpose.msra.mxu0 0.0
      %1963 = vmatpush.xpose.msra.mxu0 0.0
      %1964 = vmatpush.xpose.msra.mxu0 0.0
      %1965 = vmatpush.xpose.msra.mxu0 0.0
      %1966 = vmatpush.xpose.msra.mxu0 %v1949
      %1967 = vmatmul.f32.gmra.mxu0 %v1946
      %v1968 = vpop.f32.mrf.mxu0
      %v1969 = vadd.f32 0.0, %v1968
      %1970 = vdwg.mxu0
      %v1972 = vsel %vm1080, %v1669, 0
      %v1975 = vsel %vm1080, %v1783, 0
      %1977 = vmatpush.xpose.msra.mxu0 0.0
      %1978 = vmatpush.xpose.msra.mxu0 0.0
      %1979 = vmatpush.xpose.msra.mxu0 0.0
      %1980 = vmatpush.xpose.msra.mxu0 0.0
      %1981 = vmatpush.xpose.msra.mxu0 0.0
      %1982 = vmatpush.xpose.msra.mxu0 0.0
      %1983 = vmatpush.xpose.msra.mxu0 0.0
      %1984 = vmatpush.xpose.msra.mxu0 0.0
      %1985 = vmatpush.xpose.msra.mxu0 0.0
      %1986 = vmatpush.xpose.msra.mxu0 0.0
      %1987 = vmatpush.xpose.msra.mxu0 0.0
      %1988 = vmatpush.xpose.msra.mxu0 0.0
      %1989 = vmatpush.xpose.msra.mxu0 0.0
      %1990 = vmatpush.xpose.msra.mxu0 0.0
      %1991 = vmatpush.xpose.msra.mxu0 0.0
      %1992 = vmatpush.xpose.msra.mxu0 %v1975
      %1993 = vmatmul.f32.gmra.mxu0 %v1972
      %v1994 = vpop.f32.mrf.mxu0
      %v1995 = vadd.f32 0.0, %v1994
      %1996 = vdwg.mxu0
      %v1998 = vsel %vm1080, %v1689, 0
      %v2001 = vsel %vm1080, %v1803, 0
      %2003 = vmatpush.xpose.msra.mxu0 0.0
      %2004 = vmatpush.xpose.msra.mxu0 0.0
      %2005 = vmatpush.xpose.msra.mxu0 0.0
      %2006 = vmatpush.xpose.msra.mxu0 0.0
      %2007 = vmatpush.xpose.msra.mxu0 0.0
      %2008 = vmatpush.xpose.msra.mxu0 0.0
      %2009 = vmatpush.xpose.msra.mxu0 0.0
      %2010 = vmatpush.xpose.msra.mxu0 0.0
      %2011 = vmatpush.xpose.msra.mxu0 0.0
      %2012 = vmatpush.xpose.msra.mxu0 0.0
      %2013 = vmatpush.xpose.msra.mxu0 0.0
      %2014 = vmatpush.xpose.msra.mxu0 0.0
      %2015 = vmatpush.xpose.msra.mxu0 0.0
      %2016 = vmatpush.xpose.msra.mxu0 0.0
      %2017 = vmatpush.xpose.msra.mxu0 0.0
      %2018 = vmatpush.xpose.msra.mxu0 %v2001
      %2019 = vmatmul.f32.gmra.mxu0 %v1998
      %v2020 = vpop.f32.mrf.mxu0
      %v2021 = vadd.f32 0.0, %v2020
      %2022 = vdwg.mxu0
      %v2023 = vmul.f32 %v1943, 0.35355338
      %v2024 = vmul.f32 %v1969, 0.35355338
      %v2025 = vmul.f32 %v1995, 0.35355338
      %v2026 = vmul.f32 %v2021, 0.35355338
      %v2027 = vsel %vm1080, %v2023, -inf
      %2028 = vmax.xlane.f32.xlu0 %v2027
      %v2029 = vpop.xlane.xlu0 %2028
      %v2030 = vsel %vm1080, %v2024, -inf
      %2031 = vmax.xlane.f32.xlu0 %v2030
      %v2032 = vpop.xlane.xlu0 %2031
      %v2033 = vsel %vm1080, %v2025, -inf
      %2034 = vmax.xlane.f32.xlu0 %v2033
      %v2035 = vpop.xlane.xlu0 %2034
      %v2036 = vsel %vm1080, %v2026, -inf
      %2037 = vmax.xlane.f32.xlu0 %v2036
      %v2038 = vpop.xlane.xlu0 %2037
      %v2039 = vsub.f32 %v2023, %v2029
      %v2040 = vsub.f32 %v2024, %v2032
      %v2041 = vsub.f32 %v2025, %v2035
      %v2042 = vsub.f32 %v2026, %v2038
      %v2043 = vmul.f32 %v2039, 1.442695
      %v2044 = vpow.pop %v2043
      %v2045 = vmul.f32 %v2040, 1.442695
      %v2046 = vpow.pop %v2045
      %v2047 = vmul.f32 %v2041, 1.442695
      %v2048 = vpow.pop %v2047
      %v2049 = vmul.f32 %v2042, 1.442695
      %v2050 = vpow.pop %v2049
      %v2051 = vsel %vm1080, %v2044, 0.0
      %2052 = vadd.xlane.f32.xlu0 %v2051
      %v2053 = vpop.xlane.xlu0 %2052
      %v2054 = vsel %vm1080, %v2046, 0.0
      %2055 = vadd.xlane.f32.xlu0 %v2054
      %v2056 = vpop.xlane.xlu0 %2055
      %v2057 = vsel %vm1080, %v2048, 0.0
      %2058 = vadd.xlane.f32.xlu0 %v2057
      %v2059 = vpop.xlane.xlu0 %2058
      %v2060 = vsel %vm1080, %v2050, 0.0
      %2061 = vadd.xlane.f32.xlu0 %v2060
      %v2062 = vpop.xlane.xlu0 %2061
      %v2063 = vrcp.pop %v2053
      %v2064 = vrcp.pop %v2056
      %v2065 = vrcp.pop %v2059
      %v2066 = vrcp.pop %v2062
      %v2067 = vmul.f32 %v2044, %v2063
      %v2068 = vmul.f32 %v2046, %v2064
      %v2069 = vmul.f32 %v2048, %v2065
      %v2070 = vmul.f32 %v2050, %v2066
      %v2072 = vsel %vm1080, %v2067, 0
      %2074 = vmatpush.msra.mxu0 0.0
      %2075 = vmatpush.msra.mxu0 0.0
      %2076 = vmatpush.msra.mxu0 0.0
      %2077 = vmatpush.msra.mxu0 0.0
      %2078 = vmatpush.msra.mxu0 0.0
      %2079 = vmatpush.msra.mxu0 0.0
      %2080 = vmatpush.msra.mxu0 0.0
      %2081 = vmatpush.msra.mxu0 0.0
      %2082 = vmatpush.msra.mxu0 0.0
      %2083 = vmatpush.msra.mxu0 0.0
      %2084 = vmatpush.msra.mxu0 0.0
      %2085 = vmatpush.msra.mxu0 0.0
      %2086 = vmatpush.msra.mxu0 0.0
      %2087 = vmatpush.msra.mxu0 0.0
      %2088 = vmatpush.msra.mxu0 0.0
      %2089 = vmatpush.msra.mxu0 %v1857
      %2090 = vmatmul.f32.gmra.mxu0 %v2072
      %v2091 = vpop.f32.mrf.mxu0
      %v2092 = vadd.f32 0.0, %v2091
      %2093 = vdwg.mxu0
      %v2095 = vsel %vm1080, %v2068, 0
      %2097 = vmatpush.msra.mxu0 0.0
      %2098 = vmatpush.msra.mxu0 0.0
      %2099 = vmatpush.msra.mxu0 0.0
      %2100 = vmatpush.msra.mxu0 0.0
      %2101 = vmatpush.msra.mxu0 0.0
      %2102 = vmatpush.msra.mxu0 0.0
      %2103 = vmatpush.msra.mxu0 0.0
      %2104 = vmatpush.msra.mxu0 0.0
      %2105 = vmatpush.msra.mxu0 0.0
      %2106 = vmatpush.msra.mxu0 0.0
      %2107 = vmatpush.msra.mxu0 0.0
      %2108 = vmatpush.msra.mxu0 0.0
      %2109 = vmatpush.msra.mxu0 0.0
      %2110 = vmatpush.msra.mxu0 0.0
      %2111 = vmatpush.msra.mxu0 0.0
      %2112 = vmatpush.msra.mxu0 %v1877
      %2113 = vmatmul.f32.gmra.mxu0 %v2095
      %v2114 = vpop.f32.mrf.mxu0
      %v2115 = vadd.f32 0.0, %v2114
      %2116 = vdwg.mxu0
      %v2118 = vsel %vm1080, %v2069, 0
      %2120 = vmatpush.msra.mxu0 0.0
      %2121 = vmatpush.msra.mxu0 0.0
      %2122 = vmatpush.msra.mxu0 0.0
      %2123 = vmatpush.msra.mxu0 0.0
      %2124 = vmatpush.msra.mxu0 0.0
      %2125 = vmatpush.msra.mxu0 0.0
      %2126 = vmatpush.msra.mxu0 0.0
      %2127 = vmatpush.msra.mxu0 0.0
      %2128 = vmatpush.msra.mxu0 0.0
      %2129 = vmatpush.msra.mxu0 0.0
      %2130 = vmatpush.msra.mxu0 0.0
      %2131 = vmatpush.msra.mxu0 0.0
      %2132 = vmatpush.msra.mxu0 0.0
      %2133 = vmatpush.msra.mxu0 0.0
      %2134 = vmatpush.msra.mxu0 0.0
      %2135 = vmatpush.msra.mxu0 %v1897
      %2136 = vmatmul.f32.gmra.mxu0 %v2118
      %v2137 = vpop.f32.mrf.mxu0
      %v2138 = vadd.f32 0.0, %v2137
      %2139 = vdwg.mxu0
      %v2141 = vsel %vm1080, %v2070, 0
      %2143 = vmatpush.msra.mxu0 0.0
      %2144 = vmatpush.msra.mxu0 0.0
      %2145 = vmatpush.msra.mxu0 0.0
      %2146 = vmatpush.msra.mxu0 0.0
      %2147 = vmatpush.msra.mxu0 0.0
      %2148 = vmatpush.msra.mxu0 0.0
      %2149 = vmatpush.msra.mxu0 0.0
      %2150 = vmatpush.msra.mxu0 0.0
      %2151 = vmatpush.msra.mxu0 0.0
      %2152 = vmatpush.msra.mxu0 0.0
      %2153 = vmatpush.msra.mxu0 0.0
      %2154 = vmatpush.msra.mxu0 0.0
      %2155 = vmatpush.msra.mxu0 0.0
      %2156 = vmatpush.msra.mxu0 0.0
      %2157 = vmatpush.msra.mxu0 0.0
      %2158 = vmatpush.msra.mxu0 %v1917
      %2159 = vmatmul.f32.gmra.mxu0 %v2141
      %v2160 = vpop.f32.mrf.mxu0
      %v2161 = vadd.f32 0.0, %v2160
      %2162 = vdwg.mxu0
      %s2163 = scalar_lea.vmem %s8, 64
      %v2164 = vld [vmem:[%s2163] sm:$0xff]
      %v2165 = vld [vmem:[%s2163 + $0x8] sm:$0xff]
      %v2166 = vld [vmem:[%s2163 + $0x10] sm:$0xff]
      %v2167 = vld [vmem:[%s2163 + $0x18] sm:$0xff]
      %v2169 = vsel %vm1080, %v2092, 0
      %2171 = vmatpush.msra.mxu0 0.0
      %2172 = vmatpush.msra.mxu0 0.0
      %2173 = vmatpush.msra.mxu0 0.0
      %2174 = vmatpush.msra.mxu0 0.0
      %2175 = vmatpush.msra.mxu0 0.0
      %2176 = vmatpush.msra.mxu0 0.0
      %2177 = vmatpush.msra.mxu0 0.0
      %2178 = vmatpush.msra.mxu0 0.0
      %2179 = vmatpush.msra.mxu0 0.0
      %2180 = vmatpush.msra.mxu0 0.0
      %2181 = vmatpush.msra.mxu0 0.0
      %2182 = vmatpush.msra.mxu0 0.0
      %2183 = vmatpush.msra.mxu0 0.0
      %2184 = vmatpush.msra.mxu0 0.0
      %2185 = vmatpush.msra.mxu0 0.0
      %2186 = vmatpush.msra.mxu0 %v2164
      %2187 = vmatmul.f32.gmra.mxu0 %v2169
      %v2188 = vpop.f32.mrf.mxu0
      %v2189 = vadd.f32 0.0, %v2188
      %2190 = vdwg.mxu0
      %v2192 = vsel %vm1080, %v2115, 0
      %2194 = vmatpush.msra.mxu0 0.0
      %2195 = vmatpush.msra.mxu0 0.0
      %2196 = vmatpush.msra.mxu0 0.0
      %2197 = vmatpush.msra.mxu0 0.0
      %2198 = vmatpush.msra.mxu0 0.0
      %2199 = vmatpush.msra.mxu0 0.0
      %2200 = vmatpush.msra.mxu0 0.0
      %2201 = vmatpush.msra.mxu0 0.0
      %2202 = vmatpush.msra.mxu0 0.0
      %2203 = vmatpush.msra.mxu0 0.0
      %2204 = vmatpush.msra.mxu0 0.0
      %2205 = vmatpush.msra.mxu0 0.0
      %2206 = vmatpush.msra.mxu0 0.0
      %2207 = vmatpush.msra.mxu0 0.0
      %2208 = vmatpush.msra.mxu0 0.0
      %2209 = vmatpush.msra.mxu0 %v2165
      %2210 = vmatmul.f32.gmra.mxu0 %v2192
      %v2211 = vpop.f32.mrf.mxu0
      %v2212 = vadd.f32 0.0, %v2211
      %2213 = vdwg.mxu0
      %v2215 = vsel %vm1080, %v2138, 0
      %2217 = vmatpush.msra.mxu0 0.0
      %2218 = vmatpush.msra.mxu0 0.0
      %2219 = vmatpush.msra.mxu0 0.0
      %2220 = vmatpush.msra.mxu0 0.0
      %2221 = vmatpush.msra.mxu0 0.0
      %2222 = vmatpush.msra.mxu0 0.0
      %2223 = vmatpush.msra.mxu0 0.0
      %2224 = vmatpush.msra.mxu0 0.0
      %2225 = vmatpush.msra.mxu0 0.0
      %2226 = vmatpush.msra.mxu0 0.0
      %2227 = vmatpush.msra.mxu0 0.0
      %2228 = vmatpush.msra.mxu0 0.0
      %2229 = vmatpush.msra.mxu0 0.0
      %2230 = vmatpush.msra.mxu0 0.0
      %2231 = vmatpush.msra.mxu0 0.0
      %2232 = vmatpush.msra.mxu0 %v2166
      %2233 = vmatmul.f32.gmra.mxu0 %v2215
      %v2234 = vpop.f32.mrf.mxu0
      %v2235 = vadd.f32 0.0, %v2234
      %2236 = vdwg.mxu0
      %v2238 = vsel %vm1080, %v2161, 0
      %2240 = vmatpush.msra.mxu0 0.0
      %2241 = vmatpush.msra.mxu0 0.0
      %2242 = vmatpush.msra.mxu0 0.0
      %2243 = vmatpush.msra.mxu0 0.0
      %2244 = vmatpush.msra.mxu0 0.0
      %2245 = vmatpush.msra.mxu0 0.0
      %2246 = vmatpush.msra.mxu0 0.0
      %2247 = vmatpush.msra.mxu0 0.0
      %2248 = vmatpush.msra.mxu0 0.0
      %2249 = vmatpush.msra.mxu0 0.0
      %2250 = vmatpush.msra.mxu0 0.0
      %2251 = vmatpush.msra.mxu0 0.0
      %2252 = vmatpush.msra.mxu0 0.0
      %2253 = vmatpush.msra.mxu0 0.0
      %2254 = vmatpush.msra.mxu0 0.0
      %2255 = vmatpush.msra.mxu0 %v2167
      %2256 = vmatmul.f32.gmra.mxu0 %v2238
      %v2257 = vpop.f32.mrf.mxu0
      %v2258 = vadd.f32 0.0, %v2257
      %2259 = vdwg.mxu0
      %v2260 = vsel %vm771, %v2189, 0.0
      %v2261 = vsel %vm771, %v2212, 0.0
      %v2262 = vadd.f32 %v2260, %v2261
      %v2263 = vsel %vm771, %v2235, 0.0
      %v2264 = vadd.f32 %v2262, %v2263
      %v2265 = vsel %vm771, %v2258, 0.0
      %v2266 = vadd.f32 %v2264, %v2265
      %s2267 = scalar_lea.vmem %s9, 2
      %v2268 = vld [vmem:[%s2267] sm:$0x1]
      %v2270 = vperm.slane %v2268, 0
      %v2272 = vadd.f32 %v2266, %v2270
      %2274 = vrot.lane.b32.xlu0 %v2272, 32
      %v2275 = vpop.permute.xlu0 %2274
      %v2277 = vadd.f32 %v735, %v2275
      %2279 = vrot.lane.b32.xlu0 %v2277, 96
      %v2280 = vpop.permute.xlu0 %2279
      %v2282 = vsel %vm771, %v2280, 0.0
      %2283 = vadd.xlane.f32.xlu0 %v2282
      %v2284 = vpop.xlane.xlu0 %2283
      %v2285 = vmul.f32 %v2284, %v1443
      %v2286 = vsub.f32 %v2277, %v2285
      %v2287 = vmul.f32 %v2286, %v2286
      %2289 = vrot.lane.b32.xlu0 %v2287, 96
      %v2290 = vpop.permute.xlu0 %2289
      %v2292 = vsel %vm771, %v2290, 0.0
      %2293 = vadd.xlane.f32.xlu0 %v2292
      %v2294 = vpop.xlane.xlu0 %2293
      %v2295 = vmul.f32 %v2294, %v1443
      %v2296 = vadd.f32 %v2295, 1e-05
      %v2297 = vrsqrt.pop %v2296
      %v2298 = vmul.f32 %v2297, %v2296
      %v2299 = vmul.f32 %v2298, %v2297
      %v2300 = vmul.f32 0.5, %v2299
      %v2301 = vsub.f32 1.5, %v2300
      %v2302 = vmul.f32 %v2297, %v2301
      %vm2303 = vweird.f32 %v2296
      %vm2304 = vweird.f32 %v2297
      %vm2305 = vmor %vm2303, %vm2304
      %v2306 = vsel %vm2305, %v2297, %v2302
      %v2307 = vmul.f32 %v2286, %v2306
      %s2308 = scalar_lea.vmem %s10, 2
      %v2309 = vld [vmem:[%s2308] sm:$0x1]
      %v2311 = vperm.slane %v2309, 0
      %2312 = vrot.lane.b32.xlu0 %v2311, 32
      %v2313 = vpop.permute.xlu0 %2312
      %v2315 = vmul.f32 %v2307, %v2313
      %s2316 = scalar_lea.vmem %s11, 2
      %v2317 = vld [vmem:[%s2316] sm:$0x1]
      %v2319 = vperm.slane %v2317, 0
      %2320 = vrot.lane.b32.xlu0 %v2319, 32
      %v2321 = vpop.permute.xlu0 %2320
      %v2323 = vadd.f32 %v2315, %v2321
      %s2324 = scalar_lea.vmem %s12, 64
      %v2325 = vld [vmem:[%s2324] sm:$0xff]
      %v2326 = vld [vmem:[%s2324 + $0x8] sm:$0xff]
      %v2327 = vld [vmem:[%s2324 + $0x10] sm:$0xff]
      %v2328 = vld [vmem:[%s2324 + $0x18] sm:$0xff]
      %s2329 = scalar_lea.vmem %s13, 2
      %v2330 = vld [vmem:[%s2329] sm:$0x1]
      %v2332 = vperm.slane %v2330, 0
      %2335 = vrot.lane.b32.xlu0 %v2323, 96
      %v2336 = vpop.permute.xlu0 %2335
      %v2337 = vsel %vm771, %v2336, 0
      %2339 = vmatpush.msra.mxu0 0.0
      %2340 = vmatpush.msra.mxu0 0.0
      %2341 = vmatpush.msra.mxu0 0.0
      %2342 = vmatpush.msra.mxu0 0.0
      %2343 = vmatpush.msra.mxu0 0.0
      %2344 = vmatpush.msra.mxu0 0.0
      %2345 = vmatpush.msra.mxu0 0.0
      %2346 = vmatpush.msra.mxu0 0.0
      %2347 = vmatpush.msra.mxu0 0.0
      %2348 = vmatpush.msra.mxu0 0.0
      %2349 = vmatpush.msra.mxu0 0.0
      %2350 = vmatpush.msra.mxu0 0.0
      %2351 = vmatpush.msra.mxu0 %v2328
      %2352 = vmatpush.msra.mxu0 %v2327
      %2353 = vmatpush.msra.mxu0 %v2326
      %2354 = vmatpush.msra.mxu0 %v2325
      %2355 = vmatmul.f32.gmra.mxu0 %v2337
      %v2356 = vpop.f32.mrf.mxu0
      %v2357 = vadd.f32 %v2332, %v2356
      %2358 = vdwg.mxu0
      %v2359 = vmax.f32 %v2357, 0.0
      %s2360 = scalar_lea.vmem %s14, 128
      %v2361 = vld [vmem:[%s2360] sm:$0xff]
      %v2362 = vld [vmem:[%s2360 + $0x8] sm:$0xff]
      %v2363 = vld [vmem:[%s2360 + $0x10] sm:$0xff]
      %v2364 = vld [vmem:[%s2360 + $0x18] sm:$0xff]
      %v2365 = vld [vmem:[%s2360 + $0x20] sm:$0xff]
      %v2366 = vld [vmem:[%s2360 + $0x28] sm:$0xff]
      %v2367 = vld [vmem:[%s2360 + $0x30] sm:$0xff]
      %v2368 = vld [vmem:[%s2360 + $0x38] sm:$0xff]
      %s2369 = scalar_lea.vmem %s15, 2
      %v2370 = vld [vmem:[%s2369] sm:$0x1]
      %v2372 = vperm.slane %v2370, 0
      %v2375 = vsel %vm1517, %v2359, 0
      %2377 = vmatpush.msra.mxu0 0.0
      %2378 = vmatpush.msra.mxu0 0.0
      %2379 = vmatpush.msra.mxu0 0.0
      %2380 = vmatpush.msra.mxu0 0.0
      %2381 = vmatpush.msra.mxu0 0.0
      %2382 = vmatpush.msra.mxu0 0.0
      %2383 = vmatpush.msra.mxu0 0.0
      %2384 = vmatpush.msra.mxu0 0.0
      %2385 = vmatpush.msra.mxu0 %v2368
      %2386 = vmatpush.msra.mxu0 %v2367
      %2387 = vmatpush.msra.mxu0 %v2366
      %2388 = vmatpush.msra.mxu0 %v2365
      %2389 = vmatpush.msra.mxu0 %v2364
      %2390 = vmatpush.msra.mxu0 %v2363
      %2391 = vmatpush.msra.mxu0 %v2362
      %2392 = vmatpush.msra.mxu0 %v2361
      %2393 = vmatmul.f32.gmra.mxu0 %v2375
      %v2394 = vpop.f32.mrf.mxu0
      %v2395 = vadd.f32 %v2372, %v2394
      %2396 = vdwg.mxu0
      %2398 = vrot.lane.b32.xlu0 %v2395, 32
      %v2399 = vpop.permute.xlu0 %2398
      %v2401 = vadd.f32 %v2323, %v2399
      %2403 = vrot.lane.b32.xlu0 %v2401, 96
      %v2404 = vpop.permute.xlu0 %2403
      %v2406 = vsel %vm771, %v2404, 0.0
      %2407 = vadd.xlane.f32.xlu0 %v2406
      %v2408 = vpop.xlane.xlu0 %2407
      %v2409 = vmul.f32 %v2408, %v1443
      %v2410 = vsub.f32 %v2401, %v2409
      %v2411 = vmul.f32 %v2410, %v2410
      %2413 = vrot.lane.b32.xlu0 %v2411, 96
      %v2414 = vpop.permute.xlu0 %2413
      %v2416 = vsel %vm771, %v2414, 0.0
      %2417 = vadd.xlane.f32.xlu0 %v2416
      %v2418 = vpop.xlane.xlu0 %2417
      %v2419 = vmul.f32 %v2418, %v1443
      %v2420 = vadd.f32 %v2419, 1e-05
      %v2421 = vrsqrt.pop %v2420
      %v2422 = vmul.f32 %v2421, %v2420
      %v2423 = vmul.f32 %v2422, %v2421
      %v2424 = vmul.f32 0.5, %v2423
      %v2425 = vsub.f32 1.5, %v2424
      %v2426 = vmul.f32 %v2421, %v2425
      %vm2427 = vweird.f32 %v2420
      %vm2428 = vweird.f32 %v2421
      %vm2429 = vmor %vm2427, %vm2428
      %v2430 = vsel %vm2429, %v2421, %v2426
      %v2431 = vmul.f32 %v2410, %v2430
      %s2432 = scalar_lea.vmem %s16, 2
      %v2433 = vld [vmem:[%s2432] sm:$0x1]
      %v2435 = vperm.slane %v2433, 0
      %2436 = vrot.lane.b32.xlu0 %v2435, 32
      %v2437 = vpop.permute.xlu0 %2436
      %v2439 = vmul.f32 %v2431, %v2437
      %s2440 = scalar_lea.vmem %s17, 2
      %v2441 = vld [vmem:[%s2440] sm:$0x1]
      %v2443 = vperm.slane %v2441, 0
      %2444 = vrot.lane.b32.xlu0 %v2443, 32
      %v2445 = vpop.permute.xlu0 %2444
      %v2447 = vadd.f32 %v2439, %v2445
      %s2448 = scalar_lea.vmem %s2, 128
      %v2449 = vld [vmem:[%s2448] sm:$0xff]
      %v2450 = vld [vmem:[%s2448 + $0x8] sm:$0xff]
      %v2451 = vld [vmem:[%s2448 + $0x10] sm:$0xff]
      %v2452 = vld [vmem:[%s2448 + $0x18] sm:$0xff]
      %v2453 = vld [vmem:[%s2448 + $0x20] sm:$0xff]
      %v2454 = vld [vmem:[%s2448 + $0x28] sm:$0xff]
      %v2455 = vld [vmem:[%s2448 + $0x30] sm:$0xff]
      %v2456 = vld [vmem:[%s2448 + $0x38] sm:$0xff]
      %v2457 = vld [vmem:[%s2448 + $0x40] sm:$0xff]
      %v2458 = vld [vmem:[%s2448 + $0x48] sm:$0xff]
      %v2459 = vld [vmem:[%s2448 + $0x50] sm:$0xff]
      %v2460 = vld [vmem:[%s2448 + $0x58] sm:$0xff]
      %v2461 = vld [vmem:[%s2448 + $0x60] sm:$0xff]
      %v2462 = vld [vmem:[%s2448 + $0x68] sm:$0xff]
      %v2463 = vld [vmem:[%s2448 + $0x70] sm:$0xff]
      %v2464 = vld [vmem:[%s2448 + $0x78] sm:$0xff]
      %s2465 = scalar_lea.vmem %s3, 4
      %v2466 = vld [vmem:[%s2465] sm:$0x1]
      %v2467 = vld [vmem:[%s2465 + $0x1] sm:$0x1]
      %v2468 = vld [vmem:[%s2465 + $0x2] sm:$0x1]
      %v2469 = vld [vmem:[%s2465 + $0x3] sm:$0x1]
      %v2474 = vperm.slane %v2466, 0
      %v2475 = vperm.slane %v2467, 0
      %v2476 = vperm.slane %v2468, 0
      %v2477 = vperm.slane %v2469, 0
      %2483 = vrot.lane.b32.xlu0 %v2447, 96
      %v2484 = vpop.permute.xlu0 %2483
      %v2485 = vsel %vm771, %v2484, 0
      %2487 = vmatpush.msra.mxu0 0.0
      %2488 = vmatpush.msra.mxu0 0.0
      %2489 = vmatpush.msra.mxu0 0.0
      %2490 = vmatpush.msra.mxu0 0.0
      %2491 = vmatpush.msra.mxu0 0.0
      %2492 = vmatpush.msra.mxu0 0.0
      %2493 = vmatpush.msra.mxu0 0.0
      %2494 = vmatpush.msra.mxu0 0.0
      %2495 = vmatpush.msra.mxu0 0.0
      %2496 = vmatpush.msra.mxu0 0.0
      %2497 = vmatpush.msra.mxu0 0.0
      %2498 = vmatpush.msra.mxu0 0.0
      %2499 = vmatpush.msra.mxu0 %v2452
      %2500 = vmatpush.msra.mxu0 %v2451
      %2501 = vmatpush.msra.mxu0 %v2450
      %2502 = vmatpush.msra.mxu0 %v2449
      %2503 = vmatmul.f32.gmra.mxu0 %v2485
      %v2504 = vpop.f32.mrf.mxu0
      %v2505 = vadd.f32 %v2474, %v2504
      %2506 = vdwg.mxu0
      %2507 = vmatpush.msra.mxu0 0.0
      %2508 = vmatpush.msra.mxu0 0.0
      %2509 = vmatpush.msra.mxu0 0.0
      %2510 = vmatpush.msra.mxu0 0.0
      %2511 = vmatpush.msra.mxu0 0.0
      %2512 = vmatpush.msra.mxu0 0.0
      %2513 = vmatpush.msra.mxu0 0.0
      %2514 = vmatpush.msra.mxu0 0.0
      %2515 = vmatpush.msra.mxu0 0.0
      %2516 = vmatpush.msra.mxu0 0.0
      %2517 = vmatpush.msra.mxu0 0.0
      %2518 = vmatpush.msra.mxu0 0.0
      %2519 = vmatpush.msra.mxu0 %v2456
      %2520 = vmatpush.msra.mxu0 %v2455
      %2521 = vmatpush.msra.mxu0 %v2454
      %2522 = vmatpush.msra.mxu0 %v2453
      %2523 = vmatmul.f32.gmra.mxu0 %v2485
      %v2524 = vpop.f32.mrf.mxu0
      %v2525 = vadd.f32 %v2475, %v2524
      %2526 = vdwg.mxu0
      %2527 = vmatpush.msra.mxu0 0.0
      %2528 = vmatpush.msra.mxu0 0.0
      %2529 = vmatpush.msra.mxu0 0.0
      %2530 = vmatpush.msra.mxu0 0.0
      %2531 = vmatpush.msra.mxu0 0.0
      %2532 = vmatpush.msra.mxu0 0.0
      %2533 = vmatpush.msra.mxu0 0.0
      %2534 = vmatpush.msra.mxu0 0.0
      %2535 = vmatpush.msra.mxu0 0.0
      %2536 = vmatpush.msra.mxu0 0.0
      %2537 = vmatpush.msra.mxu0 0.0
      %2538 = vmatpush.msra.mxu0 0.0
      %2539 = vmatpush.msra.mxu0 %v2460
      %2540 = vmatpush.msra.mxu0 %v2459
      %2541 = vmatpush.msra.mxu0 %v2458
      %2542 = vmatpush.msra.mxu0 %v2457
      %2543 = vmatmul.f32.gmra.mxu0 %v2485
      %v2544 = vpop.f32.mrf.mxu0
      %v2545 = vadd.f32 %v2476, %v2544
      %2546 = vdwg.mxu0
      %2547 = vmatpush.msra.mxu0 0.0
      %2548 = vmatpush.msra.mxu0 0.0
      %2549 = vmatpush.msra.mxu0 0.0
      %2550 = vmatpush.msra.mxu0 0.0
      %2551 = vmatpush.msra.mxu0 0.0
      %2552 = vmatpush.msra.mxu0 0.0
      %2553 = vmatpush.msra.mxu0 0.0
      %2554 = vmatpush.msra.mxu0 0.0
      %2555 = vmatpush.msra.mxu0 0.0
      %2556 = vmatpush.msra.mxu0 0.0
      %2557 = vmatpush.msra.mxu0 0.0
      %2558 = vmatpush.msra.mxu0 0.0
      %2559 = vmatpush.msra.mxu0 %v2464
      %2560 = vmatpush.msra.mxu0 %v2463
      %2561 = vmatpush.msra.mxu0 %v2462
      %2562 = vmatpush.msra.mxu0 %v2461
      %2563 = vmatmul.f32.gmra.mxu0 %v2485
      %v2564 = vpop.f32.mrf.mxu0
      %v2565 = vadd.f32 %v2477, %v2564
      %2566 = vdwg.mxu0
      %s2567 = scalar_lea.vmem %s4, 128
      %v2568 = vld [vmem:[%s2567] sm:$0xff]
      %v2569 = vld [vmem:[%s2567 + $0x8] sm:$0xff]
      %v2570 = vld [vmem:[%s2567 + $0x10] sm:$0xff]
      %v2571 = vld [vmem:[%s2567 + $0x18] sm:$0xff]
      %v2572 = vld [vmem:[%s2567 + $0x20] sm:$0xff]
      %v2573 = vld [vmem:[%s2567 + $0x28] sm:$0xff]
      %v2574 = vld [vmem:[%s2567 + $0x30] sm:$0xff]
      %v2575 = vld [vmem:[%s2567 + $0x38] sm:$0xff]
      %v2576 = vld [vmem:[%s2567 + $0x40] sm:$0xff]
      %v2577 = vld [vmem:[%s2567 + $0x48] sm:$0xff]
      %v2578 = vld [vmem:[%s2567 + $0x50] sm:$0xff]
      %v2579 = vld [vmem:[%s2567 + $0x58] sm:$0xff]
      %v2580 = vld [vmem:[%s2567 + $0x60] sm:$0xff]
      %v2581 = vld [vmem:[%s2567 + $0x68] sm:$0xff]
      %v2582 = vld [vmem:[%s2567 + $0x70] sm:$0xff]
      %v2583 = vld [vmem:[%s2567 + $0x78] sm:$0xff]
      %s2584 = scalar_lea.vmem %s5, 4
      %v2585 = vld [vmem:[%s2584] sm:$0x1]
      %v2586 = vld [vmem:[%s2584 + $0x1] sm:$0x1]
      %v2587 = vld [vmem:[%s2584 + $0x2] sm:$0x1]
      %v2588 = vld [vmem:[%s2584 + $0x3] sm:$0x1]
      %v2593 = vperm.slane %v2585, 0
      %v2594 = vperm.slane %v2586, 0
      %v2595 = vperm.slane %v2587, 0
      %v2596 = vperm.slane %v2588, 0
      %2601 = vmatpush.msra.mxu0 0.0
      %2602 = vmatpush.msra.mxu0 0.0
      %2603 = vmatpush.msra.mxu0 0.0
      %2604 = vmatpush.msra.mxu0 0.0
      %2605 = vmatpush.msra.mxu0 0.0
      %2606 = vmatpush.msra.mxu0 0.0
      %2607 = vmatpush.msra.mxu0 0.0
      %2608 = vmatpush.msra.mxu0 0.0
      %2609 = vmatpush.msra.mxu0 0.0
      %2610 = vmatpush.msra.mxu0 0.0
      %2611 = vmatpush.msra.mxu0 0.0
      %2612 = vmatpush.msra.mxu0 0.0
      %2613 = vmatpush.msra.mxu0 %v2571
      %2614 = vmatpush.msra.mxu0 %v2570
      %2615 = vmatpush.msra.mxu0 %v2569
      %2616 = vmatpush.msra.mxu0 %v2568
      %2617 = vmatmul.f32.gmra.mxu0 %v1609
      %v2618 = vpop.f32.mrf.mxu0
      %v2619 = vadd.f32 %v2593, %v2618
      %2620 = vdwg.mxu0
      %2621 = vmatpush.msra.mxu0 0.0
      %2622 = vmatpush.msra.mxu0 0.0
      %2623 = vmatpush.msra.mxu0 0.0
      %2624 = vmatpush.msra.mxu0 0.0
      %2625 = vmatpush.msra.mxu0 0.0
      %2626 = vmatpush.msra.mxu0 0.0
      %2627 = vmatpush.msra.mxu0 0.0
      %2628 = vmatpush.msra.mxu0 0.0
      %2629 = vmatpush.msra.mxu0 0.0
      %2630 = vmatpush.msra.mxu0 0.0
      %2631 = vmatpush.msra.mxu0 0.0
      %2632 = vmatpush.msra.mxu0 0.0
      %2633 = vmatpush.msra.mxu0 %v2575
      %2634 = vmatpush.msra.mxu0 %v2574
      %2635 = vmatpush.msra.mxu0 %v2573
      %2636 = vmatpush.msra.mxu0 %v2572
      %2637 = vmatmul.f32.gmra.mxu0 %v1609
      %v2638 = vpop.f32.mrf.mxu0
      %v2639 = vadd.f32 %v2594, %v2638
      %2640 = vdwg.mxu0
      %2641 = vmatpush.msra.mxu0 0.0
      %2642 = vmatpush.msra.mxu0 0.0
      %2643 = vmatpush.msra.mxu0 0.0
      %2644 = vmatpush.msra.mxu0 0.0
      %2645 = vmatpush.msra.mxu0 0.0
      %2646 = vmatpush.msra.mxu0 0.0
      %2647 = vmatpush.msra.mxu0 0.0
      %2648 = vmatpush.msra.mxu0 0.0
      %2649 = vmatpush.msra.mxu0 0.0
      %2650 = vmatpush.msra.mxu0 0.0
      %2651 = vmatpush.msra.mxu0 0.0
      %2652 = vmatpush.msra.mxu0 0.0
      %2653 = vmatpush.msra.mxu0 %v2579
      %2654 = vmatpush.msra.mxu0 %v2578
      %2655 = vmatpush.msra.mxu0 %v2577
      %2656 = vmatpush.msra.mxu0 %v2576
      %2657 = vmatmul.f32.gmra.mxu0 %v1609
      %v2658 = vpop.f32.mrf.mxu0
      %v2659 = vadd.f32 %v2595, %v2658
      %2660 = vdwg.mxu0
      %2661 = vmatpush.msra.mxu0 0.0
      %2662 = vmatpush.msra.mxu0 0.0
      %2663 = vmatpush.msra.mxu0 0.0
      %2664 = vmatpush.msra.mxu0 0.0
      %2665 = vmatpush.msra.mxu0 0.0
      %2666 = vmatpush.msra.mxu0 0.0
      %2667 = vmatpush.msra.mxu0 0.0
      %2668 = vmatpush.msra.mxu0 0.0
      %2669 = vmatpush.msra.mxu0 0.0
      %2670 = vmatpush.msra.mxu0 0.0
      %2671 = vmatpush.msra.mxu0 0.0
      %2672 = vmatpush.msra.mxu0 0.0
      %2673 = vmatpush.msra.mxu0 %v2583
      %2674 = vmatpush.msra.mxu0 %v2582
      %2675 = vmatpush.msra.mxu0 %v2581
      %2676 = vmatpush.msra.mxu0 %v2580
      %2677 = vmatmul.f32.gmra.mxu0 %v1609
      %v2678 = vpop.f32.mrf.mxu0
      %v2679 = vadd.f32 %v2596, %v2678
      %2680 = vdwg.mxu0
      %s2681 = scalar_lea.vmem %s6, 128
      %v2682 = vld [vmem:[%s2681] sm:$0xff]
      %v2683 = vld [vmem:[%s2681 + $0x8] sm:$0xff]
      %v2684 = vld [vmem:[%s2681 + $0x10] sm:$0xff]
      %v2685 = vld [vmem:[%s2681 + $0x18] sm:$0xff]
      %v2686 = vld [vmem:[%s2681 + $0x20] sm:$0xff]
      %v2687 = vld [vmem:[%s2681 + $0x28] sm:$0xff]
      %v2688 = vld [vmem:[%s2681 + $0x30] sm:$0xff]
      %v2689 = vld [vmem:[%s2681 + $0x38] sm:$0xff]
      %v2690 = vld [vmem:[%s2681 + $0x40] sm:$0xff]
      %v2691 = vld [vmem:[%s2681 + $0x48] sm:$0xff]
      %v2692 = vld [vmem:[%s2681 + $0x50] sm:$0xff]
      %v2693 = vld [vmem:[%s2681 + $0x58] sm:$0xff]
      %v2694 = vld [vmem:[%s2681 + $0x60] sm:$0xff]
      %v2695 = vld [vmem:[%s2681 + $0x68] sm:$0xff]
      %v2696 = vld [vmem:[%s2681 + $0x70] sm:$0xff]
      %v2697 = vld [vmem:[%s2681 + $0x78] sm:$0xff]
      %s2698 = scalar_lea.vmem %s7, 4
      %v2699 = vld [vmem:[%s2698] sm:$0x1]
      %v2700 = vld [vmem:[%s2698 + $0x1] sm:$0x1]
      %v2701 = vld [vmem:[%s2698 + $0x2] sm:$0x1]
      %v2702 = vld [vmem:[%s2698 + $0x3] sm:$0x1]
      %v2707 = vperm.slane %v2699, 0
      %v2708 = vperm.slane %v2700, 0
      %v2709 = vperm.slane %v2701, 0
      %v2710 = vperm.slane %v2702, 0
      %2715 = vmatpush.msra.mxu0 0.0
      %2716 = vmatpush.msra.mxu0 0.0
      %2717 = vmatpush.msra.mxu0 0.0
      %2718 = vmatpush.msra.mxu0 0.0
      %2719 = vmatpush.msra.mxu0 0.0
      %2720 = vmatpush.msra.mxu0 0.0
      %2721 = vmatpush.msra.mxu0 0.0
      %2722 = vmatpush.msra.mxu0 0.0
      %2723 = vmatpush.msra.mxu0 0.0
      %2724 = vmatpush.msra.mxu0 0.0
      %2725 = vmatpush.msra.mxu0 0.0
      %2726 = vmatpush.msra.mxu0 0.0
      %2727 = vmatpush.msra.mxu0 %v2685
      %2728 = vmatpush.msra.mxu0 %v2684
      %2729 = vmatpush.msra.mxu0 %v2683
      %2730 = vmatpush.msra.mxu0 %v2682
      %2731 = vmatmul.f32.gmra.mxu0 %v1609
      %v2732 = vpop.f32.mrf.mxu0
      %v2733 = vadd.f32 %v2707, %v2732
      %2734 = vdwg.mxu0
      %2735 = vmatpush.msra.mxu0 0.0
      %2736 = vmatpush.msra.mxu0 0.0
      %2737 = vmatpush.msra.mxu0 0.0
      %2738 = vmatpush.msra.mxu0 0.0
      %2739 = vmatpush.msra.mxu0 0.0
      %2740 = vmatpush.msra.mxu0 0.0
      %2741 = vmatpush.msra.mxu0 0.0
      %2742 = vmatpush.msra.mxu0 0.0
      %2743 = vmatpush.msra.mxu0 0.0
      %2744 = vmatpush.msra.mxu0 0.0
      %2745 = vmatpush.msra.mxu0 0.0
      %2746 = vmatpush.msra.mxu0 0.0
      %2747 = vmatpush.msra.mxu0 %v2689
      %2748 = vmatpush.msra.mxu0 %v2688
      %2749 = vmatpush.msra.mxu0 %v2687
      %2750 = vmatpush.msra.mxu0 %v2686
      %2751 = vmatmul.f32.gmra.mxu0 %v1609
      %v2752 = vpop.f32.mrf.mxu0
      %v2753 = vadd.f32 %v2708, %v2752
      %2754 = vdwg.mxu0
      %2755 = vmatpush.msra.mxu0 0.0
      %2756 = vmatpush.msra.mxu0 0.0
      %2757 = vmatpush.msra.mxu0 0.0
      %2758 = vmatpush.msra.mxu0 0.0
      %2759 = vmatpush.msra.mxu0 0.0
      %2760 = vmatpush.msra.mxu0 0.0
      %2761 = vmatpush.msra.mxu0 0.0
      %2762 = vmatpush.msra.mxu0 0.0
      %2763 = vmatpush.msra.mxu0 0.0
      %2764 = vmatpush.msra.mxu0 0.0
      %2765 = vmatpush.msra.mxu0 0.0
      %2766 = vmatpush.msra.mxu0 0.0
      %2767 = vmatpush.msra.mxu0 %v2693
      %2768 = vmatpush.msra.mxu0 %v2692
      %2769 = vmatpush.msra.mxu0 %v2691
      %2770 = vmatpush.msra.mxu0 %v2690
      %2771 = vmatmul.f32.gmra.mxu0 %v1609
      %v2772 = vpop.f32.mrf.mxu0
      %v2773 = vadd.f32 %v2709, %v2772
      %2774 = vdwg.mxu0
      %2775 = vmatpush.msra.mxu0 0.0
      %2776 = vmatpush.msra.mxu0 0.0
      %2777 = vmatpush.msra.mxu0 0.0
      %2778 = vmatpush.msra.mxu0 0.0
      %2779 = vmatpush.msra.mxu0 0.0
      %2780 = vmatpush.msra.mxu0 0.0
      %2781 = vmatpush.msra.mxu0 0.0
      %2782 = vmatpush.msra.mxu0 0.0
      %2783 = vmatpush.msra.mxu0 0.0
      %2784 = vmatpush.msra.mxu0 0.0
      %2785 = vmatpush.msra.mxu0 0.0
      %2786 = vmatpush.msra.mxu0 0.0
      %2787 = vmatpush.msra.mxu0 %v2697
      %2788 = vmatpush.msra.mxu0 %v2696
      %2789 = vmatpush.msra.mxu0 %v2695
      %2790 = vmatpush.msra.mxu0 %v2694
      %2791 = vmatmul.f32.gmra.mxu0 %v1609
      %v2792 = vpop.f32.mrf.mxu0
      %v2793 = vadd.f32 %v2710, %v2792
      %2794 = vdwg.mxu0
      %v2796 = vsel %vm1080, %v2505, 0
      %v2799 = vsel %vm1080, %v2619, 0
      %2801 = vmatpush.xpose.msra.mxu0 0.0
      %2802 = vmatpush.xpose.msra.mxu0 0.0
      %2803 = vmatpush.xpose.msra.mxu0 0.0
      %2804 = vmatpush.xpose.msra.mxu0 0.0
      %2805 = vmatpush.xpose.msra.mxu0 0.0
      %2806 = vmatpush.xpose.msra.mxu0 0.0
      %2807 = vmatpush.xpose.msra.mxu0 0.0
      %2808 = vmatpush.xpose.msra.mxu0 0.0
      %2809 = vmatpush.xpose.msra.mxu0 0.0
      %2810 = vmatpush.xpose.msra.mxu0 0.0
      %2811 = vmatpush.xpose.msra.mxu0 0.0
      %2812 = vmatpush.xpose.msra.mxu0 0.0
      %2813 = vmatpush.xpose.msra.mxu0 0.0
      %2814 = vmatpush.xpose.msra.mxu0 0.0
      %2815 = vmatpush.xpose.msra.mxu0 0.0
      %2816 = vmatpush.xpose.msra.mxu0 %v2799
      %2817 = vmatmul.f32.gmra.mxu0 %v2796
      %v2818 = vpop.f32.mrf.mxu0
      %v2819 = vadd.f32 0.0, %v2818
      %2820 = vdwg.mxu0
      %v2822 = vsel %vm1080, %v2525, 0
      %v2825 = vsel %vm1080, %v2639, 0
      %2827 = vmatpush.xpose.msra.mxu0 0.0
      %2828 = vmatpush.xpose.msra.mxu0 0.0
      %2829 = vmatpush.xpose.msra.mxu0 0.0
      %2830 = vmatpush.xpose.msra.mxu0 0.0
      %2831 = vmatpush.xpose.msra.mxu0 0.0
      %2832 = vmatpush.xpose.msra.mxu0 0.0
      %2833 = vmatpush.xpose.msra.mxu0 0.0
      %2834 = vmatpush.xpose.msra.mxu0 0.0
      %2835 = vmatpush.xpose.msra.mxu0 0.0
      %2836 = vmatpush.xpose.msra.mxu0 0.0
      %2837 = vmatpush.xpose.msra.mxu0 0.0
      %2838 = vmatpush.xpose.msra.mxu0 0.0
      %2839 = vmatpush.xpose.msra.mxu0 0.0
      %2840 = vmatpush.xpose.msra.mxu0 0.0
      %2841 = vmatpush.xpose.msra.mxu0 0.0
      %2842 = vmatpush.xpose.msra.mxu0 %v2825
      %2843 = vmatmul.f32.gmra.mxu0 %v2822
      %v2844 = vpop.f32.mrf.mxu0
      %v2845 = vadd.f32 0.0, %v2844
      %2846 = vdwg.mxu0
      %v2848 = vsel %vm1080, %v2545, 0
      %v2851 = vsel %vm1080, %v2659, 0
      %2853 = vmatpush.xpose.msra.mxu0 0.0
      %2854 = vmatpush.xpose.msra.mxu0 0.0
      %2855 = vmatpush.xpose.msra.mxu0 0.0
      %2856 = vmatpush.xpose.msra.mxu0 0.0
      %2857 = vmatpush.xpose.msra.mxu0 0.0
      %2858 = vmatpush.xpose.msra.mxu0 0.0
      %2859 = vmatpush.xpose.msra.mxu0 0.0
      %2860 = vmatpush.xpose.msra.mxu0 0.0
      %2861 = vmatpush.xpose.msra.mxu0 0.0
      %2862 = vmatpush.xpose.msra.mxu0 0.0
      %2863 = vmatpush.xpose.msra.mxu0 0.0
      %2864 = vmatpush.xpose.msra.mxu0 0.0
      %2865 = vmatpush.xpose.msra.mxu0 0.0
      %2866 = vmatpush.xpose.msra.mxu0 0.0
      %2867 = vmatpush.xpose.msra.mxu0 0.0
      %2868 = vmatpush.xpose.msra.mxu0 %v2851
      %2869 = vmatmul.f32.gmra.mxu0 %v2848
      %v2870 = vpop.f32.mrf.mxu0
      %v2871 = vadd.f32 0.0, %v2870
      %2872 = vdwg.mxu0
      %v2874 = vsel %vm1080, %v2565, 0
      %v2877 = vsel %vm1080, %v2679, 0
      %2879 = vmatpush.xpose.msra.mxu0 0.0
      %2880 = vmatpush.xpose.msra.mxu0 0.0
      %2881 = vmatpush.xpose.msra.mxu0 0.0
      %2882 = vmatpush.xpose.msra.mxu0 0.0
      %2883 = vmatpush.xpose.msra.mxu0 0.0
      %2884 = vmatpush.xpose.msra.mxu0 0.0
      %2885 = vmatpush.xpose.msra.mxu0 0.0
      %2886 = vmatpush.xpose.msra.mxu0 0.0
      %2887 = vmatpush.xpose.msra.mxu0 0.0
      %2888 = vmatpush.xpose.msra.mxu0 0.0
      %2889 = vmatpush.xpose.msra.mxu0 0.0
      %2890 = vmatpush.xpose.msra.mxu0 0.0
      %2891 = vmatpush.xpose.msra.mxu0 0.0
      %2892 = vmatpush.xpose.msra.mxu0 0.0
      %2893 = vmatpush.xpose.msra.mxu0 0.0
      %2894 = vmatpush.xpose.msra.mxu0 %v2877
      %2895 = vmatmul.f32.gmra.mxu0 %v2874
      %v2896 = vpop.f32.mrf.mxu0
      %v2897 = vadd.f32 0.0, %v2896
      %2898 = vdwg.mxu0
      %v2899 = vmul.f32 %v2819, 0.35355338
      %v2900 = vmul.f32 %v2845, 0.35355338
      %v2901 = vmul.f32 %v2871, 0.35355338
      %v2902 = vmul.f32 %v2897, 0.35355338
      %v2903 = vsel %vm1080, %v2899, -inf
      %2904 = vmax.xlane.f32.xlu0 %v2903
      %v2905 = vpop.xlane.xlu0 %2904
      %v2906 = vsel %vm1080, %v2900, -inf
      %2907 = vmax.xlane.f32.xlu0 %v2906
      %v2908 = vpop.xlane.xlu0 %2907
      %v2909 = vsel %vm1080, %v2901, -inf
      %2910 = vmax.xlane.f32.xlu0 %v2909
      %v2911 = vpop.xlane.xlu0 %2910
      %v2912 = vsel %vm1080, %v2902, -inf
      %2913 = vmax.xlane.f32.xlu0 %v2912
      %v2914 = vpop.xlane.xlu0 %2913
      %v2915 = vsub.f32 %v2899, %v2905
      %v2916 = vsub.f32 %v2900, %v2908
      %v2917 = vsub.f32 %v2901, %v2911
      %v2918 = vsub.f32 %v2902, %v2914
      %v2919 = vmul.f32 %v2915, 1.442695
      %v2920 = vpow.pop %v2919
      %v2921 = vmul.f32 %v2916, 1.442695
      %v2922 = vpow.pop %v2921
      %v2923 = vmul.f32 %v2917, 1.442695
      %v2924 = vpow.pop %v2923
      %v2925 = vmul.f32 %v2918, 1.442695
      %v2926 = vpow.pop %v2925
      %v2927 = vsel %vm1080, %v2920, 0.0
      %2928 = vadd.xlane.f32.xlu0 %v2927
      %v2929 = vpop.xlane.xlu0 %2928
      %v2930 = vsel %vm1080, %v2922, 0.0
      %2931 = vadd.xlane.f32.xlu0 %v2930
      %v2932 = vpop.xlane.xlu0 %2931
      %v2933 = vsel %vm1080, %v2924, 0.0
      %2934 = vadd.xlane.f32.xlu0 %v2933
      %v2935 = vpop.xlane.xlu0 %2934
      %v2936 = vsel %vm1080, %v2926, 0.0
      %2937 = vadd.xlane.f32.xlu0 %v2936
      %v2938 = vpop.xlane.xlu0 %2937
      %v2939 = vrcp.pop %v2929
      %v2940 = vrcp.pop %v2932
      %v2941 = vrcp.pop %v2935
      %v2942 = vrcp.pop %v2938
      %v2943 = vmul.f32 %v2920, %v2939
      %v2944 = vmul.f32 %v2922, %v2940
      %v2945 = vmul.f32 %v2924, %v2941
      %v2946 = vmul.f32 %v2926, %v2942
      %v2948 = vsel %vm1080, %v2943, 0
      %2950 = vmatpush.msra.mxu0 0.0
      %2951 = vmatpush.msra.mxu0 0.0
      %2952 = vmatpush.msra.mxu0 0.0
      %2953 = vmatpush.msra.mxu0 0.0
      %2954 = vmatpush.msra.mxu0 0.0
      %2955 = vmatpush.msra.mxu0 0.0
      %2956 = vmatpush.msra.mxu0 0.0
      %2957 = vmatpush.msra.mxu0 0.0
      %2958 = vmatpush.msra.mxu0 0.0
      %2959 = vmatpush.msra.mxu0 0.0
      %2960 = vmatpush.msra.mxu0 0.0
      %2961 = vmatpush.msra.mxu0 0.0
      %2962 = vmatpush.msra.mxu0 0.0
      %2963 = vmatpush.msra.mxu0 0.0
      %2964 = vmatpush.msra.mxu0 0.0
      %2965 = vmatpush.msra.mxu0 %v2733
      %2966 = vmatmul.f32.gmra.mxu0 %v2948
      %v2967 = vpop.f32.mrf.mxu0
      %v2968 = vadd.f32 0.0, %v2967
      %2969 = vdwg.mxu0
      %v2971 = vsel %vm1080, %v2944, 0
      %2973 = vmatpush.msra.mxu0 0.0
      %2974 = vmatpush.msra.mxu0 0.0
      %2975 = vmatpush.msra.mxu0 0.0
      %2976 = vmatpush.msra.mxu0 0.0
      %2977 = vmatpush.msra.mxu0 0.0
      %2978 = vmatpush.msra.mxu0 0.0
      %2979 = vmatpush.msra.mxu0 0.0
      %2980 = vmatpush.msra.mxu0 0.0
      %2981 = vmatpush.msra.mxu0 0.0
      %2982 = vmatpush.msra.mxu0 0.0
      %2983 = vmatpush.msra.mxu0 0.0
      %2984 = vmatpush.msra.mxu0 0.0
      %2985 = vmatpush.msra.mxu0 0.0
      %2986 = vmatpush.msra.mxu0 0.0
      %2987 = vmatpush.msra.mxu0 0.0
      %2988 = vmatpush.msra.mxu0 %v2753
      %2989 = vmatmul.f32.gmra.mxu0 %v2971
      %v2990 = vpop.f32.mrf.mxu0
      %v2991 = vadd.f32 0.0, %v2990
      %2992 = vdwg.mxu0
      %v2994 = vsel %vm1080, %v2945, 0
      %2996 = vmatpush.msra.mxu0 0.0
      %2997 = vmatpush.msra.mxu0 0.0
      %2998 = vmatpush.msra.mxu0 0.0
      %2999 = vmatpush.msra.mxu0 0.0
      %3000 = vmatpush.msra.mxu0 0.0
      %3001 = vmatpush.msra.mxu0 0.0
      %3002 = vmatpush.msra.mxu0 0.0
      %3003 = vmatpush.msra.mxu0 0.0
      %3004 = vmatpush.msra.mxu0 0.0
      %3005 = vmatpush.msra.mxu0 0.0
      %3006 = vmatpush.msra.mxu0 0.0
      %3007 = vmatpush.msra.mxu0 0.0
      %3008 = vmatpush.msra.mxu0 0.0
      %3009 = vmatpush.msra.mxu0 0.0
      %3010 = vmatpush.msra.mxu0 0.0
      %3011 = vmatpush.msra.mxu0 %v2773
      %3012 = vmatmul.f32.gmra.mxu0 %v2994
      %v3013 = vpop.f32.mrf.mxu0
      %v3014 = vadd.f32 0.0, %v3013
      %3015 = vdwg.mxu0
      %v3017 = vsel %vm1080, %v2946, 0
      %3019 = vmatpush.msra.mxu0 0.0
      %3020 = vmatpush.msra.mxu0 0.0
      %3021 = vmatpush.msra.mxu0 0.0
      %3022 = vmatpush.msra.mxu0 0.0
      %3023 = vmatpush.msra.mxu0 0.0
      %3024 = vmatpush.msra.mxu0 0.0
      %3025 = vmatpush.msra.mxu0 0.0
      %3026 = vmatpush.msra.mxu0 0.0
      %3027 = vmatpush.msra.mxu0 0.0
      %3028 = vmatpush.msra.mxu0 0.0
      %3029 = vmatpush.msra.mxu0 0.0
      %3030 = vmatpush.msra.mxu0 0.0
      %3031 = vmatpush.msra.mxu0 0.0
      %3032 = vmatpush.msra.mxu0 0.0
      %3033 = vmatpush.msra.mxu0 0.0
      %3034 = vmatpush.msra.mxu0 %v2793
      %3035 = vmatmul.f32.gmra.mxu0 %v3017
      %v3036 = vpop.f32.mrf.mxu0
      %v3037 = vadd.f32 0.0, %v3036
      %3038 = vdwg.mxu0
      %s3039 = scalar_lea.vmem %s8, 32
      %v3040 = vld [vmem:[%s3039] sm:$0xff]
      %v3041 = vld [vmem:[%s3039 + $0x8] sm:$0xff]
      %v3042 = vld [vmem:[%s3039 + $0x10] sm:$0xff]
      %v3043 = vld [vmem:[%s3039 + $0x18] sm:$0xff]
      %v3045 = vsel %vm1080, %v2968, 0
      %3047 = vmatpush.msra.mxu0 0.0
      %3048 = vmatpush.msra.mxu0 0.0
      %3049 = vmatpush.msra.mxu0 0.0
      %3050 = vmatpush.msra.mxu0 0.0
      %3051 = vmatpush.msra.mxu0 0.0
      %3052 = vmatpush.msra.mxu0 0.0
      %3053 = vmatpush.msra.mxu0 0.0
      %3054 = vmatpush.msra.mxu0 0.0
      %3055 = vmatpush.msra.mxu0 0.0
      %3056 = vmatpush.msra.mxu0 0.0
      %3057 = vmatpush.msra.mxu0 0.0
      %3058 = vmatpush.msra.mxu0 0.0
      %3059 = vmatpush.msra.mxu0 0.0
      %3060 = vmatpush.msra.mxu0 0.0
      %3061 = vmatpush.msra.mxu0 0.0
      %3062 = vmatpush.msra.mxu0 %v3040
      %3063 = vmatmul.f32.gmra.mxu0 %v3045
      %v3064 = vpop.f32.mrf.mxu0
      %v3065 = vadd.f32 0.0, %v3064
      %3066 = vdwg.mxu0
      %v3068 = vsel %vm1080, %v2991, 0
      %3070 = vmatpush.msra.mxu0 0.0
      %3071 = vmatpush.msra.mxu0 0.0
      %3072 = vmatpush.msra.mxu0 0.0
      %3073 = vmatpush.msra.mxu0 0.0
      %3074 = vmatpush.msra.mxu0 0.0
      %3075 = vmatpush.msra.mxu0 0.0
      %3076 = vmatpush.msra.mxu0 0.0
      %3077 = vmatpush.msra.mxu0 0.0
      %3078 = vmatpush.msra.mxu0 0.0
      %3079 = vmatpush.msra.mxu0 0.0
      %3080 = vmatpush.msra.mxu0 0.0
      %3081 = vmatpush.msra.mxu0 0.0
      %3082 = vmatpush.msra.mxu0 0.0
      %3083 = vmatpush.msra.mxu0 0.0
      %3084 = vmatpush.msra.mxu0 0.0
      %3085 = vmatpush.msra.mxu0 %v3041
      %3086 = vmatmul.f32.gmra.mxu0 %v3068
      %v3087 = vpop.f32.mrf.mxu0
      %v3088 = vadd.f32 0.0, %v3087
      %3089 = vdwg.mxu0
      %v3091 = vsel %vm1080, %v3014, 0
      %3093 = vmatpush.msra.mxu0 0.0
      %3094 = vmatpush.msra.mxu0 0.0
      %3095 = vmatpush.msra.mxu0 0.0
      %3096 = vmatpush.msra.mxu0 0.0
      %3097 = vmatpush.msra.mxu0 0.0
      %3098 = vmatpush.msra.mxu0 0.0
      %3099 = vmatpush.msra.mxu0 0.0
      %3100 = vmatpush.msra.mxu0 0.0
      %3101 = vmatpush.msra.mxu0 0.0
      %3102 = vmatpush.msra.mxu0 0.0
      %3103 = vmatpush.msra.mxu0 0.0
      %3104 = vmatpush.msra.mxu0 0.0
      %3105 = vmatpush.msra.mxu0 0.0
      %3106 = vmatpush.msra.mxu0 0.0
      %3107 = vmatpush.msra.mxu0 0.0
      %3108 = vmatpush.msra.mxu0 %v3042
      %3109 = vmatmul.f32.gmra.mxu0 %v3091
      %v3110 = vpop.f32.mrf.mxu0
      %v3111 = vadd.f32 0.0, %v3110
      %3112 = vdwg.mxu0
      %v3114 = vsel %vm1080, %v3037, 0
      %3116 = vmatpush.msra.mxu0 0.0
      %3117 = vmatpush.msra.mxu0 0.0
      %3118 = vmatpush.msra.mxu0 0.0
      %3119 = vmatpush.msra.mxu0 0.0
      %3120 = vmatpush.msra.mxu0 0.0
      %3121 = vmatpush.msra.mxu0 0.0
      %3122 = vmatpush.msra.mxu0 0.0
      %3123 = vmatpush.msra.mxu0 0.0
      %3124 = vmatpush.msra.mxu0 0.0
      %3125 = vmatpush.msra.mxu0 0.0
      %3126 = vmatpush.msra.mxu0 0.0
      %3127 = vmatpush.msra.mxu0 0.0
      %3128 = vmatpush.msra.mxu0 0.0
      %3129 = vmatpush.msra.mxu0 0.0
      %3130 = vmatpush.msra.mxu0 0.0
      %3131 = vmatpush.msra.mxu0 %v3043
      %3132 = vmatmul.f32.gmra.mxu0 %v3114
      %v3133 = vpop.f32.mrf.mxu0
      %v3134 = vadd.f32 0.0, %v3133
      %3135 = vdwg.mxu0
      %v3136 = vsel %vm771, %v3065, 0.0
      %v3137 = vsel %vm771, %v3088, 0.0
      %v3138 = vadd.f32 %v3136, %v3137
      %v3139 = vsel %vm771, %v3111, 0.0
      %v3140 = vadd.f32 %v3138, %v3139
      %v3141 = vsel %vm771, %v3134, 0.0
      %v3142 = vadd.f32 %v3140, %v3141
      %s3143 = scalar_lea.vmem %s9, 1
      %v3144 = vld [vmem:[%s3143] sm:$0x1]
      %v3146 = vperm.slane %v3144, 0
      %v3148 = vadd.f32 %v3142, %v3146
      %v3149 = vadd.f32 %v1573, %v3148
      %v3150 = vsel %vm771, %v3149, 0.0
      %3151 = vadd.xlane.f32.xlu0 %v3150
      %v3152 = vpop.xlane.xlu0 %3151
      %v3153 = vmul.f32 %v3152, %v1443
      %v3154 = vsub.f32 %v3149, %v3153
      %v3155 = vmul.f32 %v3154, %v3154
      %v3156 = vsel %vm771, %v3155, 0.0
      %3157 = vadd.xlane.f32.xlu0 %v3156
      %v3158 = vpop.xlane.xlu0 %3157
      %v3159 = vmul.f32 %v3158, %v1443
      %v3160 = vadd.f32 %v3159, 1e-05
      %v3161 = vrsqrt.pop %v3160
      %v3162 = vmul.f32 %v3161, %v3160
      %v3163 = vmul.f32 %v3162, %v3161
      %v3164 = vmul.f32 0.5, %v3163
      %v3165 = vsub.f32 1.5, %v3164
      %v3166 = vmul.f32 %v3161, %v3165
      %vm3167 = vweird.f32 %v3160
      %vm3168 = vweird.f32 %v3161
      %vm3169 = vmor %vm3167, %vm3168
      %v3170 = vsel %vm3169, %v3161, %v3166
      %v3171 = vmul.f32 %v3154, %v3170
      %s3172 = scalar_lea.vmem %s10, 1
      %v3173 = vld [vmem:[%s3172] sm:$0x1]
      %v3175 = vperm.slane %v3173, 0
      %v3177 = vmul.f32 %v3171, %v3175
      %s3178 = scalar_lea.vmem %s11, 1
      %v3179 = vld [vmem:[%s3178] sm:$0x1]
      %v3181 = vperm.slane %v3179, 0
      %v3183 = vadd.f32 %v3177, %v3181
      %s3184 = scalar_lea.vmem %s12, 32
      %v3185 = vld [vmem:[%s3184] sm:$0xff]
      %v3186 = vld [vmem:[%s3184 + $0x8] sm:$0xff]
      %v3187 = vld [vmem:[%s3184 + $0x10] sm:$0xff]
      %v3188 = vld [vmem:[%s3184 + $0x18] sm:$0xff]
      %s3189 = scalar_lea.vmem %s13, 1
      %v3190 = vld [vmem:[%s3189] sm:$0x1]
      %v3192 = vperm.slane %v3190, 0
      %v3195 = vsel %vm771, %v3183, 0
      %3197 = vmatpush.msra.mxu0 0.0
      %3198 = vmatpush.msra.mxu0 0.0
      %3199 = vmatpush.msra.mxu0 0.0
      %3200 = vmatpush.msra.mxu0 0.0
      %3201 = vmatpush.msra.mxu0 0.0
      %3202 = vmatpush.msra.mxu0 0.0
      %3203 = vmatpush.msra.mxu0 0.0
      %3204 = vmatpush.msra.mxu0 0.0
      %3205 = vmatpush.msra.mxu0 0.0
      %3206 = vmatpush.msra.mxu0 0.0
      %3207 = vmatpush.msra.mxu0 0.0
      %3208 = vmatpush.msra.mxu0 0.0
      %3209 = vmatpush.msra.mxu0 %v3188
      %3210 = vmatpush.msra.mxu0 %v3187
      %3211 = vmatpush.msra.mxu0 %v3186
      %3212 = vmatpush.msra.mxu0 %v3185
      %3213 = vmatmul.f32.gmra.mxu0 %v3195
      %v3214 = vpop.f32.mrf.mxu0
      %v3215 = vadd.f32 %v3192, %v3214
      %3216 = vdwg.mxu0
      %v3217 = vmax.f32 %v3215, 0.0
      %s3218 = scalar_lea.vmem %s14, 64
      %v3219 = vld [vmem:[%s3218] sm:$0xff]
      %v3220 = vld [vmem:[%s3218 + $0x8] sm:$0xff]
      %v3221 = vld [vmem:[%s3218 + $0x10] sm:$0xff]
      %v3222 = vld [vmem:[%s3218 + $0x18] sm:$0xff]
      %v3223 = vld [vmem:[%s3218 + $0x20] sm:$0xff]
      %v3224 = vld [vmem:[%s3218 + $0x28] sm:$0xff]
      %v3225 = vld [vmem:[%s3218 + $0x30] sm:$0xff]
      %v3226 = vld [vmem:[%s3218 + $0x38] sm:$0xff]
      %s3227 = scalar_lea.vmem %s15, 1
      %v3228 = vld [vmem:[%s3227] sm:$0x1]
      %v3230 = vperm.slane %v3228, 0
      %v3233 = vsel %vm1517, %v3217, 0
      %3235 = vmatpush.msra.mxu0 0.0
      %3236 = vmatpush.msra.mxu0 0.0
      %3237 = vmatpush.msra.mxu0 0.0
      %3238 = vmatpush.msra.mxu0 0.0
      %3239 = vmatpush.msra.mxu0 0.0
      %3240 = vmatpush.msra.mxu0 0.0
      %3241 = vmatpush.msra.mxu0 0.0
      %3242 = vmatpush.msra.mxu0 0.0
      %3243 = vmatpush.msra.mxu0 %v3226
      %3244 = vmatpush.msra.mxu0 %v3225
      %3245 = vmatpush.msra.mxu0 %v3224
      %3246 = vmatpush.msra.mxu0 %v3223
      %3247 = vmatpush.msra.mxu0 %v3222
      %3248 = vmatpush.msra.mxu0 %v3221
      %3249 = vmatpush.msra.mxu0 %v3220
      %3250 = vmatpush.msra.mxu0 %v3219
      %3251 = vmatmul.f32.gmra.mxu0 %v3233
      %v3252 = vpop.f32.mrf.mxu0
      %v3253 = vadd.f32 %v3230, %v3252
      %3254 = vdwg.mxu0
      %v3255 = vadd.f32 %v3183, %v3253
      %v3256 = vsel %vm771, %v3255, 0.0
      %3257 = vadd.xlane.f32.xlu0 %v3256
      %v3258 = vpop.xlane.xlu0 %3257
      %v3259 = vmul.f32 %v3258, %v1443
      %v3260 = vsub.f32 %v3255, %v3259
      %v3261 = vmul.f32 %v3260, %v3260
      %v3262 = vsel %vm771, %v3261, 0.0
      %3263 = vadd.xlane.f32.xlu0 %v3262
      %v3264 = vpop.xlane.xlu0 %3263
      %v3265 = vmul.f32 %v3264, %v1443
      %v3266 = vadd.f32 %v3265, 1e-05
      %v3267 = vrsqrt.pop %v3266
      %v3268 = vmul.f32 %v3267, %v3266
      %v3269 = vmul.f32 %v3268, %v3267
      %v3270 = vmul.f32 0.5, %v3269
      %v3271 = vsub.f32 1.5, %v3270
      %v3272 = vmul.f32 %v3267, %v3271
      %vm3273 = vweird.f32 %v3266
      %vm3274 = vweird.f32 %v3267
      %vm3275 = vmor %vm3273, %vm3274
      %v3276 = vsel %vm3275, %v3267, %v3272
      %v3277 = vmul.f32 %v3260, %v3276
      %s3278 = scalar_lea.vmem %s16, 1
      %v3279 = vld [vmem:[%s3278] sm:$0x1]
      %v3281 = vperm.slane %v3279, 0
      %v3283 = vmul.f32 %v3277, %v3281
      %s3284 = scalar_lea.vmem %s17, 1
      %v3285 = vld [vmem:[%s3284] sm:$0x1]
      %v3287 = vperm.slane %v3285, 0
      %v3289 = vadd.f32 %v3283, %v3287
      %s3290 = scalar_lea.vmem %s2, 384
      %v3291 = vld [vmem:[%s3290] sm:$0xff]
      %v3292 = vld [vmem:[%s3290 + $0x8] sm:$0xff]
      %v3293 = vld [vmem:[%s3290 + $0x10] sm:$0xff]
      %v3294 = vld [vmem:[%s3290 + $0x18] sm:$0xff]
      %v3295 = vld [vmem:[%s3290 + $0x20] sm:$0xff]
      %v3296 = vld [vmem:[%s3290 + $0x28] sm:$0xff]
      %v3297 = vld [vmem:[%s3290 + $0x30] sm:$0xff]
      %v3298 = vld [vmem:[%s3290 + $0x38] sm:$0xff]
      %v3299 = vld [vmem:[%s3290 + $0x40] sm:$0xff]
      %v3300 = vld [vmem:[%s3290 + $0x48] sm:$0xff]
      %v3301 = vld [vmem:[%s3290 + $0x50] sm:$0xff]
      %v3302 = vld [vmem:[%s3290 + $0x58] sm:$0xff]
      %v3303 = vld [vmem:[%s3290 + $0x60] sm:$0xff]
      %v3304 = vld [vmem:[%s3290 + $0x68] sm:$0xff]
      %v3305 = vld [vmem:[%s3290 + $0x70] sm:$0xff]
      %v3306 = vld [vmem:[%s3290 + $0x78] sm:$0xff]
      %s3307 = scalar_lea.vmem %s3, 12
      %v3308 = vld [vmem:[%s3307] sm:$0x1]
      %v3309 = vld [vmem:[%s3307 + $0x1] sm:$0x1]
      %v3310 = vld [vmem:[%s3307 + $0x2] sm:$0x1]
      %v3311 = vld [vmem:[%s3307 + $0x3] sm:$0x1]
      %v3316 = vperm.slane %v3308, 0
      %v3317 = vperm.slane %v3309, 0
      %v3318 = vperm.slane %v3310, 0
      %v3319 = vperm.slane %v3311, 0
      %v3325 = vsel %vm771, %v3289, 0
      %3327 = vmatpush.msra.mxu0 0.0
      %3328 = vmatpush.msra.mxu0 0.0
      %3329 = vmatpush.msra.mxu0 0.0
      %3330 = vmatpush.msra.mxu0 0.0
      %3331 = vmatpush.msra.mxu0 0.0
      %3332 = vmatpush.msra.mxu0 0.0
      %3333 = vmatpush.msra.mxu0 0.0
      %3334 = vmatpush.msra.mxu0 0.0
      %3335 = vmatpush.msra.mxu0 0.0
      %3336 = vmatpush.msra.mxu0 0.0
      %3337 = vmatpush.msra.mxu0 0.0
      %3338 = vmatpush.msra.mxu0 0.0
      %3339 = vmatpush.msra.mxu0 %v3294
      %3340 = vmatpush.msra.mxu0 %v3293
      %3341 = vmatpush.msra.mxu0 %v3292
      %3342 = vmatpush.msra.mxu0 %v3291
      %3343 = vmatmul.f32.gmra.mxu0 %v3325
      %v3344 = vpop.f32.mrf.mxu0
      %v3345 = vadd.f32 %v3316, %v3344
      %3346 = vdwg.mxu0
      %3347 = vmatpush.msra.mxu0 0.0
      %3348 = vmatpush.msra.mxu0 0.0
      %3349 = vmatpush.msra.mxu0 0.0
      %3350 = vmatpush.msra.mxu0 0.0
      %3351 = vmatpush.msra.mxu0 0.0
      %3352 = vmatpush.msra.mxu0 0.0
      %3353 = vmatpush.msra.mxu0 0.0
      %3354 = vmatpush.msra.mxu0 0.0
      %3355 = vmatpush.msra.mxu0 0.0
      %3356 = vmatpush.msra.mxu0 0.0
      %3357 = vmatpush.msra.mxu0 0.0
      %3358 = vmatpush.msra.mxu0 0.0
      %3359 = vmatpush.msra.mxu0 %v3298
      %3360 = vmatpush.msra.mxu0 %v3297
      %3361 = vmatpush.msra.mxu0 %v3296
      %3362 = vmatpush.msra.mxu0 %v3295
      %3363 = vmatmul.f32.gmra.mxu0 %v3325
      %v3364 = vpop.f32.mrf.mxu0
      %v3365 = vadd.f32 %v3317, %v3364
      %3366 = vdwg.mxu0
      %3367 = vmatpush.msra.mxu0 0.0
      %3368 = vmatpush.msra.mxu0 0.0
      %3369 = vmatpush.msra.mxu0 0.0
      %3370 = vmatpush.msra.mxu0 0.0
      %3371 = vmatpush.msra.mxu0 0.0
      %3372 = vmatpush.msra.mxu0 0.0
      %3373 = vmatpush.msra.mxu0 0.0
      %3374 = vmatpush.msra.mxu0 0.0
      %3375 = vmatpush.msra.mxu0 0.0
      %3376 = vmatpush.msra.mxu0 0.0
      %3377 = vmatpush.msra.mxu0 0.0
      %3378 = vmatpush.msra.mxu0 0.0
      %3379 = vmatpush.msra.mxu0 %v3302
      %3380 = vmatpush.msra.mxu0 %v3301
      %3381 = vmatpush.msra.mxu0 %v3300
      %3382 = vmatpush.msra.mxu0 %v3299
      %3383 = vmatmul.f32.gmra.mxu0 %v3325
      %v3384 = vpop.f32.mrf.mxu0
      %v3385 = vadd.f32 %v3318, %v3384
      %3386 = vdwg.mxu0
      %3387 = vmatpush.msra.mxu0 0.0
      %3388 = vmatpush.msra.mxu0 0.0
      %3389 = vmatpush.msra.mxu0 0.0
      %3390 = vmatpush.msra.mxu0 0.0
      %3391 = vmatpush.msra.mxu0 0.0
      %3392 = vmatpush.msra.mxu0 0.0
      %3393 = vmatpush.msra.mxu0 0.0
      %3394 = vmatpush.msra.mxu0 0.0
      %3395 = vmatpush.msra.mxu0 0.0
      %3396 = vmatpush.msra.mxu0 0.0
      %3397 = vmatpush.msra.mxu0 0.0
      %3398 = vmatpush.msra.mxu0 0.0
      %3399 = vmatpush.msra.mxu0 %v3306
      %3400 = vmatpush.msra.mxu0 %v3305
      %3401 = vmatpush.msra.mxu0 %v3304
      %3402 = vmatpush.msra.mxu0 %v3303
      %3403 = vmatmul.f32.gmra.mxu0 %v3325
      %v3404 = vpop.f32.mrf.mxu0
      %v3405 = vadd.f32 %v3319, %v3404
      %3406 = vdwg.mxu0
      %s3407 = scalar_lea.vmem %s4, 384
      %v3408 = vld [vmem:[%s3407] sm:$0xff]
      %v3409 = vld [vmem:[%s3407 + $0x8] sm:$0xff]
      %v3410 = vld [vmem:[%s3407 + $0x10] sm:$0xff]
      %v3411 = vld [vmem:[%s3407 + $0x18] sm:$0xff]
      %v3412 = vld [vmem:[%s3407 + $0x20] sm:$0xff]
      %v3413 = vld [vmem:[%s3407 + $0x28] sm:$0xff]
      %v3414 = vld [vmem:[%s3407 + $0x30] sm:$0xff]
      %v3415 = vld [vmem:[%s3407 + $0x38] sm:$0xff]
      %v3416 = vld [vmem:[%s3407 + $0x40] sm:$0xff]
      %v3417 = vld [vmem:[%s3407 + $0x48] sm:$0xff]
      %v3418 = vld [vmem:[%s3407 + $0x50] sm:$0xff]
      %v3419 = vld [vmem:[%s3407 + $0x58] sm:$0xff]
      %v3420 = vld [vmem:[%s3407 + $0x60] sm:$0xff]
      %v3421 = vld [vmem:[%s3407 + $0x68] sm:$0xff]
      %v3422 = vld [vmem:[%s3407 + $0x70] sm:$0xff]
      %v3423 = vld [vmem:[%s3407 + $0x78] sm:$0xff]
      %s3424 = scalar_lea.vmem %s5, 12
      %v3425 = vld [vmem:[%s3424] sm:$0x1]
      %v3426 = vld [vmem:[%s3424 + $0x1] sm:$0x1]
      %v3427 = vld [vmem:[%s3424 + $0x2] sm:$0x1]
      %v3428 = vld [vmem:[%s3424 + $0x3] sm:$0x1]
      %v3433 = vperm.slane %v3425, 0
      %v3434 = vperm.slane %v3426, 0
      %v3435 = vperm.slane %v3427, 0
      %v3436 = vperm.slane %v3428, 0
      %3441 = vmatpush.msra.mxu0 0.0
      %3442 = vmatpush.msra.mxu0 0.0
      %3443 = vmatpush.msra.mxu0 0.0
      %3444 = vmatpush.msra.mxu0 0.0
      %3445 = vmatpush.msra.mxu0 0.0
      %3446 = vmatpush.msra.mxu0 0.0
      %3447 = vmatpush.msra.mxu0 0.0
      %3448 = vmatpush.msra.mxu0 0.0
      %3449 = vmatpush.msra.mxu0 0.0
      %3450 = vmatpush.msra.mxu0 0.0
      %3451 = vmatpush.msra.mxu0 0.0
      %3452 = vmatpush.msra.mxu0 0.0
      %3453 = vmatpush.msra.mxu0 %v3411
      %3454 = vmatpush.msra.mxu0 %v3410
      %3455 = vmatpush.msra.mxu0 %v3409
      %3456 = vmatpush.msra.mxu0 %v3408
      %3457 = vmatmul.f32.gmra.mxu0 %v2485
      %v3458 = vpop.f32.mrf.mxu0
      %v3459 = vadd.f32 %v3433, %v3458
      %3460 = vdwg.mxu0
      %3461 = vmatpush.msra.mxu0 0.0
      %3462 = vmatpush.msra.mxu0 0.0
      %3463 = vmatpush.msra.mxu0 0.0
      %3464 = vmatpush.msra.mxu0 0.0
      %3465 = vmatpush.msra.mxu0 0.0
      %3466 = vmatpush.msra.mxu0 0.0
      %3467 = vmatpush.msra.mxu0 0.0
      %3468 = vmatpush.msra.mxu0 0.0
      %3469 = vmatpush.msra.mxu0 0.0
      %3470 = vmatpush.msra.mxu0 0.0
      %3471 = vmatpush.msra.mxu0 0.0
      %3472 = vmatpush.msra.mxu0 0.0
      %3473 = vmatpush.msra.mxu0 %v3415
      %3474 = vmatpush.msra.mxu0 %v3414
      %3475 = vmatpush.msra.mxu0 %v3413
      %3476 = vmatpush.msra.mxu0 %v3412
      %3477 = vmatmul.f32.gmra.mxu0 %v2485
      %v3478 = vpop.f32.mrf.mxu0
      %v3479 = vadd.f32 %v3434, %v3478
      %3480 = vdwg.mxu0
      %3481 = vmatpush.msra.mxu0 0.0
      %3482 = vmatpush.msra.mxu0 0.0
      %3483 = vmatpush.msra.mxu0 0.0
      %3484 = vmatpush.msra.mxu0 0.0
      %3485 = vmatpush.msra.mxu0 0.0
      %3486 = vmatpush.msra.mxu0 0.0
      %3487 = vmatpush.msra.mxu0 0.0
      %3488 = vmatpush.msra.mxu0 0.0
      %3489 = vmatpush.msra.mxu0 0.0
      %3490 = vmatpush.msra.mxu0 0.0
      %3491 = vmatpush.msra.mxu0 0.0
      %3492 = vmatpush.msra.mxu0 0.0
      %3493 = vmatpush.msra.mxu0 %v3419
      %3494 = vmatpush.msra.mxu0 %v3418
      %3495 = vmatpush.msra.mxu0 %v3417
      %3496 = vmatpush.msra.mxu0 %v3416
      %3497 = vmatmul.f32.gmra.mxu0 %v2485
      %v3498 = vpop.f32.mrf.mxu0
      %v3499 = vadd.f32 %v3435, %v3498
      %3500 = vdwg.mxu0
      %3501 = vmatpush.msra.mxu0 0.0
      %3502 = vmatpush.msra.mxu0 0.0
      %3503 = vmatpush.msra.mxu0 0.0
      %3504 = vmatpush.msra.mxu0 0.0
      %3505 = vmatpush.msra.mxu0 0.0
      %3506 = vmatpush.msra.mxu0 0.0
      %3507 = vmatpush.msra.mxu0 0.0
      %3508 = vmatpush.msra.mxu0 0.0
      %3509 = vmatpush.msra.mxu0 0.0
      %3510 = vmatpush.msra.mxu0 0.0
      %3511 = vmatpush.msra.mxu0 0.0
      %3512 = vmatpush.msra.mxu0 0.0
      %3513 = vmatpush.msra.mxu0 %v3423
      %3514 = vmatpush.msra.mxu0 %v3422
      %3515 = vmatpush.msra.mxu0 %v3421
      %3516 = vmatpush.msra.mxu0 %v3420
      %3517 = vmatmul.f32.gmra.mxu0 %v2485
      %v3518 = vpop.f32.mrf.mxu0
      %v3519 = vadd.f32 %v3436, %v3518
      %3520 = vdwg.mxu0
      %s3521 = scalar_lea.vmem %s6, 384
      %v3522 = vld [vmem:[%s3521] sm:$0xff]
      %v3523 = vld [vmem:[%s3521 + $0x8] sm:$0xff]
      %v3524 = vld [vmem:[%s3521 + $0x10] sm:$0xff]
      %v3525 = vld [vmem:[%s3521 + $0x18] sm:$0xff]
      %v3526 = vld [vmem:[%s3521 + $0x20] sm:$0xff]
      %v3527 = vld [vmem:[%s3521 + $0x28] sm:$0xff]
      %v3528 = vld [vmem:[%s3521 + $0x30] sm:$0xff]
      %v3529 = vld [vmem:[%s3521 + $0x38] sm:$0xff]
      %v3530 = vld [vmem:[%s3521 + $0x40] sm:$0xff]
      %v3531 = vld [vmem:[%s3521 + $0x48] sm:$0xff]
      %v3532 = vld [vmem:[%s3521 + $0x50] sm:$0xff]
      %v3533 = vld [vmem:[%s3521 + $0x58] sm:$0xff]
      %v3534 = vld [vmem:[%s3521 + $0x60] sm:$0xff]
      %v3535 = vld [vmem:[%s3521 + $0x68] sm:$0xff]
      %v3536 = vld [vmem:[%s3521 + $0x70] sm:$0xff]
      %v3537 = vld [vmem:[%s3521 + $0x78] sm:$0xff]
      %s3538 = scalar_lea.vmem %s7, 12
      %v3539 = vld [vmem:[%s3538] sm:$0x1]
      %v3540 = vld [vmem:[%s3538 + $0x1] sm:$0x1]
      %v3541 = vld [vmem:[%s3538 + $0x2] sm:$0x1]
      %v3542 = vld [vmem:[%s3538 + $0x3] sm:$0x1]
      %v3547 = vperm.slane %v3539, 0
      %v3548 = vperm.slane %v3540, 0
      %v3549 = vperm.slane %v3541, 0
      %v3550 = vperm.slane %v3542, 0
      %3555 = vmatpush.msra.mxu0 0.0
      %3556 = vmatpush.msra.mxu0 0.0
      %3557 = vmatpush.msra.mxu0 0.0
      %3558 = vmatpush.msra.mxu0 0.0
      %3559 = vmatpush.msra.mxu0 0.0
      %3560 = vmatpush.msra.mxu0 0.0
      %3561 = vmatpush.msra.mxu0 0.0
      %3562 = vmatpush.msra.mxu0 0.0
      %3563 = vmatpush.msra.mxu0 0.0
      %3564 = vmatpush.msra.mxu0 0.0
      %3565 = vmatpush.msra.mxu0 0.0
      %3566 = vmatpush.msra.mxu0 0.0
      %3567 = vmatpush.msra.mxu0 %v3525
      %3568 = vmatpush.msra.mxu0 %v3524
      %3569 = vmatpush.msra.mxu0 %v3523
      %3570 = vmatpush.msra.mxu0 %v3522
      %3571 = vmatmul.f32.gmra.mxu0 %v2485
      %v3572 = vpop.f32.mrf.mxu0
      %v3573 = vadd.f32 %v3547, %v3572
      %3574 = vdwg.mxu0
      %3575 = vmatpush.msra.mxu0 0.0
      %3576 = vmatpush.msra.mxu0 0.0
      %3577 = vmatpush.msra.mxu0 0.0
      %3578 = vmatpush.msra.mxu0 0.0
      %3579 = vmatpush.msra.mxu0 0.0
      %3580 = vmatpush.msra.mxu0 0.0
      %3581 = vmatpush.msra.mxu0 0.0
      %3582 = vmatpush.msra.mxu0 0.0
      %3583 = vmatpush.msra.mxu0 0.0
      %3584 = vmatpush.msra.mxu0 0.0
      %3585 = vmatpush.msra.mxu0 0.0
      %3586 = vmatpush.msra.mxu0 0.0
      %3587 = vmatpush.msra.mxu0 %v3529
      %3588 = vmatpush.msra.mxu0 %v3528
      %3589 = vmatpush.msra.mxu0 %v3527
      %3590 = vmatpush.msra.mxu0 %v3526
      %3591 = vmatmul.f32.gmra.mxu0 %v2485
      %v3592 = vpop.f32.mrf.mxu0
      %v3593 = vadd.f32 %v3548, %v3592
      %3594 = vdwg.mxu0
      %3595 = vmatpush.msra.mxu0 0.0
      %3596 = vmatpush.msra.mxu0 0.0
      %3597 = vmatpush.msra.mxu0 0.0
      %3598 = vmatpush.msra.mxu0 0.0
      %3599 = vmatpush.msra.mxu0 0.0
      %3600 = vmatpush.msra.mxu0 0.0
      %3601 = vmatpush.msra.mxu0 0.0
      %3602 = vmatpush.msra.mxu0 0.0
      %3603 = vmatpush.msra.mxu0 0.0
      %3604 = vmatpush.msra.mxu0 0.0
      %3605 = vmatpush.msra.mxu0 0.0
      %3606 = vmatpush.msra.mxu0 0.0
      %3607 = vmatpush.msra.mxu0 %v3533
      %3608 = vmatpush.msra.mxu0 %v3532
      %3609 = vmatpush.msra.mxu0 %v3531
      %3610 = vmatpush.msra.mxu0 %v3530
      %3611 = vmatmul.f32.gmra.mxu0 %v2485
      %v3612 = vpop.f32.mrf.mxu0
      %v3613 = vadd.f32 %v3549, %v3612
      %3614 = vdwg.mxu0
      %3615 = vmatpush.msra.mxu0 0.0
      %3616 = vmatpush.msra.mxu0 0.0
      %3617 = vmatpush.msra.mxu0 0.0
      %3618 = vmatpush.msra.mxu0 0.0
      %3619 = vmatpush.msra.mxu0 0.0
      %3620 = vmatpush.msra.mxu0 0.0
      %3621 = vmatpush.msra.mxu0 0.0
      %3622 = vmatpush.msra.mxu0 0.0
      %3623 = vmatpush.msra.mxu0 0.0
      %3624 = vmatpush.msra.mxu0 0.0
      %3625 = vmatpush.msra.mxu0 0.0
      %3626 = vmatpush.msra.mxu0 0.0
      %3627 = vmatpush.msra.mxu0 %v3537
      %3628 = vmatpush.msra.mxu0 %v3536
      %3629 = vmatpush.msra.mxu0 %v3535
      %3630 = vmatpush.msra.mxu0 %v3534
      %3631 = vmatmul.f32.gmra.mxu0 %v2485
      %v3632 = vpop.f32.mrf.mxu0
      %v3633 = vadd.f32 %v3550, %v3632
      %3634 = vdwg.mxu0
      %v3636 = vsel %vm1080, %v3345, 0
      %v3639 = vsel %vm1080, %v3459, 0
      %3641 = vmatpush.xpose.msra.mxu0 0.0
      %3642 = vmatpush.xpose.msra.mxu0 0.0
      %3643 = vmatpush.xpose.msra.mxu0 0.0
      %3644 = vmatpush.xpose.msra.mxu0 0.0
      %3645 = vmatpush.xpose.msra.mxu0 0.0
      %3646 = vmatpush.xpose.msra.mxu0 0.0
      %3647 = vmatpush.xpose.msra.mxu0 0.0
      %3648 = vmatpush.xpose.msra.mxu0 0.0
      %3649 = vmatpush.xpose.msra.mxu0 0.0
      %3650 = vmatpush.xpose.msra.mxu0 0.0
      %3651 = vmatpush.xpose.msra.mxu0 0.0
      %3652 = vmatpush.xpose.msra.mxu0 0.0
      %3653 = vmatpush.xpose.msra.mxu0 0.0
      %3654 = vmatpush.xpose.msra.mxu0 0.0
      %3655 = vmatpush.xpose.msra.mxu0 0.0
      %3656 = vmatpush.xpose.msra.mxu0 %v3639
      %3657 = vmatmul.f32.gmra.mxu0 %v3636
      %v3658 = vpop.f32.mrf.mxu0
      %v3659 = vadd.f32 0.0, %v3658
      %3660 = vdwg.mxu0
      %v3662 = vsel %vm1080, %v3365, 0
      %v3665 = vsel %vm1080, %v3479, 0
      %3667 = vmatpush.xpose.msra.mxu0 0.0
      %3668 = vmatpush.xpose.msra.mxu0 0.0
      %3669 = vmatpush.xpose.msra.mxu0 0.0
      %3670 = vmatpush.xpose.msra.mxu0 0.0
      %3671 = vmatpush.xpose.msra.mxu0 0.0
      %3672 = vmatpush.xpose.msra.mxu0 0.0
      %3673 = vmatpush.xpose.msra.mxu0 0.0
      %3674 = vmatpush.xpose.msra.mxu0 0.0
      %3675 = vmatpush.xpose.msra.mxu0 0.0
      %3676 = vmatpush.xpose.msra.mxu0 0.0
      %3677 = vmatpush.xpose.msra.mxu0 0.0
      %3678 = vmatpush.xpose.msra.mxu0 0.0
      %3679 = vmatpush.xpose.msra.mxu0 0.0
      %3680 = vmatpush.xpose.msra.mxu0 0.0
      %3681 = vmatpush.xpose.msra.mxu0 0.0
      %3682 = vmatpush.xpose.msra.mxu0 %v3665
      %3683 = vmatmul.f32.gmra.mxu0 %v3662
      %v3684 = vpop.f32.mrf.mxu0
      %v3685 = vadd.f32 0.0, %v3684
      %3686 = vdwg.mxu0
      %v3688 = vsel %vm1080, %v3385, 0
      %v3691 = vsel %vm1080, %v3499, 0
      %3693 = vmatpush.xpose.msra.mxu0 0.0
      %3694 = vmatpush.xpose.msra.mxu0 0.0
      %3695 = vmatpush.xpose.msra.mxu0 0.0
      %3696 = vmatpush.xpose.msra.mxu0 0.0
      %3697 = vmatpush.xpose.msra.mxu0 0.0
      %3698 = vmatpush.xpose.msra.mxu0 0.0
      %3699 = vmatpush.xpose.msra.mxu0 0.0
      %3700 = vmatpush.xpose.msra.mxu0 0.0
      %3701 = vmatpush.xpose.msra.mxu0 0.0
      %3702 = vmatpush.xpose.msra.mxu0 0.0
      %3703 = vmatpush.xpose.msra.mxu0 0.0
      %3704 = vmatpush.xpose.msra.mxu0 0.0
      %3705 = vmatpush.xpose.msra.mxu0 0.0
      %3706 = vmatpush.xpose.msra.mxu0 0.0
      %3707 = vmatpush.xpose.msra.mxu0 0.0
      %3708 = vmatpush.xpose.msra.mxu0 %v3691
      %3709 = vmatmul.f32.gmra.mxu0 %v3688
      %v3710 = vpop.f32.mrf.mxu0
      %v3711 = vadd.f32 0.0, %v3710
      %3712 = vdwg.mxu0
      %v3714 = vsel %vm1080, %v3405, 0
      %v3717 = vsel %vm1080, %v3519, 0
      %3719 = vmatpush.xpose.msra.mxu0 0.0
      %3720 = vmatpush.xpose.msra.mxu0 0.0
      %3721 = vmatpush.xpose.msra.mxu0 0.0
      %3722 = vmatpush.xpose.msra.mxu0 0.0
      %3723 = vmatpush.xpose.msra.mxu0 0.0
      %3724 = vmatpush.xpose.msra.mxu0 0.0
      %3725 = vmatpush.xpose.msra.mxu0 0.0
      %3726 = vmatpush.xpose.msra.mxu0 0.0
      %3727 = vmatpush.xpose.msra.mxu0 0.0
      %3728 = vmatpush.xpose.msra.mxu0 0.0
      %3729 = vmatpush.xpose.msra.mxu0 0.0
      %3730 = vmatpush.xpose.msra.mxu0 0.0
      %3731 = vmatpush.xpose.msra.mxu0 0.0
      %3732 = vmatpush.xpose.msra.mxu0 0.0
      %3733 = vmatpush.xpose.msra.mxu0 0.0
      %3734 = vmatpush.xpose.msra.mxu0 %v3717
      %3735 = vmatmul.f32.gmra.mxu0 %v3714
      %v3736 = vpop.f32.mrf.mxu0
      %v3737 = vadd.f32 0.0, %v3736
      %3738 = vdwg.mxu0
      %v3739 = vmul.f32 %v3659, 0.35355338
      %v3740 = vmul.f32 %v3685, 0.35355338
      %v3741 = vmul.f32 %v3711, 0.35355338
      %v3742 = vmul.f32 %v3737, 0.35355338
      %v3743 = vsel %vm1080, %v3739, -inf
      %3744 = vmax.xlane.f32.xlu0 %v3743
      %v3745 = vpop.xlane.xlu0 %3744
      %v3746 = vsel %vm1080, %v3740, -inf
      %3747 = vmax.xlane.f32.xlu0 %v3746
      %v3748 = vpop.xlane.xlu0 %3747
      %v3749 = vsel %vm1080, %v3741, -inf
      %3750 = vmax.xlane.f32.xlu0 %v3749
      %v3751 = vpop.xlane.xlu0 %3750
      %v3752 = vsel %vm1080, %v3742, -inf
      %3753 = vmax.xlane.f32.xlu0 %v3752
      %v3754 = vpop.xlane.xlu0 %3753
      %v3755 = vsub.f32 %v3739, %v3745
      %v3756 = vsub.f32 %v3740, %v3748
      %v3757 = vsub.f32 %v3741, %v3751
      %v3758 = vsub.f32 %v3742, %v3754
      %v3759 = vmul.f32 %v3755, 1.442695
      %v3760 = vpow.pop %v3759
      %v3761 = vmul.f32 %v3756, 1.442695
      %v3762 = vpow.pop %v3761
      %v3763 = vmul.f32 %v3757, 1.442695
      %v3764 = vpow.pop %v3763
      %v3765 = vmul.f32 %v3758, 1.442695
      %v3766 = vpow.pop %v3765
      %v3767 = vsel %vm1080, %v3760, 0.0
      %3768 = vadd.xlane.f32.xlu0 %v3767
      %v3769 = vpop.xlane.xlu0 %3768
      %v3770 = vsel %vm1080, %v3762, 0.0
      %3771 = vadd.xlane.f32.xlu0 %v3770
      %v3772 = vpop.xlane.xlu0 %3771
      %v3773 = vsel %vm1080, %v3764, 0.0
      %3774 = vadd.xlane.f32.xlu0 %v3773
      %v3775 = vpop.xlane.xlu0 %3774
      %v3776 = vsel %vm1080, %v3766, 0.0
      %3777 = vadd.xlane.f32.xlu0 %v3776
      %v3778 = vpop.xlane.xlu0 %3777
      %v3779 = vrcp.pop %v3769
      %v3780 = vrcp.pop %v3772
      %v3781 = vrcp.pop %v3775
      %v3782 = vrcp.pop %v3778
      %v3783 = vmul.f32 %v3760, %v3779
      %v3784 = vmul.f32 %v3762, %v3780
      %v3785 = vmul.f32 %v3764, %v3781
      %v3786 = vmul.f32 %v3766, %v3782
      %v3788 = vsel %vm1080, %v3783, 0
      %3790 = vmatpush.msra.mxu0 0.0
      %3791 = vmatpush.msra.mxu0 0.0
      %3792 = vmatpush.msra.mxu0 0.0
      %3793 = vmatpush.msra.mxu0 0.0
      %3794 = vmatpush.msra.mxu0 0.0
      %3795 = vmatpush.msra.mxu0 0.0
      %3796 = vmatpush.msra.mxu0 0.0
      %3797 = vmatpush.msra.mxu0 0.0
      %3798 = vmatpush.msra.mxu0 0.0
      %3799 = vmatpush.msra.mxu0 0.0
      %3800 = vmatpush.msra.mxu0 0.0
      %3801 = vmatpush.msra.mxu0 0.0
      %3802 = vmatpush.msra.mxu0 0.0
      %3803 = vmatpush.msra.mxu0 0.0
      %3804 = vmatpush.msra.mxu0 0.0
      %3805 = vmatpush.msra.mxu0 %v3573
      %3806 = vmatmul.f32.gmra.mxu0 %v3788
      %v3807 = vpop.f32.mrf.mxu0
      %v3808 = vadd.f32 0.0, %v3807
      %3809 = vdwg.mxu0
      %v3811 = vsel %vm1080, %v3784, 0
      %3813 = vmatpush.msra.mxu0 0.0
      %3814 = vmatpush.msra.mxu0 0.0
      %3815 = vmatpush.msra.mxu0 0.0
      %3816 = vmatpush.msra.mxu0 0.0
      %3817 = vmatpush.msra.mxu0 0.0
      %3818 = vmatpush.msra.mxu0 0.0
      %3819 = vmatpush.msra.mxu0 0.0
      %3820 = vmatpush.msra.mxu0 0.0
      %3821 = vmatpush.msra.mxu0 0.0
      %3822 = vmatpush.msra.mxu0 0.0
      %3823 = vmatpush.msra.mxu0 0.0
      %3824 = vmatpush.msra.mxu0 0.0
      %3825 = vmatpush.msra.mxu0 0.0
      %3826 = vmatpush.msra.mxu0 0.0
      %3827 = vmatpush.msra.mxu0 0.0
      %3828 = vmatpush.msra.mxu0 %v3593
      %3829 = vmatmul.f32.gmra.mxu0 %v3811
      %v3830 = vpop.f32.mrf.mxu0
      %v3831 = vadd.f32 0.0, %v3830
      %3832 = vdwg.mxu0
      %v3834 = vsel %vm1080, %v3785, 0
      %3836 = vmatpush.msra.mxu0 0.0
      %3837 = vmatpush.msra.mxu0 0.0
      %3838 = vmatpush.msra.mxu0 0.0
      %3839 = vmatpush.msra.mxu0 0.0
      %3840 = vmatpush.msra.mxu0 0.0
      %3841 = vmatpush.msra.mxu0 0.0
      %3842 = vmatpush.msra.mxu0 0.0
      %3843 = vmatpush.msra.mxu0 0.0
      %3844 = vmatpush.msra.mxu0 0.0
      %3845 = vmatpush.msra.mxu0 0.0
      %3846 = vmatpush.msra.mxu0 0.0
      %3847 = vmatpush.msra.mxu0 0.0
      %3848 = vmatpush.msra.mxu0 0.0
      %3849 = vmatpush.msra.mxu0 0.0
      %3850 = vmatpush.msra.mxu0 0.0
      %3851 = vmatpush.msra.mxu0 %v3613
      %3852 = vmatmul.f32.gmra.mxu0 %v3834
      %v3853 = vpop.f32.mrf.mxu0
      %v3854 = vadd.f32 0.0, %v3853
      %3855 = vdwg.mxu0
      %v3857 = vsel %vm1080, %v3786, 0
      %3859 = vmatpush.msra.mxu0 0.0
      %3860 = vmatpush.msra.mxu0 0.0
      %3861 = vmatpush.msra.mxu0 0.0
      %3862 = vmatpush.msra.mxu0 0.0
      %3863 = vmatpush.msra.mxu0 0.0
      %3864 = vmatpush.msra.mxu0 0.0
      %3865 = vmatpush.msra.mxu0 0.0
      %3866 = vmatpush.msra.mxu0 0.0
      %3867 = vmatpush.msra.mxu0 0.0
      %3868 = vmatpush.msra.mxu0 0.0
      %3869 = vmatpush.msra.mxu0 0.0
      %3870 = vmatpush.msra.mxu0 0.0
      %3871 = vmatpush.msra.mxu0 0.0
      %3872 = vmatpush.msra.mxu0 0.0
      %3873 = vmatpush.msra.mxu0 0.0
      %3874 = vmatpush.msra.mxu0 %v3633
      %3875 = vmatmul.f32.gmra.mxu0 %v3857
      %v3876 = vpop.f32.mrf.mxu0
      %v3877 = vadd.f32 0.0, %v3876
      %3878 = vdwg.mxu0
      %s3879 = scalar_lea.vmem %s8, 96
      %v3880 = vld [vmem:[%s3879] sm:$0xff]
      %v3881 = vld [vmem:[%s3879 + $0x8] sm:$0xff]
      %v3882 = vld [vmem:[%s3879 + $0x10] sm:$0xff]
      %v3883 = vld [vmem:[%s3879 + $0x18] sm:$0xff]
      %v3885 = vsel %vm1080, %v3808, 0
      %3887 = vmatpush.msra.mxu0 0.0
      %3888 = vmatpush.msra.mxu0 0.0
      %3889 = vmatpush.msra.mxu0 0.0
      %3890 = vmatpush.msra.mxu0 0.0
      %3891 = vmatpush.msra.mxu0 0.0
      %3892 = vmatpush.msra.mxu0 0.0
      %3893 = vmatpush.msra.mxu0 0.0
      %3894 = vmatpush.msra.mxu0 0.0
      %3895 = vmatpush.msra.mxu0 0.0
      %3896 = vmatpush.msra.mxu0 0.0
      %3897 = vmatpush.msra.mxu0 0.0
      %3898 = vmatpush.msra.mxu0 0.0
      %3899 = vmatpush.msra.mxu0 0.0
      %3900 = vmatpush.msra.mxu0 0.0
      %3901 = vmatpush.msra.mxu0 0.0
      %3902 = vmatpush.msra.mxu0 %v3880
      %3903 = vmatmul.f32.gmra.mxu0 %v3885
      %v3904 = vpop.f32.mrf.mxu0
      %v3905 = vadd.f32 0.0, %v3904
      %3906 = vdwg.mxu0
      %v3908 = vsel %vm1080, %v3831, 0
      %3910 = vmatpush.msra.mxu0 0.0
      %3911 = vmatpush.msra.mxu0 0.0
      %3912 = vmatpush.msra.mxu0 0.0
      %3913 = vmatpush.msra.mxu0 0.0
      %3914 = vmatpush.msra.mxu0 0.0
      %3915 = vmatpush.msra.mxu0 0.0
      %3916 = vmatpush.msra.mxu0 0.0
      %3917 = vmatpush.msra.mxu0 0.0
      %3918 = vmatpush.msra.mxu0 0.0
      %3919 = vmatpush.msra.mxu0 0.0
      %3920 = vmatpush.msra.mxu0 0.0
      %3921 = vmatpush.msra.mxu0 0.0
      %3922 = vmatpush.msra.mxu0 0.0
      %3923 = vmatpush.msra.mxu0 0.0
      %3924 = vmatpush.msra.mxu0 0.0
      %3925 = vmatpush.msra.mxu0 %v3881
      %3926 = vmatmul.f32.gmra.mxu0 %v3908
      %v3927 = vpop.f32.mrf.mxu0
      %v3928 = vadd.f32 0.0, %v3927
      %3929 = vdwg.mxu0
      %v3931 = vsel %vm1080, %v3854, 0
      %3933 = vmatpush.msra.mxu0 0.0
      %3934 = vmatpush.msra.mxu0 0.0
      %3935 = vmatpush.msra.mxu0 0.0
      %3936 = vmatpush.msra.mxu0 0.0
      %3937 = vmatpush.msra.mxu0 0.0
      %3938 = vmatpush.msra.mxu0 0.0
      %3939 = vmatpush.msra.mxu0 0.0
      %3940 = vmatpush.msra.mxu0 0.0
      %3941 = vmatpush.msra.mxu0 0.0
      %3942 = vmatpush.msra.mxu0 0.0
      %3943 = vmatpush.msra.mxu0 0.0
      %3944 = vmatpush.msra.mxu0 0.0
      %3945 = vmatpush.msra.mxu0 0.0
      %3946 = vmatpush.msra.mxu0 0.0
      %3947 = vmatpush.msra.mxu0 0.0
      %3948 = vmatpush.msra.mxu0 %v3882
      %3949 = vmatmul.f32.gmra.mxu0 %v3931
      %v3950 = vpop.f32.mrf.mxu0
      %v3951 = vadd.f32 0.0, %v3950
      %3952 = vdwg.mxu0
      %v3954 = vsel %vm1080, %v3877, 0
      %3956 = vmatpush.msra.mxu0 0.0
      %3957 = vmatpush.msra.mxu0 0.0
      %3958 = vmatpush.msra.mxu0 0.0
      %3959 = vmatpush.msra.mxu0 0.0
      %3960 = vmatpush.msra.mxu0 0.0
      %3961 = vmatpush.msra.mxu0 0.0
      %3962 = vmatpush.msra.mxu0 0.0
      %3963 = vmatpush.msra.mxu0 0.0
      %3964 = vmatpush.msra.mxu0 0.0
      %3965 = vmatpush.msra.mxu0 0.0
      %3966 = vmatpush.msra.mxu0 0.0
      %3967 = vmatpush.msra.mxu0 0.0
      %3968 = vmatpush.msra.mxu0 0.0
      %3969 = vmatpush.msra.mxu0 0.0
      %3970 = vmatpush.msra.mxu0 0.0
      %3971 = vmatpush.msra.mxu0 %v3883
      %3972 = vmatmul.f32.gmra.mxu0 %v3954
      %v3973 = vpop.f32.mrf.mxu0
      %v3974 = vadd.f32 0.0, %v3973
      %3975 = vdwg.mxu0
      %v3976 = vsel %vm771, %v3905, 0.0
      %v3977 = vsel %vm771, %v3928, 0.0
      %v3978 = vadd.f32 %v3976, %v3977
      %v3979 = vsel %vm771, %v3951, 0.0
      %v3980 = vadd.f32 %v3978, %v3979
      %v3981 = vsel %vm771, %v3974, 0.0
      %v3982 = vadd.f32 %v3980, %v3981
      %s3983 = scalar_lea.vmem %s9, 3
      %v3984 = vld [vmem:[%s3983] sm:$0x1]
      %v3986 = vperm.slane %v3984, 0
      %v3988 = vadd.f32 %v3982, %v3986
      %3990 = vrot.lane.b32.xlu0 %v3988, 32
      %v3991 = vpop.permute.xlu0 %3990
      %v3993 = vadd.f32 %v2447, %v3991
      %3995 = vrot.lane.b32.xlu0 %v3993, 96
      %v3996 = vpop.permute.xlu0 %3995
      %v3998 = vsel %vm771, %v3996, 0.0
      %3999 = vadd.xlane.f32.xlu0 %v3998
      %v4000 = vpop.xlane.xlu0 %3999
      %v4001 = vmul.f32 %v4000, %v1443
      %v4002 = vsub.f32 %v3993, %v4001
      %v4003 = vmul.f32 %v4002, %v4002
      %4005 = vrot.lane.b32.xlu0 %v4003, 96
      %v4006 = vpop.permute.xlu0 %4005
      %v4008 = vsel %vm771, %v4006, 0.0
      %4009 = vadd.xlane.f32.xlu0 %v4008
      %v4010 = vpop.xlane.xlu0 %4009
      %v4011 = vmul.f32 %v4010, %v1443
      %v4012 = vadd.f32 %v4011, 1e-05
      %v4013 = vrsqrt.pop %v4012
      %v4014 = vmul.f32 %v4013, %v4012
      %v4015 = vmul.f32 %v4014, %v4013
      %v4016 = vmul.f32 0.5, %v4015
      %v4017 = vsub.f32 1.5, %v4016
      %v4018 = vmul.f32 %v4013, %v4017
      %vm4019 = vweird.f32 %v4012
      %vm4020 = vweird.f32 %v4013
      %vm4021 = vmor %vm4019, %vm4020
      %v4022 = vsel %vm4021, %v4013, %v4018
      %v4023 = vmul.f32 %v4002, %v4022
      %s4024 = scalar_lea.vmem %s10, 3
      %v4025 = vld [vmem:[%s4024] sm:$0x1]
      %v4027 = vperm.slane %v4025, 0
      %4028 = vrot.lane.b32.xlu0 %v4027, 32
      %v4029 = vpop.permute.xlu0 %4028
      %v4031 = vmul.f32 %v4023, %v4029
      %s4032 = scalar_lea.vmem %s11, 3
      %v4033 = vld [vmem:[%s4032] sm:$0x1]
      %v4035 = vperm.slane %v4033, 0
      %4036 = vrot.lane.b32.xlu0 %v4035, 32
      %v4037 = vpop.permute.xlu0 %4036
      %v4039 = vadd.f32 %v4031, %v4037
      %s4040 = scalar_lea.vmem %s12, 96
      %v4041 = vld [vmem:[%s4040] sm:$0xff]
      %v4042 = vld [vmem:[%s4040 + $0x8] sm:$0xff]
      %v4043 = vld [vmem:[%s4040 + $0x10] sm:$0xff]
      %v4044 = vld [vmem:[%s4040 + $0x18] sm:$0xff]
      %s4045 = scalar_lea.vmem %s13, 3
      %v4046 = vld [vmem:[%s4045] sm:$0x1]
      %v4048 = vperm.slane %v4046, 0
      %4051 = vrot.lane.b32.xlu0 %v4039, 96
      %v4052 = vpop.permute.xlu0 %4051
      %v4053 = vsel %vm771, %v4052, 0
      %4055 = vmatpush.msra.mxu0 0.0
      %4056 = vmatpush.msra.mxu0 0.0
      %4057 = vmatpush.msra.mxu0 0.0
      %4058 = vmatpush.msra.mxu0 0.0
      %4059 = vmatpush.msra.mxu0 0.0
      %4060 = vmatpush.msra.mxu0 0.0
      %4061 = vmatpush.msra.mxu0 0.0
      %4062 = vmatpush.msra.mxu0 0.0
      %4063 = vmatpush.msra.mxu0 0.0
      %4064 = vmatpush.msra.mxu0 0.0
      %4065 = vmatpush.msra.mxu0 0.0
      %4066 = vmatpush.msra.mxu0 0.0
      %4067 = vmatpush.msra.mxu0 %v4044
      %4068 = vmatpush.msra.mxu0 %v4043
      %4069 = vmatpush.msra.mxu0 %v4042
      %4070 = vmatpush.msra.mxu0 %v4041
      %4071 = vmatmul.f32.gmra.mxu0 %v4053
      %v4072 = vpop.f32.mrf.mxu0
      %v4073 = vadd.f32 %v4048, %v4072
      %4074 = vdwg.mxu0
      %v4075 = vmax.f32 %v4073, 0.0
      %s4076 = scalar_lea.vmem %s14, 192
      %v4077 = vld [vmem:[%s4076] sm:$0xff]
      %v4078 = vld [vmem:[%s4076 + $0x8] sm:$0xff]
      %v4079 = vld [vmem:[%s4076 + $0x10] sm:$0xff]
      %v4080 = vld [vmem:[%s4076 + $0x18] sm:$0xff]
      %v4081 = vld [vmem:[%s4076 + $0x20] sm:$0xff]
      %v4082 = vld [vmem:[%s4076 + $0x28] sm:$0xff]
      %v4083 = vld [vmem:[%s4076 + $0x30] sm:$0xff]
      %v4084 = vld [vmem:[%s4076 + $0x38] sm:$0xff]
      %s4085 = scalar_lea.vmem %s15, 3
      %v4086 = vld [vmem:[%s4085] sm:$0x1]
      %v4088 = vperm.slane %v4086, 0
      %v4091 = vsel %vm1517, %v4075, 0
      %4093 = vmatpush.msra.mxu0 0.0
      %4094 = vmatpush.msra.mxu0 0.0
      %4095 = vmatpush.msra.mxu0 0.0
      %4096 = vmatpush.msra.mxu0 0.0
      %4097 = vmatpush.msra.mxu0 0.0
      %4098 = vmatpush.msra.mxu0 0.0
      %4099 = vmatpush.msra.mxu0 0.0
      %4100 = vmatpush.msra.mxu0 0.0
      %4101 = vmatpush.msra.mxu0 %v4084
      %4102 = vmatpush.msra.mxu0 %v4083
      %4103 = vmatpush.msra.mxu0 %v4082
      %4104 = vmatpush.msra.mxu0 %v4081
      %4105 = vmatpush.msra.mxu0 %v4080
      %4106 = vmatpush.msra.mxu0 %v4079
      %4107 = vmatpush.msra.mxu0 %v4078
      %4108 = vmatpush.msra.mxu0 %v4077
      %4109 = vmatmul.f32.gmra.mxu0 %v4091
      %v4110 = vpop.f32.mrf.mxu0
      %v4111 = vadd.f32 %v4088, %v4110
      %4112 = vdwg.mxu0
      %4114 = vrot.lane.b32.xlu0 %v4111, 32
      %v4115 = vpop.permute.xlu0 %4114
      %v4117 = vadd.f32 %v4039, %v4115
      %4119 = vrot.lane.b32.xlu0 %v4117, 96
      %v4120 = vpop.permute.xlu0 %4119
      %v4122 = vsel %vm771, %v4120, 0.0
      %4123 = vadd.xlane.f32.xlu0 %v4122
      %v4124 = vpop.xlane.xlu0 %4123
      %v4125 = vmul.f32 %v4124, %v1443
      %v4126 = vsub.f32 %v4117, %v4125
      %v4127 = vmul.f32 %v4126, %v4126
      %4129 = vrot.lane.b32.xlu0 %v4127, 96
      %v4130 = vpop.permute.xlu0 %4129
      %v4132 = vsel %vm771, %v4130, 0.0
      %4133 = vadd.xlane.f32.xlu0 %v4132
      %v4134 = vpop.xlane.xlu0 %4133
      %v4135 = vmul.f32 %v4134, %v1443
      %v4136 = vadd.f32 %v4135, 1e-05
      %v4137 = vrsqrt.pop %v4136
      %v4138 = vmul.f32 %v4137, %v4136
      %v4139 = vmul.f32 %v4138, %v4137
      %v4140 = vmul.f32 0.5, %v4139
      %v4141 = vsub.f32 1.5, %v4140
      %v4142 = vmul.f32 %v4137, %v4141
      %vm4143 = vweird.f32 %v4136
      %vm4144 = vweird.f32 %v4137
      %vm4145 = vmor %vm4143, %vm4144
      %v4146 = vsel %vm4145, %v4137, %v4142
      %v4147 = vmul.f32 %v4126, %v4146
      %s4148 = scalar_lea.vmem %s16, 3
      %v4149 = vld [vmem:[%s4148] sm:$0x1]
      %v4151 = vperm.slane %v4149, 0
      %4152 = vrot.lane.b32.xlu0 %v4151, 32
      %v4153 = vpop.permute.xlu0 %4152
      %v4155 = vmul.f32 %v4147, %v4153
      %s4156 = scalar_lea.vmem %s17, 3
      %v4157 = vld [vmem:[%s4156] sm:$0x1]
      %v4159 = vperm.slane %v4157, 0
      %4160 = vrot.lane.b32.xlu0 %v4159, 32
      %v4161 = vpop.permute.xlu0 %4160
      %v4163 = vadd.f32 %v4155, %v4161
      %s4164 = scalar_lea.vmem %s2, 512
      %v4165 = vld [vmem:[%s4164] sm:$0xff]
      %v4166 = vld [vmem:[%s4164 + $0x8] sm:$0xff]
      %v4167 = vld [vmem:[%s4164 + $0x10] sm:$0xff]
      %v4168 = vld [vmem:[%s4164 + $0x18] sm:$0xff]
      %v4169 = vld [vmem:[%s4164 + $0x20] sm:$0xff]
      %v4170 = vld [vmem:[%s4164 + $0x28] sm:$0xff]
      %v4171 = vld [vmem:[%s4164 + $0x30] sm:$0xff]
      %v4172 = vld [vmem:[%s4164 + $0x38] sm:$0xff]
      %v4173 = vld [vmem:[%s4164 + $0x40] sm:$0xff]
      %v4174 = vld [vmem:[%s4164 + $0x48] sm:$0xff]
      %v4175 = vld [vmem:[%s4164 + $0x50] sm:$0xff]
      %v4176 = vld [vmem:[%s4164 + $0x58] sm:$0xff]
      %v4177 = vld [vmem:[%s4164 + $0x60] sm:$0xff]
      %v4178 = vld [vmem:[%s4164 + $0x68] sm:$0xff]
      %v4179 = vld [vmem:[%s4164 + $0x70] sm:$0xff]
      %v4180 = vld [vmem:[%s4164 + $0x78] sm:$0xff]
      %s4181 = scalar_lea.vmem %s3, 16
      %v4182 = vld [vmem:[%s4181] sm:$0x1]
      %v4183 = vld [vmem:[%s4181 + $0x1] sm:$0x1]
      %v4184 = vld [vmem:[%s4181 + $0x2] sm:$0x1]
      %v4185 = vld [vmem:[%s4181 + $0x3] sm:$0x1]
      %v4190 = vperm.slane %v4182, 0
      %v4191 = vperm.slane %v4183, 0
      %v4192 = vperm.slane %v4184, 0
      %v4193 = vperm.slane %v4185, 0
      %4198 = vmatpush.msra.mxu0 0.0
      %4199 = vmatpush.msra.mxu0 0.0
      %4200 = vmatpush.msra.mxu0 0.0
      %4201 = vmatpush.msra.mxu0 0.0
      %4202 = vmatpush.msra.mxu0 0.0
      %4203 = vmatpush.msra.mxu0 0.0
      %4204 = vmatpush.msra.mxu0 0.0
      %4205 = vmatpush.msra.mxu0 0.0
      %4206 = vmatpush.msra.mxu0 0.0
      %4207 = vmatpush.msra.mxu0 0.0
      %4208 = vmatpush.msra.mxu0 0.0
      %4209 = vmatpush.msra.mxu0 0.0
      %4210 = vmatpush.msra.mxu0 %v4168
      %4211 = vmatpush.msra.mxu0 %v4167
      %4212 = vmatpush.msra.mxu0 %v4166
      %4213 = vmatpush.msra.mxu0 %v4165
      %4214 = vmatmul.f32.gmra.mxu0 %v3325
      %v4215 = vpop.f32.mrf.mxu0
      %v4216 = vadd.f32 %v4190, %v4215
      %4217 = vdwg.mxu0
      %4218 = vmatpush.msra.mxu0 0.0
      %4219 = vmatpush.msra.mxu0 0.0
      %4220 = vmatpush.msra.mxu0 0.0
      %4221 = vmatpush.msra.mxu0 0.0
      %4222 = vmatpush.msra.mxu0 0.0
      %4223 = vmatpush.msra.mxu0 0.0
      %4224 = vmatpush.msra.mxu0 0.0
      %4225 = vmatpush.msra.mxu0 0.0
      %4226 = vmatpush.msra.mxu0 0.0
      %4227 = vmatpush.msra.mxu0 0.0
      %4228 = vmatpush.msra.mxu0 0.0
      %4229 = vmatpush.msra.mxu0 0.0
      %4230 = vmatpush.msra.mxu0 %v4172
      %4231 = vmatpush.msra.mxu0 %v4171
      %4232 = vmatpush.msra.mxu0 %v4170
      %4233 = vmatpush.msra.mxu0 %v4169
      %4234 = vmatmul.f32.gmra.mxu0 %v3325
      %v4235 = vpop.f32.mrf.mxu0
      %v4236 = vadd.f32 %v4191, %v4235
      %4237 = vdwg.mxu0
      %4238 = vmatpush.msra.mxu0 0.0
      %4239 = vmatpush.msra.mxu0 0.0
      %4240 = vmatpush.msra.mxu0 0.0
      %4241 = vmatpush.msra.mxu0 0.0
      %4242 = vmatpush.msra.mxu0 0.0
      %4243 = vmatpush.msra.mxu0 0.0
      %4244 = vmatpush.msra.mxu0 0.0
      %4245 = vmatpush.msra.mxu0 0.0
      %4246 = vmatpush.msra.mxu0 0.0
      %4247 = vmatpush.msra.mxu0 0.0
      %4248 = vmatpush.msra.mxu0 0.0
      %4249 = vmatpush.msra.mxu0 0.0
      %4250 = vmatpush.msra.mxu0 %v4176
      %4251 = vmatpush.msra.mxu0 %v4175
      %4252 = vmatpush.msra.mxu0 %v4174
      %4253 = vmatpush.msra.mxu0 %v4173
      %4254 = vmatmul.f32.gmra.mxu0 %v3325
      %v4255 = vpop.f32.mrf.mxu0
      %v4256 = vadd.f32 %v4192, %v4255
      %4257 = vdwg.mxu0
      %4258 = vmatpush.msra.mxu0 0.0
      %4259 = vmatpush.msra.mxu0 0.0
      %4260 = vmatpush.msra.mxu0 0.0
      %4261 = vmatpush.msra.mxu0 0.0
      %4262 = vmatpush.msra.mxu0 0.0
      %4263 = vmatpush.msra.mxu0 0.0
      %4264 = vmatpush.msra.mxu0 0.0
      %4265 = vmatpush.msra.mxu0 0.0
      %4266 = vmatpush.msra.mxu0 0.0
      %4267 = vmatpush.msra.mxu0 0.0
      %4268 = vmatpush.msra.mxu0 0.0
      %4269 = vmatpush.msra.mxu0 0.0
      %4270 = vmatpush.msra.mxu0 %v4180
      %4271 = vmatpush.msra.mxu0 %v4179
      %4272 = vmatpush.msra.mxu0 %v4178
      %4273 = vmatpush.msra.mxu0 %v4177
      %4274 = vmatmul.f32.gmra.mxu0 %v3325
      %v4275 = vpop.f32.mrf.mxu0
      %v4276 = vadd.f32 %v4193, %v4275
      %4277 = vdwg.mxu0
      %s4278 = scalar_lea.vmem %s4, 512
      %v4279 = vld [vmem:[%s4278] sm:$0xff]
      %v4280 = vld [vmem:[%s4278 + $0x8] sm:$0xff]
      %v4281 = vld [vmem:[%s4278 + $0x10] sm:$0xff]
      %v4282 = vld [vmem:[%s4278 + $0x18] sm:$0xff]
      %v4283 = vld [vmem:[%s4278 + $0x20] sm:$0xff]
      %v4284 = vld [vmem:[%s4278 + $0x28] sm:$0xff]
      %v4285 = vld [vmem:[%s4278 + $0x30] sm:$0xff]
      %v4286 = vld [vmem:[%s4278 + $0x38] sm:$0xff]
      %v4287 = vld [vmem:[%s4278 + $0x40] sm:$0xff]
      %v4288 = vld [vmem:[%s4278 + $0x48] sm:$0xff]
      %v4289 = vld [vmem:[%s4278 + $0x50] sm:$0xff]
      %v4290 = vld [vmem:[%s4278 + $0x58] sm:$0xff]
      %v4291 = vld [vmem:[%s4278 + $0x60] sm:$0xff]
      %v4292 = vld [vmem:[%s4278 + $0x68] sm:$0xff]
      %v4293 = vld [vmem:[%s4278 + $0x70] sm:$0xff]
      %v4294 = vld [vmem:[%s4278 + $0x78] sm:$0xff]
      %s4295 = scalar_lea.vmem %s5, 16
      %v4296 = vld [vmem:[%s4295] sm:$0x1]
      %v4297 = vld [vmem:[%s4295 + $0x1] sm:$0x1]
      %v4298 = vld [vmem:[%s4295 + $0x2] sm:$0x1]
      %v4299 = vld [vmem:[%s4295 + $0x3] sm:$0x1]
      %v4304 = vperm.slane %v4296, 0
      %v4305 = vperm.slane %v4297, 0
      %v4306 = vperm.slane %v4298, 0
      %v4307 = vperm.slane %v4299, 0
      %4312 = vmatpush.msra.mxu0 0.0
      %4313 = vmatpush.msra.mxu0 0.0
      %4314 = vmatpush.msra.mxu0 0.0
      %4315 = vmatpush.msra.mxu0 0.0
      %4316 = vmatpush.msra.mxu0 0.0
      %4317 = vmatpush.msra.mxu0 0.0
      %4318 = vmatpush.msra.mxu0 0.0
      %4319 = vmatpush.msra.mxu0 0.0
      %4320 = vmatpush.msra.mxu0 0.0
      %4321 = vmatpush.msra.mxu0 0.0
      %4322 = vmatpush.msra.mxu0 0.0
      %4323 = vmatpush.msra.mxu0 0.0
      %4324 = vmatpush.msra.mxu0 %v4282
      %4325 = vmatpush.msra.mxu0 %v4281
      %4326 = vmatpush.msra.mxu0 %v4280
      %4327 = vmatpush.msra.mxu0 %v4279
      %4328 = vmatmul.f32.gmra.mxu0 %v3325
      %v4329 = vpop.f32.mrf.mxu0
      %v4330 = vadd.f32 %v4304, %v4329
      %4331 = vdwg.mxu0
      %4332 = vmatpush.msra.mxu0 0.0
      %4333 = vmatpush.msra.mxu0 0.0
      %4334 = vmatpush.msra.mxu0 0.0
      %4335 = vmatpush.msra.mxu0 0.0
      %4336 = vmatpush.msra.mxu0 0.0
      %4337 = vmatpush.msra.mxu0 0.0
      %4338 = vmatpush.msra.mxu0 0.0
      %4339 = vmatpush.msra.mxu0 0.0
      %4340 = vmatpush.msra.mxu0 0.0
      %4341 = vmatpush.msra.mxu0 0.0
      %4342 = vmatpush.msra.mxu0 0.0
      %4343 = vmatpush.msra.mxu0 0.0
      %4344 = vmatpush.msra.mxu0 %v4286
      %4345 = vmatpush.msra.mxu0 %v4285
      %4346 = vmatpush.msra.mxu0 %v4284
      %4347 = vmatpush.msra.mxu0 %v4283
      %4348 = vmatmul.f32.gmra.mxu0 %v3325
      %v4349 = vpop.f32.mrf.mxu0
      %v4350 = vadd.f32 %v4305, %v4349
      %4351 = vdwg.mxu0
      %4352 = vmatpush.msra.mxu0 0.0
      %4353 = vmatpush.msra.mxu0 0.0
      %4354 = vmatpush.msra.mxu0 0.0
      %4355 = vmatpush.msra.mxu0 0.0
      %4356 = vmatpush.msra.mxu0 0.0
      %4357 = vmatpush.msra.mxu0 0.0
      %4358 = vmatpush.msra.mxu0 0.0
      %4359 = vmatpush.msra.mxu0 0.0
      %4360 = vmatpush.msra.mxu0 0.0
      %4361 = vmatpush.msra.mxu0 0.0
      %4362 = vmatpush.msra.mxu0 0.0
      %4363 = vmatpush.msra.mxu0 0.0
      %4364 = vmatpush.msra.mxu0 %v4290
      %4365 = vmatpush.msra.mxu0 %v4289
      %4366 = vmatpush.msra.mxu0 %v4288
      %4367 = vmatpush.msra.mxu0 %v4287
      %4368 = vmatmul.f32.gmra.mxu0 %v3325
      %v4369 = vpop.f32.mrf.mxu0
      %v4370 = vadd.f32 %v4306, %v4369
      %4371 = vdwg.mxu0
      %4372 = vmatpush.msra.mxu0 0.0
      %4373 = vmatpush.msra.mxu0 0.0
      %4374 = vmatpush.msra.mxu0 0.0
      %4375 = vmatpush.msra.mxu0 0.0
      %4376 = vmatpush.msra.mxu0 0.0
      %4377 = vmatpush.msra.mxu0 0.0
      %4378 = vmatpush.msra.mxu0 0.0
      %4379 = vmatpush.msra.mxu0 0.0
      %4380 = vmatpush.msra.mxu0 0.0
      %4381 = vmatpush.msra.mxu0 0.0
      %4382 = vmatpush.msra.mxu0 0.0
      %4383 = vmatpush.msra.mxu0 0.0
      %4384 = vmatpush.msra.mxu0 %v4294
      %4385 = vmatpush.msra.mxu0 %v4293
      %4386 = vmatpush.msra.mxu0 %v4292
      %4387 = vmatpush.msra.mxu0 %v4291
      %4388 = vmatmul.f32.gmra.mxu0 %v3325
      %v4389 = vpop.f32.mrf.mxu0
      %v4390 = vadd.f32 %v4307, %v4389
      %4391 = vdwg.mxu0
      %s4392 = scalar_lea.vmem %s6, 512
      %v4393 = vld [vmem:[%s4392] sm:$0xff]
      %v4394 = vld [vmem:[%s4392 + $0x8] sm:$0xff]
      %v4395 = vld [vmem:[%s4392 + $0x10] sm:$0xff]
      %v4396 = vld [vmem:[%s4392 + $0x18] sm:$0xff]
      %v4397 = vld [vmem:[%s4392 + $0x20] sm:$0xff]
      %v4398 = vld [vmem:[%s4392 + $0x28] sm:$0xff]
      %v4399 = vld [vmem:[%s4392 + $0x30] sm:$0xff]
      %v4400 = vld [vmem:[%s4392 + $0x38] sm:$0xff]
      %v4401 = vld [vmem:[%s4392 + $0x40] sm:$0xff]
      %v4402 = vld [vmem:[%s4392 + $0x48] sm:$0xff]
      %v4403 = vld [vmem:[%s4392 + $0x50] sm:$0xff]
      %v4404 = vld [vmem:[%s4392 + $0x58] sm:$0xff]
      %v4405 = vld [vmem:[%s4392 + $0x60] sm:$0xff]
      %v4406 = vld [vmem:[%s4392 + $0x68] sm:$0xff]
      %v4407 = vld [vmem:[%s4392 + $0x70] sm:$0xff]
      %v4408 = vld [vmem:[%s4392 + $0x78] sm:$0xff]
      %s4409 = scalar_lea.vmem %s7, 16
      %v4410 = vld [vmem:[%s4409] sm:$0x1]
      %v4411 = vld [vmem:[%s4409 + $0x1] sm:$0x1]
      %v4412 = vld [vmem:[%s4409 + $0x2] sm:$0x1]
      %v4413 = vld [vmem:[%s4409 + $0x3] sm:$0x1]
      %v4418 = vperm.slane %v4410, 0
      %v4419 = vperm.slane %v4411, 0
      %v4420 = vperm.slane %v4412, 0
      %v4421 = vperm.slane %v4413, 0
      %4426 = vmatpush.msra.mxu0 0.0
      %4427 = vmatpush.msra.mxu0 0.0
      %4428 = vmatpush.msra.mxu0 0.0
      %4429 = vmatpush.msra.mxu0 0.0
      %4430 = vmatpush.msra.mxu0 0.0
      %4431 = vmatpush.msra.mxu0 0.0
      %4432 = vmatpush.msra.mxu0 0.0
      %4433 = vmatpush.msra.mxu0 0.0
      %4434 = vmatpush.msra.mxu0 0.0
      %4435 = vmatpush.msra.mxu0 0.0
      %4436 = vmatpush.msra.mxu0 0.0
      %4437 = vmatpush.msra.mxu0 0.0
      %4438 = vmatpush.msra.mxu0 %v4396
      %4439 = vmatpush.msra.mxu0 %v4395
      %4440 = vmatpush.msra.mxu0 %v4394
      %4441 = vmatpush.msra.mxu0 %v4393
      %4442 = vmatmul.f32.gmra.mxu0 %v3325
      %v4443 = vpop.f32.mrf.mxu0
      %v4444 = vadd.f32 %v4418, %v4443
      %4445 = vdwg.mxu0
      %4446 = vmatpush.msra.mxu0 0.0
      %4447 = vmatpush.msra.mxu0 0.0
      %4448 = vmatpush.msra.mxu0 0.0
      %4449 = vmatpush.msra.mxu0 0.0
      %4450 = vmatpush.msra.mxu0 0.0
      %4451 = vmatpush.msra.mxu0 0.0
      %4452 = vmatpush.msra.mxu0 0.0
      %4453 = vmatpush.msra.mxu0 0.0
      %4454 = vmatpush.msra.mxu0 0.0
      %4455 = vmatpush.msra.mxu0 0.0
      %4456 = vmatpush.msra.mxu0 0.0
      %4457 = vmatpush.msra.mxu0 0.0
      %4458 = vmatpush.msra.mxu0 %v4400
      %4459 = vmatpush.msra.mxu0 %v4399
      %4460 = vmatpush.msra.mxu0 %v4398
      %4461 = vmatpush.msra.mxu0 %v4397
      %4462 = vmatmul.f32.gmra.mxu0 %v3325
      %v4463 = vpop.f32.mrf.mxu0
      %v4464 = vadd.f32 %v4419, %v4463
      %4465 = vdwg.mxu0
      %4466 = vmatpush.msra.mxu0 0.0
      %4467 = vmatpush.msra.mxu0 0.0
      %4468 = vmatpush.msra.mxu0 0.0
      %4469 = vmatpush.msra.mxu0 0.0
      %4470 = vmatpush.msra.mxu0 0.0
      %4471 = vmatpush.msra.mxu0 0.0
      %4472 = vmatpush.msra.mxu0 0.0
      %4473 = vmatpush.msra.mxu0 0.0
      %4474 = vmatpush.msra.mxu0 0.0
      %4475 = vmatpush.msra.mxu0 0.0
      %4476 = vmatpush.msra.mxu0 0.0
      %4477 = vmatpush.msra.mxu0 0.0
      %4478 = vmatpush.msra.mxu0 %v4404
      %4479 = vmatpush.msra.mxu0 %v4403
      %4480 = vmatpush.msra.mxu0 %v4402
      %4481 = vmatpush.msra.mxu0 %v4401
      %4482 = vmatmul.f32.gmra.mxu0 %v3325
      %v4483 = vpop.f32.mrf.mxu0
      %v4484 = vadd.f32 %v4420, %v4483
      %4485 = vdwg.mxu0
      %4486 = vmatpush.msra.mxu0 0.0
      %4487 = vmatpush.msra.mxu0 0.0
      %4488 = vmatpush.msra.mxu0 0.0
      %4489 = vmatpush.msra.mxu0 0.0
      %4490 = vmatpush.msra.mxu0 0.0
      %4491 = vmatpush.msra.mxu0 0.0
      %4492 = vmatpush.msra.mxu0 0.0
      %4493 = vmatpush.msra.mxu0 0.0
      %4494 = vmatpush.msra.mxu0 0.0
      %4495 = vmatpush.msra.mxu0 0.0
      %4496 = vmatpush.msra.mxu0 0.0
      %4497 = vmatpush.msra.mxu0 0.0
      %4498 = vmatpush.msra.mxu0 %v4408
      %4499 = vmatpush.msra.mxu0 %v4407
      %4500 = vmatpush.msra.mxu0 %v4406
      %4501 = vmatpush.msra.mxu0 %v4405
      %4502 = vmatmul.f32.gmra.mxu0 %v3325
      %v4503 = vpop.f32.mrf.mxu0
      %v4504 = vadd.f32 %v4421, %v4503
      %4505 = vdwg.mxu0
      %v4507 = vsel %vm1080, %v4216, 0
      %v4510 = vsel %vm1080, %v4330, 0
      %4512 = vmatpush.xpose.msra.mxu0 0.0
      %4513 = vmatpush.xpose.msra.mxu0 0.0
      %4514 = vmatpush.xpose.msra.mxu0 0.0
      %4515 = vmatpush.xpose.msra.mxu0 0.0
      %4516 = vmatpush.xpose.msra.mxu0 0.0
      %4517 = vmatpush.xpose.msra.mxu0 0.0
      %4518 = vmatpush.xpose.msra.mxu0 0.0
      %4519 = vmatpush.xpose.msra.mxu0 0.0
      %4520 = vmatpush.xpose.msra.mxu0 0.0
      %4521 = vmatpush.xpose.msra.mxu0 0.0
      %4522 = vmatpush.xpose.msra.mxu0 0.0
      %4523 = vmatpush.xpose.msra.mxu0 0.0
      %4524 = vmatpush.xpose.msra.mxu0 0.0
      %4525 = vmatpush.xpose.msra.mxu0 0.0
      %4526 = vmatpush.xpose.msra.mxu0 0.0
      %4527 = vmatpush.xpose.msra.mxu0 %v4510
      %4528 = vmatmul.f32.gmra.mxu0 %v4507
      %v4529 = vpop.f32.mrf.mxu0
      %v4530 = vadd.f32 0.0, %v4529
      %4531 = vdwg.mxu0
      %v4533 = vsel %vm1080, %v4236, 0
      %v4536 = vsel %vm1080, %v4350, 0
      %4538 = vmatpush.xpose.msra.mxu0 0.0
      %4539 = vmatpush.xpose.msra.mxu0 0.0
      %4540 = vmatpush.xpose.msra.mxu0 0.0
      %4541 = vmatpush.xpose.msra.mxu0 0.0
      %4542 = vmatpush.xpose.msra.mxu0 0.0
      %4543 = vmatpush.xpose.msra.mxu0 0.0
      %4544 = vmatpush.xpose.msra.mxu0 0.0
      %4545 = vmatpush.xpose.msra.mxu0 0.0
      %4546 = vmatpush.xpose.msra.mxu0 0.0
      %4547 = vmatpush.xpose.msra.mxu0 0.0
      %4548 = vmatpush.xpose.msra.mxu0 0.0
      %4549 = vmatpush.xpose.msra.mxu0 0.0
      %4550 = vmatpush.xpose.msra.mxu0 0.0
      %4551 = vmatpush.xpose.msra.mxu0 0.0
      %4552 = vmatpush.xpose.msra.mxu0 0.0
      %4553 = vmatpush.xpose.msra.mxu0 %v4536
      %4554 = vmatmul.f32.gmra.mxu0 %v4533
      %v4555 = vpop.f32.mrf.mxu0
      %v4556 = vadd.f32 0.0, %v4555
      %4557 = vdwg.mxu0
      %v4559 = vsel %vm1080, %v4256, 0
      %v4562 = vsel %vm1080, %v4370, 0
      %4564 = vmatpush.xpose.msra.mxu0 0.0
      %4565 = vmatpush.xpose.msra.mxu0 0.0
      %4566 = vmatpush.xpose.msra.mxu0 0.0
      %4567 = vmatpush.xpose.msra.mxu0 0.0
      %4568 = vmatpush.xpose.msra.mxu0 0.0
      %4569 = vmatpush.xpose.msra.mxu0 0.0
      %4570 = vmatpush.xpose.msra.mxu0 0.0
      %4571 = vmatpush.xpose.msra.mxu0 0.0
      %4572 = vmatpush.xpose.msra.mxu0 0.0
      %4573 = vmatpush.xpose.msra.mxu0 0.0
      %4574 = vmatpush.xpose.msra.mxu0 0.0
      %4575 = vmatpush.xpose.msra.mxu0 0.0
      %4576 = vmatpush.xpose.msra.mxu0 0.0
      %4577 = vmatpush.xpose.msra.mxu0 0.0
      %4578 = vmatpush.xpose.msra.mxu0 0.0
      %4579 = vmatpush.xpose.msra.mxu0 %v4562
      %4580 = vmatmul.f32.gmra.mxu0 %v4559
      %v4581 = vpop.f32.mrf.mxu0
      %v4582 = vadd.f32 0.0, %v4581
      %4583 = vdwg.mxu0
      %v4585 = vsel %vm1080, %v4276, 0
      %v4588 = vsel %vm1080, %v4390, 0
      %4590 = vmatpush.xpose.msra.mxu0 0.0
      %4591 = vmatpush.xpose.msra.mxu0 0.0
      %4592 = vmatpush.xpose.msra.mxu0 0.0
      %4593 = vmatpush.xpose.msra.mxu0 0.0
      %4594 = vmatpush.xpose.msra.mxu0 0.0
      %4595 = vmatpush.xpose.msra.mxu0 0.0
      %4596 = vmatpush.xpose.msra.mxu0 0.0
      %4597 = vmatpush.xpose.msra.mxu0 0.0
      %4598 = vmatpush.xpose.msra.mxu0 0.0
      %4599 = vmatpush.xpose.msra.mxu0 0.0
      %4600 = vmatpush.xpose.msra.mxu0 0.0
      %4601 = vmatpush.xpose.msra.mxu0 0.0
      %4602 = vmatpush.xpose.msra.mxu0 0.0
      %4603 = vmatpush.xpose.msra.mxu0 0.0
      %4604 = vmatpush.xpose.msra.mxu0 0.0
      %4605 = vmatpush.xpose.msra.mxu0 %v4588
      %4606 = vmatmul.f32.gmra.mxu0 %v4585
      %v4607 = vpop.f32.mrf.mxu0
      %v4608 = vadd.f32 0.0, %v4607
      %4609 = vdwg.mxu0
      %v4610 = vmul.f32 %v4530, 0.35355338
      %v4611 = vmul.f32 %v4556, 0.35355338
      %v4612 = vmul.f32 %v4582, 0.35355338
      %v4613 = vmul.f32 %v4608, 0.35355338
      %v4614 = vsel %vm1080, %v4610, -inf
      %4615 = vmax.xlane.f32.xlu0 %v4614
      %v4616 = vpop.xlane.xlu0 %4615
      %v4617 = vsel %vm1080, %v4611, -inf
      %4618 = vmax.xlane.f32.xlu0 %v4617
      %v4619 = vpop.xlane.xlu0 %4618
      %v4620 = vsel %vm1080, %v4612, -inf
      %4621 = vmax.xlane.f32.xlu0 %v4620
      %v4622 = vpop.xlane.xlu0 %4621
      %v4623 = vsel %vm1080, %v4613, -inf
      %4624 = vmax.xlane.f32.xlu0 %v4623
      %v4625 = vpop.xlane.xlu0 %4624
      %v4626 = vsub.f32 %v4610, %v4616
      %v4627 = vsub.f32 %v4611, %v4619
      %v4628 = vsub.f32 %v4612, %v4622
      %v4629 = vsub.f32 %v4613, %v4625
      %v4630 = vmul.f32 %v4626, 1.442695
      %v4631 = vpow.pop %v4630
      %v4632 = vmul.f32 %v4627, 1.442695
      %v4633 = vpow.pop %v4632
      %v4634 = vmul.f32 %v4628, 1.442695
      %v4635 = vpow.pop %v4634
      %v4636 = vmul.f32 %v4629, 1.442695
      %v4637 = vpow.pop %v4636
      %v4638 = vsel %vm1080, %v4631, 0.0
      %4639 = vadd.xlane.f32.xlu0 %v4638
      %v4640 = vpop.xlane.xlu0 %4639
      %v4641 = vsel %vm1080, %v4633, 0.0
      %4642 = vadd.xlane.f32.xlu0 %v4641
      %v4643 = vpop.xlane.xlu0 %4642
      %v4644 = vsel %vm1080, %v4635, 0.0
      %4645 = vadd.xlane.f32.xlu0 %v4644
      %v4646 = vpop.xlane.xlu0 %4645
      %v4647 = vsel %vm1080, %v4637, 0.0
      %4648 = vadd.xlane.f32.xlu0 %v4647
      %v4649 = vpop.xlane.xlu0 %4648
      %v4650 = vrcp.pop %v4640
      %v4651 = vrcp.pop %v4643
      %v4652 = vrcp.pop %v4646
      %v4653 = vrcp.pop %v4649
      %v4654 = vmul.f32 %v4631, %v4650
      %v4655 = vmul.f32 %v4633, %v4651
      %v4656 = vmul.f32 %v4635, %v4652
      %v4657 = vmul.f32 %v4637, %v4653
      %v4659 = vsel %vm1080, %v4654, 0
      %4661 = vmatpush.msra.mxu0 0.0
      %4662 = vmatpush.msra.mxu0 0.0
      %4663 = vmatpush.msra.mxu0 0.0
      %4664 = vmatpush.msra.mxu0 0.0
      %4665 = vmatpush.msra.mxu0 0.0
      %4666 = vmatpush.msra.mxu0 0.0
      %4667 = vmatpush.msra.mxu0 0.0
      %4668 = vmatpush.msra.mxu0 0.0
      %4669 = vmatpush.msra.mxu0 0.0
      %4670 = vmatpush.msra.mxu0 0.0
      %4671 = vmatpush.msra.mxu0 0.0
      %4672 = vmatpush.msra.mxu0 0.0
      %4673 = vmatpush.msra.mxu0 0.0
      %4674 = vmatpush.msra.mxu0 0.0
      %4675 = vmatpush.msra.mxu0 0.0
      %4676 = vmatpush.msra.mxu0 %v4444
      %4677 = vmatmul.f32.gmra.mxu0 %v4659
      %v4678 = vpop.f32.mrf.mxu0
      %v4679 = vadd.f32 0.0, %v4678
      %4680 = vdwg.mxu0
      %v4682 = vsel %vm1080, %v4655, 0
      %4684 = vmatpush.msra.mxu0 0.0
      %4685 = vmatpush.msra.mxu0 0.0
      %4686 = vmatpush.msra.mxu0 0.0
      %4687 = vmatpush.msra.mxu0 0.0
      %4688 = vmatpush.msra.mxu0 0.0
      %4689 = vmatpush.msra.mxu0 0.0
      %4690 = vmatpush.msra.mxu0 0.0
      %4691 = vmatpush.msra.mxu0 0.0
      %4692 = vmatpush.msra.mxu0 0.0
      %4693 = vmatpush.msra.mxu0 0.0
      %4694 = vmatpush.msra.mxu0 0.0
      %4695 = vmatpush.msra.mxu0 0.0
      %4696 = vmatpush.msra.mxu0 0.0
      %4697 = vmatpush.msra.mxu0 0.0
      %4698 = vmatpush.msra.mxu0 0.0
      %4699 = vmatpush.msra.mxu0 %v4464
      %4700 = vmatmul.f32.gmra.mxu0 %v4682
      %v4701 = vpop.f32.mrf.mxu0
      %v4702 = vadd.f32 0.0, %v4701
      %4703 = vdwg.mxu0
      %v4705 = vsel %vm1080, %v4656, 0
      %4707 = vmatpush.msra.mxu0 0.0
      %4708 = vmatpush.msra.mxu0 0.0
      %4709 = vmatpush.msra.mxu0 0.0
      %4710 = vmatpush.msra.mxu0 0.0
      %4711 = vmatpush.msra.mxu0 0.0
      %4712 = vmatpush.msra.mxu0 0.0
      %4713 = vmatpush.msra.mxu0 0.0
      %4714 = vmatpush.msra.mxu0 0.0
      %4715 = vmatpush.msra.mxu0 0.0
      %4716 = vmatpush.msra.mxu0 0.0
      %4717 = vmatpush.msra.mxu0 0.0
      %4718 = vmatpush.msra.mxu0 0.0
      %4719 = vmatpush.msra.mxu0 0.0
      %4720 = vmatpush.msra.mxu0 0.0
      %4721 = vmatpush.msra.mxu0 0.0
      %4722 = vmatpush.msra.mxu0 %v4484
      %4723 = vmatmul.f32.gmra.mxu0 %v4705
      %v4724 = vpop.f32.mrf.mxu0
      %v4725 = vadd.f32 0.0, %v4724
      %4726 = vdwg.mxu0
      %v4728 = vsel %vm1080, %v4657, 0
      %4730 = vmatpush.msra.mxu0 0.0
      %4731 = vmatpush.msra.mxu0 0.0
      %4732 = vmatpush.msra.mxu0 0.0
      %4733 = vmatpush.msra.mxu0 0.0
      %4734 = vmatpush.msra.mxu0 0.0
      %4735 = vmatpush.msra.mxu0 0.0
      %4736 = vmatpush.msra.mxu0 0.0
      %4737 = vmatpush.msra.mxu0 0.0
      %4738 = vmatpush.msra.mxu0 0.0
      %4739 = vmatpush.msra.mxu0 0.0
      %4740 = vmatpush.msra.mxu0 0.0
      %4741 = vmatpush.msra.mxu0 0.0
      %4742 = vmatpush.msra.mxu0 0.0
      %4743 = vmatpush.msra.mxu0 0.0
      %4744 = vmatpush.msra.mxu0 0.0
      %4745 = vmatpush.msra.mxu0 %v4504
      %4746 = vmatmul.f32.gmra.mxu0 %v4728
      %v4747 = vpop.f32.mrf.mxu0
      %v4748 = vadd.f32 0.0, %v4747
      %4749 = vdwg.mxu0
      %s4750 = scalar_lea.vmem %s8, 128
      %v4751 = vld [vmem:[%s4750] sm:$0xff]
      %v4752 = vld [vmem:[%s4750 + $0x8] sm:$0xff]
      %v4753 = vld [vmem:[%s4750 + $0x10] sm:$0xff]
      %v4754 = vld [vmem:[%s4750 + $0x18] sm:$0xff]
      %v4756 = vsel %vm1080, %v4679, 0
      %4758 = vmatpush.msra.mxu0 0.0
      %4759 = vmatpush.msra.mxu0 0.0
      %4760 = vmatpush.msra.mxu0 0.0
      %4761 = vmatpush.msra.mxu0 0.0
      %4762 = vmatpush.msra.mxu0 0.0
      %4763 = vmatpush.msra.mxu0 0.0
      %4764 = vmatpush.msra.mxu0 0.0
      %4765 = vmatpush.msra.mxu0 0.0
      %4766 = vmatpush.msra.mxu0 0.0
      %4767 = vmatpush.msra.mxu0 0.0
      %4768 = vmatpush.msra.mxu0 0.0
      %4769 = vmatpush.msra.mxu0 0.0
      %4770 = vmatpush.msra.mxu0 0.0
      %4771 = vmatpush.msra.mxu0 0.0
      %4772 = vmatpush.msra.mxu0 0.0
      %4773 = vmatpush.msra.mxu0 %v4751
      %4774 = vmatmul.f32.gmra.mxu0 %v4756
      %v4775 = vpop.f32.mrf.mxu0
      %v4776 = vadd.f32 0.0, %v4775
      %4777 = vdwg.mxu0
      %v4779 = vsel %vm1080, %v4702, 0
      %4781 = vmatpush.msra.mxu0 0.0
      %4782 = vmatpush.msra.mxu0 0.0
      %4783 = vmatpush.msra.mxu0 0.0
      %4784 = vmatpush.msra.mxu0 0.0
      %4785 = vmatpush.msra.mxu0 0.0
      %4786 = vmatpush.msra.mxu0 0.0
      %4787 = vmatpush.msra.mxu0 0.0
      %4788 = vmatpush.msra.mxu0 0.0
      %4789 = vmatpush.msra.mxu0 0.0
      %4790 = vmatpush.msra.mxu0 0.0
      %4791 = vmatpush.msra.mxu0 0.0
      %4792 = vmatpush.msra.mxu0 0.0
      %4793 = vmatpush.msra.mxu0 0.0
      %4794 = vmatpush.msra.mxu0 0.0
      %4795 = vmatpush.msra.mxu0 0.0
      %4796 = vmatpush.msra.mxu0 %v4752
      %4797 = vmatmul.f32.gmra.mxu0 %v4779
      %v4798 = vpop.f32.mrf.mxu0
      %v4799 = vadd.f32 0.0, %v4798
      %4800 = vdwg.mxu0
      %v4802 = vsel %vm1080, %v4725, 0
      %4804 = vmatpush.msra.mxu0 0.0
      %4805 = vmatpush.msra.mxu0 0.0
      %4806 = vmatpush.msra.mxu0 0.0
      %4807 = vmatpush.msra.mxu0 0.0
      %4808 = vmatpush.msra.mxu0 0.0
      %4809 = vmatpush.msra.mxu0 0.0
      %4810 = vmatpush.msra.mxu0 0.0
      %4811 = vmatpush.msra.mxu0 0.0
      %4812 = vmatpush.msra.mxu0 0.0
      %4813 = vmatpush.msra.mxu0 0.0
      %4814 = vmatpush.msra.mxu0 0.0
      %4815 = vmatpush.msra.mxu0 0.0
      %4816 = vmatpush.msra.mxu0 0.0
      %4817 = vmatpush.msra.mxu0 0.0
      %4818 = vmatpush.msra.mxu0 0.0
      %4819 = vmatpush.msra.mxu0 %v4753
      %4820 = vmatmul.f32.gmra.mxu0 %v4802
      %v4821 = vpop.f32.mrf.mxu0
      %v4822 = vadd.f32 0.0, %v4821
      %4823 = vdwg.mxu0
      %v4825 = vsel %vm1080, %v4748, 0
      %4827 = vmatpush.msra.mxu0 0.0
      %4828 = vmatpush.msra.mxu0 0.0
      %4829 = vmatpush.msra.mxu0 0.0
      %4830 = vmatpush.msra.mxu0 0.0
      %4831 = vmatpush.msra.mxu0 0.0
      %4832 = vmatpush.msra.mxu0 0.0
      %4833 = vmatpush.msra.mxu0 0.0
      %4834 = vmatpush.msra.mxu0 0.0
      %4835 = vmatpush.msra.mxu0 0.0
      %4836 = vmatpush.msra.mxu0 0.0
      %4837 = vmatpush.msra.mxu0 0.0
      %4838 = vmatpush.msra.mxu0 0.0
      %4839 = vmatpush.msra.mxu0 0.0
      %4840 = vmatpush.msra.mxu0 0.0
      %4841 = vmatpush.msra.mxu0 0.0
      %4842 = vmatpush.msra.mxu0 %v4754
      %4843 = vmatmul.f32.gmra.mxu0 %v4825
      %v4844 = vpop.f32.mrf.mxu0
      %v4845 = vadd.f32 0.0, %v4844
      %4846 = vdwg.mxu0
      %v4847 = vsel %vm771, %v4776, 0.0
      %v4848 = vsel %vm771, %v4799, 0.0
      %v4849 = vadd.f32 %v4847, %v4848
      %v4850 = vsel %vm771, %v4822, 0.0
      %v4851 = vadd.f32 %v4849, %v4850
      %v4852 = vsel %vm771, %v4845, 0.0
      %v4853 = vadd.f32 %v4851, %v4852
      %s4854 = scalar_lea.vmem %s9, 4
      %v4855 = vld [vmem:[%s4854] sm:$0x1]
      %v4857 = vperm.slane %v4855, 0
      %v4859 = vadd.f32 %v4853, %v4857
      %v4860 = vadd.f32 %v3289, %v4859
      %v4861 = vsel %vm771, %v4860, 0.0
      %4862 = vadd.xlane.f32.xlu0 %v4861
      %v4863 = vpop.xlane.xlu0 %4862
      %v4864 = vmul.f32 %v4863, %v1443
      %v4865 = vsub.f32 %v4860, %v4864
      %v4866 = vmul.f32 %v4865, %v4865
      %v4867 = vsel %vm771, %v4866, 0.0
      %4868 = vadd.xlane.f32.xlu0 %v4867
      %v4869 = vpop.xlane.xlu0 %4868
      %v4870 = vmul.f32 %v4869, %v1443
      %v4871 = vadd.f32 %v4870, 1e-05
      %v4872 = vrsqrt.pop %v4871
      %v4873 = vmul.f32 %v4872, %v4871
      %v4874 = vmul.f32 %v4873, %v4872
      %v4875 = vmul.f32 0.5, %v4874
      %v4876 = vsub.f32 1.5, %v4875
      %v4877 = vmul.f32 %v4872, %v4876
      %vm4878 = vweird.f32 %v4871
      %vm4879 = vweird.f32 %v4872
      %vm4880 = vmor %vm4878, %vm4879
      %v4881 = vsel %vm4880, %v4872, %v4877
      %v4882 = vmul.f32 %v4865, %v4881
      %s4883 = scalar_lea.vmem %s10, 4
      %v4884 = vld [vmem:[%s4883] sm:$0x1]
      %v4886 = vperm.slane %v4884, 0
      %v4888 = vmul.f32 %v4882, %v4886
      %s4889 = scalar_lea.vmem %s11, 4
      %v4890 = vld [vmem:[%s4889] sm:$0x1]
      %v4892 = vperm.slane %v4890, 0
      %v4894 = vadd.f32 %v4888, %v4892
      %s4895 = scalar_lea.vmem %s12, 128
      %v4896 = vld [vmem:[%s4895] sm:$0xff]
      %v4897 = vld [vmem:[%s4895 + $0x8] sm:$0xff]
      %v4898 = vld [vmem:[%s4895 + $0x10] sm:$0xff]
      %v4899 = vld [vmem:[%s4895 + $0x18] sm:$0xff]
      %s4900 = scalar_lea.vmem %s13, 4
      %v4901 = vld [vmem:[%s4900] sm:$0x1]
      %v4903 = vperm.slane %v4901, 0
      %v4906 = vsel %vm771, %v4894, 0
      %4908 = vmatpush.msra.mxu0 0.0
      %4909 = vmatpush.msra.mxu0 0.0
      %4910 = vmatpush.msra.mxu0 0.0
      %4911 = vmatpush.msra.mxu0 0.0
      %4912 = vmatpush.msra.mxu0 0.0
      %4913 = vmatpush.msra.mxu0 0.0
      %4914 = vmatpush.msra.mxu0 0.0
      %4915 = vmatpush.msra.mxu0 0.0
      %4916 = vmatpush.msra.mxu0 0.0
      %4917 = vmatpush.msra.mxu0 0.0
      %4918 = vmatpush.msra.mxu0 0.0
      %4919 = vmatpush.msra.mxu0 0.0
      %4920 = vmatpush.msra.mxu0 %v4899
      %4921 = vmatpush.msra.mxu0 %v4898
      %4922 = vmatpush.msra.mxu0 %v4897
      %4923 = vmatpush.msra.mxu0 %v4896
      %4924 = vmatmul.f32.gmra.mxu0 %v4906
      %v4925 = vpop.f32.mrf.mxu0
      %v4926 = vadd.f32 %v4903, %v4925
      %4927 = vdwg.mxu0
      %v4928 = vmax.f32 %v4926, 0.0
      %s4929 = scalar_lea.vmem %s14, 256
      %v4930 = vld [vmem:[%s4929] sm:$0xff]
      %v4931 = vld [vmem:[%s4929 + $0x8] sm:$0xff]
      %v4932 = vld [vmem:[%s4929 + $0x10] sm:$0xff]
      %v4933 = vld [vmem:[%s4929 + $0x18] sm:$0xff]
      %v4934 = vld [vmem:[%s4929 + $0x20] sm:$0xff]
      %v4935 = vld [vmem:[%s4929 + $0x28] sm:$0xff]
      %v4936 = vld [vmem:[%s4929 + $0x30] sm:$0xff]
      %v4937 = vld [vmem:[%s4929 + $0x38] sm:$0xff]
      %s4938 = scalar_lea.vmem %s15, 4
      %v4939 = vld [vmem:[%s4938] sm:$0x1]
      %v4941 = vperm.slane %v4939, 0
      %v4944 = vsel %vm1517, %v4928, 0
      %4946 = vmatpush.msra.mxu0 0.0
      %4947 = vmatpush.msra.mxu0 0.0
      %4948 = vmatpush.msra.mxu0 0.0
      %4949 = vmatpush.msra.mxu0 0.0
      %4950 = vmatpush.msra.mxu0 0.0
      %4951 = vmatpush.msra.mxu0 0.0
      %4952 = vmatpush.msra.mxu0 0.0
      %4953 = vmatpush.msra.mxu0 0.0
      %4954 = vmatpush.msra.mxu0 %v4937
      %4955 = vmatpush.msra.mxu0 %v4936
      %4956 = vmatpush.msra.mxu0 %v4935
      %4957 = vmatpush.msra.mxu0 %v4934
      %4958 = vmatpush.msra.mxu0 %v4933
      %4959 = vmatpush.msra.mxu0 %v4932
      %4960 = vmatpush.msra.mxu0 %v4931
      %4961 = vmatpush.msra.mxu0 %v4930
      %4962 = vmatmul.f32.gmra.mxu0 %v4944
      %v4963 = vpop.f32.mrf.mxu0
      %v4964 = vadd.f32 %v4941, %v4963
      %4965 = vdwg.mxu0
      %v4966 = vadd.f32 %v4894, %v4964
      %v4967 = vsel %vm771, %v4966, 0.0
      %4968 = vadd.xlane.f32.xlu0 %v4967
      %v4969 = vpop.xlane.xlu0 %4968
      %v4970 = vmul.f32 %v4969, %v1443
      %v4971 = vsub.f32 %v4966, %v4970
      %v4972 = vmul.f32 %v4971, %v4971
      %v4973 = vsel %vm771, %v4972, 0.0
      %4974 = vadd.xlane.f32.xlu0 %v4973
      %v4975 = vpop.xlane.xlu0 %4974
      %v4976 = vmul.f32 %v4975, %v1443
      %v4977 = vadd.f32 %v4976, 1e-05
      %v4978 = vrsqrt.pop %v4977
      %v4979 = vmul.f32 %v4978, %v4977
      %v4980 = vmul.f32 %v4979, %v4978
      %v4981 = vmul.f32 0.5, %v4980
      %v4982 = vsub.f32 1.5, %v4981
      %v4983 = vmul.f32 %v4978, %v4982
      %vm4984 = vweird.f32 %v4977
      %vm4985 = vweird.f32 %v4978
      %vm4986 = vmor %vm4984, %vm4985
      %v4987 = vsel %vm4986, %v4978, %v4983
      %v4988 = vmul.f32 %v4971, %v4987
      %s4989 = scalar_lea.vmem %s16, 4
      %v4990 = vld [vmem:[%s4989] sm:$0x1]
      %v4992 = vperm.slane %v4990, 0
      %v4994 = vmul.f32 %v4988, %v4992
      %s4995 = scalar_lea.vmem %s17, 4
      %v4996 = vld [vmem:[%s4995] sm:$0x1]
      %v4998 = vperm.slane %v4996, 0
      %v5000 = vadd.f32 %v4994, %v4998
      %s5001 = scalar_lea.vmem %s2, 640
      %v5002 = vld [vmem:[%s5001] sm:$0xff]
      %v5003 = vld [vmem:[%s5001 + $0x8] sm:$0xff]
      %v5004 = vld [vmem:[%s5001 + $0x10] sm:$0xff]
      %v5005 = vld [vmem:[%s5001 + $0x18] sm:$0xff]
      %v5006 = vld [vmem:[%s5001 + $0x20] sm:$0xff]
      %v5007 = vld [vmem:[%s5001 + $0x28] sm:$0xff]
      %v5008 = vld [vmem:[%s5001 + $0x30] sm:$0xff]
      %v5009 = vld [vmem:[%s5001 + $0x38] sm:$0xff]
      %v5010 = vld [vmem:[%s5001 + $0x40] sm:$0xff]
      %v5011 = vld [vmem:[%s5001 + $0x48] sm:$0xff]
      %v5012 = vld [vmem:[%s5001 + $0x50] sm:$0xff]
      %v5013 = vld [vmem:[%s5001 + $0x58] sm:$0xff]
      %v5014 = vld [vmem:[%s5001 + $0x60] sm:$0xff]
      %v5015 = vld [vmem:[%s5001 + $0x68] sm:$0xff]
      %v5016 = vld [vmem:[%s5001 + $0x70] sm:$0xff]
      %v5017 = vld [vmem:[%s5001 + $0x78] sm:$0xff]
      %s5018 = scalar_lea.vmem %s3, 20
      %v5019 = vld [vmem:[%s5018] sm:$0x1]
      %v5020 = vld [vmem:[%s5018 + $0x1] sm:$0x1]
      %v5021 = vld [vmem:[%s5018 + $0x2] sm:$0x1]
      %v5022 = vld [vmem:[%s5018 + $0x3] sm:$0x1]
      %v5027 = vperm.slane %v5019, 0
      %v5028 = vperm.slane %v5020, 0
      %v5029 = vperm.slane %v5021, 0
      %v5030 = vperm.slane %v5022, 0
      %v5036 = vsel %vm771, %v5000, 0
      %5038 = vmatpush.msra.mxu0 0.0
      %5039 = vmatpush.msra.mxu0 0.0
      %5040 = vmatpush.msra.mxu0 0.0
      %5041 = vmatpush.msra.mxu0 0.0
      %5042 = vmatpush.msra.mxu0 0.0
      %5043 = vmatpush.msra.mxu0 0.0
      %5044 = vmatpush.msra.mxu0 0.0
      %5045 = vmatpush.msra.mxu0 0.0
      %5046 = vmatpush.msra.mxu0 0.0
      %5047 = vmatpush.msra.mxu0 0.0
      %5048 = vmatpush.msra.mxu0 0.0
      %5049 = vmatpush.msra.mxu0 0.0
      %5050 = vmatpush.msra.mxu0 %v5005
      %5051 = vmatpush.msra.mxu0 %v5004
      %5052 = vmatpush.msra.mxu0 %v5003
      %5053 = vmatpush.msra.mxu0 %v5002
      %5054 = vmatmul.f32.gmra.mxu0 %v5036
      %v5055 = vpop.f32.mrf.mxu0
      %v5056 = vadd.f32 %v5027, %v5055
      %5057 = vdwg.mxu0
      %5058 = vmatpush.msra.mxu0 0.0
      %5059 = vmatpush.msra.mxu0 0.0
      %5060 = vmatpush.msra.mxu0 0.0
      %5061 = vmatpush.msra.mxu0 0.0
      %5062 = vmatpush.msra.mxu0 0.0
      %5063 = vmatpush.msra.mxu0 0.0
      %5064 = vmatpush.msra.mxu0 0.0
      %5065 = vmatpush.msra.mxu0 0.0
      %5066 = vmatpush.msra.mxu0 0.0
      %5067 = vmatpush.msra.mxu0 0.0
      %5068 = vmatpush.msra.mxu0 0.0
      %5069 = vmatpush.msra.mxu0 0.0
      %5070 = vmatpush.msra.mxu0 %v5009
      %5071 = vmatpush.msra.mxu0 %v5008
      %5072 = vmatpush.msra.mxu0 %v5007
      %5073 = vmatpush.msra.mxu0 %v5006
      %5074 = vmatmul.f32.gmra.mxu0 %v5036
      %v5075 = vpop.f32.mrf.mxu0
      %v5076 = vadd.f32 %v5028, %v5075
      %5077 = vdwg.mxu0
      %5078 = vmatpush.msra.mxu0 0.0
      %5079 = vmatpush.msra.mxu0 0.0
      %5080 = vmatpush.msra.mxu0 0.0
      %5081 = vmatpush.msra.mxu0 0.0
      %5082 = vmatpush.msra.mxu0 0.0
      %5083 = vmatpush.msra.mxu0 0.0
      %5084 = vmatpush.msra.mxu0 0.0
      %5085 = vmatpush.msra.mxu0 0.0
      %5086 = vmatpush.msra.mxu0 0.0
      %5087 = vmatpush.msra.mxu0 0.0
      %5088 = vmatpush.msra.mxu0 0.0
      %5089 = vmatpush.msra.mxu0 0.0
      %5090 = vmatpush.msra.mxu0 %v5013
      %5091 = vmatpush.msra.mxu0 %v5012
      %5092 = vmatpush.msra.mxu0 %v5011
      %5093 = vmatpush.msra.mxu0 %v5010
      %5094 = vmatmul.f32.gmra.mxu0 %v5036
      %v5095 = vpop.f32.mrf.mxu0
      %v5096 = vadd.f32 %v5029, %v5095
      %5097 = vdwg.mxu0
      %5098 = vmatpush.msra.mxu0 0.0
      %5099 = vmatpush.msra.mxu0 0.0
      %5100 = vmatpush.msra.mxu0 0.0
      %5101 = vmatpush.msra.mxu0 0.0
      %5102 = vmatpush.msra.mxu0 0.0
      %5103 = vmatpush.msra.mxu0 0.0
      %5104 = vmatpush.msra.mxu0 0.0
      %5105 = vmatpush.msra.mxu0 0.0
      %5106 = vmatpush.msra.mxu0 0.0
      %5107 = vmatpush.msra.mxu0 0.0
      %5108 = vmatpush.msra.mxu0 0.0
      %5109 = vmatpush.msra.mxu0 0.0
      %5110 = vmatpush.msra.mxu0 %v5017
      %5111 = vmatpush.msra.mxu0 %v5016
      %5112 = vmatpush.msra.mxu0 %v5015
      %5113 = vmatpush.msra.mxu0 %v5014
      %5114 = vmatmul.f32.gmra.mxu0 %v5036
      %v5115 = vpop.f32.mrf.mxu0
      %v5116 = vadd.f32 %v5030, %v5115
      %5117 = vdwg.mxu0
      %s5118 = scalar_lea.vmem %s4, 640
      %v5119 = vld [vmem:[%s5118] sm:$0xff]
      %v5120 = vld [vmem:[%s5118 + $0x8] sm:$0xff]
      %v5121 = vld [vmem:[%s5118 + $0x10] sm:$0xff]
      %v5122 = vld [vmem:[%s5118 + $0x18] sm:$0xff]
      %v5123 = vld [vmem:[%s5118 + $0x20] sm:$0xff]
      %v5124 = vld [vmem:[%s5118 + $0x28] sm:$0xff]
      %v5125 = vld [vmem:[%s5118 + $0x30] sm:$0xff]
      %v5126 = vld [vmem:[%s5118 + $0x38] sm:$0xff]
      %v5127 = vld [vmem:[%s5118 + $0x40] sm:$0xff]
      %v5128 = vld [vmem:[%s5118 + $0x48] sm:$0xff]
      %v5129 = vld [vmem:[%s5118 + $0x50] sm:$0xff]
      %v5130 = vld [vmem:[%s5118 + $0x58] sm:$0xff]
      %v5131 = vld [vmem:[%s5118 + $0x60] sm:$0xff]
      %v5132 = vld [vmem:[%s5118 + $0x68] sm:$0xff]
      %v5133 = vld [vmem:[%s5118 + $0x70] sm:$0xff]
      %v5134 = vld [vmem:[%s5118 + $0x78] sm:$0xff]
      %s5135 = scalar_lea.vmem %s5, 20
      %v5136 = vld [vmem:[%s5135] sm:$0x1]
      %v5137 = vld [vmem:[%s5135 + $0x1] sm:$0x1]
      %v5138 = vld [vmem:[%s5135 + $0x2] sm:$0x1]
      %v5139 = vld [vmem:[%s5135 + $0x3] sm:$0x1]
      %v5144 = vperm.slane %v5136, 0
      %v5145 = vperm.slane %v5137, 0
      %v5146 = vperm.slane %v5138, 0
      %v5147 = vperm.slane %v5139, 0
      %5152 = vmatpush.msra.mxu0 0.0
      %5153 = vmatpush.msra.mxu0 0.0
      %5154 = vmatpush.msra.mxu0 0.0
      %5155 = vmatpush.msra.mxu0 0.0
      %5156 = vmatpush.msra.mxu0 0.0
      %5157 = vmatpush.msra.mxu0 0.0
      %5158 = vmatpush.msra.mxu0 0.0
      %5159 = vmatpush.msra.mxu0 0.0
      %5160 = vmatpush.msra.mxu0 0.0
      %5161 = vmatpush.msra.mxu0 0.0
      %5162 = vmatpush.msra.mxu0 0.0
      %5163 = vmatpush.msra.mxu0 0.0
      %5164 = vmatpush.msra.mxu0 %v5122
      %5165 = vmatpush.msra.mxu0 %v5121
      %5166 = vmatpush.msra.mxu0 %v5120
      %5167 = vmatpush.msra.mxu0 %v5119
      %5168 = vmatmul.f32.gmra.mxu0 %v5036
      %v5169 = vpop.f32.mrf.mxu0
      %v5170 = vadd.f32 %v5144, %v5169
      %5171 = vdwg.mxu0
      %5172 = vmatpush.msra.mxu0 0.0
      %5173 = vmatpush.msra.mxu0 0.0
      %5174 = vmatpush.msra.mxu0 0.0
      %5175 = vmatpush.msra.mxu0 0.0
      %5176 = vmatpush.msra.mxu0 0.0
      %5177 = vmatpush.msra.mxu0 0.0
      %5178 = vmatpush.msra.mxu0 0.0
      %5179 = vmatpush.msra.mxu0 0.0
      %5180 = vmatpush.msra.mxu0 0.0
      %5181 = vmatpush.msra.mxu0 0.0
      %5182 = vmatpush.msra.mxu0 0.0
      %5183 = vmatpush.msra.mxu0 0.0
      %5184 = vmatpush.msra.mxu0 %v5126
      %5185 = vmatpush.msra.mxu0 %v5125
      %5186 = vmatpush.msra.mxu0 %v5124
      %5187 = vmatpush.msra.mxu0 %v5123
      %5188 = vmatmul.f32.gmra.mxu0 %v5036
      %v5189 = vpop.f32.mrf.mxu0
      %v5190 = vadd.f32 %v5145, %v5189
      %5191 = vdwg.mxu0
      %5192 = vmatpush.msra.mxu0 0.0
      %5193 = vmatpush.msra.mxu0 0.0
      %5194 = vmatpush.msra.mxu0 0.0
      %5195 = vmatpush.msra.mxu0 0.0
      %5196 = vmatpush.msra.mxu0 0.0
      %5197 = vmatpush.msra.mxu0 0.0
      %5198 = vmatpush.msra.mxu0 0.0
      %5199 = vmatpush.msra.mxu0 0.0
      %5200 = vmatpush.msra.mxu0 0.0
      %5201 = vmatpush.msra.mxu0 0.0
      %5202 = vmatpush.msra.mxu0 0.0
      %5203 = vmatpush.msra.mxu0 0.0
      %5204 = vmatpush.msra.mxu0 %v5130
      %5205 = vmatpush.msra.mxu0 %v5129
      %5206 = vmatpush.msra.mxu0 %v5128
      %5207 = vmatpush.msra.mxu0 %v5127
      %5208 = vmatmul.f32.gmra.mxu0 %v5036
      %v5209 = vpop.f32.mrf.mxu0
      %v5210 = vadd.f32 %v5146, %v5209
      %5211 = vdwg.mxu0
      %5212 = vmatpush.msra.mxu0 0.0
      %5213 = vmatpush.msra.mxu0 0.0
      %5214 = vmatpush.msra.mxu0 0.0
      %5215 = vmatpush.msra.mxu0 0.0
      %5216 = vmatpush.msra.mxu0 0.0
      %5217 = vmatpush.msra.mxu0 0.0
      %5218 = vmatpush.msra.mxu0 0.0
      %5219 = vmatpush.msra.mxu0 0.0
      %5220 = vmatpush.msra.mxu0 0.0
      %5221 = vmatpush.msra.mxu0 0.0
      %5222 = vmatpush.msra.mxu0 0.0
      %5223 = vmatpush.msra.mxu0 0.0
      %5224 = vmatpush.msra.mxu0 %v5134
      %5225 = vmatpush.msra.mxu0 %v5133
      %5226 = vmatpush.msra.mxu0 %v5132
      %5227 = vmatpush.msra.mxu0 %v5131
      %5228 = vmatmul.f32.gmra.mxu0 %v5036
      %v5229 = vpop.f32.mrf.mxu0
      %v5230 = vadd.f32 %v5147, %v5229
      %5231 = vdwg.mxu0
      %s5232 = scalar_lea.vmem %s6, 640
      %v5233 = vld [vmem:[%s5232] sm:$0xff]
      %v5234 = vld [vmem:[%s5232 + $0x8] sm:$0xff]
      %v5235 = vld [vmem:[%s5232 + $0x10] sm:$0xff]
      %v5236 = vld [vmem:[%s5232 + $0x18] sm:$0xff]
      %v5237 = vld [vmem:[%s5232 + $0x20] sm:$0xff]
      %v5238 = vld [vmem:[%s5232 + $0x28] sm:$0xff]
      %v5239 = vld [vmem:[%s5232 + $0x30] sm:$0xff]
      %v5240 = vld [vmem:[%s5232 + $0x38] sm:$0xff]
      %v5241 = vld [vmem:[%s5232 + $0x40] sm:$0xff]
      %v5242 = vld [vmem:[%s5232 + $0x48] sm:$0xff]
      %v5243 = vld [vmem:[%s5232 + $0x50] sm:$0xff]
      %v5244 = vld [vmem:[%s5232 + $0x58] sm:$0xff]
      %v5245 = vld [vmem:[%s5232 + $0x60] sm:$0xff]
      %v5246 = vld [vmem:[%s5232 + $0x68] sm:$0xff]
      %v5247 = vld [vmem:[%s5232 + $0x70] sm:$0xff]
      %v5248 = vld [vmem:[%s5232 + $0x78] sm:$0xff]
      %s5249 = scalar_lea.vmem %s7, 20
      %v5250 = vld [vmem:[%s5249] sm:$0x1]
      %v5251 = vld [vmem:[%s5249 + $0x1] sm:$0x1]
      %v5252 = vld [vmem:[%s5249 + $0x2] sm:$0x1]
      %v5253 = vld [vmem:[%s5249 + $0x3] sm:$0x1]
      %v5258 = vperm.slane %v5250, 0
      %v5259 = vperm.slane %v5251, 0
      %v5260 = vperm.slane %v5252, 0
      %v5261 = vperm.slane %v5253, 0
      %5266 = vmatpush.msra.mxu0 0.0
      %5267 = vmatpush.msra.mxu0 0.0
      %5268 = vmatpush.msra.mxu0 0.0
      %5269 = vmatpush.msra.mxu0 0.0
      %5270 = vmatpush.msra.mxu0 0.0
      %5271 = vmatpush.msra.mxu0 0.0
      %5272 = vmatpush.msra.mxu0 0.0
      %5273 = vmatpush.msra.mxu0 0.0
      %5274 = vmatpush.msra.mxu0 0.0
      %5275 = vmatpush.msra.mxu0 0.0
      %5276 = vmatpush.msra.mxu0 0.0
      %5277 = vmatpush.msra.mxu0 0.0
      %5278 = vmatpush.msra.mxu0 %v5236
      %5279 = vmatpush.msra.mxu0 %v5235
      %5280 = vmatpush.msra.mxu0 %v5234
      %5281 = vmatpush.msra.mxu0 %v5233
      %5282 = vmatmul.f32.gmra.mxu0 %v5036
      %v5283 = vpop.f32.mrf.mxu0
      %v5284 = vadd.f32 %v5258, %v5283
      %5285 = vdwg.mxu0
      %5286 = vmatpush.msra.mxu0 0.0
      %5287 = vmatpush.msra.mxu0 0.0
      %5288 = vmatpush.msra.mxu0 0.0
      %5289 = vmatpush.msra.mxu0 0.0
      %5290 = vmatpush.msra.mxu0 0.0
      %5291 = vmatpush.msra.mxu0 0.0
      %5292 = vmatpush.msra.mxu0 0.0
      %5293 = vmatpush.msra.mxu0 0.0
      %5294 = vmatpush.msra.mxu0 0.0
      %5295 = vmatpush.msra.mxu0 0.0
      %5296 = vmatpush.msra.mxu0 0.0
      %5297 = vmatpush.msra.mxu0 0.0
      %5298 = vmatpush.msra.mxu0 %v5240
      %5299 = vmatpush.msra.mxu0 %v5239
      %5300 = vmatpush.msra.mxu0 %v5238
      %5301 = vmatpush.msra.mxu0 %v5237
      %5302 = vmatmul.f32.gmra.mxu0 %v5036
      %v5303 = vpop.f32.mrf.mxu0
      %v5304 = vadd.f32 %v5259, %v5303
      %5305 = vdwg.mxu0
      %5306 = vmatpush.msra.mxu0 0.0
      %5307 = vmatpush.msra.mxu0 0.0
      %5308 = vmatpush.msra.mxu0 0.0
      %5309 = vmatpush.msra.mxu0 0.0
      %5310 = vmatpush.msra.mxu0 0.0
      %5311 = vmatpush.msra.mxu0 0.0
      %5312 = vmatpush.msra.mxu0 0.0
      %5313 = vmatpush.msra.mxu0 0.0
      %5314 = vmatpush.msra.mxu0 0.0
      %5315 = vmatpush.msra.mxu0 0.0
      %5316 = vmatpush.msra.mxu0 0.0
      %5317 = vmatpush.msra.mxu0 0.0
      %5318 = vmatpush.msra.mxu0 %v5244
      %5319 = vmatpush.msra.mxu0 %v5243
      %5320 = vmatpush.msra.mxu0 %v5242
      %5321 = vmatpush.msra.mxu0 %v5241
      %5322 = vmatmul.f32.gmra.mxu0 %v5036
      %v5323 = vpop.f32.mrf.mxu0
      %v5324 = vadd.f32 %v5260, %v5323
      %5325 = vdwg.mxu0
      %5326 = vmatpush.msra.mxu0 0.0
      %5327 = vmatpush.msra.mxu0 0.0
      %5328 = vmatpush.msra.mxu0 0.0
      %5329 = vmatpush.msra.mxu0 0.0
      %5330 = vmatpush.msra.mxu0 0.0
      %5331 = vmatpush.msra.mxu0 0.0
      %5332 = vmatpush.msra.mxu0 0.0
      %5333 = vmatpush.msra.mxu0 0.0
      %5334 = vmatpush.msra.mxu0 0.0
      %5335 = vmatpush.msra.mxu0 0.0
      %5336 = vmatpush.msra.mxu0 0.0
      %5337 = vmatpush.msra.mxu0 0.0
      %5338 = vmatpush.msra.mxu0 %v5248
      %5339 = vmatpush.msra.mxu0 %v5247
      %5340 = vmatpush.msra.mxu0 %v5246
      %5341 = vmatpush.msra.mxu0 %v5245
      %5342 = vmatmul.f32.gmra.mxu0 %v5036
      %v5343 = vpop.f32.mrf.mxu0
      %v5344 = vadd.f32 %v5261, %v5343
      %5345 = vdwg.mxu0
      %v5347 = vsel %vm1080, %v5056, 0
      %v5350 = vsel %vm1080, %v5170, 0
      %5352 = vmatpush.xpose.msra.mxu0 0.0
      %5353 = vmatpush.xpose.msra.mxu0 0.0
      %5354 = vmatpush.xpose.msra.mxu0 0.0
      %5355 = vmatpush.xpose.msra.mxu0 0.0
      %5356 = vmatpush.xpose.msra.mxu0 0.0
      %5357 = vmatpush.xpose.msra.mxu0 0.0
      %5358 = vmatpush.xpose.msra.mxu0 0.0
      %5359 = vmatpush.xpose.msra.mxu0 0.0
      %5360 = vmatpush.xpose.msra.mxu0 0.0
      %5361 = vmatpush.xpose.msra.mxu0 0.0
      %5362 = vmatpush.xpose.msra.mxu0 0.0
      %5363 = vmatpush.xpose.msra.mxu0 0.0
      %5364 = vmatpush.xpose.msra.mxu0 0.0
      %5365 = vmatpush.xpose.msra.mxu0 0.0
      %5366 = vmatpush.xpose.msra.mxu0 0.0
      %5367 = vmatpush.xpose.msra.mxu0 %v5350
      %5368 = vmatmul.f32.gmra.mxu0 %v5347
      %v5369 = vpop.f32.mrf.mxu0
      %v5370 = vadd.f32 0.0, %v5369
      %5371 = vdwg.mxu0
      %v5373 = vsel %vm1080, %v5076, 0
      %v5376 = vsel %vm1080, %v5190, 0
      %5378 = vmatpush.xpose.msra.mxu0 0.0
      %5379 = vmatpush.xpose.msra.mxu0 0.0
      %5380 = vmatpush.xpose.msra.mxu0 0.0
      %5381 = vmatpush.xpose.msra.mxu0 0.0
      %5382 = vmatpush.xpose.msra.mxu0 0.0
      %5383 = vmatpush.xpose.msra.mxu0 0.0
      %5384 = vmatpush.xpose.msra.mxu0 0.0
      %5385 = vmatpush.xpose.msra.mxu0 0.0
      %5386 = vmatpush.xpose.msra.mxu0 0.0
      %5387 = vmatpush.xpose.msra.mxu0 0.0
      %5388 = vmatpush.xpose.msra.mxu0 0.0
      %5389 = vmatpush.xpose.msra.mxu0 0.0
      %5390 = vmatpush.xpose.msra.mxu0 0.0
      %5391 = vmatpush.xpose.msra.mxu0 0.0
      %5392 = vmatpush.xpose.msra.mxu0 0.0
      %5393 = vmatpush.xpose.msra.mxu0 %v5376
      %5394 = vmatmul.f32.gmra.mxu0 %v5373
      %v5395 = vpop.f32.mrf.mxu0
      %v5396 = vadd.f32 0.0, %v5395
      %5397 = vdwg.mxu0
      %v5399 = vsel %vm1080, %v5096, 0
      %v5402 = vsel %vm1080, %v5210, 0
      %5404 = vmatpush.xpose.msra.mxu0 0.0
      %5405 = vmatpush.xpose.msra.mxu0 0.0
      %5406 = vmatpush.xpose.msra.mxu0 0.0
      %5407 = vmatpush.xpose.msra.mxu0 0.0
      %5408 = vmatpush.xpose.msra.mxu0 0.0
      %5409 = vmatpush.xpose.msra.mxu0 0.0
      %5410 = vmatpush.xpose.msra.mxu0 0.0
      %5411 = vmatpush.xpose.msra.mxu0 0.0
      %5412 = vmatpush.xpose.msra.mxu0 0.0
      %5413 = vmatpush.xpose.msra.mxu0 0.0
      %5414 = vmatpush.xpose.msra.mxu0 0.0
      %5415 = vmatpush.xpose.msra.mxu0 0.0
      %5416 = vmatpush.xpose.msra.mxu0 0.0
      %5417 = vmatpush.xpose.msra.mxu0 0.0
      %5418 = vmatpush.xpose.msra.mxu0 0.0
      %5419 = vmatpush.xpose.msra.mxu0 %v5402
      %5420 = vmatmul.f32.gmra.mxu0 %v5399
      %v5421 = vpop.f32.mrf.mxu0
      %v5422 = vadd.f32 0.0, %v5421
      %5423 = vdwg.mxu0
      %v5425 = vsel %vm1080, %v5116, 0
      %v5428 = vsel %vm1080, %v5230, 0
      %5430 = vmatpush.xpose.msra.mxu0 0.0
      %5431 = vmatpush.xpose.msra.mxu0 0.0
      %5432 = vmatpush.xpose.msra.mxu0 0.0
      %5433 = vmatpush.xpose.msra.mxu0 0.0
      %5434 = vmatpush.xpose.msra.mxu0 0.0
      %5435 = vmatpush.xpose.msra.mxu0 0.0
      %5436 = vmatpush.xpose.msra.mxu0 0.0
      %5437 = vmatpush.xpose.msra.mxu0 0.0
      %5438 = vmatpush.xpose.msra.mxu0 0.0
      %5439 = vmatpush.xpose.msra.mxu0 0.0
      %5440 = vmatpush.xpose.msra.mxu0 0.0
      %5441 = vmatpush.xpose.msra.mxu0 0.0
      %5442 = vmatpush.xpose.msra.mxu0 0.0
      %5443 = vmatpush.xpose.msra.mxu0 0.0
      %5444 = vmatpush.xpose.msra.mxu0 0.0
      %5445 = vmatpush.xpose.msra.mxu0 %v5428
      %5446 = vmatmul.f32.gmra.mxu0 %v5425
      %v5447 = vpop.f32.mrf.mxu0
      %v5448 = vadd.f32 0.0, %v5447
      %5449 = vdwg.mxu0
      %v5450 = vmul.f32 %v5370, 0.35355338
      %v5451 = vmul.f32 %v5396, 0.35355338
      %v5452 = vmul.f32 %v5422, 0.35355338
      %v5453 = vmul.f32 %v5448, 0.35355338
      %v5454 = vsel %vm1080, %v5450, -inf
      %5455 = vmax.xlane.f32.xlu0 %v5454
      %v5456 = vpop.xlane.xlu0 %5455
      %v5457 = vsel %vm1080, %v5451, -inf
      %5458 = vmax.xlane.f32.xlu0 %v5457
      %v5459 = vpop.xlane.xlu0 %5458
      %v5460 = vsel %vm1080, %v5452, -inf
      %5461 = vmax.xlane.f32.xlu0 %v5460
      %v5462 = vpop.xlane.xlu0 %5461
      %v5463 = vsel %vm1080, %v5453, -inf
      %5464 = vmax.xlane.f32.xlu0 %v5463
      %v5465 = vpop.xlane.xlu0 %5464
      %v5466 = vsub.f32 %v5450, %v5456
      %v5467 = vsub.f32 %v5451, %v5459
      %v5468 = vsub.f32 %v5452, %v5462
      %v5469 = vsub.f32 %v5453, %v5465
      %v5470 = vmul.f32 %v5466, 1.442695
      %v5471 = vpow.pop %v5470
      %v5472 = vmul.f32 %v5467, 1.442695
      %v5473 = vpow.pop %v5472
      %v5474 = vmul.f32 %v5468, 1.442695
      %v5475 = vpow.pop %v5474
      %v5476 = vmul.f32 %v5469, 1.442695
      %v5477 = vpow.pop %v5476
      %v5478 = vsel %vm1080, %v5471, 0.0
      %5479 = vadd.xlane.f32.xlu0 %v5478
      %v5480 = vpop.xlane.xlu0 %5479
      %v5481 = vsel %vm1080, %v5473, 0.0
      %5482 = vadd.xlane.f32.xlu0 %v5481
      %v5483 = vpop.xlane.xlu0 %5482
      %v5484 = vsel %vm1080, %v5475, 0.0
      %5485 = vadd.xlane.f32.xlu0 %v5484
      %v5486 = vpop.xlane.xlu0 %5485
      %v5487 = vsel %vm1080, %v5477, 0.0
      %5488 = vadd.xlane.f32.xlu0 %v5487
      %v5489 = vpop.xlane.xlu0 %5488
      %v5490 = vrcp.pop %v5480
      %v5491 = vrcp.pop %v5483
      %v5492 = vrcp.pop %v5486
      %v5493 = vrcp.pop %v5489
      %v5494 = vmul.f32 %v5471, %v5490
      %v5495 = vmul.f32 %v5473, %v5491
      %v5496 = vmul.f32 %v5475, %v5492
      %v5497 = vmul.f32 %v5477, %v5493
      %v5499 = vsel %vm1080, %v5494, 0
      %5501 = vmatpush.msra.mxu0 0.0
      %5502 = vmatpush.msra.mxu0 0.0
      %5503 = vmatpush.msra.mxu0 0.0
      %5504 = vmatpush.msra.mxu0 0.0
      %5505 = vmatpush.msra.mxu0 0.0
      %5506 = vmatpush.msra.mxu0 0.0
      %5507 = vmatpush.msra.mxu0 0.0
      %5508 = vmatpush.msra.mxu0 0.0
      %5509 = vmatpush.msra.mxu0 0.0
      %5510 = vmatpush.msra.mxu0 0.0
      %5511 = vmatpush.msra.mxu0 0.0
      %5512 = vmatpush.msra.mxu0 0.0
      %5513 = vmatpush.msra.mxu0 0.0
      %5514 = vmatpush.msra.mxu0 0.0
      %5515 = vmatpush.msra.mxu0 0.0
      %5516 = vmatpush.msra.mxu0 %v5284
      %5517 = vmatmul.f32.gmra.mxu0 %v5499
      %v5518 = vpop.f32.mrf.mxu0
      %v5519 = vadd.f32 0.0, %v5518
      %5520 = vdwg.mxu0
      %v5522 = vsel %vm1080, %v5495, 0
      %5524 = vmatpush.msra.mxu0 0.0
      %5525 = vmatpush.msra.mxu0 0.0
      %5526 = vmatpush.msra.mxu0 0.0
      %5527 = vmatpush.msra.mxu0 0.0
      %5528 = vmatpush.msra.mxu0 0.0
      %5529 = vmatpush.msra.mxu0 0.0
      %5530 = vmatpush.msra.mxu0 0.0
      %5531 = vmatpush.msra.mxu0 0.0
      %5532 = vmatpush.msra.mxu0 0.0
      %5533 = vmatpush.msra.mxu0 0.0
      %5534 = vmatpush.msra.mxu0 0.0
      %5535 = vmatpush.msra.mxu0 0.0
      %5536 = vmatpush.msra.mxu0 0.0
      %5537 = vmatpush.msra.mxu0 0.0
      %5538 = vmatpush.msra.mxu0 0.0
      %5539 = vmatpush.msra.mxu0 %v5304
      %5540 = vmatmul.f32.gmra.mxu0 %v5522
      %v5541 = vpop.f32.mrf.mxu0
      %v5542 = vadd.f32 0.0, %v5541
      %5543 = vdwg.mxu0
      %v5545 = vsel %vm1080, %v5496, 0
      %5547 = vmatpush.msra.mxu0 0.0
      %5548 = vmatpush.msra.mxu0 0.0
      %5549 = vmatpush.msra.mxu0 0.0
      %5550 = vmatpush.msra.mxu0 0.0
      %5551 = vmatpush.msra.mxu0 0.0
      %5552 = vmatpush.msra.mxu0 0.0
      %5553 = vmatpush.msra.mxu0 0.0
      %5554 = vmatpush.msra.mxu0 0.0
      %5555 = vmatpush.msra.mxu0 0.0
      %5556 = vmatpush.msra.mxu0 0.0
      %5557 = vmatpush.msra.mxu0 0.0
      %5558 = vmatpush.msra.mxu0 0.0
      %5559 = vmatpush.msra.mxu0 0.0
      %5560 = vmatpush.msra.mxu0 0.0
      %5561 = vmatpush.msra.mxu0 0.0
      %5562 = vmatpush.msra.mxu0 %v5324
      %5563 = vmatmul.f32.gmra.mxu0 %v5545
      %v5564 = vpop.f32.mrf.mxu0
      %v5565 = vadd.f32 0.0, %v5564
      %5566 = vdwg.mxu0
      %v5568 = vsel %vm1080, %v5497, 0
      %5570 = vmatpush.msra.mxu0 0.0
      %5571 = vmatpush.msra.mxu0 0.0
      %5572 = vmatpush.msra.mxu0 0.0
      %5573 = vmatpush.msra.mxu0 0.0
      %5574 = vmatpush.msra.mxu0 0.0
      %5575 = vmatpush.msra.mxu0 0.0
      %5576 = vmatpush.msra.mxu0 0.0
      %5577 = vmatpush.msra.mxu0 0.0
      %5578 = vmatpush.msra.mxu0 0.0
      %5579 = vmatpush.msra.mxu0 0.0
      %5580 = vmatpush.msra.mxu0 0.0
      %5581 = vmatpush.msra.mxu0 0.0
      %5582 = vmatpush.msra.mxu0 0.0
      %5583 = vmatpush.msra.mxu0 0.0
      %5584 = vmatpush.msra.mxu0 0.0
      %5585 = vmatpush.msra.mxu0 %v5344
      %5586 = vmatmul.f32.gmra.mxu0 %v5568
      %v5587 = vpop.f32.mrf.mxu0
      %v5588 = vadd.f32 0.0, %v5587
      %5589 = vdwg.mxu0
      %s5590 = scalar_lea.vmem %s8, 160
      %v5591 = vld [vmem:[%s5590] sm:$0xff]
      %v5592 = vld [vmem:[%s5590 + $0x8] sm:$0xff]
      %v5593 = vld [vmem:[%s5590 + $0x10] sm:$0xff]
      %v5594 = vld [vmem:[%s5590 + $0x18] sm:$0xff]
      %v5596 = vsel %vm1080, %v5519, 0
      %5598 = vmatpush.msra.mxu0 0.0
      %5599 = vmatpush.msra.mxu0 0.0
      %5600 = vmatpush.msra.mxu0 0.0
      %5601 = vmatpush.msra.mxu0 0.0
      %5602 = vmatpush.msra.mxu0 0.0
      %5603 = vmatpush.msra.mxu0 0.0
      %5604 = vmatpush.msra.mxu0 0.0
      %5605 = vmatpush.msra.mxu0 0.0
      %5606 = vmatpush.msra.mxu0 0.0
      %5607 = vmatpush.msra.mxu0 0.0
      %5608 = vmatpush.msra.mxu0 0.0
      %5609 = vmatpush.msra.mxu0 0.0
      %5610 = vmatpush.msra.mxu0 0.0
      %5611 = vmatpush.msra.mxu0 0.0
      %5612 = vmatpush.msra.mxu0 0.0
      %5613 = vmatpush.msra.mxu0 %v5591
      %5614 = vmatmul.f32.gmra.mxu0 %v5596
      %v5615 = vpop.f32.mrf.mxu0
      %v5616 = vadd.f32 0.0, %v5615
      %5617 = vdwg.mxu0
      %v5619 = vsel %vm1080, %v5542, 0
      %5621 = vmatpush.msra.mxu0 0.0
      %5622 = vmatpush.msra.mxu0 0.0
      %5623 = vmatpush.msra.mxu0 0.0
      %5624 = vmatpush.msra.mxu0 0.0
      %5625 = vmatpush.msra.mxu0 0.0
      %5626 = vmatpush.msra.mxu0 0.0
      %5627 = vmatpush.msra.mxu0 0.0
      %5628 = vmatpush.msra.mxu0 0.0
      %5629 = vmatpush.msra.mxu0 0.0
      %5630 = vmatpush.msra.mxu0 0.0
      %5631 = vmatpush.msra.mxu0 0.0
      %5632 = vmatpush.msra.mxu0 0.0
      %5633 = vmatpush.msra.mxu0 0.0
      %5634 = vmatpush.msra.mxu0 0.0
      %5635 = vmatpush.msra.mxu0 0.0
      %5636 = vmatpush.msra.mxu0 %v5592
      %5637 = vmatmul.f32.gmra.mxu0 %v5619
      %v5638 = vpop.f32.mrf.mxu0
      %v5639 = vadd.f32 0.0, %v5638
      %5640 = vdwg.mxu0
      %v5642 = vsel %vm1080, %v5565, 0
      %5644 = vmatpush.msra.mxu0 0.0
      %5645 = vmatpush.msra.mxu0 0.0
      %5646 = vmatpush.msra.mxu0 0.0
      %5647 = vmatpush.msra.mxu0 0.0
      %5648 = vmatpush.msra.mxu0 0.0
      %5649 = vmatpush.msra.mxu0 0.0
      %5650 = vmatpush.msra.mxu0 0.0
      %5651 = vmatpush.msra.mxu0 0.0
      %5652 = vmatpush.msra.mxu0 0.0
      %5653 = vmatpush.msra.mxu0 0.0
      %5654 = vmatpush.msra.mxu0 0.0
      %5655 = vmatpush.msra.mxu0 0.0
      %5656 = vmatpush.msra.mxu0 0.0
      %5657 = vmatpush.msra.mxu0 0.0
      %5658 = vmatpush.msra.mxu0 0.0
      %5659 = vmatpush.msra.mxu0 %v5593
      %5660 = vmatmul.f32.gmra.mxu0 %v5642
      %v5661 = vpop.f32.mrf.mxu0
      %v5662 = vadd.f32 0.0, %v5661
      %5663 = vdwg.mxu0
      %v5665 = vsel %vm1080, %v5588, 0
      %5667 = vmatpush.msra.mxu0 0.0
      %5668 = vmatpush.msra.mxu0 0.0
      %5669 = vmatpush.msra.mxu0 0.0
      %5670 = vmatpush.msra.mxu0 0.0
      %5671 = vmatpush.msra.mxu0 0.0
      %5672 = vmatpush.msra.mxu0 0.0
      %5673 = vmatpush.msra.mxu0 0.0
      %5674 = vmatpush.msra.mxu0 0.0
      %5675 = vmatpush.msra.mxu0 0.0
      %5676 = vmatpush.msra.mxu0 0.0
      %5677 = vmatpush.msra.mxu0 0.0
      %5678 = vmatpush.msra.mxu0 0.0
      %5679 = vmatpush.msra.mxu0 0.0
      %5680 = vmatpush.msra.mxu0 0.0
      %5681 = vmatpush.msra.mxu0 0.0
      %5682 = vmatpush.msra.mxu0 %v5594
      %5683 = vmatmul.f32.gmra.mxu0 %v5665
      %v5684 = vpop.f32.mrf.mxu0
      %v5685 = vadd.f32 0.0, %v5684
      %5686 = vdwg.mxu0
      %v5687 = vsel %vm771, %v5616, 0.0
      %v5688 = vsel %vm771, %v5639, 0.0
      %v5689 = vadd.f32 %v5687, %v5688
      %v5690 = vsel %vm771, %v5662, 0.0
      %v5691 = vadd.f32 %v5689, %v5690
      %v5692 = vsel %vm771, %v5685, 0.0
      %v5693 = vadd.f32 %v5691, %v5692
      %s5694 = scalar_lea.vmem %s9, 5
      %v5695 = vld [vmem:[%s5694] sm:$0x1]
      %v5697 = vperm.slane %v5695, 0
      %v5699 = vadd.f32 %v5693, %v5697
      %v5700 = vadd.f32 %v5000, %v5699
      %v5701 = vsel %vm771, %v5700, 0.0
      %5702 = vadd.xlane.f32.xlu0 %v5701
      %v5703 = vpop.xlane.xlu0 %5702
      %v5704 = vmul.f32 %v5703, %v1443
      %v5705 = vsub.f32 %v5700, %v5704
      %v5706 = vmul.f32 %v5705, %v5705
      %v5707 = vsel %vm771, %v5706, 0.0
      %5708 = vadd.xlane.f32.xlu0 %v5707
      %v5709 = vpop.xlane.xlu0 %5708
      %v5710 = vmul.f32 %v5709, %v1443
      %v5711 = vadd.f32 %v5710, 1e-05
      %v5712 = vrsqrt.pop %v5711
      %v5713 = vmul.f32 %v5712, %v5711
      %v5714 = vmul.f32 %v5713, %v5712
      %v5715 = vmul.f32 0.5, %v5714
      %v5716 = vsub.f32 1.5, %v5715
      %v5717 = vmul.f32 %v5712, %v5716
      %vm5718 = vweird.f32 %v5711
      %vm5719 = vweird.f32 %v5712
      %vm5720 = vmor %vm5718, %vm5719
      %v5721 = vsel %vm5720, %v5712, %v5717
      %v5722 = vmul.f32 %v5705, %v5721
      %s5723 = scalar_lea.vmem %s10, 5
      %v5724 = vld [vmem:[%s5723] sm:$0x1]
      %v5726 = vperm.slane %v5724, 0
      %v5728 = vmul.f32 %v5722, %v5726
      %s5729 = scalar_lea.vmem %s11, 5
      %v5730 = vld [vmem:[%s5729] sm:$0x1]
      %v5732 = vperm.slane %v5730, 0
      %v5734 = vadd.f32 %v5728, %v5732
      %s5735 = scalar_lea.vmem %s12, 160
      %v5736 = vld [vmem:[%s5735] sm:$0xff]
      %v5737 = vld [vmem:[%s5735 + $0x8] sm:$0xff]
      %v5738 = vld [vmem:[%s5735 + $0x10] sm:$0xff]
      %v5739 = vld [vmem:[%s5735 + $0x18] sm:$0xff]
      %s5740 = scalar_lea.vmem %s13, 5
      %v5741 = vld [vmem:[%s5740] sm:$0x1]
      %v5743 = vperm.slane %v5741, 0
      %v5746 = vsel %vm771, %v5734, 0
      %5748 = vmatpush.msra.mxu0 0.0
      %5749 = vmatpush.msra.mxu0 0.0
      %5750 = vmatpush.msra.mxu0 0.0
      %5751 = vmatpush.msra.mxu0 0.0
      %5752 = vmatpush.msra.mxu0 0.0
      %5753 = vmatpush.msra.mxu0 0.0
      %5754 = vmatpush.msra.mxu0 0.0
      %5755 = vmatpush.msra.mxu0 0.0
      %5756 = vmatpush.msra.mxu0 0.0
      %5757 = vmatpush.msra.mxu0 0.0
      %5758 = vmatpush.msra.mxu0 0.0
      %5759 = vmatpush.msra.mxu0 0.0
      %5760 = vmatpush.msra.mxu0 %v5739
      %5761 = vmatpush.msra.mxu0 %v5738
      %5762 = vmatpush.msra.mxu0 %v5737
      %5763 = vmatpush.msra.mxu0 %v5736
      %5764 = vmatmul.f32.gmra.mxu0 %v5746
      %v5765 = vpop.f32.mrf.mxu0
      %v5766 = vadd.f32 %v5743, %v5765
      %5767 = vdwg.mxu0
      %v5768 = vmax.f32 %v5766, 0.0
      %s5769 = scalar_lea.vmem %s14, 320
      %v5770 = vld [vmem:[%s5769] sm:$0xff]
      %v5771 = vld [vmem:[%s5769 + $0x8] sm:$0xff]
      %v5772 = vld [vmem:[%s5769 + $0x10] sm:$0xff]
      %v5773 = vld [vmem:[%s5769 + $0x18] sm:$0xff]
      %v5774 = vld [vmem:[%s5769 + $0x20] sm:$0xff]
      %v5775 = vld [vmem:[%s5769 + $0x28] sm:$0xff]
      %v5776 = vld [vmem:[%s5769 + $0x30] sm:$0xff]
      %v5777 = vld [vmem:[%s5769 + $0x38] sm:$0xff]
      %s5778 = scalar_lea.vmem %s15, 5
      %v5779 = vld [vmem:[%s5778] sm:$0x1]
      %v5781 = vperm.slane %v5779, 0
      %v5784 = vsel %vm1517, %v5768, 0
      %5786 = vmatpush.msra.mxu0 0.0
      %5787 = vmatpush.msra.mxu0 0.0
      %5788 = vmatpush.msra.mxu0 0.0
      %5789 = vmatpush.msra.mxu0 0.0
      %5790 = vmatpush.msra.mxu0 0.0
      %5791 = vmatpush.msra.mxu0 0.0
      %5792 = vmatpush.msra.mxu0 0.0
      %5793 = vmatpush.msra.mxu0 0.0
      %5794 = vmatpush.msra.mxu0 %v5777
      %5795 = vmatpush.msra.mxu0 %v5776
      %5796 = vmatpush.msra.mxu0 %v5775
      %5797 = vmatpush.msra.mxu0 %v5774
      %5798 = vmatpush.msra.mxu0 %v5773
      %5799 = vmatpush.msra.mxu0 %v5772
      %5800 = vmatpush.msra.mxu0 %v5771
      %5801 = vmatpush.msra.mxu0 %v5770
      %5802 = vmatmul.f32.gmra.mxu0 %v5784
      %v5803 = vpop.f32.mrf.mxu0
      %v5804 = vadd.f32 %v5781, %v5803
      %5805 = vdwg.mxu0
      %v5806 = vadd.f32 %v5734, %v5804
      %v5807 = vsel %vm771, %v5806, 0.0
      %5808 = vadd.xlane.f32.xlu0 %v5807
      %v5809 = vpop.xlane.xlu0 %5808
      %v5810 = vmul.f32 %v5809, %v1443
      %v5811 = vsub.f32 %v5806, %v5810
      %v5812 = vmul.f32 %v5811, %v5811
      %v5813 = vsel %vm771, %v5812, 0.0
      %5814 = vadd.xlane.f32.xlu0 %v5813
      %v5815 = vpop.xlane.xlu0 %5814
      %v5816 = vmul.f32 %v5815, %v1443
      %v5817 = vadd.f32 %v5816, 1e-05
      %v5818 = vrsqrt.pop %v5817
      %v5819 = vmul.f32 %v5818, %v5817
      %v5820 = vmul.f32 %v5819, %v5818
      %v5821 = vmul.f32 0.5, %v5820
      %v5822 = vsub.f32 1.5, %v5821
      %v5823 = vmul.f32 %v5818, %v5822
      %vm5824 = vweird.f32 %v5817
      %vm5825 = vweird.f32 %v5818
      %vm5826 = vmor %vm5824, %vm5825
      %v5827 = vsel %vm5826, %v5818, %v5823
      %v5828 = vmul.f32 %v5811, %v5827
      %s5829 = scalar_lea.vmem %s16, 5
      %v5830 = vld [vmem:[%s5829] sm:$0x1]
      %v5832 = vperm.slane %v5830, 0
      %v5834 = vmul.f32 %v5828, %v5832
      %s5835 = scalar_lea.vmem %s17, 5
      %v5836 = vld [vmem:[%s5835] sm:$0x1]
      %v5838 = vperm.slane %v5836, 0
      %v5840 = vadd.f32 %v5834, %v5838
      %s5841 = scalar_lea.vmem %s2, 768
      %v5842 = vld [vmem:[%s5841] sm:$0xff]
      %v5843 = vld [vmem:[%s5841 + $0x8] sm:$0xff]
      %v5844 = vld [vmem:[%s5841 + $0x10] sm:$0xff]
      %v5845 = vld [vmem:[%s5841 + $0x18] sm:$0xff]
      %v5846 = vld [vmem:[%s5841 + $0x20] sm:$0xff]
      %v5847 = vld [vmem:[%s5841 + $0x28] sm:$0xff]
      %v5848 = vld [vmem:[%s5841 + $0x30] sm:$0xff]
      %v5849 = vld [vmem:[%s5841 + $0x38] sm:$0xff]
      %v5850 = vld [vmem:[%s5841 + $0x40] sm:$0xff]
      %v5851 = vld [vmem:[%s5841 + $0x48] sm:$0xff]
      %v5852 = vld [vmem:[%s5841 + $0x50] sm:$0xff]
      %v5853 = vld [vmem:[%s5841 + $0x58] sm:$0xff]
      %v5854 = vld [vmem:[%s5841 + $0x60] sm:$0xff]
      %v5855 = vld [vmem:[%s5841 + $0x68] sm:$0xff]
      %v5856 = vld [vmem:[%s5841 + $0x70] sm:$0xff]
      %v5857 = vld [vmem:[%s5841 + $0x78] sm:$0xff]
      %s5858 = scalar_lea.vmem %s3, 24
      %v5859 = vld [vmem:[%s5858] sm:$0x1]
      %v5860 = vld [vmem:[%s5858 + $0x1] sm:$0x1]
      %v5861 = vld [vmem:[%s5858 + $0x2] sm:$0x1]
      %v5862 = vld [vmem:[%s5858 + $0x3] sm:$0x1]
      %v5867 = vperm.slane %v5859, 0
      %v5868 = vperm.slane %v5860, 0
      %v5869 = vperm.slane %v5861, 0
      %v5870 = vperm.slane %v5862, 0
      %5876 = vrot.lane.b32.xlu0 %v4163, 96
      %v5877 = vpop.permute.xlu0 %5876
      %v5878 = vsel %vm771, %v5877, 0
      %5880 = vmatpush.msra.mxu0 0.0
      %5881 = vmatpush.msra.mxu0 0.0
      %5882 = vmatpush.msra.mxu0 0.0
      %5883 = vmatpush.msra.mxu0 0.0
      %5884 = vmatpush.msra.mxu0 0.0
      %5885 = vmatpush.msra.mxu0 0.0
      %5886 = vmatpush.msra.mxu0 0.0
      %5887 = vmatpush.msra.mxu0 0.0
      %5888 = vmatpush.msra.mxu0 0.0
      %5889 = vmatpush.msra.mxu0 0.0
      %5890 = vmatpush.msra.mxu0 0.0
      %5891 = vmatpush.msra.mxu0 0.0
      %5892 = vmatpush.msra.mxu0 %v5845
      %5893 = vmatpush.msra.mxu0 %v5844
      %5894 = vmatpush.msra.mxu0 %v5843
      %5895 = vmatpush.msra.mxu0 %v5842
      %5896 = vmatmul.f32.gmra.mxu0 %v5878
      %v5897 = vpop.f32.mrf.mxu0
      %v5898 = vadd.f32 %v5867, %v5897
      %5899 = vdwg.mxu0
      %5900 = vmatpush.msra.mxu0 0.0
      %5901 = vmatpush.msra.mxu0 0.0
      %5902 = vmatpush.msra.mxu0 0.0
      %5903 = vmatpush.msra.mxu0 0.0
      %5904 = vmatpush.msra.mxu0 0.0
      %5905 = vmatpush.msra.mxu0 0.0
      %5906 = vmatpush.msra.mxu0 0.0
      %5907 = vmatpush.msra.mxu0 0.0
      %5908 = vmatpush.msra.mxu0 0.0
      %5909 = vmatpush.msra.mxu0 0.0
      %5910 = vmatpush.msra.mxu0 0.0
      %5911 = vmatpush.msra.mxu0 0.0
      %5912 = vmatpush.msra.mxu0 %v5849
      %5913 = vmatpush.msra.mxu0 %v5848
      %5914 = vmatpush.msra.mxu0 %v5847
      %5915 = vmatpush.msra.mxu0 %v5846
      %5916 = vmatmul.f32.gmra.mxu0 %v5878
      %v5917 = vpop.f32.mrf.mxu0
      %v5918 = vadd.f32 %v5868, %v5917
      %5919 = vdwg.mxu0
      %5920 = vmatpush.msra.mxu0 0.0
      %5921 = vmatpush.msra.mxu0 0.0
      %5922 = vmatpush.msra.mxu0 0.0
      %5923 = vmatpush.msra.mxu0 0.0
      %5924 = vmatpush.msra.mxu0 0.0
      %5925 = vmatpush.msra.mxu0 0.0
      %5926 = vmatpush.msra.mxu0 0.0
      %5927 = vmatpush.msra.mxu0 0.0
      %5928 = vmatpush.msra.mxu0 0.0
      %5929 = vmatpush.msra.mxu0 0.0
      %5930 = vmatpush.msra.mxu0 0.0
      %5931 = vmatpush.msra.mxu0 0.0
      %5932 = vmatpush.msra.mxu0 %v5853
      %5933 = vmatpush.msra.mxu0 %v5852
      %5934 = vmatpush.msra.mxu0 %v5851
      %5935 = vmatpush.msra.mxu0 %v5850
      %5936 = vmatmul.f32.gmra.mxu0 %v5878
      %v5937 = vpop.f32.mrf.mxu0
      %v5938 = vadd.f32 %v5869, %v5937
      %5939 = vdwg.mxu0
      %5940 = vmatpush.msra.mxu0 0.0
      %5941 = vmatpush.msra.mxu0 0.0
      %5942 = vmatpush.msra.mxu0 0.0
      %5943 = vmatpush.msra.mxu0 0.0
      %5944 = vmatpush.msra.mxu0 0.0
      %5945 = vmatpush.msra.mxu0 0.0
      %5946 = vmatpush.msra.mxu0 0.0
      %5947 = vmatpush.msra.mxu0 0.0
      %5948 = vmatpush.msra.mxu0 0.0
      %5949 = vmatpush.msra.mxu0 0.0
      %5950 = vmatpush.msra.mxu0 0.0
      %5951 = vmatpush.msra.mxu0 0.0
      %5952 = vmatpush.msra.mxu0 %v5857
      %5953 = vmatpush.msra.mxu0 %v5856
      %5954 = vmatpush.msra.mxu0 %v5855
      %5955 = vmatpush.msra.mxu0 %v5854
      %5956 = vmatmul.f32.gmra.mxu0 %v5878
      %v5957 = vpop.f32.mrf.mxu0
      %v5958 = vadd.f32 %v5870, %v5957
      %5959 = vdwg.mxu0
      %s5960 = scalar_lea.vmem %s4, 768
      %v5961 = vld [vmem:[%s5960] sm:$0xff]
      %v5962 = vld [vmem:[%s5960 + $0x8] sm:$0xff]
      %v5963 = vld [vmem:[%s5960 + $0x10] sm:$0xff]
      %v5964 = vld [vmem:[%s5960 + $0x18] sm:$0xff]
      %v5965 = vld [vmem:[%s5960 + $0x20] sm:$0xff]
      %v5966 = vld [vmem:[%s5960 + $0x28] sm:$0xff]
      %v5967 = vld [vmem:[%s5960 + $0x30] sm:$0xff]
      %v5968 = vld [vmem:[%s5960 + $0x38] sm:$0xff]
      %v5969 = vld [vmem:[%s5960 + $0x40] sm:$0xff]
      %v5970 = vld [vmem:[%s5960 + $0x48] sm:$0xff]
      %v5971 = vld [vmem:[%s5960 + $0x50] sm:$0xff]
      %v5972 = vld [vmem:[%s5960 + $0x58] sm:$0xff]
      %v5973 = vld [vmem:[%s5960 + $0x60] sm:$0xff]
      %v5974 = vld [vmem:[%s5960 + $0x68] sm:$0xff]
      %v5975 = vld [vmem:[%s5960 + $0x70] sm:$0xff]
      %v5976 = vld [vmem:[%s5960 + $0x78] sm:$0xff]
      %s5977 = scalar_lea.vmem %s5, 24
      %v5978 = vld [vmem:[%s5977] sm:$0x1]
      %v5979 = vld [vmem:[%s5977 + $0x1] sm:$0x1]
      %v5980 = vld [vmem:[%s5977 + $0x2] sm:$0x1]
      %v5981 = vld [vmem:[%s5977 + $0x3] sm:$0x1]
      %v5986 = vperm.slane %v5978, 0
      %v5987 = vperm.slane %v5979, 0
      %v5988 = vperm.slane %v5980, 0
      %v5989 = vperm.slane %v5981, 0
      %5994 = vmatpush.msra.mxu0 0.0
      %5995 = vmatpush.msra.mxu0 0.0
      %5996 = vmatpush.msra.mxu0 0.0
      %5997 = vmatpush.msra.mxu0 0.0
      %5998 = vmatpush.msra.mxu0 0.0
      %5999 = vmatpush.msra.mxu0 0.0
      %6000 = vmatpush.msra.mxu0 0.0
      %6001 = vmatpush.msra.mxu0 0.0
      %6002 = vmatpush.msra.mxu0 0.0
      %6003 = vmatpush.msra.mxu0 0.0
      %6004 = vmatpush.msra.mxu0 0.0
      %6005 = vmatpush.msra.mxu0 0.0
      %6006 = vmatpush.msra.mxu0 %v5964
      %6007 = vmatpush.msra.mxu0 %v5963
      %6008 = vmatpush.msra.mxu0 %v5962
      %6009 = vmatpush.msra.mxu0 %v5961
      %6010 = vmatmul.f32.gmra.mxu0 %v5878
      %v6011 = vpop.f32.mrf.mxu0
      %v6012 = vadd.f32 %v5986, %v6011
      %6013 = vdwg.mxu0
      %6014 = vmatpush.msra.mxu0 0.0
      %6015 = vmatpush.msra.mxu0 0.0
      %6016 = vmatpush.msra.mxu0 0.0
      %6017 = vmatpush.msra.mxu0 0.0
      %6018 = vmatpush.msra.mxu0 0.0
      %6019 = vmatpush.msra.mxu0 0.0
      %6020 = vmatpush.msra.mxu0 0.0
      %6021 = vmatpush.msra.mxu0 0.0
      %6022 = vmatpush.msra.mxu0 0.0
      %6023 = vmatpush.msra.mxu0 0.0
      %6024 = vmatpush.msra.mxu0 0.0
      %6025 = vmatpush.msra.mxu0 0.0
      %6026 = vmatpush.msra.mxu0 %v5968
      %6027 = vmatpush.msra.mxu0 %v5967
      %6028 = vmatpush.msra.mxu0 %v5966
      %6029 = vmatpush.msra.mxu0 %v5965
      %6030 = vmatmul.f32.gmra.mxu0 %v5878
      %v6031 = vpop.f32.mrf.mxu0
      %v6032 = vadd.f32 %v5987, %v6031
      %6033 = vdwg.mxu0
      %6034 = vmatpush.msra.mxu0 0.0
      %6035 = vmatpush.msra.mxu0 0.0
      %6036 = vmatpush.msra.mxu0 0.0
      %6037 = vmatpush.msra.mxu0 0.0
      %6038 = vmatpush.msra.mxu0 0.0
      %6039 = vmatpush.msra.mxu0 0.0
      %6040 = vmatpush.msra.mxu0 0.0
      %6041 = vmatpush.msra.mxu0 0.0
      %6042 = vmatpush.msra.mxu0 0.0
      %6043 = vmatpush.msra.mxu0 0.0
      %6044 = vmatpush.msra.mxu0 0.0
      %6045 = vmatpush.msra.mxu0 0.0
      %6046 = vmatpush.msra.mxu0 %v5972
      %6047 = vmatpush.msra.mxu0 %v5971
      %6048 = vmatpush.msra.mxu0 %v5970
      %6049 = vmatpush.msra.mxu0 %v5969
      %6050 = vmatmul.f32.gmra.mxu0 %v5878
      %v6051 = vpop.f32.mrf.mxu0
      %v6052 = vadd.f32 %v5988, %v6051
      %6053 = vdwg.mxu0
      %6054 = vmatpush.msra.mxu0 0.0
      %6055 = vmatpush.msra.mxu0 0.0
      %6056 = vmatpush.msra.mxu0 0.0
      %6057 = vmatpush.msra.mxu0 0.0
      %6058 = vmatpush.msra.mxu0 0.0
      %6059 = vmatpush.msra.mxu0 0.0
      %6060 = vmatpush.msra.mxu0 0.0
      %6061 = vmatpush.msra.mxu0 0.0
      %6062 = vmatpush.msra.mxu0 0.0
      %6063 = vmatpush.msra.mxu0 0.0
      %6064 = vmatpush.msra.mxu0 0.0
      %6065 = vmatpush.msra.mxu0 0.0
      %6066 = vmatpush.msra.mxu0 %v5976
      %6067 = vmatpush.msra.mxu0 %v5975
      %6068 = vmatpush.msra.mxu0 %v5974
      %6069 = vmatpush.msra.mxu0 %v5973
      %6070 = vmatmul.f32.gmra.mxu0 %v5878
      %v6071 = vpop.f32.mrf.mxu0
      %v6072 = vadd.f32 %v5989, %v6071
      %6073 = vdwg.mxu0
      %s6074 = scalar_lea.vmem %s6, 768
      %v6075 = vld [vmem:[%s6074] sm:$0xff]
      %v6076 = vld [vmem:[%s6074 + $0x8] sm:$0xff]
      %v6077 = vld [vmem:[%s6074 + $0x10] sm:$0xff]
      %v6078 = vld [vmem:[%s6074 + $0x18] sm:$0xff]
      %v6079 = vld [vmem:[%s6074 + $0x20] sm:$0xff]
      %v6080 = vld [vmem:[%s6074 + $0x28] sm:$0xff]
      %v6081 = vld [vmem:[%s6074 + $0x30] sm:$0xff]
      %v6082 = vld [vmem:[%s6074 + $0x38] sm:$0xff]
      %v6083 = vld [vmem:[%s6074 + $0x40] sm:$0xff]
      %v6084 = vld [vmem:[%s6074 + $0x48] sm:$0xff]
      %v6085 = vld [vmem:[%s6074 + $0x50] sm:$0xff]
      %v6086 = vld [vmem:[%s6074 + $0x58] sm:$0xff]
      %v6087 = vld [vmem:[%s6074 + $0x60] sm:$0xff]
      %v6088 = vld [vmem:[%s6074 + $0x68] sm:$0xff]
      %v6089 = vld [vmem:[%s6074 + $0x70] sm:$0xff]
      %v6090 = vld [vmem:[%s6074 + $0x78] sm:$0xff]
      %s6091 = scalar_lea.vmem %s7, 24
      %v6092 = vld [vmem:[%s6091] sm:$0x1]
      %v6093 = vld [vmem:[%s6091 + $0x1] sm:$0x1]
      %v6094 = vld [vmem:[%s6091 + $0x2] sm:$0x1]
      %v6095 = vld [vmem:[%s6091 + $0x3] sm:$0x1]
      %v6100 = vperm.slane %v6092, 0
      %v6101 = vperm.slane %v6093, 0
      %v6102 = vperm.slane %v6094, 0
      %v6103 = vperm.slane %v6095, 0
      %6108 = vmatpush.msra.mxu0 0.0
      %6109 = vmatpush.msra.mxu0 0.0
      %6110 = vmatpush.msra.mxu0 0.0
      %6111 = vmatpush.msra.mxu0 0.0
      %6112 = vmatpush.msra.mxu0 0.0
      %6113 = vmatpush.msra.mxu0 0.0
      %6114 = vmatpush.msra.mxu0 0.0
      %6115 = vmatpush.msra.mxu0 0.0
      %6116 = vmatpush.msra.mxu0 0.0
      %6117 = vmatpush.msra.mxu0 0.0
      %6118 = vmatpush.msra.mxu0 0.0
      %6119 = vmatpush.msra.mxu0 0.0
      %6120 = vmatpush.msra.mxu0 %v6078
      %6121 = vmatpush.msra.mxu0 %v6077
      %6122 = vmatpush.msra.mxu0 %v6076
      %6123 = vmatpush.msra.mxu0 %v6075
      %6124 = vmatmul.f32.gmra.mxu0 %v5878
      %v6125 = vpop.f32.mrf.mxu0
      %v6126 = vadd.f32 %v6100, %v6125
      %6127 = vdwg.mxu0
      %6128 = vmatpush.msra.mxu0 0.0
      %6129 = vmatpush.msra.mxu0 0.0
      %6130 = vmatpush.msra.mxu0 0.0
      %6131 = vmatpush.msra.mxu0 0.0
      %6132 = vmatpush.msra.mxu0 0.0
      %6133 = vmatpush.msra.mxu0 0.0
      %6134 = vmatpush.msra.mxu0 0.0
      %6135 = vmatpush.msra.mxu0 0.0
      %6136 = vmatpush.msra.mxu0 0.0
      %6137 = vmatpush.msra.mxu0 0.0
      %6138 = vmatpush.msra.mxu0 0.0
      %6139 = vmatpush.msra.mxu0 0.0
      %6140 = vmatpush.msra.mxu0 %v6082
      %6141 = vmatpush.msra.mxu0 %v6081
      %6142 = vmatpush.msra.mxu0 %v6080
      %6143 = vmatpush.msra.mxu0 %v6079
      %6144 = vmatmul.f32.gmra.mxu0 %v5878
      %v6145 = vpop.f32.mrf.mxu0
      %v6146 = vadd.f32 %v6101, %v6145
      %6147 = vdwg.mxu0
      %6148 = vmatpush.msra.mxu0 0.0
      %6149 = vmatpush.msra.mxu0 0.0
      %6150 = vmatpush.msra.mxu0 0.0
      %6151 = vmatpush.msra.mxu0 0.0
      %6152 = vmatpush.msra.mxu0 0.0
      %6153 = vmatpush.msra.mxu0 0.0
      %6154 = vmatpush.msra.mxu0 0.0
      %6155 = vmatpush.msra.mxu0 0.0
      %6156 = vmatpush.msra.mxu0 0.0
      %6157 = vmatpush.msra.mxu0 0.0
      %6158 = vmatpush.msra.mxu0 0.0
      %6159 = vmatpush.msra.mxu0 0.0
      %6160 = vmatpush.msra.mxu0 %v6086
      %6161 = vmatpush.msra.mxu0 %v6085
      %6162 = vmatpush.msra.mxu0 %v6084
      %6163 = vmatpush.msra.mxu0 %v6083
      %6164 = vmatmul.f32.gmra.mxu0 %v5878
      %v6165 = vpop.f32.mrf.mxu0
      %v6166 = vadd.f32 %v6102, %v6165
      %6167 = vdwg.mxu0
      %6168 = vmatpush.msra.mxu0 0.0
      %6169 = vmatpush.msra.mxu0 0.0
      %6170 = vmatpush.msra.mxu0 0.0
      %6171 = vmatpush.msra.mxu0 0.0
      %6172 = vmatpush.msra.mxu0 0.0
      %6173 = vmatpush.msra.mxu0 0.0
      %6174 = vmatpush.msra.mxu0 0.0
      %6175 = vmatpush.msra.mxu0 0.0
      %6176 = vmatpush.msra.mxu0 0.0
      %6177 = vmatpush.msra.mxu0 0.0
      %6178 = vmatpush.msra.mxu0 0.0
      %6179 = vmatpush.msra.mxu0 0.0
      %6180 = vmatpush.msra.mxu0 %v6090
      %6181 = vmatpush.msra.mxu0 %v6089
      %6182 = vmatpush.msra.mxu0 %v6088
      %6183 = vmatpush.msra.mxu0 %v6087
      %6184 = vmatmul.f32.gmra.mxu0 %v5878
      %v6185 = vpop.f32.mrf.mxu0
      %v6186 = vadd.f32 %v6103, %v6185
      %6187 = vdwg.mxu0
      %v6189 = vsel %vm1080, %v5898, 0
      %v6192 = vsel %vm1080, %v6012, 0
      %6194 = vmatpush.xpose.msra.mxu0 0.0
      %6195 = vmatpush.xpose.msra.mxu0 0.0
      %6196 = vmatpush.xpose.msra.mxu0 0.0
      %6197 = vmatpush.xpose.msra.mxu0 0.0
      %6198 = vmatpush.xpose.msra.mxu0 0.0
      %6199 = vmatpush.xpose.msra.mxu0 0.0
      %6200 = vmatpush.xpose.msra.mxu0 0.0
      %6201 = vmatpush.xpose.msra.mxu0 0.0
      %6202 = vmatpush.xpose.msra.mxu0 0.0
      %6203 = vmatpush.xpose.msra.mxu0 0.0
      %6204 = vmatpush.xpose.msra.mxu0 0.0
      %6205 = vmatpush.xpose.msra.mxu0 0.0
      %6206 = vmatpush.xpose.msra.mxu0 0.0
      %6207 = vmatpush.xpose.msra.mxu0 0.0
      %6208 = vmatpush.xpose.msra.mxu0 0.0
      %6209 = vmatpush.xpose.msra.mxu0 %v6192
      %6210 = vmatmul.f32.gmra.mxu0 %v6189
      %v6211 = vpop.f32.mrf.mxu0
      %v6212 = vadd.f32 0.0, %v6211
      %6213 = vdwg.mxu0
      %v6215 = vsel %vm1080, %v5918, 0
      %v6218 = vsel %vm1080, %v6032, 0
      %6220 = vmatpush.xpose.msra.mxu0 0.0
      %6221 = vmatpush.xpose.msra.mxu0 0.0
      %6222 = vmatpush.xpose.msra.mxu0 0.0
      %6223 = vmatpush.xpose.msra.mxu0 0.0
      %6224 = vmatpush.xpose.msra.mxu0 0.0
      %6225 = vmatpush.xpose.msra.mxu0 0.0
      %6226 = vmatpush.xpose.msra.mxu0 0.0
      %6227 = vmatpush.xpose.msra.mxu0 0.0
      %6228 = vmatpush.xpose.msra.mxu0 0.0
      %6229 = vmatpush.xpose.msra.mxu0 0.0
      %6230 = vmatpush.xpose.msra.mxu0 0.0
      %6231 = vmatpush.xpose.msra.mxu0 0.0
      %6232 = vmatpush.xpose.msra.mxu0 0.0
      %6233 = vmatpush.xpose.msra.mxu0 0.0
      %6234 = vmatpush.xpose.msra.mxu0 0.0
      %6235 = vmatpush.xpose.msra.mxu0 %v6218
      %6236 = vmatmul.f32.gmra.mxu0 %v6215
      %v6237 = vpop.f32.mrf.mxu0
      %v6238 = vadd.f32 0.0, %v6237
      %6239 = vdwg.mxu0
      %v6241 = vsel %vm1080, %v5938, 0
      %v6244 = vsel %vm1080, %v6052, 0
      %6246 = vmatpush.xpose.msra.mxu0 0.0
      %6247 = vmatpush.xpose.msra.mxu0 0.0
      %6248 = vmatpush.xpose.msra.mxu0 0.0
      %6249 = vmatpush.xpose.msra.mxu0 0.0
      %6250 = vmatpush.xpose.msra.mxu0 0.0
      %6251 = vmatpush.xpose.msra.mxu0 0.0
      %6252 = vmatpush.xpose.msra.mxu0 0.0
      %6253 = vmatpush.xpose.msra.mxu0 0.0
      %6254 = vmatpush.xpose.msra.mxu0 0.0
      %6255 = vmatpush.xpose.msra.mxu0 0.0
      %6256 = vmatpush.xpose.msra.mxu0 0.0
      %6257 = vmatpush.xpose.msra.mxu0 0.0
      %6258 = vmatpush.xpose.msra.mxu0 0.0
      %6259 = vmatpush.xpose.msra.mxu0 0.0
      %6260 = vmatpush.xpose.msra.mxu0 0.0
      %6261 = vmatpush.xpose.msra.mxu0 %v6244
      %6262 = vmatmul.f32.gmra.mxu0 %v6241
      %v6263 = vpop.f32.mrf.mxu0
      %v6264 = vadd.f32 0.0, %v6263
      %6265 = vdwg.mxu0
      %v6267 = vsel %vm1080, %v5958, 0
      %v6270 = vsel %vm1080, %v6072, 0
      %6272 = vmatpush.xpose.msra.mxu0 0.0
      %6273 = vmatpush.xpose.msra.mxu0 0.0
      %6274 = vmatpush.xpose.msra.mxu0 0.0
      %6275 = vmatpush.xpose.msra.mxu0 0.0
      %6276 = vmatpush.xpose.msra.mxu0 0.0
      %6277 = vmatpush.xpose.msra.mxu0 0.0
      %6278 = vmatpush.xpose.msra.mxu0 0.0
      %6279 = vmatpush.xpose.msra.mxu0 0.0
      %6280 = vmatpush.xpose.msra.mxu0 0.0
      %6281 = vmatpush.xpose.msra.mxu0 0.0
      %6282 = vmatpush.xpose.msra.mxu0 0.0
      %6283 = vmatpush.xpose.msra.mxu0 0.0
      %6284 = vmatpush.xpose.msra.mxu0 0.0
      %6285 = vmatpush.xpose.msra.mxu0 0.0
      %6286 = vmatpush.xpose.msra.mxu0 0.0
      %6287 = vmatpush.xpose.msra.mxu0 %v6270
      %6288 = vmatmul.f32.gmra.mxu0 %v6267
      %v6289 = vpop.f32.mrf.mxu0
      %v6290 = vadd.f32 0.0, %v6289
      %6291 = vdwg.mxu0
      %v6292 = vmul.f32 %v6212, 0.35355338
      %v6293 = vmul.f32 %v6238, 0.35355338
      %v6294 = vmul.f32 %v6264, 0.35355338
      %v6295 = vmul.f32 %v6290, 0.35355338
      %v6296 = vsel %vm1080, %v6292, -inf
      %6297 = vmax.xlane.f32.xlu0 %v6296
      %v6298 = vpop.xlane.xlu0 %6297
      %v6299 = vsel %vm1080, %v6293, -inf
      %6300 = vmax.xlane.f32.xlu0 %v6299
      %v6301 = vpop.xlane.xlu0 %6300
      %v6302 = vsel %vm1080, %v6294, -inf
      %6303 = vmax.xlane.f32.xlu0 %v6302
      %v6304 = vpop.xlane.xlu0 %6303
      %v6305 = vsel %vm1080, %v6295, -inf
      %6306 = vmax.xlane.f32.xlu0 %v6305
      %v6307 = vpop.xlane.xlu0 %6306
      %v6308 = vsub.f32 %v6292, %v6298
      %v6309 = vsub.f32 %v6293, %v6301
      %v6310 = vsub.f32 %v6294, %v6304
      %v6311 = vsub.f32 %v6295, %v6307
      %v6312 = vmul.f32 %v6308, 1.442695
      %v6313 = vpow.pop %v6312
      %v6314 = vmul.f32 %v6309, 1.442695
      %v6315 = vpow.pop %v6314
      %v6316 = vmul.f32 %v6310, 1.442695
      %v6317 = vpow.pop %v6316
      %v6318 = vmul.f32 %v6311, 1.442695
      %v6319 = vpow.pop %v6318
      %v6320 = vsel %vm1080, %v6313, 0.0
      %6321 = vadd.xlane.f32.xlu0 %v6320
      %v6322 = vpop.xlane.xlu0 %6321
      %v6323 = vsel %vm1080, %v6315, 0.0
      %6324 = vadd.xlane.f32.xlu0 %v6323
      %v6325 = vpop.xlane.xlu0 %6324
      %v6326 = vsel %vm1080, %v6317, 0.0
      %6327 = vadd.xlane.f32.xlu0 %v6326
      %v6328 = vpop.xlane.xlu0 %6327
      %v6329 = vsel %vm1080, %v6319, 0.0
      %6330 = vadd.xlane.f32.xlu0 %v6329
      %v6331 = vpop.xlane.xlu0 %6330
      %v6332 = vrcp.pop %v6322
      %v6333 = vrcp.pop %v6325
      %v6334 = vrcp.pop %v6328
      %v6335 = vrcp.pop %v6331
      %v6336 = vmul.f32 %v6313, %v6332
      %v6337 = vmul.f32 %v6315, %v6333
      %v6338 = vmul.f32 %v6317, %v6334
      %v6339 = vmul.f32 %v6319, %v6335
      %v6341 = vsel %vm1080, %v6336, 0
      %6343 = vmatpush.msra.mxu0 0.0
      %6344 = vmatpush.msra.mxu0 0.0
      %6345 = vmatpush.msra.mxu0 0.0
      %6346 = vmatpush.msra.mxu0 0.0
      %6347 = vmatpush.msra.mxu0 0.0
      %6348 = vmatpush.msra.mxu0 0.0
      %6349 = vmatpush.msra.mxu0 0.0
      %6350 = vmatpush.msra.mxu0 0.0
      %6351 = vmatpush.msra.mxu0 0.0
      %6352 = vmatpush.msra.mxu0 0.0
      %6353 = vmatpush.msra.mxu0 0.0
      %6354 = vmatpush.msra.mxu0 0.0
      %6355 = vmatpush.msra.mxu0 0.0
      %6356 = vmatpush.msra.mxu0 0.0
      %6357 = vmatpush.msra.mxu0 0.0
      %6358 = vmatpush.msra.mxu0 %v6126
      %6359 = vmatmul.f32.gmra.mxu0 %v6341
      %v6360 = vpop.f32.mrf.mxu0
      %v6361 = vadd.f32 0.0, %v6360
      %6362 = vdwg.mxu0
      %v6364 = vsel %vm1080, %v6337, 0
      %6366 = vmatpush.msra.mxu0 0.0
      %6367 = vmatpush.msra.mxu0 0.0
      %6368 = vmatpush.msra.mxu0 0.0
      %6369 = vmatpush.msra.mxu0 0.0
      %6370 = vmatpush.msra.mxu0 0.0
      %6371 = vmatpush.msra.mxu0 0.0
      %6372 = vmatpush.msra.mxu0 0.0
      %6373 = vmatpush.msra.mxu0 0.0
      %6374 = vmatpush.msra.mxu0 0.0
      %6375 = vmatpush.msra.mxu0 0.0
      %6376 = vmatpush.msra.mxu0 0.0
      %6377 = vmatpush.msra.mxu0 0.0
      %6378 = vmatpush.msra.mxu0 0.0
      %6379 = vmatpush.msra.mxu0 0.0
      %6380 = vmatpush.msra.mxu0 0.0
      %6381 = vmatpush.msra.mxu0 %v6146
      %6382 = vmatmul.f32.gmra.mxu0 %v6364
      %v6383 = vpop.f32.mrf.mxu0
      %v6384 = vadd.f32 0.0, %v6383
      %6385 = vdwg.mxu0
      %v6387 = vsel %vm1080, %v6338, 0
      %6389 = vmatpush.msra.mxu0 0.0
      %6390 = vmatpush.msra.mxu0 0.0
      %6391 = vmatpush.msra.mxu0 0.0
      %6392 = vmatpush.msra.mxu0 0.0
      %6393 = vmatpush.msra.mxu0 0.0
      %6394 = vmatpush.msra.mxu0 0.0
      %6395 = vmatpush.msra.mxu0 0.0
      %6396 = vmatpush.msra.mxu0 0.0
      %6397 = vmatpush.msra.mxu0 0.0
      %6398 = vmatpush.msra.mxu0 0.0
      %6399 = vmatpush.msra.mxu0 0.0
      %6400 = vmatpush.msra.mxu0 0.0
      %6401 = vmatpush.msra.mxu0 0.0
      %6402 = vmatpush.msra.mxu0 0.0
      %6403 = vmatpush.msra.mxu0 0.0
      %6404 = vmatpush.msra.mxu0 %v6166
      %6405 = vmatmul.f32.gmra.mxu0 %v6387
      %v6406 = vpop.f32.mrf.mxu0
      %v6407 = vadd.f32 0.0, %v6406
      %6408 = vdwg.mxu0
      %v6410 = vsel %vm1080, %v6339, 0
      %6412 = vmatpush.msra.mxu0 0.0
      %6413 = vmatpush.msra.mxu0 0.0
      %6414 = vmatpush.msra.mxu0 0.0
      %6415 = vmatpush.msra.mxu0 0.0
      %6416 = vmatpush.msra.mxu0 0.0
      %6417 = vmatpush.msra.mxu0 0.0
      %6418 = vmatpush.msra.mxu0 0.0
      %6419 = vmatpush.msra.mxu0 0.0
      %6420 = vmatpush.msra.mxu0 0.0
      %6421 = vmatpush.msra.mxu0 0.0
      %6422 = vmatpush.msra.mxu0 0.0
      %6423 = vmatpush.msra.mxu0 0.0
      %6424 = vmatpush.msra.mxu0 0.0
      %6425 = vmatpush.msra.mxu0 0.0
      %6426 = vmatpush.msra.mxu0 0.0
      %6427 = vmatpush.msra.mxu0 %v6186
      %6428 = vmatmul.f32.gmra.mxu0 %v6410
      %v6429 = vpop.f32.mrf.mxu0
      %v6430 = vadd.f32 0.0, %v6429
      %6431 = vdwg.mxu0
      %s6432 = scalar_lea.vmem %s8, 192
      %v6433 = vld [vmem:[%s6432] sm:$0xff]
      %v6434 = vld [vmem:[%s6432 + $0x8] sm:$0xff]
      %v6435 = vld [vmem:[%s6432 + $0x10] sm:$0xff]
      %v6436 = vld [vmem:[%s6432 + $0x18] sm:$0xff]
      %v6438 = vsel %vm1080, %v6361, 0
      %6440 = vmatpush.msra.mxu0 0.0
      %6441 = vmatpush.msra.mxu0 0.0
      %6442 = vmatpush.msra.mxu0 0.0
      %6443 = vmatpush.msra.mxu0 0.0
      %6444 = vmatpush.msra.mxu0 0.0
      %6445 = vmatpush.msra.mxu0 0.0
      %6446 = vmatpush.msra.mxu0 0.0
      %6447 = vmatpush.msra.mxu0 0.0
      %6448 = vmatpush.msra.mxu0 0.0
      %6449 = vmatpush.msra.mxu0 0.0
      %6450 = vmatpush.msra.mxu0 0.0
      %6451 = vmatpush.msra.mxu0 0.0
      %6452 = vmatpush.msra.mxu0 0.0
      %6453 = vmatpush.msra.mxu0 0.0
      %6454 = vmatpush.msra.mxu0 0.0
      %6455 = vmatpush.msra.mxu0 %v6433
      %6456 = vmatmul.f32.gmra.mxu0 %v6438
      %v6457 = vpop.f32.mrf.mxu0
      %v6458 = vadd.f32 0.0, %v6457
      %6459 = vdwg.mxu0
      %v6461 = vsel %vm1080, %v6384, 0
      %6463 = vmatpush.msra.mxu0 0.0
      %6464 = vmatpush.msra.mxu0 0.0
      %6465 = vmatpush.msra.mxu0 0.0
      %6466 = vmatpush.msra.mxu0 0.0
      %6467 = vmatpush.msra.mxu0 0.0
      %6468 = vmatpush.msra.mxu0 0.0
      %6469 = vmatpush.msra.mxu0 0.0
      %6470 = vmatpush.msra.mxu0 0.0
      %6471 = vmatpush.msra.mxu0 0.0
      %6472 = vmatpush.msra.mxu0 0.0
      %6473 = vmatpush.msra.mxu0 0.0
      %6474 = vmatpush.msra.mxu0 0.0
      %6475 = vmatpush.msra.mxu0 0.0
      %6476 = vmatpush.msra.mxu0 0.0
      %6477 = vmatpush.msra.mxu0 0.0
      %6478 = vmatpush.msra.mxu0 %v6434
      %6479 = vmatmul.f32.gmra.mxu0 %v6461
      %v6480 = vpop.f32.mrf.mxu0
      %v6481 = vadd.f32 0.0, %v6480
      %6482 = vdwg.mxu0
      %v6484 = vsel %vm1080, %v6407, 0
      %6486 = vmatpush.msra.mxu0 0.0
      %6487 = vmatpush.msra.mxu0 0.0
      %6488 = vmatpush.msra.mxu0 0.0
      %6489 = vmatpush.msra.mxu0 0.0
      %6490 = vmatpush.msra.mxu0 0.0
      %6491 = vmatpush.msra.mxu0 0.0
      %6492 = vmatpush.msra.mxu0 0.0
      %6493 = vmatpush.msra.mxu0 0.0
      %6494 = vmatpush.msra.mxu0 0.0
      %6495 = vmatpush.msra.mxu0 0.0
      %6496 = vmatpush.msra.mxu0 0.0
      %6497 = vmatpush.msra.mxu0 0.0
      %6498 = vmatpush.msra.mxu0 0.0
      %6499 = vmatpush.msra.mxu0 0.0
      %6500 = vmatpush.msra.mxu0 0.0
      %6501 = vmatpush.msra.mxu0 %v6435
      %6502 = vmatmul.f32.gmra.mxu0 %v6484
      %v6503 = vpop.f32.mrf.mxu0
      %v6504 = vadd.f32 0.0, %v6503
      %6505 = vdwg.mxu0
      %v6507 = vsel %vm1080, %v6430, 0
      %6509 = vmatpush.msra.mxu0 0.0
      %6510 = vmatpush.msra.mxu0 0.0
      %6511 = vmatpush.msra.mxu0 0.0
      %6512 = vmatpush.msra.mxu0 0.0
      %6513 = vmatpush.msra.mxu0 0.0
      %6514 = vmatpush.msra.mxu0 0.0
      %6515 = vmatpush.msra.mxu0 0.0
      %6516 = vmatpush.msra.mxu0 0.0
      %6517 = vmatpush.msra.mxu0 0.0
      %6518 = vmatpush.msra.mxu0 0.0
      %6519 = vmatpush.msra.mxu0 0.0
      %6520 = vmatpush.msra.mxu0 0.0
      %6521 = vmatpush.msra.mxu0 0.0
      %6522 = vmatpush.msra.mxu0 0.0
      %6523 = vmatpush.msra.mxu0 0.0
      %6524 = vmatpush.msra.mxu0 %v6436
      %6525 = vmatmul.f32.gmra.mxu0 %v6507
      %v6526 = vpop.f32.mrf.mxu0
      %v6527 = vadd.f32 0.0, %v6526
      %6528 = vdwg.mxu0
      %v6529 = vsel %vm771, %v6458, 0.0
      %v6530 = vsel %vm771, %v6481, 0.0
      %v6531 = vadd.f32 %v6529, %v6530
      %v6532 = vsel %vm771, %v6504, 0.0
      %v6533 = vadd.f32 %v6531, %v6532
      %v6534 = vsel %vm771, %v6527, 0.0
      %v6535 = vadd.f32 %v6533, %v6534
      %s6536 = scalar_lea.vmem %s9, 6
      %v6537 = vld [vmem:[%s6536] sm:$0x1]
      %v6539 = vperm.slane %v6537, 0
      %v6541 = vadd.f32 %v6535, %v6539
      %6543 = vrot.lane.b32.xlu0 %v6541, 32
      %v6544 = vpop.permute.xlu0 %6543
      %v6546 = vadd.f32 %v4163, %v6544
      %6548 = vrot.lane.b32.xlu0 %v6546, 96
      %v6549 = vpop.permute.xlu0 %6548
      %v6551 = vsel %vm771, %v6549, 0.0
      %6552 = vadd.xlane.f32.xlu0 %v6551
      %v6553 = vpop.xlane.xlu0 %6552
      %v6554 = vmul.f32 %v6553, %v1443
      %v6555 = vsub.f32 %v6546, %v6554
      %v6556 = vmul.f32 %v6555, %v6555
      %6558 = vrot.lane.b32.xlu0 %v6556, 96
      %v6559 = vpop.permute.xlu0 %6558
      %v6561 = vsel %vm771, %v6559, 0.0
      %6562 = vadd.xlane.f32.xlu0 %v6561
      %v6563 = vpop.xlane.xlu0 %6562
      %v6564 = vmul.f32 %v6563, %v1443
      %v6565 = vadd.f32 %v6564, 1e-05
      %v6566 = vrsqrt.pop %v6565
      %v6567 = vmul.f32 %v6566, %v6565
      %v6568 = vmul.f32 %v6567, %v6566
      %v6569 = vmul.f32 0.5, %v6568
      %v6570 = vsub.f32 1.5, %v6569
      %v6571 = vmul.f32 %v6566, %v6570
      %vm6572 = vweird.f32 %v6565
      %vm6573 = vweird.f32 %v6566
      %vm6574 = vmor %vm6572, %vm6573
      %v6575 = vsel %vm6574, %v6566, %v6571
      %v6576 = vmul.f32 %v6555, %v6575
      %s6577 = scalar_lea.vmem %s10, 6
      %v6578 = vld [vmem:[%s6577] sm:$0x1]
      %v6580 = vperm.slane %v6578, 0
      %6581 = vrot.lane.b32.xlu0 %v6580, 32
      %v6582 = vpop.permute.xlu0 %6581
      %v6584 = vmul.f32 %v6576, %v6582
      %s6585 = scalar_lea.vmem %s11, 6
      %v6586 = vld [vmem:[%s6585] sm:$0x1]
      %v6588 = vperm.slane %v6586, 0
      %6589 = vrot.lane.b32.xlu0 %v6588, 32
      %v6590 = vpop.permute.xlu0 %6589
      %v6592 = vadd.f32 %v6584, %v6590
      %s6593 = scalar_lea.vmem %s12, 192
      %v6594 = vld [vmem:[%s6593] sm:$0xff]
      %v6595 = vld [vmem:[%s6593 + $0x8] sm:$0xff]
      %v6596 = vld [vmem:[%s6593 + $0x10] sm:$0xff]
      %v6597 = vld [vmem:[%s6593 + $0x18] sm:$0xff]
      %s6598 = scalar_lea.vmem %s13, 6
      %v6599 = vld [vmem:[%s6598] sm:$0x1]
      %v6601 = vperm.slane %v6599, 0
      %6604 = vrot.lane.b32.xlu0 %v6592, 96
      %v6605 = vpop.permute.xlu0 %6604
      %v6606 = vsel %vm771, %v6605, 0
      %6608 = vmatpush.msra.mxu0 0.0
      %6609 = vmatpush.msra.mxu0 0.0
      %6610 = vmatpush.msra.mxu0 0.0
      %6611 = vmatpush.msra.mxu0 0.0
      %6612 = vmatpush.msra.mxu0 0.0
      %6613 = vmatpush.msra.mxu0 0.0
      %6614 = vmatpush.msra.mxu0 0.0
      %6615 = vmatpush.msra.mxu0 0.0
      %6616 = vmatpush.msra.mxu0 0.0
      %6617 = vmatpush.msra.mxu0 0.0
      %6618 = vmatpush.msra.mxu0 0.0
      %6619 = vmatpush.msra.mxu0 0.0
      %6620 = vmatpush.msra.mxu0 %v6597
      %6621 = vmatpush.msra.mxu0 %v6596
      %6622 = vmatpush.msra.mxu0 %v6595
      %6623 = vmatpush.msra.mxu0 %v6594
      %6624 = vmatmul.f32.gmra.mxu0 %v6606
      %v6625 = vpop.f32.mrf.mxu0
      %v6626 = vadd.f32 %v6601, %v6625
      %6627 = vdwg.mxu0
      %v6628 = vmax.f32 %v6626, 0.0
      %s6629 = scalar_lea.vmem %s14, 384
      %v6630 = vld [vmem:[%s6629] sm:$0xff]
      %v6631 = vld [vmem:[%s6629 + $0x8] sm:$0xff]
      %v6632 = vld [vmem:[%s6629 + $0x10] sm:$0xff]
      %v6633 = vld [vmem:[%s6629 + $0x18] sm:$0xff]
      %v6634 = vld [vmem:[%s6629 + $0x20] sm:$0xff]
      %v6635 = vld [vmem:[%s6629 + $0x28] sm:$0xff]
      %v6636 = vld [vmem:[%s6629 + $0x30] sm:$0xff]
      %v6637 = vld [vmem:[%s6629 + $0x38] sm:$0xff]
      %s6638 = scalar_lea.vmem %s15, 6
      %v6639 = vld [vmem:[%s6638] sm:$0x1]
      %v6641 = vperm.slane %v6639, 0
      %v6644 = vsel %vm1517, %v6628, 0
      %6646 = vmatpush.msra.mxu0 0.0
      %6647 = vmatpush.msra.mxu0 0.0
      %6648 = vmatpush.msra.mxu0 0.0
      %6649 = vmatpush.msra.mxu0 0.0
      %6650 = vmatpush.msra.mxu0 0.0
      %6651 = vmatpush.msra.mxu0 0.0
      %6652 = vmatpush.msra.mxu0 0.0
      %6653 = vmatpush.msra.mxu0 0.0
      %6654 = vmatpush.msra.mxu0 %v6637
      %6655 = vmatpush.msra.mxu0 %v6636
      %6656 = vmatpush.msra.mxu0 %v6635
      %6657 = vmatpush.msra.mxu0 %v6634
      %6658 = vmatpush.msra.mxu0 %v6633
      %6659 = vmatpush.msra.mxu0 %v6632
      %6660 = vmatpush.msra.mxu0 %v6631
      %6661 = vmatpush.msra.mxu0 %v6630
      %6662 = vmatmul.f32.gmra.mxu0 %v6644
      %v6663 = vpop.f32.mrf.mxu0
      %v6664 = vadd.f32 %v6641, %v6663
      %6665 = vdwg.mxu0
      %6667 = vrot.lane.b32.xlu0 %v6664, 32
      %v6668 = vpop.permute.xlu0 %6667
      %v6670 = vadd.f32 %v6592, %v6668
      %6672 = vrot.lane.b32.xlu0 %v6670, 96
      %v6673 = vpop.permute.xlu0 %6672
      %v6675 = vsel %vm771, %v6673, 0.0
      %6676 = vadd.xlane.f32.xlu0 %v6675
      %v6677 = vpop.xlane.xlu0 %6676
      %v6678 = vmul.f32 %v6677, %v1443
      %v6679 = vsub.f32 %v6670, %v6678
      %v6680 = vmul.f32 %v6679, %v6679
      %6682 = vrot.lane.b32.xlu0 %v6680, 96
      %v6683 = vpop.permute.xlu0 %6682
      %v6685 = vsel %vm771, %v6683, 0.0
      %6686 = vadd.xlane.f32.xlu0 %v6685
      %v6687 = vpop.xlane.xlu0 %6686
      %v6688 = vmul.f32 %v6687, %v1443
      %v6689 = vadd.f32 %v6688, 1e-05
      %v6690 = vrsqrt.pop %v6689
      %v6691 = vmul.f32 %v6690, %v6689
      %v6692 = vmul.f32 %v6691, %v6690
      %v6693 = vmul.f32 0.5, %v6692
      %v6694 = vsub.f32 1.5, %v6693
      %v6695 = vmul.f32 %v6690, %v6694
      %vm6696 = vweird.f32 %v6689
      %vm6697 = vweird.f32 %v6690
      %vm6698 = vmor %vm6696, %vm6697
      %v6699 = vsel %vm6698, %v6690, %v6695
      %v6700 = vmul.f32 %v6679, %v6699
      %s6701 = scalar_lea.vmem %s16, 6
      %v6702 = vld [vmem:[%s6701] sm:$0x1]
      %v6704 = vperm.slane %v6702, 0
      %6705 = vrot.lane.b32.xlu0 %v6704, 32
      %v6706 = vpop.permute.xlu0 %6705
      %v6708 = vmul.f32 %v6700, %v6706
      %s6709 = scalar_lea.vmem %s17, 6
      %v6710 = vld [vmem:[%s6709] sm:$0x1]
      %v6712 = vperm.slane %v6710, 0
      %6713 = vrot.lane.b32.xlu0 %v6712, 32
      %v6714 = vpop.permute.xlu0 %6713
      %v6716 = vadd.f32 %v6708, %v6714
      %s6717 = scalar_lea.vmem %s2, 896
      %v6718 = vld [vmem:[%s6717] sm:$0xff]
      %v6719 = vld [vmem:[%s6717 + $0x8] sm:$0xff]
      %v6720 = vld [vmem:[%s6717 + $0x10] sm:$0xff]
      %v6721 = vld [vmem:[%s6717 + $0x18] sm:$0xff]
      %v6722 = vld [vmem:[%s6717 + $0x20] sm:$0xff]
      %v6723 = vld [vmem:[%s6717 + $0x28] sm:$0xff]
      %v6724 = vld [vmem:[%s6717 + $0x30] sm:$0xff]
      %v6725 = vld [vmem:[%s6717 + $0x38] sm:$0xff]
      %v6726 = vld [vmem:[%s6717 + $0x40] sm:$0xff]
      %v6727 = vld [vmem:[%s6717 + $0x48] sm:$0xff]
      %v6728 = vld [vmem:[%s6717 + $0x50] sm:$0xff]
      %v6729 = vld [vmem:[%s6717 + $0x58] sm:$0xff]
      %v6730 = vld [vmem:[%s6717 + $0x60] sm:$0xff]
      %v6731 = vld [vmem:[%s6717 + $0x68] sm:$0xff]
      %v6732 = vld [vmem:[%s6717 + $0x70] sm:$0xff]
      %v6733 = vld [vmem:[%s6717 + $0x78] sm:$0xff]
      %s6734 = scalar_lea.vmem %s3, 28
      %v6735 = vld [vmem:[%s6734] sm:$0x1]
      %v6736 = vld [vmem:[%s6734 + $0x1] sm:$0x1]
      %v6737 = vld [vmem:[%s6734 + $0x2] sm:$0x1]
      %v6738 = vld [vmem:[%s6734 + $0x3] sm:$0x1]
      %v6743 = vperm.slane %v6735, 0
      %v6744 = vperm.slane %v6736, 0
      %v6745 = vperm.slane %v6737, 0
      %v6746 = vperm.slane %v6738, 0
      %6752 = vrot.lane.b32.xlu0 %v6716, 96
      %v6753 = vpop.permute.xlu0 %6752
      %v6754 = vsel %vm771, %v6753, 0
      %6756 = vmatpush.msra.mxu0 0.0
      %6757 = vmatpush.msra.mxu0 0.0
      %6758 = vmatpush.msra.mxu0 0.0
      %6759 = vmatpush.msra.mxu0 0.0
      %6760 = vmatpush.msra.mxu0 0.0
      %6761 = vmatpush.msra.mxu0 0.0
      %6762 = vmatpush.msra.mxu0 0.0
      %6763 = vmatpush.msra.mxu0 0.0
      %6764 = vmatpush.msra.mxu0 0.0
      %6765 = vmatpush.msra.mxu0 0.0
      %6766 = vmatpush.msra.mxu0 0.0
      %6767 = vmatpush.msra.mxu0 0.0
      %6768 = vmatpush.msra.mxu0 %v6721
      %6769 = vmatpush.msra.mxu0 %v6720
      %6770 = vmatpush.msra.mxu0 %v6719
      %6771 = vmatpush.msra.mxu0 %v6718
      %6772 = vmatmul.f32.gmra.mxu0 %v6754
      %v6773 = vpop.f32.mrf.mxu0
      %v6774 = vadd.f32 %v6743, %v6773
      %6775 = vdwg.mxu0
      %6776 = vmatpush.msra.mxu0 0.0
      %6777 = vmatpush.msra.mxu0 0.0
      %6778 = vmatpush.msra.mxu0 0.0
      %6779 = vmatpush.msra.mxu0 0.0
      %6780 = vmatpush.msra.mxu0 0.0
      %6781 = vmatpush.msra.mxu0 0.0
      %6782 = vmatpush.msra.mxu0 0.0
      %6783 = vmatpush.msra.mxu0 0.0
      %6784 = vmatpush.msra.mxu0 0.0
      %6785 = vmatpush.msra.mxu0 0.0
      %6786 = vmatpush.msra.mxu0 0.0
      %6787 = vmatpush.msra.mxu0 0.0
      %6788 = vmatpush.msra.mxu0 %v6725
      %6789 = vmatpush.msra.mxu0 %v6724
      %6790 = vmatpush.msra.mxu0 %v6723
      %6791 = vmatpush.msra.mxu0 %v6722
      %6792 = vmatmul.f32.gmra.mxu0 %v6754
      %v6793 = vpop.f32.mrf.mxu0
      %v6794 = vadd.f32 %v6744, %v6793
      %6795 = vdwg.mxu0
      %6796 = vmatpush.msra.mxu0 0.0
      %6797 = vmatpush.msra.mxu0 0.0
      %6798 = vmatpush.msra.mxu0 0.0
      %6799 = vmatpush.msra.mxu0 0.0
      %6800 = vmatpush.msra.mxu0 0.0
      %6801 = vmatpush.msra.mxu0 0.0
      %6802 = vmatpush.msra.mxu0 0.0
      %6803 = vmatpush.msra.mxu0 0.0
      %6804 = vmatpush.msra.mxu0 0.0
      %6805 = vmatpush.msra.mxu0 0.0
      %6806 = vmatpush.msra.mxu0 0.0
      %6807 = vmatpush.msra.mxu0 0.0
      %6808 = vmatpush.msra.mxu0 %v6729
      %6809 = vmatpush.msra.mxu0 %v6728
      %6810 = vmatpush.msra.mxu0 %v6727
      %6811 = vmatpush.msra.mxu0 %v6726
      %6812 = vmatmul.f32.gmra.mxu0 %v6754
      %v6813 = vpop.f32.mrf.mxu0
      %v6814 = vadd.f32 %v6745, %v6813
      %6815 = vdwg.mxu0
      %6816 = vmatpush.msra.mxu0 0.0
      %6817 = vmatpush.msra.mxu0 0.0
      %6818 = vmatpush.msra.mxu0 0.0
      %6819 = vmatpush.msra.mxu0 0.0
      %6820 = vmatpush.msra.mxu0 0.0
      %6821 = vmatpush.msra.mxu0 0.0
      %6822 = vmatpush.msra.mxu0 0.0
      %6823 = vmatpush.msra.mxu0 0.0
      %6824 = vmatpush.msra.mxu0 0.0
      %6825 = vmatpush.msra.mxu0 0.0
      %6826 = vmatpush.msra.mxu0 0.0
      %6827 = vmatpush.msra.mxu0 0.0
      %6828 = vmatpush.msra.mxu0 %v6733
      %6829 = vmatpush.msra.mxu0 %v6732
      %6830 = vmatpush.msra.mxu0 %v6731
      %6831 = vmatpush.msra.mxu0 %v6730
      %6832 = vmatmul.f32.gmra.mxu0 %v6754
      %v6833 = vpop.f32.mrf.mxu0
      %v6834 = vadd.f32 %v6746, %v6833
      %6835 = vdwg.mxu0
      %s6836 = scalar_lea.vmem %s4, 896
      %v6837 = vld [vmem:[%s6836] sm:$0xff]
      %v6838 = vld [vmem:[%s6836 + $0x8] sm:$0xff]
      %v6839 = vld [vmem:[%s6836 + $0x10] sm:$0xff]
      %v6840 = vld [vmem:[%s6836 + $0x18] sm:$0xff]
      %v6841 = vld [vmem:[%s6836 + $0x20] sm:$0xff]
      %v6842 = vld [vmem:[%s6836 + $0x28] sm:$0xff]
      %v6843 = vld [vmem:[%s6836 + $0x30] sm:$0xff]
      %v6844 = vld [vmem:[%s6836 + $0x38] sm:$0xff]
      %v6845 = vld [vmem:[%s6836 + $0x40] sm:$0xff]
      %v6846 = vld [vmem:[%s6836 + $0x48] sm:$0xff]
      %v6847 = vld [vmem:[%s6836 + $0x50] sm:$0xff]
      %v6848 = vld [vmem:[%s6836 + $0x58] sm:$0xff]
      %v6849 = vld [vmem:[%s6836 + $0x60] sm:$0xff]
      %v6850 = vld [vmem:[%s6836 + $0x68] sm:$0xff]
      %v6851 = vld [vmem:[%s6836 + $0x70] sm:$0xff]
      %v6852 = vld [vmem:[%s6836 + $0x78] sm:$0xff]
      %s6853 = scalar_lea.vmem %s5, 28
      %v6854 = vld [vmem:[%s6853] sm:$0x1]
      %v6855 = vld [vmem:[%s6853 + $0x1] sm:$0x1]
      %v6856 = vld [vmem:[%s6853 + $0x2] sm:$0x1]
      %v6857 = vld [vmem:[%s6853 + $0x3] sm:$0x1]
      %v6862 = vperm.slane %v6854, 0
      %v6863 = vperm.slane %v6855, 0
      %v6864 = vperm.slane %v6856, 0
      %v6865 = vperm.slane %v6857, 0
      %6870 = vmatpush.msra.mxu0 0.0
      %6871 = vmatpush.msra.mxu0 0.0
      %6872 = vmatpush.msra.mxu0 0.0
      %6873 = vmatpush.msra.mxu0 0.0
      %6874 = vmatpush.msra.mxu0 0.0
      %6875 = vmatpush.msra.mxu0 0.0
      %6876 = vmatpush.msra.mxu0 0.0
      %6877 = vmatpush.msra.mxu0 0.0
      %6878 = vmatpush.msra.mxu0 0.0
      %6879 = vmatpush.msra.mxu0 0.0
      %6880 = vmatpush.msra.mxu0 0.0
      %6881 = vmatpush.msra.mxu0 0.0
      %6882 = vmatpush.msra.mxu0 %v6840
      %6883 = vmatpush.msra.mxu0 %v6839
      %6884 = vmatpush.msra.mxu0 %v6838
      %6885 = vmatpush.msra.mxu0 %v6837
      %6886 = vmatmul.f32.gmra.mxu0 %v6754
      %v6887 = vpop.f32.mrf.mxu0
      %v6888 = vadd.f32 %v6862, %v6887
      %6889 = vdwg.mxu0
      %6890 = vmatpush.msra.mxu0 0.0
      %6891 = vmatpush.msra.mxu0 0.0
      %6892 = vmatpush.msra.mxu0 0.0
      %6893 = vmatpush.msra.mxu0 0.0
      %6894 = vmatpush.msra.mxu0 0.0
      %6895 = vmatpush.msra.mxu0 0.0
      %6896 = vmatpush.msra.mxu0 0.0
      %6897 = vmatpush.msra.mxu0 0.0
      %6898 = vmatpush.msra.mxu0 0.0
      %6899 = vmatpush.msra.mxu0 0.0
      %6900 = vmatpush.msra.mxu0 0.0
      %6901 = vmatpush.msra.mxu0 0.0
      %6902 = vmatpush.msra.mxu0 %v6844
      %6903 = vmatpush.msra.mxu0 %v6843
      %6904 = vmatpush.msra.mxu0 %v6842
      %6905 = vmatpush.msra.mxu0 %v6841
      %6906 = vmatmul.f32.gmra.mxu0 %v6754
      %v6907 = vpop.f32.mrf.mxu0
      %v6908 = vadd.f32 %v6863, %v6907
      %6909 = vdwg.mxu0
      %6910 = vmatpush.msra.mxu0 0.0
      %6911 = vmatpush.msra.mxu0 0.0
      %6912 = vmatpush.msra.mxu0 0.0
      %6913 = vmatpush.msra.mxu0 0.0
      %6914 = vmatpush.msra.mxu0 0.0
      %6915 = vmatpush.msra.mxu0 0.0
      %6916 = vmatpush.msra.mxu0 0.0
      %6917 = vmatpush.msra.mxu0 0.0
      %6918 = vmatpush.msra.mxu0 0.0
      %6919 = vmatpush.msra.mxu0 0.0
      %6920 = vmatpush.msra.mxu0 0.0
      %6921 = vmatpush.msra.mxu0 0.0
      %6922 = vmatpush.msra.mxu0 %v6848
      %6923 = vmatpush.msra.mxu0 %v6847
      %6924 = vmatpush.msra.mxu0 %v6846
      %6925 = vmatpush.msra.mxu0 %v6845
      %6926 = vmatmul.f32.gmra.mxu0 %v6754
      %v6927 = vpop.f32.mrf.mxu0
      %v6928 = vadd.f32 %v6864, %v6927
      %6929 = vdwg.mxu0
      %6930 = vmatpush.msra.mxu0 0.0
      %6931 = vmatpush.msra.mxu0 0.0
      %6932 = vmatpush.msra.mxu0 0.0
      %6933 = vmatpush.msra.mxu0 0.0
      %6934 = vmatpush.msra.mxu0 0.0
      %6935 = vmatpush.msra.mxu0 0.0
      %6936 = vmatpush.msra.mxu0 0.0
      %6937 = vmatpush.msra.mxu0 0.0
      %6938 = vmatpush.msra.mxu0 0.0
      %6939 = vmatpush.msra.mxu0 0.0
      %6940 = vmatpush.msra.mxu0 0.0
      %6941 = vmatpush.msra.mxu0 0.0
      %6942 = vmatpush.msra.mxu0 %v6852
      %6943 = vmatpush.msra.mxu0 %v6851
      %6944 = vmatpush.msra.mxu0 %v6850
      %6945 = vmatpush.msra.mxu0 %v6849
      %6946 = vmatmul.f32.gmra.mxu0 %v6754
      %v6947 = vpop.f32.mrf.mxu0
      %v6948 = vadd.f32 %v6865, %v6947
      %6949 = vdwg.mxu0
      %s6950 = scalar_lea.vmem %s6, 896
      %v6951 = vld [vmem:[%s6950] sm:$0xff]
      %v6952 = vld [vmem:[%s6950 + $0x8] sm:$0xff]
      %v6953 = vld [vmem:[%s6950 + $0x10] sm:$0xff]
      %v6954 = vld [vmem:[%s6950 + $0x18] sm:$0xff]
      %v6955 = vld [vmem:[%s6950 + $0x20] sm:$0xff]
      %v6956 = vld [vmem:[%s6950 + $0x28] sm:$0xff]
      %v6957 = vld [vmem:[%s6950 + $0x30] sm:$0xff]
      %v6958 = vld [vmem:[%s6950 + $0x38] sm:$0xff]
      %v6959 = vld [vmem:[%s6950 + $0x40] sm:$0xff]
      %v6960 = vld [vmem:[%s6950 + $0x48] sm:$0xff]
      %v6961 = vld [vmem:[%s6950 + $0x50] sm:$0xff]
      %v6962 = vld [vmem:[%s6950 + $0x58] sm:$0xff]
      %v6963 = vld [vmem:[%s6950 + $0x60] sm:$0xff]
      %v6964 = vld [vmem:[%s6950 + $0x68] sm:$0xff]
      %v6965 = vld [vmem:[%s6950 + $0x70] sm:$0xff]
      %v6966 = vld [vmem:[%s6950 + $0x78] sm:$0xff]
      %s6967 = scalar_lea.vmem %s7, 28
      %v6968 = vld [vmem:[%s6967] sm:$0x1]
      %v6969 = vld [vmem:[%s6967 + $0x1] sm:$0x1]
      %v6970 = vld [vmem:[%s6967 + $0x2] sm:$0x1]
      %v6971 = vld [vmem:[%s6967 + $0x3] sm:$0x1]
      %v6976 = vperm.slane %v6968, 0
      %v6977 = vperm.slane %v6969, 0
      %v6978 = vperm.slane %v6970, 0
      %v6979 = vperm.slane %v6971, 0
      %6984 = vmatpush.msra.mxu0 0.0
      %6985 = vmatpush.msra.mxu0 0.0
      %6986 = vmatpush.msra.mxu0 0.0
      %6987 = vmatpush.msra.mxu0 0.0
      %6988 = vmatpush.msra.mxu0 0.0
      %6989 = vmatpush.msra.mxu0 0.0
      %6990 = vmatpush.msra.mxu0 0.0
      %6991 = vmatpush.msra.mxu0 0.0
      %6992 = vmatpush.msra.mxu0 0.0
      %6993 = vmatpush.msra.mxu0 0.0
      %6994 = vmatpush.msra.mxu0 0.0
      %6995 = vmatpush.msra.mxu0 0.0
      %6996 = vmatpush.msra.mxu0 %v6954
      %6997 = vmatpush.msra.mxu0 %v6953
      %6998 = vmatpush.msra.mxu0 %v6952
      %6999 = vmatpush.msra.mxu0 %v6951
      %7000 = vmatmul.f32.gmra.mxu0 %v6754
      %v7001 = vpop.f32.mrf.mxu0
      %v7002 = vadd.f32 %v6976, %v7001
      %7003 = vdwg.mxu0
      %7004 = vmatpush.msra.mxu0 0.0
      %7005 = vmatpush.msra.mxu0 0.0
      %7006 = vmatpush.msra.mxu0 0.0
      %7007 = vmatpush.msra.mxu0 0.0
      %7008 = vmatpush.msra.mxu0 0.0
      %7009 = vmatpush.msra.mxu0 0.0
      %7010 = vmatpush.msra.mxu0 0.0
      %7011 = vmatpush.msra.mxu0 0.0
      %7012 = vmatpush.msra.mxu0 0.0
      %7013 = vmatpush.msra.mxu0 0.0
      %7014 = vmatpush.msra.mxu0 0.0
      %7015 = vmatpush.msra.mxu0 0.0
      %7016 = vmatpush.msra.mxu0 %v6958
      %7017 = vmatpush.msra.mxu0 %v6957
      %7018 = vmatpush.msra.mxu0 %v6956
      %7019 = vmatpush.msra.mxu0 %v6955
      %7020 = vmatmul.f32.gmra.mxu0 %v6754
      %v7021 = vpop.f32.mrf.mxu0
      %v7022 = vadd.f32 %v6977, %v7021
      %7023 = vdwg.mxu0
      %7024 = vmatpush.msra.mxu0 0.0
      %7025 = vmatpush.msra.mxu0 0.0
      %7026 = vmatpush.msra.mxu0 0.0
      %7027 = vmatpush.msra.mxu0 0.0
      %7028 = vmatpush.msra.mxu0 0.0
      %7029 = vmatpush.msra.mxu0 0.0
      %7030 = vmatpush.msra.mxu0 0.0
      %7031 = vmatpush.msra.mxu0 0.0
      %7032 = vmatpush.msra.mxu0 0.0
      %7033 = vmatpush.msra.mxu0 0.0
      %7034 = vmatpush.msra.mxu0 0.0
      %7035 = vmatpush.msra.mxu0 0.0
      %7036 = vmatpush.msra.mxu0 %v6962
      %7037 = vmatpush.msra.mxu0 %v6961
      %7038 = vmatpush.msra.mxu0 %v6960
      %7039 = vmatpush.msra.mxu0 %v6959
      %7040 = vmatmul.f32.gmra.mxu0 %v6754
      %v7041 = vpop.f32.mrf.mxu0
      %v7042 = vadd.f32 %v6978, %v7041
      %7043 = vdwg.mxu0
      %7044 = vmatpush.msra.mxu0 0.0
      %7045 = vmatpush.msra.mxu0 0.0
      %7046 = vmatpush.msra.mxu0 0.0
      %7047 = vmatpush.msra.mxu0 0.0
      %7048 = vmatpush.msra.mxu0 0.0
      %7049 = vmatpush.msra.mxu0 0.0
      %7050 = vmatpush.msra.mxu0 0.0
      %7051 = vmatpush.msra.mxu0 0.0
      %7052 = vmatpush.msra.mxu0 0.0
      %7053 = vmatpush.msra.mxu0 0.0
      %7054 = vmatpush.msra.mxu0 0.0
      %7055 = vmatpush.msra.mxu0 0.0
      %7056 = vmatpush.msra.mxu0 %v6966
      %7057 = vmatpush.msra.mxu0 %v6965
      %7058 = vmatpush.msra.mxu0 %v6964
      %7059 = vmatpush.msra.mxu0 %v6963
      %7060 = vmatmul.f32.gmra.mxu0 %v6754
      %v7061 = vpop.f32.mrf.mxu0
      %v7062 = vadd.f32 %v6979, %v7061
      %7063 = vdwg.mxu0
      %v7065 = vsel %vm1080, %v6774, 0
      %v7068 = vsel %vm1080, %v6888, 0
      %7070 = vmatpush.xpose.msra.mxu0 0.0
      %7071 = vmatpush.xpose.msra.mxu0 0.0
      %7072 = vmatpush.xpose.msra.mxu0 0.0
      %7073 = vmatpush.xpose.msra.mxu0 0.0
      %7074 = vmatpush.xpose.msra.mxu0 0.0
      %7075 = vmatpush.xpose.msra.mxu0 0.0
      %7076 = vmatpush.xpose.msra.mxu0 0.0
      %7077 = vmatpush.xpose.msra.mxu0 0.0
      %7078 = vmatpush.xpose.msra.mxu0 0.0
      %7079 = vmatpush.xpose.msra.mxu0 0.0
      %7080 = vmatpush.xpose.msra.mxu0 0.0
      %7081 = vmatpush.xpose.msra.mxu0 0.0
      %7082 = vmatpush.xpose.msra.mxu0 0.0
      %7083 = vmatpush.xpose.msra.mxu0 0.0
      %7084 = vmatpush.xpose.msra.mxu0 0.0
      %7085 = vmatpush.xpose.msra.mxu0 %v7068
      %7086 = vmatmul.f32.gmra.mxu0 %v7065
      %v7087 = vpop.f32.mrf.mxu0
      %v7088 = vadd.f32 0.0, %v7087
      %7089 = vdwg.mxu0
      %v7091 = vsel %vm1080, %v6794, 0
      %v7094 = vsel %vm1080, %v6908, 0
      %7096 = vmatpush.xpose.msra.mxu0 0.0
      %7097 = vmatpush.xpose.msra.mxu0 0.0
      %7098 = vmatpush.xpose.msra.mxu0 0.0
      %7099 = vmatpush.xpose.msra.mxu0 0.0
      %7100 = vmatpush.xpose.msra.mxu0 0.0
      %7101 = vmatpush.xpose.msra.mxu0 0.0
      %7102 = vmatpush.xpose.msra.mxu0 0.0
      %7103 = vmatpush.xpose.msra.mxu0 0.0
      %7104 = vmatpush.xpose.msra.mxu0 0.0
      %7105 = vmatpush.xpose.msra.mxu0 0.0
      %7106 = vmatpush.xpose.msra.mxu0 0.0
      %7107 = vmatpush.xpose.msra.mxu0 0.0
      %7108 = vmatpush.xpose.msra.mxu0 0.0
      %7109 = vmatpush.xpose.msra.mxu0 0.0
      %7110 = vmatpush.xpose.msra.mxu0 0.0
      %7111 = vmatpush.xpose.msra.mxu0 %v7094
      %7112 = vmatmul.f32.gmra.mxu0 %v7091
      %v7113 = vpop.f32.mrf.mxu0
      %v7114 = vadd.f32 0.0, %v7113
      %7115 = vdwg.mxu0
      %v7117 = vsel %vm1080, %v6814, 0
      %v7120 = vsel %vm1080, %v6928, 0
      %7122 = vmatpush.xpose.msra.mxu0 0.0
      %7123 = vmatpush.xpose.msra.mxu0 0.0
      %7124 = vmatpush.xpose.msra.mxu0 0.0
      %7125 = vmatpush.xpose.msra.mxu0 0.0
      %7126 = vmatpush.xpose.msra.mxu0 0.0
      %7127 = vmatpush.xpose.msra.mxu0 0.0
      %7128 = vmatpush.xpose.msra.mxu0 0.0
      %7129 = vmatpush.xpose.msra.mxu0 0.0
      %7130 = vmatpush.xpose.msra.mxu0 0.0
      %7131 = vmatpush.xpose.msra.mxu0 0.0
      %7132 = vmatpush.xpose.msra.mxu0 0.0
      %7133 = vmatpush.xpose.msra.mxu0 0.0
      %7134 = vmatpush.xpose.msra.mxu0 0.0
      %7135 = vmatpush.xpose.msra.mxu0 0.0
      %7136 = vmatpush.xpose.msra.mxu0 0.0
      %7137 = vmatpush.xpose.msra.mxu0 %v7120
      %7138 = vmatmul.f32.gmra.mxu0 %v7117
      %v7139 = vpop.f32.mrf.mxu0
      %v7140 = vadd.f32 0.0, %v7139
      %7141 = vdwg.mxu0
      %v7143 = vsel %vm1080, %v6834, 0
      %v7146 = vsel %vm1080, %v6948, 0
      %7148 = vmatpush.xpose.msra.mxu0 0.0
      %7149 = vmatpush.xpose.msra.mxu0 0.0
      %7150 = vmatpush.xpose.msra.mxu0 0.0
      %7151 = vmatpush.xpose.msra.mxu0 0.0
      %7152 = vmatpush.xpose.msra.mxu0 0.0
      %7153 = vmatpush.xpose.msra.mxu0 0.0
      %7154 = vmatpush.xpose.msra.mxu0 0.0
      %7155 = vmatpush.xpose.msra.mxu0 0.0
      %7156 = vmatpush.xpose.msra.mxu0 0.0
      %7157 = vmatpush.xpose.msra.mxu0 0.0
      %7158 = vmatpush.xpose.msra.mxu0 0.0
      %7159 = vmatpush.xpose.msra.mxu0 0.0
      %7160 = vmatpush.xpose.msra.mxu0 0.0
      %7161 = vmatpush.xpose.msra.mxu0 0.0
      %7162 = vmatpush.xpose.msra.mxu0 0.0
      %7163 = vmatpush.xpose.msra.mxu0 %v7146
      %7164 = vmatmul.f32.gmra.mxu0 %v7143
      %v7165 = vpop.f32.mrf.mxu0
      %v7166 = vadd.f32 0.0, %v7165
      %7167 = vdwg.mxu0
      %v7168 = vmul.f32 %v7088, 0.35355338
      %v7169 = vmul.f32 %v7114, 0.35355338
      %v7170 = vmul.f32 %v7140, 0.35355338
      %v7171 = vmul.f32 %v7166, 0.35355338
      %v7172 = vsel %vm1080, %v7168, -inf
      %7173 = vmax.xlane.f32.xlu0 %v7172
      %v7174 = vpop.xlane.xlu0 %7173
      %v7175 = vsel %vm1080, %v7169, -inf
      %7176 = vmax.xlane.f32.xlu0 %v7175
      %v7177 = vpop.xlane.xlu0 %7176
      %v7178 = vsel %vm1080, %v7170, -inf
      %7179 = vmax.xlane.f32.xlu0 %v7178
      %v7180 = vpop.xlane.xlu0 %7179
      %v7181 = vsel %vm1080, %v7171, -inf
      %7182 = vmax.xlane.f32.xlu0 %v7181
      %v7183 = vpop.xlane.xlu0 %7182
      %v7184 = vsub.f32 %v7168, %v7174
      %v7185 = vsub.f32 %v7169, %v7177
      %v7186 = vsub.f32 %v7170, %v7180
      %v7187 = vsub.f32 %v7171, %v7183
      %v7188 = vmul.f32 %v7184, 1.442695
      %v7189 = vpow.pop %v7188
      %v7190 = vmul.f32 %v7185, 1.442695
      %v7191 = vpow.pop %v7190
      %v7192 = vmul.f32 %v7186, 1.442695
      %v7193 = vpow.pop %v7192
      %v7194 = vmul.f32 %v7187, 1.442695
      %v7195 = vpow.pop %v7194
      %v7196 = vsel %vm1080, %v7189, 0.0
      %7197 = vadd.xlane.f32.xlu0 %v7196
      %v7198 = vpop.xlane.xlu0 %7197
      %v7199 = vsel %vm1080, %v7191, 0.0
      %7200 = vadd.xlane.f32.xlu0 %v7199
      %v7201 = vpop.xlane.xlu0 %7200
      %v7202 = vsel %vm1080, %v7193, 0.0
      %7203 = vadd.xlane.f32.xlu0 %v7202
      %v7204 = vpop.xlane.xlu0 %7203
      %v7205 = vsel %vm1080, %v7195, 0.0
      %7206 = vadd.xlane.f32.xlu0 %v7205
      %v7207 = vpop.xlane.xlu0 %7206
      %v7208 = vrcp.pop %v7198
      %v7209 = vrcp.pop %v7201
      %v7210 = vrcp.pop %v7204
      %v7211 = vrcp.pop %v7207
      %v7212 = vmul.f32 %v7189, %v7208
      %v7213 = vmul.f32 %v7191, %v7209
      %v7214 = vmul.f32 %v7193, %v7210
      %v7215 = vmul.f32 %v7195, %v7211
      %v7217 = vsel %vm1080, %v7212, 0
      %7219 = vmatpush.msra.mxu0 0.0
      %7220 = vmatpush.msra.mxu0 0.0
      %7221 = vmatpush.msra.mxu0 0.0
      %7222 = vmatpush.msra.mxu0 0.0
      %7223 = vmatpush.msra.mxu0 0.0
      %7224 = vmatpush.msra.mxu0 0.0
      %7225 = vmatpush.msra.mxu0 0.0
      %7226 = vmatpush.msra.mxu0 0.0
      %7227 = vmatpush.msra.mxu0 0.0
      %7228 = vmatpush.msra.mxu0 0.0
      %7229 = vmatpush.msra.mxu0 0.0
      %7230 = vmatpush.msra.mxu0 0.0
      %7231 = vmatpush.msra.mxu0 0.0
      %7232 = vmatpush.msra.mxu0 0.0
      %7233 = vmatpush.msra.mxu0 0.0
      %7234 = vmatpush.msra.mxu0 %v7002
      %7235 = vmatmul.f32.gmra.mxu0 %v7217
      %v7236 = vpop.f32.mrf.mxu0
      %v7237 = vadd.f32 0.0, %v7236
      %7238 = vdwg.mxu0
      %v7240 = vsel %vm1080, %v7213, 0
      %7242 = vmatpush.msra.mxu0 0.0
      %7243 = vmatpush.msra.mxu0 0.0
      %7244 = vmatpush.msra.mxu0 0.0
      %7245 = vmatpush.msra.mxu0 0.0
      %7246 = vmatpush.msra.mxu0 0.0
      %7247 = vmatpush.msra.mxu0 0.0
      %7248 = vmatpush.msra.mxu0 0.0
      %7249 = vmatpush.msra.mxu0 0.0
      %7250 = vmatpush.msra.mxu0 0.0
      %7251 = vmatpush.msra.mxu0 0.0
      %7252 = vmatpush.msra.mxu0 0.0
      %7253 = vmatpush.msra.mxu0 0.0
      %7254 = vmatpush.msra.mxu0 0.0
      %7255 = vmatpush.msra.mxu0 0.0
      %7256 = vmatpush.msra.mxu0 0.0
      %7257 = vmatpush.msra.mxu0 %v7022
      %7258 = vmatmul.f32.gmra.mxu0 %v7240
      %v7259 = vpop.f32.mrf.mxu0
      %v7260 = vadd.f32 0.0, %v7259
      %7261 = vdwg.mxu0
      %v7263 = vsel %vm1080, %v7214, 0
      %7265 = vmatpush.msra.mxu0 0.0
      %7266 = vmatpush.msra.mxu0 0.0
      %7267 = vmatpush.msra.mxu0 0.0
      %7268 = vmatpush.msra.mxu0 0.0
      %7269 = vmatpush.msra.mxu0 0.0
      %7270 = vmatpush.msra.mxu0 0.0
      %7271 = vmatpush.msra.mxu0 0.0
      %7272 = vmatpush.msra.mxu0 0.0
      %7273 = vmatpush.msra.mxu0 0.0
      %7274 = vmatpush.msra.mxu0 0.0
      %7275 = vmatpush.msra.mxu0 0.0
      %7276 = vmatpush.msra.mxu0 0.0
      %7277 = vmatpush.msra.mxu0 0.0
      %7278 = vmatpush.msra.mxu0 0.0
      %7279 = vmatpush.msra.mxu0 0.0
      %7280 = vmatpush.msra.mxu0 %v7042
      %7281 = vmatmul.f32.gmra.mxu0 %v7263
      %v7282 = vpop.f32.mrf.mxu0
      %v7283 = vadd.f32 0.0, %v7282
      %7284 = vdwg.mxu0
      %v7286 = vsel %vm1080, %v7215, 0
      %7288 = vmatpush.msra.mxu0 0.0
      %7289 = vmatpush.msra.mxu0 0.0
      %7290 = vmatpush.msra.mxu0 0.0
      %7291 = vmatpush.msra.mxu0 0.0
      %7292 = vmatpush.msra.mxu0 0.0
      %7293 = vmatpush.msra.mxu0 0.0
      %7294 = vmatpush.msra.mxu0 0.0
      %7295 = vmatpush.msra.mxu0 0.0
      %7296 = vmatpush.msra.mxu0 0.0
      %7297 = vmatpush.msra.mxu0 0.0
      %7298 = vmatpush.msra.mxu0 0.0
      %7299 = vmatpush.msra.mxu0 0.0
      %7300 = vmatpush.msra.mxu0 0.0
      %7301 = vmatpush.msra.mxu0 0.0
      %7302 = vmatpush.msra.mxu0 0.0
      %7303 = vmatpush.msra.mxu0 %v7062
      %7304 = vmatmul.f32.gmra.mxu0 %v7286
      %v7305 = vpop.f32.mrf.mxu0
      %v7306 = vadd.f32 0.0, %v7305
      %7307 = vdwg.mxu0
      %s7308 = scalar_lea.vmem %s8, 224
      %v7309 = vld [vmem:[%s7308] sm:$0xff]
      %v7310 = vld [vmem:[%s7308 + $0x8] sm:$0xff]
      %v7311 = vld [vmem:[%s7308 + $0x10] sm:$0xff]
      %v7312 = vld [vmem:[%s7308 + $0x18] sm:$0xff]
      %v7314 = vsel %vm1080, %v7237, 0
      %7316 = vmatpush.msra.mxu0 0.0
      %7317 = vmatpush.msra.mxu0 0.0
      %7318 = vmatpush.msra.mxu0 0.0
      %7319 = vmatpush.msra.mxu0 0.0
      %7320 = vmatpush.msra.mxu0 0.0
      %7321 = vmatpush.msra.mxu0 0.0
      %7322 = vmatpush.msra.mxu0 0.0
      %7323 = vmatpush.msra.mxu0 0.0
      %7324 = vmatpush.msra.mxu0 0.0
      %7325 = vmatpush.msra.mxu0 0.0
      %7326 = vmatpush.msra.mxu0 0.0
      %7327 = vmatpush.msra.mxu0 0.0
      %7328 = vmatpush.msra.mxu0 0.0
      %7329 = vmatpush.msra.mxu0 0.0
      %7330 = vmatpush.msra.mxu0 0.0
      %7331 = vmatpush.msra.mxu0 %v7309
      %7332 = vmatmul.f32.gmra.mxu0 %v7314
      %v7333 = vpop.f32.mrf.mxu0
      %v7334 = vadd.f32 0.0, %v7333
      %7335 = vdwg.mxu0
      %v7337 = vsel %vm1080, %v7260, 0
      %7339 = vmatpush.msra.mxu0 0.0
      %7340 = vmatpush.msra.mxu0 0.0
      %7341 = vmatpush.msra.mxu0 0.0
      %7342 = vmatpush.msra.mxu0 0.0
      %7343 = vmatpush.msra.mxu0 0.0
      %7344 = vmatpush.msra.mxu0 0.0
      %7345 = vmatpush.msra.mxu0 0.0
      %7346 = vmatpush.msra.mxu0 0.0
      %7347 = vmatpush.msra.mxu0 0.0
      %7348 = vmatpush.msra.mxu0 0.0
      %7349 = vmatpush.msra.mxu0 0.0
      %7350 = vmatpush.msra.mxu0 0.0
      %7351 = vmatpush.msra.mxu0 0.0
      %7352 = vmatpush.msra.mxu0 0.0
      %7353 = vmatpush.msra.mxu0 0.0
      %7354 = vmatpush.msra.mxu0 %v7310
      %7355 = vmatmul.f32.gmra.mxu0 %v7337
      %v7356 = vpop.f32.mrf.mxu0
      %v7357 = vadd.f32 0.0, %v7356
      %7358 = vdwg.mxu0
      %v7360 = vsel %vm1080, %v7283, 0
      %7362 = vmatpush.msra.mxu0 0.0
      %7363 = vmatpush.msra.mxu0 0.0
      %7364 = vmatpush.msra.mxu0 0.0
      %7365 = vmatpush.msra.mxu0 0.0
      %7366 = vmatpush.msra.mxu0 0.0
      %7367 = vmatpush.msra.mxu0 0.0
      %7368 = vmatpush.msra.mxu0 0.0
      %7369 = vmatpush.msra.mxu0 0.0
      %7370 = vmatpush.msra.mxu0 0.0
      %7371 = vmatpush.msra.mxu0 0.0
      %7372 = vmatpush.msra.mxu0 0.0
      %7373 = vmatpush.msra.mxu0 0.0
      %7374 = vmatpush.msra.mxu0 0.0
      %7375 = vmatpush.msra.mxu0 0.0
      %7376 = vmatpush.msra.mxu0 0.0
      %7377 = vmatpush.msra.mxu0 %v7311
      %7378 = vmatmul.f32.gmra.mxu0 %v7360
      %v7379 = vpop.f32.mrf.mxu0
      %v7380 = vadd.f32 0.0, %v7379
      %7381 = vdwg.mxu0
      %v7383 = vsel %vm1080, %v7306, 0
      %7385 = vmatpush.msra.mxu0 0.0
      %7386 = vmatpush.msra.mxu0 0.0
      %7387 = vmatpush.msra.mxu0 0.0
      %7388 = vmatpush.msra.mxu0 0.0
      %7389 = vmatpush.msra.mxu0 0.0
      %7390 = vmatpush.msra.mxu0 0.0
      %7391 = vmatpush.msra.mxu0 0.0
      %7392 = vmatpush.msra.mxu0 0.0
      %7393 = vmatpush.msra.mxu0 0.0
      %7394 = vmatpush.msra.mxu0 0.0
      %7395 = vmatpush.msra.mxu0 0.0
      %7396 = vmatpush.msra.mxu0 0.0
      %7397 = vmatpush.msra.mxu0 0.0
      %7398 = vmatpush.msra.mxu0 0.0
      %7399 = vmatpush.msra.mxu0 0.0
      %7400 = vmatpush.msra.mxu0 %v7312
      %7401 = vmatmul.f32.gmra.mxu0 %v7383
      %v7402 = vpop.f32.mrf.mxu0
      %v7403 = vadd.f32 0.0, %v7402
      %7404 = vdwg.mxu0
      %v7405 = vsel %vm771, %v7334, 0.0
      %v7406 = vsel %vm771, %v7357, 0.0
      %v7407 = vadd.f32 %v7405, %v7406
      %v7408 = vsel %vm771, %v7380, 0.0
      %v7409 = vadd.f32 %v7407, %v7408
      %v7410 = vsel %vm771, %v7403, 0.0
      %v7411 = vadd.f32 %v7409, %v7410
      %s7412 = scalar_lea.vmem %s9, 7
      %v7413 = vld [vmem:[%s7412] sm:$0x1]
      %v7415 = vperm.slane %v7413, 0
      %v7417 = vadd.f32 %v7411, %v7415
      %7419 = vrot.lane.b32.xlu0 %v7417, 32
      %v7420 = vpop.permute.xlu0 %7419
      %v7422 = vadd.f32 %v6716, %v7420
      %7424 = vrot.lane.b32.xlu0 %v7422, 96
      %v7425 = vpop.permute.xlu0 %7424
      %v7427 = vsel %vm771, %v7425, 0.0
      %7428 = vadd.xlane.f32.xlu0 %v7427
      %v7429 = vpop.xlane.xlu0 %7428
      %v7430 = vmul.f32 %v7429, %v1443
      %v7431 = vsub.f32 %v7422, %v7430
      %v7432 = vmul.f32 %v7431, %v7431
      %7434 = vrot.lane.b32.xlu0 %v7432, 96
      %v7435 = vpop.permute.xlu0 %7434
      %v7437 = vsel %vm771, %v7435, 0.0
      %7438 = vadd.xlane.f32.xlu0 %v7437
      %v7439 = vpop.xlane.xlu0 %7438
      %v7440 = vmul.f32 %v7439, %v1443
      %v7441 = vadd.f32 %v7440, 1e-05
      %v7442 = vrsqrt.pop %v7441
      %v7443 = vmul.f32 %v7442, %v7441
      %v7444 = vmul.f32 %v7443, %v7442
      %v7445 = vmul.f32 0.5, %v7444
      %v7446 = vsub.f32 1.5, %v7445
      %v7447 = vmul.f32 %v7442, %v7446
      %vm7448 = vweird.f32 %v7441
      %vm7449 = vweird.f32 %v7442
      %vm7450 = vmor %vm7448, %vm7449
      %v7451 = vsel %vm7450, %v7442, %v7447
      %v7452 = vmul.f32 %v7431, %v7451
      %s7453 = scalar_lea.vmem %s10, 7
      %v7454 = vld [vmem:[%s7453] sm:$0x1]
      %v7456 = vperm.slane %v7454, 0
      %7457 = vrot.lane.b32.xlu0 %v7456, 32
      %v7458 = vpop.permute.xlu0 %7457
      %v7460 = vmul.f32 %v7452, %v7458
      %s7461 = scalar_lea.vmem %s11, 7
      %v7462 = vld [vmem:[%s7461] sm:$0x1]
      %v7464 = vperm.slane %v7462, 0
      %7465 = vrot.lane.b32.xlu0 %v7464, 32
      %v7466 = vpop.permute.xlu0 %7465
      %v7468 = vadd.f32 %v7460, %v7466
      %s7469 = scalar_lea.vmem %s12, 224
      %v7470 = vld [vmem:[%s7469] sm:$0xff]
      %v7471 = vld [vmem:[%s7469 + $0x8] sm:$0xff]
      %v7472 = vld [vmem:[%s7469 + $0x10] sm:$0xff]
      %v7473 = vld [vmem:[%s7469 + $0x18] sm:$0xff]
      %s7474 = scalar_lea.vmem %s13, 7
      %v7475 = vld [vmem:[%s7474] sm:$0x1]
      %v7477 = vperm.slane %v7475, 0
      %7480 = vrot.lane.b32.xlu0 %v7468, 96
      %v7481 = vpop.permute.xlu0 %7480
      %v7482 = vsel %vm771, %v7481, 0
      %7484 = vmatpush.msra.mxu0 0.0
      %7485 = vmatpush.msra.mxu0 0.0
      %7486 = vmatpush.msra.mxu0 0.0
      %7487 = vmatpush.msra.mxu0 0.0
      %7488 = vmatpush.msra.mxu0 0.0
      %7489 = vmatpush.msra.mxu0 0.0
      %7490 = vmatpush.msra.mxu0 0.0
      %7491 = vmatpush.msra.mxu0 0.0
      %7492 = vmatpush.msra.mxu0 0.0
      %7493 = vmatpush.msra.mxu0 0.0
      %7494 = vmatpush.msra.mxu0 0.0
      %7495 = vmatpush.msra.mxu0 0.0
      %7496 = vmatpush.msra.mxu0 %v7473
      %7497 = vmatpush.msra.mxu0 %v7472
      %7498 = vmatpush.msra.mxu0 %v7471
      %7499 = vmatpush.msra.mxu0 %v7470
      %7500 = vmatmul.f32.gmra.mxu0 %v7482
      %v7501 = vpop.f32.mrf.mxu0
      %v7502 = vadd.f32 %v7477, %v7501
      %7503 = vdwg.mxu0
      %v7504 = vmax.f32 %v7502, 0.0
      %s7505 = scalar_lea.vmem %s14, 448
      %v7506 = vld [vmem:[%s7505] sm:$0xff]
      %v7507 = vld [vmem:[%s7505 + $0x8] sm:$0xff]
      %v7508 = vld [vmem:[%s7505 + $0x10] sm:$0xff]
      %v7509 = vld [vmem:[%s7505 + $0x18] sm:$0xff]
      %v7510 = vld [vmem:[%s7505 + $0x20] sm:$0xff]
      %v7511 = vld [vmem:[%s7505 + $0x28] sm:$0xff]
      %v7512 = vld [vmem:[%s7505 + $0x30] sm:$0xff]
      %v7513 = vld [vmem:[%s7505 + $0x38] sm:$0xff]
      %s7514 = scalar_lea.vmem %s15, 7
      %v7515 = vld [vmem:[%s7514] sm:$0x1]
      %v7517 = vperm.slane %v7515, 0
      %v7520 = vsel %vm1517, %v7504, 0
      %7522 = vmatpush.msra.mxu0 0.0
      %7523 = vmatpush.msra.mxu0 0.0
      %7524 = vmatpush.msra.mxu0 0.0
      %7525 = vmatpush.msra.mxu0 0.0
      %7526 = vmatpush.msra.mxu0 0.0
      %7527 = vmatpush.msra.mxu0 0.0
      %7528 = vmatpush.msra.mxu0 0.0
      %7529 = vmatpush.msra.mxu0 0.0
      %7530 = vmatpush.msra.mxu0 %v7513
      %7531 = vmatpush.msra.mxu0 %v7512
      %7532 = vmatpush.msra.mxu0 %v7511
      %7533 = vmatpush.msra.mxu0 %v7510
      %7534 = vmatpush.msra.mxu0 %v7509
      %7535 = vmatpush.msra.mxu0 %v7508
      %7536 = vmatpush.msra.mxu0 %v7507
      %7537 = vmatpush.msra.mxu0 %v7506
      %7538 = vmatmul.f32.gmra.mxu0 %v7520
      %v7539 = vpop.f32.mrf.mxu0
      %v7540 = vadd.f32 %v7517, %v7539
      %7541 = vdwg.mxu0
      %7543 = vrot.lane.b32.xlu0 %v7540, 32
      %v7544 = vpop.permute.xlu0 %7543
      %v7546 = vadd.f32 %v7468, %v7544
      %7548 = vrot.lane.b32.xlu0 %v7546, 96
      %v7549 = vpop.permute.xlu0 %7548
      %v7551 = vsel %vm771, %v7549, 0.0
      %7552 = vadd.xlane.f32.xlu0 %v7551
      %v7553 = vpop.xlane.xlu0 %7552
      %v7554 = vmul.f32 %v7553, %v1443
      %v7555 = vsub.f32 %v7546, %v7554
      %v7556 = vmul.f32 %v7555, %v7555
      %7558 = vrot.lane.b32.xlu0 %v7556, 96
      %v7559 = vpop.permute.xlu0 %7558
      %v7561 = vsel %vm771, %v7559, 0.0
      %7562 = vadd.xlane.f32.xlu0 %v7561
      %v7563 = vpop.xlane.xlu0 %7562
      %v7564 = vmul.f32 %v7563, %v1443
      %v7565 = vadd.f32 %v7564, 1e-05
      %v7566 = vrsqrt.pop %v7565
      %v7567 = vmul.f32 %v7566, %v7565
      %v7568 = vmul.f32 %v7567, %v7566
      %v7569 = vmul.f32 0.5, %v7568
      %v7570 = vsub.f32 1.5, %v7569
      %v7571 = vmul.f32 %v7566, %v7570
      %vm7572 = vweird.f32 %v7565
      %vm7573 = vweird.f32 %v7566
      %vm7574 = vmor %vm7572, %vm7573
      %v7575 = vsel %vm7574, %v7566, %v7571
      %v7576 = vmul.f32 %v7555, %v7575
      %s7577 = scalar_lea.vmem %s16, 7
      %v7578 = vld [vmem:[%s7577] sm:$0x1]
      %v7580 = vperm.slane %v7578, 0
      %7581 = vrot.lane.b32.xlu0 %v7580, 32
      %v7582 = vpop.permute.xlu0 %7581
      %v7584 = vmul.f32 %v7576, %v7582
      %s7585 = scalar_lea.vmem %s17, 7
      %v7586 = vld [vmem:[%s7585] sm:$0x1]
      %v7588 = vperm.slane %v7586, 0
      %7589 = vrot.lane.b32.xlu0 %v7588, 32
      %v7590 = vpop.permute.xlu0 %7589
      %v7592 = vadd.f32 %v7584, %v7590
      %v7593 = vsel %vm771, %v5840, %v7592
      %v7594 = vld [vmem:[%s18] sm:$0xff]
      %v7595 = vld [vmem:[%s18 + $0x8] sm:$0xff]
      %v7596 = vld [vmem:[%s18 + $0x10] sm:$0xff]
      %v7597 = vld [vmem:[%s18 + $0x18] sm:$0xff]
      %v7598 = vld [vmem:[%s18 + $0x20] sm:$0xff]
      %v7599 = vld [vmem:[%s18 + $0x28] sm:$0xff]
      %v7600 = vld [vmem:[%s18 + $0x30] sm:$0xff]
      %v7601 = vld [vmem:[%s18 + $0x38] sm:$0xff]
      %v7602 = vld [vmem:[%s19] sm:$0x1]
      %v7604 = vperm.slane %v7602, 0
      %v7607 = vsel %vm1517, %v7593, 0
      %7609 = vmatpush.msra.mxu0 0.0
      %7610 = vmatpush.msra.mxu0 0.0
      %7611 = vmatpush.msra.mxu0 0.0
      %7612 = vmatpush.msra.mxu0 0.0
      %7613 = vmatpush.msra.mxu0 0.0
      %7614 = vmatpush.msra.mxu0 0.0
      %7615 = vmatpush.msra.mxu0 0.0
      %7616 = vmatpush.msra.mxu0 0.0
      %7617 = vmatpush.msra.mxu0 %v7601
      %7618 = vmatpush.msra.mxu0 %v7600
      %7619 = vmatpush.msra.mxu0 %v7599
      %7620 = vmatpush.msra.mxu0 %v7598
      %7621 = vmatpush.msra.mxu0 %v7597
      %7622 = vmatpush.msra.mxu0 %v7596
      %7623 = vmatpush.msra.mxu0 %v7595
      %7624 = vmatpush.msra.mxu0 %v7594
      %7625 = vmatmul.f32.gmra.mxu0 %v7607
      %v7626 = vpop.f32.mrf.mxu0
      %v7627 = vadd.f32 %v7604, %v7626
      %7628 = vdwg.mxu0
      %v7629 = vmax.f32 %v7627, 0.0
      %v7630 = vld [vmem:[%s20] sm:$0xff]
      %v7631 = vld [vmem:[%s20 + $0x8] sm:$0xff]
      %v7632 = vld [vmem:[%s20 + $0x10] sm:$0xff]
      %v7633 = vld [vmem:[%s20 + $0x18] sm:$0xff]
      %v7634 = vld [vmem:[%s21] sm:$0x1]
      %v7636 = vperm.slane %v7634, 0
      %v7639 = vsel %vm771, %v7629, 0
      %7641 = vmatpush.msra.mxu0 0.0
      %7642 = vmatpush.msra.mxu0 0.0
      %7643 = vmatpush.msra.mxu0 0.0
      %7644 = vmatpush.msra.mxu0 0.0
      %7645 = vmatpush.msra.mxu0 0.0
      %7646 = vmatpush.msra.mxu0 0.0
      %7647 = vmatpush.msra.mxu0 0.0
      %7648 = vmatpush.msra.mxu0 0.0
      %7649 = vmatpush.msra.mxu0 0.0
      %7650 = vmatpush.msra.mxu0 0.0
      %7651 = vmatpush.msra.mxu0 0.0
      %7652 = vmatpush.msra.mxu0 0.0
      %7653 = vmatpush.msra.mxu0 %v7633
      %7654 = vmatpush.msra.mxu0 %v7632
      %7655 = vmatpush.msra.mxu0 %v7631
      %7656 = vmatpush.msra.mxu0 %v7630
      %7657 = vmatmul.f32.gmra.mxu0 %v7639
      %v7658 = vpop.f32.mrf.mxu0
      %v7659 = vadd.f32 %v7636, %v7658
      %7660 = vdwg.mxu0
      %v7661 = vmax.f32 %v7659, 0.0
      %v7662 = vld [vmem:[%s22] sm:$0xff]
      %v7663 = vld [vmem:[%s22 + $0x8] sm:$0xff]
      %v7664 = vld [vmem:[%s23] sm:$0x1]
      %v7666 = vperm.slane %v7664, 0
      %vm7668 = vcmask 130048
      %v7670 = vsel %vm7668, %v7661, 0
      %7672 = vmatpush.msra.mxu0 0.0
      %7673 = vmatpush.msra.mxu0 0.0
      %7674 = vmatpush.msra.mxu0 0.0
      %7675 = vmatpush.msra.mxu0 0.0
      %7676 = vmatpush.msra.mxu0 0.0
      %7677 = vmatpush.msra.mxu0 0.0
      %7678 = vmatpush.msra.mxu0 0.0
      %7679 = vmatpush.msra.mxu0 0.0
      %7680 = vmatpush.msra.mxu0 0.0
      %7681 = vmatpush.msra.mxu0 0.0
      %7682 = vmatpush.msra.mxu0 0.0
      %7683 = vmatpush.msra.mxu0 0.0
      %7684 = vmatpush.msra.mxu0 0.0
      %7685 = vmatpush.msra.mxu0 0.0
      %7686 = vmatpush.msra.mxu0 %v7663
      %7687 = vmatpush.msra.mxu0 %v7662
      %7688 = vmatmul.f32.gmra.mxu0 %v7670
      %v7689 = vpop.f32.mrf.mxu0
      %v7690 = vadd.f32 %v7666, %v7689
      %7691 = vdwg.mxu0
      %7692 = vst.msk [vmem:[%s732] sm:$0xff] %vm1080, %v7690
      %p7693 = scmp.lt.s32.totalorder %s35, 1
      %s7694 = scalar_select %p7693, %s35, 1
      %s7695 = smul.addr %s7694, 8
      %s7696 = scalar_lea.vmem %s24, %s7695
      // Predicated region
      $region117: #{multibert_v2_forward.1} parent=115 // pred_check
        %p7697 = pneg %p562
      $region118: #{multibert_v2_forward.1} parent=115 // pred_check_branch
        %7699 = sbr.rel (%p7697) target = $region120
      $region119: #{multibert_v2_forward.1} parent=115 // pred_region
        _
      $region120: #{multibert_v2_forward.1} parent=115 // pred_fallthru
        _
    $region116: #{multibert_v2_forward.1} parent=5 // pred_fallthru
      _
    %p7700 = scmp.le.s32.totalorder 2, %s30
    // Predicated region
    $region121: #{multibert_v2_forward.1} parent=5 // pred_check
      %p7701 = pneg %p7700
    $region122: #{multibert_v2_forward.1} parent=5 // pred_check_branch
      %7703 = sbr.rel (%p7701) target = $region124
    $region123: #{multibert_v2_forward.1} parent=5 // pred_region
      %s7704 = ssub.s32 %s30, 2
      // Predicated region
      $region125: #{multibert_v2_forward.1} parent=123 // pred_check
        %p7705 = pneg %p568
      $region126: #{multibert_v2_forward.1} parent=123 // pred_check_branch
        %7707 = sbr.rel (%p7705) target = $region128
      $region127: #{multibert_v2_forward.1} parent=123 // pred_region
        %p7708 = scmp.lt.s32.totalorder %s36, 1
        %s7709 = scalar_select %p7708, %s36, 1
        %s7710 = smul.addr %s7709, 8
        %s7711 = scalar_lea.vmem %s24, %s7710
      $region128: #{multibert_v2_forward.1} parent=123 // pred_fallthru
        _
    $region124: #{multibert_v2_forward.1} parent=5 // pred_fallthru
      _
  $region6: #{multibert_v2_forward.1} parent=0 // loop_footer
    %s34 = sadd.s32 1, %s30
  $region7: #{multibert_v2_forward.1} parent=0 // loop_footer_branch
    %29 = sbr.rel target = $region3
  $region8: #{multibert_v2_forward.1} parent=0 // loop_exit
    _

</llo_original>
